<compile_context>
chip_gen: v6e
topology: v6e:2x2x1
jax: 0.10.0
libtpu: 0.0.40
codegen_flags: <defaults>
</compile_context>

<pallas_src>
import numpy as np
import jax
import jax.numpy as jnp
from jax import lax
from jax.experimental import pallas as pl
from jax.experimental.pallas import tpu as pltpu

# ---------------- static config (mirrors the PyTorch module defaults) ----------------
DIM = 32                      # dim
NUM_HEADS = 4                 # num_heads
INPUT_RES = (8, 8)            # input_resolution
B = 2                         # batch
MLP_RATIO = 4.0
WINDOW_SIZE = 12
SHIFT_SIZE = 0
if min(INPUT_RES) <= WINDOW_SIZE:         # same logic as the module __init__
    SHIFT_SIZE = 0
    WINDOW_SIZE = min(INPUT_RES)
N = WINDOW_SIZE * WINDOW_SIZE             # tokens per window (== L for this config)
HEAD_DIM = DIM // NUM_HEADS
MLP_HIDDEN = int(DIM * MLP_RATIO)
L_TOK = INPUT_RES[0] * INPUT_RES[1]
NUM_SEG = 2 * B                           # (batch, view) segments packed along lanes
PACK_W = NUM_SEG * DIM                    # 128 packed lane width


# ---------------------------------- fused Pallas kernel ----------------------------------
def fused_block_kernel(x_ref, qkvw_ref, qkvb_ref, sqmask_ref, ksame_ref, kdiff_ref,
                       vmask_ref, bias_ref, projw_ref, projb_ref, avgmask_ref,
                       ln1g_ref, ln1b_ref, ln2g_ref, ln2b_ref,
                       fc1w_ref, fc1b_ref, fc2w_ref, fc2b_ref,
                       o_ref):
    """Whole batch + both views in one shot.

    Lane layout of the (N, 128) tiles: segment s = 2*b + view, channels s*32 .. s*32+31.
    """
    C, H, S, W = DIM, NUM_HEADS, NUM_SEG, PACK_W

    x = x_ref[...]                                              # (N, 128) packed input

    # ---------------- packed QKV (block-diag weights; columns grouped [q | k | v]) ----------------
    qkv = jnp.dot(x, qkvw_ref[...], preferred_element_type=jnp.float32) + qkvb_ref[...]
    q = qkv[:, 0:W]
    k = qkv[:, W:2 * W]
    v = qkv[:, 2 * W:3 * W]

    # per-(segment, head) L2 normalization via block-diag sum-of-squares matmul
    q_ss = jnp.dot(q * q, sqmask_ref[...], preferred_element_type=jnp.float32)
    k_ss = jnp.dot(k * k, sqmask_ref[...], preferred_element_type=jnp.float32)
    qn = q * lax.rsqrt(jnp.maximum(q_ss, 1e-24))                # == q / max(||q_head||, 1e-12)
    kn = k * lax.rsqrt(jnp.maximum(k_ss, 1e-24))

    # per-segment head-stacked tiles (H*N, C): row g*N + j carries token j for head block g
    kt, vt = [], []
    for s in range(S):
        ks = kn[:, s * C:(s + 1) * C]                           # (N, C)
        vs = v[:, s * C:(s + 1) * C]
        kt.append(jnp.concatenate([ks] * H, axis=0))            # (H*N, C)
        vt.append(jnp.concatenate([vs] * H, axis=0))

    dn = (((1,), (1,)), ((), ()))                               # contract channel dim of both
    vmask = vmask_ref[...]                                      # (H*N, C) head one-hot

    # ---------------- dynamic multi-view attention, per (batch, view) segment ----------------
    ys = []
    for s in range(S):
        b, view = divmod(s, 2)
        ov = 2 * b + (1 - view)                                 # other view, same batch
        qs = qn[:, s * C:(s + 1) * C]                           # (N, C)
        # proj_concat weight * logit_scale folded into per-channel K scalings:
        #   K_eff[g*N+j, c] = w_same[g,c] * kn_v[j,c] + w_diff[g,c] * kn_ov[j,c]
        keff = kt[s] * ksame_ref[view] + kt[ov] * kdiff_ref[view]            # (H*N, C)
        logits = lax.dot_general(qs, keff, dn,
                                 preferred_element_type=jnp.float32) + bias_ref[view]  # (N, H*N)
        # per-row max is constant across keys inside every head -> softmax unchanged.
        m = jnp.max(logits, axis=-1, keepdims=True)
        p = jnp.exp(logits - m)
        num = jnp.dot(p, vt[s] * vmask, preferred_element_type=jnp.float32)  # (N, C)
        den = jnp.dot(p, vmask, preferred_element_type=jnp.float32)          # per-head sums
        ys.append(num * pl.reciprocal(jnp.maximum(den, 1e-30), approx=True))

    y = jnp.concatenate(ys, axis=-1)                            # (N, 128)

    # ---------------- tail: proj -> +res -> LN -> MLP(ReLU) -> LN -> +res ----------------
    def seg_layernorm(t, g, b_):
        # per-32-lane-segment mean / variance via block-diag averaging matmul
        mu = jnp.dot(t, avgmask_ref[...], preferred_element_type=jnp.float32)
        tc = t - mu
        var = jnp.dot(tc * tc, avgmask_ref[...], preferred_element_type=jnp.float32)
        return tc * lax.rsqrt(var + 1e-5) * g + b_

    attn = jnp.dot(y, projw_ref[...], preferred_element_type=jnp.float32) + projb_ref[...]
    xr = x + seg_layernorm(attn, ln1g_ref[...], ln1b_ref[...])
    h = jnp.dot(xr, fc1w_ref[...], preferred_element_type=jnp.float32) + fc1b_ref[...]
    h = jnp.maximum(h, 0.0)                                     # nn.ReLU
    y2 = jnp.dot(h, fc2w_ref[...], preferred_element_type=jnp.float32) + fc2b_ref[...]
    o_ref[...] = xr + seg_layernorm(y2, ln2g_ref[...], ln2b_ref[...])


# ---------------------------------- plain-JAX helpers ----------------------------------
def window_partition(x, ws):
    Bx, Hx, Wx, Cx = x.shape
    x = x.reshape(Bx, Hx // ws, ws, Wx // ws, ws, Cx)
    return x.transpose(0, 1, 3, 2, 4, 5).reshape(-1, ws, ws, Cx)


def window_reverse(windows, ws, Hx, Wx):
    Bx = windows.shape[0] // (Hx * Wx // ws // ws)
    x = windows.reshape(Bx, Hx // ws, Wx // ws, ws, ws, -1)
    return x.transpose(0, 1, 3, 2, 4, 5).reshape(Bx, Hx, Wx, -1)


def make_rel_bias(ws, cpb_w1, cpb_b1, cpb_w2):
    """16*sigmoid(cpb_mlp(rel_coords_table))[rel_pos_index]  ->  (num_heads, N, N)."""
    rh = np.arange(-(ws - 1), ws, dtype=np.float32)
    rw = np.arange(-(ws - 1), ws, dtype=np.float32)
    hh, ww = np.meshgrid(rh, rw, indexing="ij")
    table = np.stack([hh, ww], axis=-1)
    table[..., 0] /= (ws - 1)
    table[..., 1] /= (ws - 1)
    table *= 8.0
    table = np.sign(table) * np.log2(np.abs(table) + 1.0) / np.log2(8.0)
    table = jnp.asarray(table.reshape(-1, 2), jnp.float32)

    hidden = jnp.maximum(table @ cpb_w1.T + cpb_b1, 0.0)
    bias_table = hidden @ cpb_w2.T                              # (M, num_heads)

    ch, cw = np.arange(ws), np.arange(ws)
    coords = np.stack(np.meshgrid(ch, cw, indexing="ij"))       # (2, ws, ws)
    flat = coords.reshape(2, -1)
    rel = (flat[:, :, None] - flat[:, None, :]).transpose(1, 2, 0)
    rel[..., 0] += ws - 1
    rel[..., 1] += ws - 1
    rel[..., 0] *= 2 * ws - 1
    idx = rel.sum(-1).reshape(-1)

    bias = bias_table[idx].reshape(ws * ws, ws * ws, NUM_HEADS).transpose(2, 0, 1)
    return 16.0 * jax.nn.sigmoid(bias)


def init_params(key):
    ks = iter(jax.random.split(key, 40))
    def nrm(shape, scale=0.02):
        return scale * jax.random.normal(next(ks), shape, jnp.float32)
    p = {}
    for v in ("1", "2"):
        p["qkv_w_" + v] = nrm((3 * DIM, DIM))
        p["q_bias_" + v] = nrm((DIM,))
        p["v_bias_" + v] = nrm((DIM,))
        p["logit_scale_" + v] = jnp.full((NUM_HEADS,), np.log(10.0), jnp.float32)
        p["cpb_w1_" + v] = nrm((512, 2))
        p["cpb_b1_" + v] = nrm((512,))
        p["cpb_w2_" + v] = nrm((NUM_HEADS, 512))
        p["pc_w_" + v] = nrm((NUM_HEADS, 2 * NUM_HEADS))
        p["pc_b_" + v] = nrm((NUM_HEADS,))
        p["proj_w_" + v] = nrm((DIM, DIM))
        p["proj_b_" + v] = nrm((DIM,))
        p["ln1_g_" + v] = 1.0 + nrm((DIM,))
        p["ln1_b_" + v] = nrm((DIM,))
        p["ln2_g_" + v] = 1.0 + nrm((DIM,))
        p["ln2_b_" + v] = nrm((DIM,))
        p["fc1_w_" + v] = nrm((MLP_HIDDEN, DIM))
        p["fc1_b_" + v] = nrm((MLP_HIDDEN,))
        p["fc2_w_" + v] = nrm((DIM, MLP_HIDDEN))
        p["fc2_b_" + v] = nrm((DIM,))
    return p


def block_diag(*blocks):
    rows = sum(blk.shape[0] for blk in blocks)
    cols = sum(blk.shape[1] for blk in blocks)
    out = jnp.zeros((rows, cols), jnp.float32)
    r = c = 0
    for blk in blocks:
        out = out.at[r:r + blk.shape[0], c:c + blk.shape[1]].set(blk)
        r += blk.shape[0]
        c += blk.shape[1]
    return out


def derive_params(raw):
    """Pre-pack / fold parameters into the lane-packed layout the fused kernel consumes."""
    H, dh, C, S = NUM_HEADS, HEAD_DIM, DIM, NUM_SEG
    views = ["1", "2"]
    seg_view = [views[s % 2] for s in range(S)]                  # segment -> view name

    def ls_of(v):
        return jnp.exp(jnp.minimum(raw["logit_scale_" + v], jnp.log(1.0 / 0.01)))

    d = {}

    # ---- packed QKV: block-diag over segments, output columns grouped [q | k | v] ----
    wq, wk, wv, bq, bk, bv = [], [], [], [], [], []
    for v in seg_view:
        wt = raw["qkv_w_" + v].T                                 # (C, 3C)
        wq.append(wt[:, 0:C]); wk.append(wt[:, C:2 * C]); wv.append(wt[:, 2 * C:3 * C])
        bq.append(raw["q_bias_" + v])
        bk.append(jnp.zeros((C,), jnp.float32))
        bv.append(raw["v_bias_" + v])
    d["qkvw"] = jnp.concatenate([block_diag(*wq), block_diag(*wk), block_diag(*wv)],
                                axis=1)                          # (S*C, 3*S*C)
    d["qkvb"] = jnp.concatenate(bq + bk + bv).reshape(1, 3 * S * C)

    # ---- block-diag masks: per-(segment, head) sum-of-squares & per-segment averaging ----
    d["sqmask"] = jnp.kron(jnp.eye(S * H, dtype=jnp.float32),
                           jnp.ones((dh, dh), jnp.float32))      # (S*C, S*C)
    d["avgmask"] = jnp.kron(jnp.eye(S, dtype=jnp.float32),
                            jnp.full((C, C), 1.0 / C, jnp.float32))

    # ---- head-stacked attention scalings / bias (per view) ----
    def head_stack(v, sl):            # (H*N, C): row block g carries w[g, head(c)] * logit_scale[g]
        ls = ls_of(v)
        per_head = jnp.repeat(raw["pc_w_" + v][:, sl] * ls[:, None], dh, axis=1)  # (H, C)
        return jnp.repeat(per_head, N, axis=0)
    d["ksame"] = jnp.stack([head_stack(v, slice(0, H)) for v in views])            # (2, H*N, C)
    d["kdiff"] = jnp.stack([head_stack(v, slice(H, 2 * H)) for v in views])        # (2, H*N, C)

    vhead = jnp.kron(jnp.eye(H, dtype=jnp.float32), jnp.ones((1, dh), jnp.float32))  # (H, C)
    d["vmask"] = jnp.repeat(vhead, N, axis=0)                                      # (H*N, C)

    def bias_flat(v):                 # (N, H*N): relative bias + scaled proj_concat bias
        ls = ls_of(v)
        rel = make_rel_bias(WINDOW_SIZE, raw["cpb_w1_" + v], raw["cpb_b1_" + v],
                            raw["cpb_w2_" + v])                                    # (H, N, N)
        flat = jnp.transpose(rel, (1, 0, 2)).reshape(N, H * N)
        return flat + jnp.repeat(raw["pc_b_" + v] * ls, N)[None, :]
    d["bias"] = jnp.stack([bias_flat(v) for v in views])                           # (2, N, H*N)

    # ---- packed tail weights (block-diagonal over segments) ----
    d["projw"] = block_diag(*[raw["proj_w_" + v].T for v in seg_view])             # (S*C, S*C)
    d["projb"] = jnp.concatenate([raw["proj_b_" + v] for v in seg_view]).reshape(1, S * C)
    for nm in ("ln1_g", "ln1_b", "ln2_g", "ln2_b"):
        d[nm] = jnp.concatenate([raw[nm + "_" + v] for v in seg_view]).reshape(1, S * C)
    d["fc1w"] = block_diag(*[raw["fc1_w_" + v].T for v in seg_view])               # (S*C, S*MLP_H)
    d["fc1b"] = jnp.concatenate([raw["fc1_b_" + v] for v in seg_view]).reshape(1, S * MLP_HIDDEN)
    d["fc2w"] = block_diag(*[raw["fc2_w_" + v].T for v in seg_view])               # (S*MLP_H, S*C)
    d["fc2b"] = jnp.concatenate([raw["fc2_b_" + v] for v in seg_view]).reshape(1, S * C)
    return d


# ----------------------------- pallas_call wrapper -----------------------------
def _wfull(a):
    nd = a.ndim
    return pl.BlockSpec(a.shape, lambda i, _nd=nd: (0,) * _nd)


def omni_block_forward(x1, x2, d):
    Bx, L, C = x1.shape
    assert SHIFT_SIZE == 0, "shifted-window mask path not implemented"
    assert WINDOW_SIZE == INPUT_RES[0] == INPUT_RES[1] and L == N and C == DIM, \
        "fused kernel assumes a single window covering the full resolution"
    assert Bx == B

    # lane-pack: rows = tokens, lanes = [b0/view1 | b0/view2 | b1/view1 | b1/view2]
    segs = []
    for b in range(Bx):
        segs += [x1[b], x2[b]]
    x_packed = jnp.concatenate(segs, axis=-1)                    # (N, 2*B*C) = (64, 128)

    args = (x_packed, d["qkvw"], d["qkvb"], d["sqmask"], d["ksame"], d["kdiff"],
            d["vmask"], d["bias"], d["projw"], d["projb"], d["avgmask"],
            d["ln1_g"], d["ln1_b"], d["ln2_g"], d["ln2_b"],
            d["fc1w"], d["fc1b"], d["fc2w"], d["fc2b"])
    out = pl.pallas_call(
        fused_block_kernel,
        grid=(1,),
        in_specs=[_wfull(a) for a in args],
        out_specs=pl.BlockSpec((N, PACK_W), lambda i: (0, 0)),
        out_shape=jax.ShapeDtypeStruct((N, PACK_W), jnp.float32),
        compiler_params=pltpu.CompilerParams(dimension_semantics=("arbitrary",)),
    )(*args)

    y1 = jnp.stack([out[:, (2 * b) * DIM:(2 * b + 1) * DIM] for b in range(Bx)], axis=0)
    y2 = jnp.stack([out[:, (2 * b + 1) * DIM:(2 * b + 2) * DIM] for b in range(Bx)], axis=0)
    return y1, y2


# ----------------------------- pure-JAX reference (for validation) -----------------------------
def _ref_ln(t, g, b):
    mu = jnp.mean(t, axis=-1, keepdims=True)
    var = jnp.mean((t - mu) ** 2, axis=-1, keepdims=True)
    return (t - mu) / jnp.sqrt(var + 1e-5) * g + b


def reference_forward(x1, x2, raw):
    Hr, Wr = INPUT_RES
    Bx, L, C = x1.shape
    sc1, sc2 = x1, x2
    xw1 = window_partition(x1.reshape(Bx, Hr, Wr, C), WINDOW_SIZE).reshape(-1, N, C)
    xw2 = window_partition(x2.reshape(Bx, Hr, Wr, C), WINDOW_SIZE).reshape(-1, N, C)
    B_ = xw1.shape[0]
    H, dh = NUM_HEADS, HEAD_DIM

    def qkv(x, v):
        bias = jnp.concatenate([raw["q_bias_" + v], jnp.zeros((C,), jnp.float32), raw["v_bias_" + v]])
        out = x @ raw["qkv_w_" + v].T + bias
        out = out.reshape(B_, N, 3, H, dh).transpose(2, 0, 3, 1, 4)
        return out[0], out[1], out[2]

    q1, k1, v1 = qkv(xw1, "1")
    q2, k2, v2 = qkv(xw2, "2")

    def l2n(t):
        return t / jnp.maximum(jnp.sqrt(jnp.sum(t * t, -1, keepdims=True)), 1e-12)

    def view_attn(qa, ka, kb, va, v):
        same = l2n(qa) @ jnp.swapaxes(l2n(ka), -2, -1)
        diff = l2n(qa) @ jnp.swapaxes(l2n(kb), -2, -1)
        ls = jnp.exp(jnp.minimum(raw["logit_scale_" + v], jnp.log(1.0 / 0.01)))
        cat = jnp.concatenate([same, diff], axis=1).transpose(0, 2, 3, 1)
        attn = (cat @ raw["pc_w_" + v].T + raw["pc_b_" + v]).transpose(0, 3, 1, 2)
        attn = attn * ls[None, :, None, None]
        rel = make_rel_bias(WINDOW_SIZE, raw["cpb_w1_" + v], raw["cpb_b1_" + v], raw["cpb_w2_" + v])
        attn = jax.nn.softmax(attn + rel[None], axis=-1)
        out = (attn @ va).transpose(0, 2, 1, 3).reshape(B_, N, C)
        return out @ raw["proj_w_" + v].T + raw["proj_b_" + v]

    a1 = view_attn(q1, k1, k2, v1, "1")
    a2 = view_attn(q2, k2, k1, v2, "2")
    a1 = window_reverse(a1.reshape(-1, WINDOW_SIZE, WINDOW_SIZE, C), WINDOW_SIZE, Hr, Wr).reshape(Bx, L, C)
    a2 = window_reverse(a2.reshape(-1, WINDOW_SIZE, WINDOW_SIZE, C), WINDOW_SIZE, Hr, Wr).reshape(Bx, L, C)

    def tail(sc, a, v):
        x = sc + _ref_ln(a, raw["ln1_g_" + v], raw["ln1_b_" + v])
        h = jnp.maximum(x @ raw["fc1_w_" + v].T + raw["fc1_b_" + v], 0.0)
        y = h @ raw["fc2_w_" + v].T + raw["fc2_b_" + v]
        return x + _ref_ln(y, raw["ln2_g_" + v], raw["ln2_b_" + v])

    return tail(sc1, a1, "1"), tail(sc2, a2, "2")


# ---------------------------------------- main ----------------------------------------
if __name__ == "__main__":
    # Note: default matmul precision on purpose (review item): 'highest' would lower every
    # tiny dot to multi-pass MXU sequences; both kernel and reference use default here.
    key = jax.random.PRNGKey(0)
    k_x1, k_x2, k_p = jax.random.split(key, 3)
    x1 = jax.random.normal(k_x1, (B, L_TOK, DIM), jnp.float32)
    x2 = jax.random.normal(k_x2, (B, L_TOK, DIM), jnp.float32)

    raw = init_params(k_p)
    derived = derive_params(raw)

    y1, y2 = omni_block_forward(x1, x2, derived)
    jax.block_until_ready((y1, y2))

    r1, r2 = reference_forward(x1, x2, raw)
    np.testing.assert_allclose(np.asarray(y1), np.asarray(r1), rtol=5e-2, atol=5e-2)
    np.testing.assert_allclose(np.asarray(y2), np.asarray(r2), rtol=5e-2, atol=5e-2)

    print("KERNEL_OK")
</pallas_src>

<mosaic_0001>
module attributes {stable_mosaic.version = 11 : i64} {
  func.func @fused_block_kernel(%arg0: i32, %arg1: memref<64x128xf32, #tpu.memory_space<vmem>>, %arg2: memref<128x384xf32, #tpu.memory_space<vmem>>, %arg3: memref<1x384xf32, #tpu.memory_space<vmem>>, %arg4: memref<128x128xf32, #tpu.memory_space<vmem>>, %arg5: memref<2x256x32xf32, #tpu.memory_space<vmem>>, %arg6: memref<2x256x32xf32, #tpu.memory_space<vmem>>, %arg7: memref<256x32xf32, #tpu.memory_space<vmem>>, %arg8: memref<2x64x256xf32, #tpu.memory_space<vmem>>, %arg9: memref<128x128xf32, #tpu.memory_space<vmem>>, %arg10: memref<1x128xf32, #tpu.memory_space<vmem>>, %arg11: memref<128x128xf32, #tpu.memory_space<vmem>>, %arg12: memref<1x128xf32, #tpu.memory_space<vmem>>, %arg13: memref<1x128xf32, #tpu.memory_space<vmem>>, %arg14: memref<1x128xf32, #tpu.memory_space<vmem>>, %arg15: memref<1x128xf32, #tpu.memory_space<vmem>>, %arg16: memref<128x512xf32, #tpu.memory_space<vmem>>, %arg17: memref<1x512xf32, #tpu.memory_space<vmem>>, %arg18: memref<512x128xf32, #tpu.memory_space<vmem>>, %arg19: memref<1x128xf32, #tpu.memory_space<vmem>>, %arg20: memref<64x128xf32, #tpu.memory_space<vmem>>) attributes {dimension_semantics = [#tpu.dimension_semantics<arbitrary>], iteration_bounds = array<i64: 1>, scalar_prefetch = 0 : i64, scratch_operands = 0 : i64, tpu.core_type = #tpu.core_type<tc>, window_params = [{pipeline_mode = #tpu.pipeline_mode<synchronous>, transform_indices = @transform_0, window_bounds = array<i64: 64, 128>}, {pipeline_mode = #tpu.pipeline_mode<synchronous>, transform_indices = @transform_1, window_bounds = array<i64: 128, 384>}, {pipeline_mode = #tpu.pipeline_mode<synchronous>, transform_indices = @transform_2, window_bounds = array<i64: 1, 384>}, {pipeline_mode = #tpu.pipeline_mode<synchronous>, transform_indices = @transform_3, window_bounds = array<i64: 128, 128>}, {pipeline_mode = #tpu.pipeline_mode<synchronous>, transform_indices = @transform_4, window_bounds = array<i64: 2, 256, 32>}, {pipeline_mode = #tpu.pipeline_mode<synchronous>, transform_indices = @transform_5, window_bounds = array<i64: 2, 256, 32>}, {pipeline_mode = #tpu.pipeline_mode<synchronous>, transform_indices = @transform_6, window_bounds = array<i64: 256, 32>}, {pipeline_mode = #tpu.pipeline_mode<synchronous>, transform_indices = @transform_7, window_bounds = array<i64: 2, 64, 256>}, {pipeline_mode = #tpu.pipeline_mode<synchronous>, transform_indices = @transform_8, window_bounds = array<i64: 128, 128>}, {pipeline_mode = #tpu.pipeline_mode<synchronous>, transform_indices = @transform_9, window_bounds = array<i64: 1, 128>}, {pipeline_mode = #tpu.pipeline_mode<synchronous>, transform_indices = @transform_10, window_bounds = array<i64: 128, 128>}, {pipeline_mode = #tpu.pipeline_mode<synchronous>, transform_indices = @transform_11, window_bounds = array<i64: 1, 128>}, {pipeline_mode = #tpu.pipeline_mode<synchronous>, transform_indices = @transform_12, window_bounds = array<i64: 1, 128>}, {pipeline_mode = #tpu.pipeline_mode<synchronous>, transform_indices = @transform_13, window_bounds = array<i64: 1, 128>}, {pipeline_mode = #tpu.pipeline_mode<synchronous>, transform_indices = @transform_14, window_bounds = array<i64: 1, 128>}, {pipeline_mode = #tpu.pipeline_mode<synchronous>, transform_indices = @transform_15, window_bounds = array<i64: 128, 512>}, {pipeline_mode = #tpu.pipeline_mode<synchronous>, transform_indices = @transform_16, window_bounds = array<i64: 1, 512>}, {pipeline_mode = #tpu.pipeline_mode<synchronous>, transform_indices = @transform_17, window_bounds = array<i64: 512, 128>}, {pipeline_mode = #tpu.pipeline_mode<synchronous>, transform_indices = @transform_18, window_bounds = array<i64: 1, 128>}, {pipeline_mode = #tpu.pipeline_mode<synchronous>, transform_indices = @transform_19, window_bounds = array<i64: 64, 128>}]} {
    %c0 = arith.constant 0 : index
    %c0_0 = arith.constant 0 : index
    %0 = vector.load %arg1[%c0, %c0_0] : memref<64x128xf32, #tpu.memory_space<vmem>>, vector<64x128xf32>
    %c0_1 = arith.constant 0 : index
    %c0_2 = arith.constant 0 : index
    %1 = vector.load %arg2[%c0_1, %c0_2] : memref<128x384xf32, #tpu.memory_space<vmem>>, vector<128x384xf32>
    %cst = arith.constant dense<0.000000e+00> : vector<64x384xf32>
    %2 = tpu.matmul %0, %1, %cst {dimension_numbers = #tpu.dot_dimension_numbers<[1], [0], [0], [1], [0, 0, 1, 1], [], []>} : vector<64x128xf32>, vector<128x384xf32>, vector<64x384xf32> -> vector<64x384xf32>
    %c0_3 = arith.constant 0 : index
    %c0_4 = arith.constant 0 : index
    %3 = vector.load %arg3[%c0_3, %c0_4] : memref<1x384xf32, #tpu.memory_space<vmem>>, vector<1x384xf32>
    %4 = vector.broadcast %3 : vector<1x384xf32> to vector<64x384xf32>
    %5 = arith.addf %2, %4 : vector<64x384xf32>
    %6 = vector.extract_strided_slice %5 {offsets = [0, 0], sizes = [64, 128], strides = [1, 1]} : vector<64x384xf32> to vector<64x128xf32>
    %7 = vector.extract_strided_slice %5 {offsets = [0, 128], sizes = [64, 128], strides = [1, 1]} : vector<64x384xf32> to vector<64x128xf32>
    %8 = vector.extract_strided_slice %5 {offsets = [0, 256], sizes = [64, 128], strides = [1, 1]} : vector<64x384xf32> to vector<64x128xf32>
    %9 = arith.mulf %6, %6 : vector<64x128xf32>
    %c0_5 = arith.constant 0 : index
    %c0_6 = arith.constant 0 : index
    %10 = vector.load %arg4[%c0_5, %c0_6] : memref<128x128xf32, #tpu.memory_space<vmem>>, vector<128x128xf32>
    %cst_7 = arith.constant dense<0.000000e+00> : vector<64x128xf32>
    %11 = tpu.matmul %9, %10, %cst_7 {dimension_numbers = #tpu.dot_dimension_numbers<[1], [0], [0], [1], [0, 0, 1, 1], [], []>} : vector<64x128xf32>, vector<128x128xf32>, vector<64x128xf32> -> vector<64x128xf32>
    %12 = arith.mulf %7, %7 : vector<64x128xf32>
    %c0_8 = arith.constant 0 : index
    %c0_9 = arith.constant 0 : index
    %13 = vector.load %arg4[%c0_8, %c0_9] : memref<128x128xf32, #tpu.memory_space<vmem>>, vector<128x128xf32>
    %cst_10 = arith.constant dense<0.000000e+00> : vector<64x128xf32>
    %14 = tpu.matmul %12, %13, %cst_10 {dimension_numbers = #tpu.dot_dimension_numbers<[1], [0], [0], [1], [0, 0, 1, 1], [], []>} : vector<64x128xf32>, vector<128x128xf32>, vector<64x128xf32> -> vector<64x128xf32>
    %cst_11 = arith.constant 1.000000e-24 : f32
    %15 = vector.broadcast %cst_11 : f32 to vector<64x128xf32>
    %16 = arith.maximumf %11, %15 : vector<64x128xf32>
    %17 = math.rsqrt %16 : vector<64x128xf32>
    %18 = arith.mulf %6, %17 : vector<64x128xf32>
    %cst_12 = arith.constant 1.000000e-24 : f32
    %19 = vector.broadcast %cst_12 : f32 to vector<64x128xf32>
    %20 = arith.maximumf %14, %19 : vector<64x128xf32>
    %21 = math.rsqrt %20 : vector<64x128xf32>
    %22 = arith.mulf %7, %21 : vector<64x128xf32>
    %23 = vector.extract_strided_slice %22 {offsets = [0, 0], sizes = [64, 32], strides = [1, 1]} : vector<64x128xf32> to vector<64x32xf32>
    %24 = vector.extract_strided_slice %8 {offsets = [0, 0], sizes = [64, 32], strides = [1, 1]} : vector<64x128xf32> to vector<64x32xf32>
    %25 = tpu.concatenate %23, %23, %23, %23 in 0 : vector<64x32xf32>, vector<64x32xf32>, vector<64x32xf32>, vector<64x32xf32> -> vector<256x32xf32>
    %26 = tpu.concatenate %24, %24, %24, %24 in 0 : vector<64x32xf32>, vector<64x32xf32>, vector<64x32xf32>, vector<64x32xf32> -> vector<256x32xf32>
    %27 = vector.extract_strided_slice %22 {offsets = [0, 32], sizes = [64, 32], strides = [1, 1]} : vector<64x128xf32> to vector<64x32xf32>
    %28 = vector.extract_strided_slice %8 {offsets = [0, 32], sizes = [64, 32], strides = [1, 1]} : vector<64x128xf32> to vector<64x32xf32>
    %29 = tpu.concatenate %27, %27, %27, %27 in 0 : vector<64x32xf32>, vector<64x32xf32>, vector<64x32xf32>, vector<64x32xf32> -> vector<256x32xf32>
    %30 = tpu.concatenate %28, %28, %28, %28 in 0 : vector<64x32xf32>, vector<64x32xf32>, vector<64x32xf32>, vector<64x32xf32> -> vector<256x32xf32>
    %31 = vector.extract_strided_slice %22 {offsets = [0, 64], sizes = [64, 32], strides = [1, 1]} : vector<64x128xf32> to vector<64x32xf32>
    %32 = vector.extract_strided_slice %8 {offsets = [0, 64], sizes = [64, 32], strides = [1, 1]} : vector<64x128xf32> to vector<64x32xf32>
    %33 = tpu.concatenate %31, %31, %31, %31 in 0 : vector<64x32xf32>, vector<64x32xf32>, vector<64x32xf32>, vector<64x32xf32> -> vector<256x32xf32>
    %34 = tpu.concatenate %32, %32, %32, %32 in 0 : vector<64x32xf32>, vector<64x32xf32>, vector<64x32xf32>, vector<64x32xf32> -> vector<256x32xf32>
    %35 = vector.extract_strided_slice %22 {offsets = [0, 96], sizes = [64, 32], strides = [1, 1]} : vector<64x128xf32> to vector<64x32xf32>
    %36 = vector.extract_strided_slice %8 {offsets = [0, 96], sizes = [64, 32], strides = [1, 1]} : vector<64x128xf32> to vector<64x32xf32>
    %37 = tpu.concatenate %35, %35, %35, %35 in 0 : vector<64x32xf32>, vector<64x32xf32>, vector<64x32xf32>, vector<64x32xf32> -> vector<256x32xf32>
    %38 = tpu.concatenate %36, %36, %36, %36 in 0 : vector<64x32xf32>, vector<64x32xf32>, vector<64x32xf32>, vector<64x32xf32> -> vector<256x32xf32>
    %c0_13 = arith.constant 0 : index
    %c0_14 = arith.constant 0 : index
    %39 = vector.load %arg7[%c0_13, %c0_14] : memref<256x32xf32, #tpu.memory_space<vmem>>, vector<256x32xf32>
    %40 = vector.extract_strided_slice %18 {offsets = [0, 0], sizes = [64, 32], strides = [1, 1]} : vector<64x128xf32> to vector<64x32xf32>
    %c0_15 = arith.constant 0 : index
    %c0_16 = arith.constant 0 : index
    %c0_17 = arith.constant 0 : index
    %41 = vector.load %arg5[%c0_15, %c0_16, %c0_17] : memref<2x256x32xf32, #tpu.memory_space<vmem>>, vector<1x256x32xf32>
    %42 = vector.shape_cast %41 : vector<1x256x32xf32> to vector<256x32xf32>
    %43 = arith.mulf %25, %42 : vector<256x32xf32>
    %c0_18 = arith.constant 0 : index
    %c0_19 = arith.constant 0 : index
    %c0_20 = arith.constant 0 : index
    %44 = vector.load %arg6[%c0_18, %c0_19, %c0_20] : memref<2x256x32xf32, #tpu.memory_space<vmem>>, vector<1x256x32xf32>
    %45 = vector.shape_cast %44 : vector<1x256x32xf32> to vector<256x32xf32>
    %46 = arith.mulf %29, %45 : vector<256x32xf32>
    %47 = arith.addf %43, %46 : vector<256x32xf32>
    %cst_21 = arith.constant dense<0.000000e+00> : vector<64x256xf32>
    %48 = tpu.matmul %40, %47, %cst_21 {dimension_numbers = #tpu.dot_dimension_numbers<[1], [1], [0], [0], [0, 0, 1, 0], [], []>} : vector<64x32xf32>, vector<256x32xf32>, vector<64x256xf32> -> vector<64x256xf32>
    %c0_22 = arith.constant 0 : index
    %c0_23 = arith.constant 0 : index
    %c0_24 = arith.constant 0 : index
    %49 = vector.load %arg8[%c0_22, %c0_23, %c0_24] : memref<2x64x256xf32, #tpu.memory_space<vmem>>, vector<1x64x256xf32>
    %50 = vector.shape_cast %49 : vector<1x64x256xf32> to vector<64x256xf32>
    %51 = arith.addf %48, %50 : vector<64x256xf32>
    %cst_25 = arith.constant dense<0xFF800000> : vector<64xf32>
    %52 = vector.multi_reduction <maximumf>, %51, %cst_25 [1] : vector<64x256xf32> to vector<64xf32>
    %53 = vector.shape_cast %52 : vector<64xf32> to vector<64x1xf32>
    %54 = vector.broadcast %53 : vector<64x1xf32> to vector<64x256xf32>
    %55 = arith.subf %51, %54 : vector<64x256xf32>
    %56 = math.exp %55 : vector<64x256xf32>
    %57 = arith.mulf %26, %39 : vector<256x32xf32>
    %cst_26 = arith.constant dense<0.000000e+00> : vector<64x32xf32>
    %58 = tpu.matmul %56, %57, %cst_26 {dimension_numbers = #tpu.dot_dimension_numbers<[1], [0], [0], [1], [0, 0, 1, 1], [], []>} : vector<64x256xf32>, vector<256x32xf32>, vector<64x32xf32> -> vector<64x32xf32>
    %cst_27 = arith.constant dense<0.000000e+00> : vector<64x32xf32>
    %59 = tpu.matmul %56, %39, %cst_27 {dimension_numbers = #tpu.dot_dimension_numbers<[1], [0], [0], [1], [0, 0, 1, 1], [], []>} : vector<64x256xf32>, vector<256x32xf32>, vector<64x32xf32> -> vector<64x32xf32>
    %cst_28 = arith.constant 1.000000e-30 : f32
    %60 = vector.broadcast %cst_28 : f32 to vector<64x32xf32>
    %61 = arith.maximumf %59, %60 : vector<64x32xf32>
    %62 = tpu.reciprocal %61 {approx = true} : vector<64x32xf32> -> vector<64x32xf32>
    %63 = arith.mulf %58, %62 : vector<64x32xf32>
    %64 = vector.extract_strided_slice %18 {offsets = [0, 32], sizes = [64, 32], strides = [1, 1]} : vector<64x128xf32> to vector<64x32xf32>
    %c1 = arith.constant 1 : index
    %c0_29 = arith.constant 0 : index
    %c0_30 = arith.constant 0 : index
    %65 = vector.load %arg5[%c1, %c0_29, %c0_30] : memref<2x256x32xf32, #tpu.memory_space<vmem>>, vector<1x256x32xf32>
    %66 = vector.shape_cast %65 : vector<1x256x32xf32> to vector<256x32xf32>
    %67 = arith.mulf %29, %66 : vector<256x32xf32>
    %c1_31 = arith.constant 1 : index
    %c0_32 = arith.constant 0 : index
    %c0_33 = arith.constant 0 : index
    %68 = vector.load %arg6[%c1_31, %c0_32, %c0_33] : memref<2x256x32xf32, #tpu.memory_space<vmem>>, vector<1x256x32xf32>
    %69 = vector.shape_cast %68 : vector<1x256x32xf32> to vector<256x32xf32>
    %70 = arith.mulf %25, %69 : vector<256x32xf32>
    %71 = arith.addf %67, %70 : vector<256x32xf32>
    %cst_34 = arith.constant dense<0.000000e+00> : vector<64x256xf32>
    %72 = tpu.matmul %64, %71, %cst_34 {dimension_numbers = #tpu.dot_dimension_numbers<[1], [1], [0], [0], [0, 0, 1, 0], [], []>} : vector<64x32xf32>, vector<256x32xf32>, vector<64x256xf32> -> vector<64x256xf32>
    %c1_35 = arith.constant 1 : index
    %c0_36 = arith.constant 0 : index
    %c0_37 = arith.constant 0 : index
    %73 = vector.load %arg8[%c1_35, %c0_36, %c0_37] : memref<2x64x256xf32, #tpu.memory_space<vmem>>, vector<1x64x256xf32>
    %74 = vector.shape_cast %73 : vector<1x64x256xf32> to vector<64x256xf32>
    %75 = arith.addf %72, %74 : vector<64x256xf32>
    %cst_38 = arith.constant dense<0xFF800000> : vector<64xf32>
    %76 = vector.multi_reduction <maximumf>, %75, %cst_38 [1] : vector<64x256xf32> to vector<64xf32>
    %77 = vector.shape_cast %76 : vector<64xf32> to vector<64x1xf32>
    %78 = vector.broadcast %77 : vector<64x1xf32> to vector<64x256xf32>
    %79 = arith.subf %75, %78 : vector<64x256xf32>
    %80 = math.exp %79 : vector<64x256xf32>
    %81 = arith.mulf %30, %39 : vector<256x32xf32>
    %cst_39 = arith.constant dense<0.000000e+00> : vector<64x32xf32>
    %82 = tpu.matmul %80, %81, %cst_39 {dimension_numbers = #tpu.dot_dimension_numbers<[1], [0], [0], [1], [0, 0, 1, 1], [], []>} : vector<64x256xf32>, vector<256x32xf32>, vector<64x32xf32> -> vector<64x32xf32>
    %cst_40 = arith.constant dense<0.000000e+00> : vector<64x32xf32>
    %83 = tpu.matmul %80, %39, %cst_40 {dimension_numbers = #tpu.dot_dimension_numbers<[1], [0], [0], [1], [0, 0, 1, 1], [], []>} : vector<64x256xf32>, vector<256x32xf32>, vector<64x32xf32> -> vector<64x32xf32>
    %cst_41 = arith.constant 1.000000e-30 : f32
    %84 = vector.broadcast %cst_41 : f32 to vector<64x32xf32>
    %85 = arith.maximumf %83, %84 : vector<64x32xf32>
    %86 = tpu.reciprocal %85 {approx = true} : vector<64x32xf32> -> vector<64x32xf32>
    %87 = arith.mulf %82, %86 : vector<64x32xf32>
    %88 = vector.extract_strided_slice %18 {offsets = [0, 64], sizes = [64, 32], strides = [1, 1]} : vector<64x128xf32> to vector<64x32xf32>
    %c0_42 = arith.constant 0 : index
    %c0_43 = arith.constant 0 : index
    %c0_44 = arith.constant 0 : index
    %89 = vector.load %arg5[%c0_42, %c0_43, %c0_44] : memref<2x256x32xf32, #tpu.memory_space<vmem>>, vector<1x256x32xf32>
    %90 = vector.shape_cast %89 : vector<1x256x32xf32> to vector<256x32xf32>
    %91 = arith.mulf %33, %90 : vector<256x32xf32>
    %c0_45 = arith.constant 0 : index
    %c0_46 = arith.constant 0 : index
    %c0_47 = arith.constant 0 : index
    %92 = vector.load %arg6[%c0_45, %c0_46, %c0_47] : memref<2x256x32xf32, #tpu.memory_space<vmem>>, vector<1x256x32xf32>
    %93 = vector.shape_cast %92 : vector<1x256x32xf32> to vector<256x32xf32>
    %94 = arith.mulf %37, %93 : vector<256x32xf32>
    %95 = arith.addf %91, %94 : vector<256x32xf32>
    %cst_48 = arith.constant dense<0.000000e+00> : vector<64x256xf32>
    %96 = tpu.matmul %88, %95, %cst_48 {dimension_numbers = #tpu.dot_dimension_numbers<[1], [1], [0], [0], [0, 0, 1, 0], [], []>} : vector<64x32xf32>, vector<256x32xf32>, vector<64x256xf32> -> vector<64x256xf32>
    %c0_49 = arith.constant 0 : index
    %c0_50 = arith.constant 0 : index
    %c0_51 = arith.constant 0 : index
    %97 = vector.load %arg8[%c0_49, %c0_50, %c0_51] : memref<2x64x256xf32, #tpu.memory_space<vmem>>, vector<1x64x256xf32>
    %98 = vector.shape_cast %97 : vector<1x64x256xf32> to vector<64x256xf32>
    %99 = arith.addf %96, %98 : vector<64x256xf32>
    %cst_52 = arith.constant dense<0xFF800000> : vector<64xf32>
    %100 = vector.multi_reduction <maximumf>, %99, %cst_52 [1] : vector<64x256xf32> to vector<64xf32>
    %101 = vector.shape_cast %100 : vector<64xf32> to vector<64x1xf32>
    %102 = vector.broadcast %101 : vector<64x1xf32> to vector<64x256xf32>
    %103 = arith.subf %99, %102 : vector<64x256xf32>
    %104 = math.exp %103 : vector<64x256xf32>
    %105 = arith.mulf %34, %39 : vector<256x32xf32>
    %cst_53 = arith.constant dense<0.000000e+00> : vector<64x32xf32>
    %106 = tpu.matmul %104, %105, %cst_53 {dimension_numbers = #tpu.dot_dimension_numbers<[1], [0], [0], [1], [0, 0, 1, 1], [], []>} : vector<64x256xf32>, vector<256x32xf32>, vector<64x32xf32> -> vector<64x32xf32>
    %cst_54 = arith.constant dense<0.000000e+00> : vector<64x32xf32>
    %107 = tpu.matmul %104, %39, %cst_54 {dimension_numbers = #tpu.dot_dimension_numbers<[1], [0], [0], [1], [0, 0, 1, 1], [], []>} : vector<64x256xf32>, vector<256x32xf32>, vector<64x32xf32> -> vector<64x32xf32>
    %cst_55 = arith.constant 1.000000e-30 : f32
    %108 = vector.broadcast %cst_55 : f32 to vector<64x32xf32>
    %109 = arith.maximumf %107, %108 : vector<64x32xf32>
    %110 = tpu.reciprocal %109 {approx = true} : vector<64x32xf32> -> vector<64x32xf32>
    %111 = arith.mulf %106, %110 : vector<64x32xf32>
    %112 = vector.extract_strided_slice %18 {offsets = [0, 96], sizes = [64, 32], strides = [1, 1]} : vector<64x128xf32> to vector<64x32xf32>
    %c1_56 = arith.constant 1 : index
    %c0_57 = arith.constant 0 : index
    %c0_58 = arith.constant 0 : index
    %113 = vector.load %arg5[%c1_56, %c0_57, %c0_58] : memref<2x256x32xf32, #tpu.memory_space<vmem>>, vector<1x256x32xf32>
    %114 = vector.shape_cast %113 : vector<1x256x32xf32> to vector<256x32xf32>
    %115 = arith.mulf %37, %114 : vector<256x32xf32>
    %c1_59 = arith.constant 1 : index
    %c0_60 = arith.constant 0 : index
    %c0_61 = arith.constant 0 : index
    %116 = vector.load %arg6[%c1_59, %c0_60, %c0_61] : memref<2x256x32xf32, #tpu.memory_space<vmem>>, vector<1x256x32xf32>
    %117 = vector.shape_cast %116 : vector<1x256x32xf32> to vector<256x32xf32>
    %118 = arith.mulf %33, %117 : vector<256x32xf32>
    %119 = arith.addf %115, %118 : vector<256x32xf32>
    %cst_62 = arith.constant dense<0.000000e+00> : vector<64x256xf32>
    %120 = tpu.matmul %112, %119, %cst_62 {dimension_numbers = #tpu.dot_dimension_numbers<[1], [1], [0], [0], [0, 0, 1, 0], [], []>} : vector<64x32xf32>, vector<256x32xf32>, vector<64x256xf32> -> vector<64x256xf32>
    %c1_63 = arith.constant 1 : index
    %c0_64 = arith.constant 0 : index
    %c0_65 = arith.constant 0 : index
    %121 = vector.load %arg8[%c1_63, %c0_64, %c0_65] : memref<2x64x256xf32, #tpu.memory_space<vmem>>, vector<1x64x256xf32>
    %122 = vector.shape_cast %121 : vector<1x64x256xf32> to vector<64x256xf32>
    %123 = arith.addf %120, %122 : vector<64x256xf32>
    %cst_66 = arith.constant dense<0xFF800000> : vector<64xf32>
    %124 = vector.multi_reduction <maximumf>, %123, %cst_66 [1] : vector<64x256xf32> to vector<64xf32>
    %125 = vector.shape_cast %124 : vector<64xf32> to vector<64x1xf32>
    %126 = vector.broadcast %125 : vector<64x1xf32> to vector<64x256xf32>
    %127 = arith.subf %123, %126 : vector<64x256xf32>
    %128 = math.exp %127 : vector<64x256xf32>
    %129 = arith.mulf %38, %39 : vector<256x32xf32>
    %cst_67 = arith.constant dense<0.000000e+00> : vector<64x32xf32>
    %130 = tpu.matmul %128, %129, %cst_67 {dimension_numbers = #tpu.dot_dimension_numbers<[1], [0], [0], [1], [0, 0, 1, 1], [], []>} : vector<64x256xf32>, vector<256x32xf32>, vector<64x32xf32> -> vector<64x32xf32>
    %cst_68 = arith.constant dense<0.000000e+00> : vector<64x32xf32>
    %131 = tpu.matmul %128, %39, %cst_68 {dimension_numbers = #tpu.dot_dimension_numbers<[1], [0], [0], [1], [0, 0, 1, 1], [], []>} : vector<64x256xf32>, vector<256x32xf32>, vector<64x32xf32> -> vector<64x32xf32>
    %cst_69 = arith.constant 1.000000e-30 : f32
    %132 = vector.broadcast %cst_69 : f32 to vector<64x32xf32>
    %133 = arith.maximumf %131, %132 : vector<64x32xf32>
    %134 = tpu.reciprocal %133 {approx = true} : vector<64x32xf32> -> vector<64x32xf32>
    %135 = arith.mulf %130, %134 : vector<64x32xf32>
    %136 = tpu.concatenate %63, %87, %111, %135 in 1 : vector<64x32xf32>, vector<64x32xf32>, vector<64x32xf32>, vector<64x32xf32> -> vector<64x128xf32>
    %c0_70 = arith.constant 0 : index
    %c0_71 = arith.constant 0 : index
    %137 = vector.load %arg9[%c0_70, %c0_71] : memref<128x128xf32, #tpu.memory_space<vmem>>, vector<128x128xf32>
    %cst_72 = arith.constant dense<0.000000e+00> : vector<64x128xf32>
    %138 = tpu.matmul %136, %137, %cst_72 {dimension_numbers = #tpu.dot_dimension_numbers<[1], [0], [0], [1], [0, 0, 1, 1], [], []>} : vector<64x128xf32>, vector<128x128xf32>, vector<64x128xf32> -> vector<64x128xf32>
    %c0_73 = arith.constant 0 : index
    %c0_74 = arith.constant 0 : index
    %139 = vector.load %arg10[%c0_73, %c0_74] : memref<1x128xf32, #tpu.memory_space<vmem>>, vector<1x128xf32>
    %140 = vector.broadcast %139 : vector<1x128xf32> to vector<64x128xf32>
    %141 = arith.addf %138, %140 : vector<64x128xf32>
    %c0_75 = arith.constant 0 : index
    %c0_76 = arith.constant 0 : index
    %142 = vector.load %arg12[%c0_75, %c0_76] : memref<1x128xf32, #tpu.memory_space<vmem>>, vector<1x128xf32>
    %c0_77 = arith.constant 0 : index
    %c0_78 = arith.constant 0 : index
    %143 = vector.load %arg13[%c0_77, %c0_78] : memref<1x128xf32, #tpu.memory_space<vmem>>, vector<1x128xf32>
    %c0_79 = arith.constant 0 : index
    %c0_80 = arith.constant 0 : index
    %144 = vector.load %arg11[%c0_79, %c0_80] : memref<128x128xf32, #tpu.memory_space<vmem>>, vector<128x128xf32>
    %cst_81 = arith.constant dense<0.000000e+00> : vector<64x128xf32>
    %145 = tpu.matmul %141, %144, %cst_81 {dimension_numbers = #tpu.dot_dimension_numbers<[1], [0], [0], [1], [0, 0, 1, 1], [], []>} : vector<64x128xf32>, vector<128x128xf32>, vector<64x128xf32> -> vector<64x128xf32>
    %146 = arith.subf %141, %145 : vector<64x128xf32>
    %147 = arith.mulf %146, %146 : vector<64x128xf32>
    %c0_82 = arith.constant 0 : index
    %c0_83 = arith.constant 0 : index
    %148 = vector.load %arg11[%c0_82, %c0_83] : memref<128x128xf32, #tpu.memory_space<vmem>>, vector<128x128xf32>
    %cst_84 = arith.constant dense<0.000000e+00> : vector<64x128xf32>
    %149 = tpu.matmul %147, %148, %cst_84 {dimension_numbers = #tpu.dot_dimension_numbers<[1], [0], [0], [1], [0, 0, 1, 1], [], []>} : vector<64x128xf32>, vector<128x128xf32>, vector<64x128xf32> -> vector<64x128xf32>
    %cst_85 = arith.constant 9.99999974E-6 : f32
    %150 = vector.broadcast %cst_85 : f32 to vector<64x128xf32>
    %151 = arith.addf %149, %150 : vector<64x128xf32>
    %152 = math.rsqrt %151 : vector<64x128xf32>
    %153 = arith.mulf %146, %152 : vector<64x128xf32>
    %154 = vector.broadcast %142 : vector<1x128xf32> to vector<64x128xf32>
    %155 = arith.mulf %153, %154 : vector<64x128xf32>
    %156 = vector.broadcast %143 : vector<1x128xf32> to vector<64x128xf32>
    %157 = arith.addf %155, %156 : vector<64x128xf32>
    %158 = arith.addf %0, %157 : vector<64x128xf32>
    %c0_86 = arith.constant 0 : index
    %c0_87 = arith.constant 0 : index
    %159 = vector.load %arg16[%c0_86, %c0_87] : memref<128x512xf32, #tpu.memory_space<vmem>>, vector<128x512xf32>
    %cst_88 = arith.constant dense<0.000000e+00> : vector<64x512xf32>
    %160 = tpu.matmul %158, %159, %cst_88 {dimension_numbers = #tpu.dot_dimension_numbers<[1], [0], [0], [1], [0, 0, 1, 1], [], []>} : vector<64x128xf32>, vector<128x512xf32>, vector<64x512xf32> -> vector<64x512xf32>
    %c0_89 = arith.constant 0 : index
    %c0_90 = arith.constant 0 : index
    %161 = vector.load %arg17[%c0_89, %c0_90] : memref<1x512xf32, #tpu.memory_space<vmem>>, vector<1x512xf32>
    %162 = vector.broadcast %161 : vector<1x512xf32> to vector<64x512xf32>
    %163 = arith.addf %160, %162 : vector<64x512xf32>
    %cst_91 = arith.constant 0.000000e+00 : f32
    %164 = vector.broadcast %cst_91 : f32 to vector<64x512xf32>
    %165 = arith.maximumf %163, %164 : vector<64x512xf32>
    %c0_92 = arith.constant 0 : index
    %c0_93 = arith.constant 0 : index
    %166 = vector.load %arg18[%c0_92, %c0_93] : memref<512x128xf32, #tpu.memory_space<vmem>>, vector<512x128xf32>
    %cst_94 = arith.constant dense<0.000000e+00> : vector<64x128xf32>
    %167 = tpu.matmul %165, %166, %cst_94 {dimension_numbers = #tpu.dot_dimension_numbers<[1], [0], [0], [1], [0, 0, 1, 1], [], []>} : vector<64x512xf32>, vector<512x128xf32>, vector<64x128xf32> -> vector<64x128xf32>
    %c0_95 = arith.constant 0 : index
    %c0_96 = arith.constant 0 : index
    %168 = vector.load %arg19[%c0_95, %c0_96] : memref<1x128xf32, #tpu.memory_space<vmem>>, vector<1x128xf32>
    %169 = vector.broadcast %168 : vector<1x128xf32> to vector<64x128xf32>
    %170 = arith.addf %167, %169 : vector<64x128xf32>
    %c0_97 = arith.constant 0 : index
    %c0_98 = arith.constant 0 : index
    %171 = vector.load %arg14[%c0_97, %c0_98] : memref<1x128xf32, #tpu.memory_space<vmem>>, vector<1x128xf32>
    %c0_99 = arith.constant 0 : index
    %c0_100 = arith.constant 0 : index
    %172 = vector.load %arg15[%c0_99, %c0_100] : memref<1x128xf32, #tpu.memory_space<vmem>>, vector<1x128xf32>
    %c0_101 = arith.constant 0 : index
    %c0_102 = arith.constant 0 : index
    %173 = vector.load %arg11[%c0_101, %c0_102] : memref<128x128xf32, #tpu.memory_space<vmem>>, vector<128x128xf32>
    %cst_103 = arith.constant dense<0.000000e+00> : vector<64x128xf32>
    %174 = tpu.matmul %170, %173, %cst_103 {dimension_numbers = #tpu.dot_dimension_numbers<[1], [0], [0], [1], [0, 0, 1, 1], [], []>} : vector<64x128xf32>, vector<128x128xf32>, vector<64x128xf32> -> vector<64x128xf32>
    %175 = arith.subf %170, %174 : vector<64x128xf32>
    %176 = arith.mulf %175, %175 : vector<64x128xf32>
    %c0_104 = arith.constant 0 : index
    %c0_105 = arith.constant 0 : index
    %177 = vector.load %arg11[%c0_104, %c0_105] : memref<128x128xf32, #tpu.memory_space<vmem>>, vector<128x128xf32>
    %cst_106 = arith.constant dense<0.000000e+00> : vector<64x128xf32>
    %178 = tpu.matmul %176, %177, %cst_106 {dimension_numbers = #tpu.dot_dimension_numbers<[1], [0], [0], [1], [0, 0, 1, 1], [], []>} : vector<64x128xf32>, vector<128x128xf32>, vector<64x128xf32> -> vector<64x128xf32>
    %cst_107 = arith.constant 9.99999974E-6 : f32
    %179 = vector.broadcast %cst_107 : f32 to vector<64x128xf32>
    %180 = arith.addf %178, %179 : vector<64x128xf32>
    %181 = math.rsqrt %180 : vector<64x128xf32>
    %182 = arith.mulf %175, %181 : vector<64x128xf32>
    %183 = vector.broadcast %171 : vector<1x128xf32> to vector<64x128xf32>
    %184 = arith.mulf %182, %183 : vector<64x128xf32>
    %185 = vector.broadcast %172 : vector<1x128xf32> to vector<64x128xf32>
    %186 = arith.addf %184, %185 : vector<64x128xf32>
    %187 = arith.addf %158, %186 : vector<64x128xf32>
    %c0_108 = arith.constant 0 : index
    %c0_109 = arith.constant 0 : index
    %188 = vector.load %arg20[%c0_108, %c0_109] : memref<64x128xf32, #tpu.memory_space<vmem>>, vector<64x128xf32>
    tpu.vector_store %arg20[%c0_108, %c0_109], %187 {strides = array<i32>} : memref<64x128xf32, #tpu.memory_space<vmem>>, vector<64x128xf32>,
    return
  }
  func.func @transform_0(%arg0: i32) -> (i32, i32) {
    %c0_i32 = arith.constant 0 : i32
    %c0_i32_0 = arith.constant 0 : i32
    %c0_i32_1 = arith.constant 0 : i32
    return %c0_i32, %c0_i32_0 : i32, i32
  }
  func.func @transform_1(%arg0: i32) -> (i32, i32) {
    %c0_i32 = arith.constant 0 : i32
    %c0_i32_0 = arith.constant 0 : i32
    %c0_i32_1 = arith.constant 0 : i32
    return %c0_i32, %c0_i32_0 : i32, i32
  }
  func.func @transform_2(%arg0: i32) -> (i32, i32) {
    %c0_i32 = arith.constant 0 : i32
    %c0_i32_0 = arith.constant 0 : i32
    %c0_i32_1 = arith.constant 0 : i32
    return %c0_i32, %c0_i32_0 : i32, i32
  }
  func.func @transform_3(%arg0: i32) -> (i32, i32) {
    %c0_i32 = arith.constant 0 : i32
    %c0_i32_0 = arith.constant 0 : i32
    %c0_i32_1 = arith.constant 0 : i32
    return %c0_i32, %c0_i32_0 : i32, i32
  }
  func.func @transform_4(%arg0: i32) -> (i32, i32, i32) {
    %c0_i32 = arith.constant 0 : i32
    %c0_i32_0 = arith.constant 0 : i32
    %c0_i32_1 = arith.constant 0 : i32
    %c0_i32_2 = arith.constant 0 : i32
    return %c0_i32, %c0_i32_0, %c0_i32_1 : i32, i32, i32
  }
  func.func @transform_5(%arg0: i32) -> (i32, i32, i32) {
    %c0_i32 = arith.constant 0 : i32
    %c0_i32_0 = arith.constant 0 : i32
    %c0_i32_1 = arith.constant 0 : i32
    %c0_i32_2 = arith.constant 0 : i32
    return %c0_i32, %c0_i32_0, %c0_i32_1 : i32, i32, i32
  }
  func.func @transform_6(%arg0: i32) -> (i32, i32) {
    %c0_i32 = arith.constant 0 : i32
    %c0_i32_0 = arith.constant 0 : i32
    %c0_i32_1 = arith.constant 0 : i32
    return %c0_i32, %c0_i32_0 : i32, i32
  }
  func.func @transform_7(%arg0: i32) -> (i32, i32, i32) {
    %c0_i32 = arith.constant 0 : i32
    %c0_i32_0 = arith.constant 0 : i32
    %c0_i32_1 = arith.constant 0 : i32
    %c0_i32_2 = arith.constant 0 : i32
    return %c0_i32, %c0_i32_0, %c0_i32_1 : i32, i32, i32
  }
  func.func @transform_8(%arg0: i32) -> (i32, i32) {
    %c0_i32 = arith.constant 0 : i32
    %c0_i32_0 = arith.constant 0 : i32
    %c0_i32_1 = arith.constant 0 : i32
    return %c0_i32, %c0_i32_0 : i32, i32
  }
  func.func @transform_9(%arg0: i32) -> (i32, i32) {
    %c0_i32 = arith.constant 0 : i32
    %c0_i32_0 = arith.constant 0 : i32
    %c0_i32_1 = arith.constant 0 : i32
    return %c0_i32, %c0_i32_0 : i32, i32
  }
  func.func @transform_10(%arg0: i32) -> (i32, i32) {
    %c0_i32 = arith.constant 0 : i32
    %c0_i32_0 = arith.constant 0 : i32
    %c0_i32_1 = arith.constant 0 : i32
    return %c0_i32, %c0_i32_0 : i32, i32
  }
  func.func @transform_11(%arg0: i32) -> (i32, i32) {
    %c0_i32 = arith.constant 0 : i32
    %c0_i32_0 = arith.constant 0 : i32
    %c0_i32_1 = arith.constant 0 : i32
    return %c0_i32, %c0_i32_0 : i32, i32
  }
  func.func @transform_12(%arg0: i32) -> (i32, i32) {
    %c0_i32 = arith.constant 0 : i32
    %c0_i32_0 = arith.constant 0 : i32
    %c0_i32_1 = arith.constant 0 : i32
    return %c0_i32, %c0_i32_0 : i32, i32
  }
  func.func @transform_13(%arg0: i32) -> (i32, i32) {
    %c0_i32 = arith.constant 0 : i32
    %c0_i32_0 = arith.constant 0 : i32
    %c0_i32_1 = arith.constant 0 : i32
    return %c0_i32, %c0_i32_0 : i32, i32
  }
  func.func @transform_14(%arg0: i32) -> (i32, i32) {
    %c0_i32 = arith.constant 0 : i32
    %c0_i32_0 = arith.constant 0 : i32
    %c0_i32_1 = arith.constant 0 : i32
    return %c0_i32, %c0_i32_0 : i32, i32
  }
  func.func @transform_15(%arg0: i32) -> (i32, i32) {
    %c0_i32 = arith.constant 0 : i32
    %c0_i32_0 = arith.constant 0 : i32
    %c0_i32_1 = arith.constant 0 : i32
    return %c0_i32, %c0_i32_0 : i32, i32
  }
  func.func @transform_16(%arg0: i32) -> (i32, i32) {
    %c0_i32 = arith.constant 0 : i32
    %c0_i32_0 = arith.constant 0 : i32
    %c0_i32_1 = arith.constant 0 : i32
    return %c0_i32, %c0_i32_0 : i32, i32
  }
  func.func @transform_17(%arg0: i32) -> (i32, i32) {
    %c0_i32 = arith.constant 0 : i32
    %c0_i32_0 = arith.constant 0 : i32
    %c0_i32_1 = arith.constant 0 : i32
    return %c0_i32, %c0_i32_0 : i32, i32
  }
  func.func @transform_18(%arg0: i32) -> (i32, i32) {
    %c0_i32 = arith.constant 0 : i32
    %c0_i32_0 = arith.constant 0 : i32
    %c0_i32_1 = arith.constant 0 : i32
    return %c0_i32, %c0_i32_0 : i32, i32
  }
  func.func @transform_19(%arg0: i32) -> (i32, i32) {
    %c0_i32 = arith.constant 0 : i32
    %c0_i32_0 = arith.constant 0 : i32
    %c0_i32_1 = arith.constant 0 : i32
    return %c0_i32, %c0_i32_0 : i32, i32
  }
}

</mosaic_0001>

<llo_original>
// kernel: tpu_custom_call.1
$region0: #{tpu_custom_call.1}
  #allocation0 [shape = 'u32[]', space=smem, size = 0x4, offset = 0x4, fixed_abs, tag = 'smem constant byte address 0x4 - core index']
  #allocation1 [shape = 'u32[144,128]{1,0:T(1,128)}', space=vmem, size = 0x12000, scoped, tag = 'internal scratch']
  %s0 = inlined_call_operand.vmem [shape: f32[64,128], index: 0, kind: input, shape index: {}]
  %s1 = inlined_call_operand.vmem [shape: f32[128,384], index: 1, kind: input, shape index: {}]
  %s2 = inlined_call_operand.vmem [shape: f32[1,384], index: 2, kind: input, shape index: {}]
  %s3 = inlined_call_operand.hbm [shape: f32[128,128], index: 3, kind: input, shape index: {}]
  %s4 = inlined_call_operand.vmem [shape: f32[2,256,32], index: 4, kind: input, shape index: {}]
  %s5 = inlined_call_operand.vmem [shape: f32[2,256,32], index: 5, kind: input, shape index: {}]
  %s6 = inlined_call_operand.vmem [shape: f32[256,32], index: 6, kind: input, shape index: {}]
  %s7 = inlined_call_operand.hbm [shape: f32[2,64,256], index: 7, kind: input, shape index: {}]
  %s8 = inlined_call_operand.hbm [shape: f32[128,128], index: 8, kind: input, shape index: {}]
  %s9 = inlined_call_operand.vmem [shape: f32[1,128], index: 9, kind: input, shape index: {}]
  %s10 = inlined_call_operand.hbm [shape: f32[128,128], index: 10, kind: input, shape index: {}]
  %s11 = inlined_call_operand.vmem [shape: f32[1,128], index: 11, kind: input, shape index: {}]
  %s12 = inlined_call_operand.vmem [shape: f32[1,128], index: 12, kind: input, shape index: {}]
  %s13 = inlined_call_operand.vmem [shape: f32[1,128], index: 13, kind: input, shape index: {}]
  %s14 = inlined_call_operand.vmem [shape: f32[1,128], index: 14, kind: input, shape index: {}]
  %s15 = inlined_call_operand.vmem [shape: f32[128,512], index: 15, kind: input, shape index: {}]
  %s16 = inlined_call_operand.vmem [shape: f32[1,512], index: 16, kind: input, shape index: {}]
  %s17 = inlined_call_operand.vmem [shape: f32[512,128], index: 17, kind: input, shape index: {}]
  %s18 = inlined_call_operand.vmem [shape: f32[1,128], index: 18, kind: input, shape index: {}]
  %s19 = inlined_call_operand.hbm [shape: f32[64,128], index: 19, kind: output, shape index: {}]
  %s20 = sld [smem:[#allocation0]]
  $region102: #{tpu_custom_call.1} parent=0
    _
  %s22 = ssub.s32 1, %s20
  %s23 = scalar_select 0, %s22, %s20
  $region1: #{tpu_custom_call.1} parent=0
    #allocation2 [shape = 'u8[65536]{0}', space=vmem, size = 0x10000, scoped, tag = 'input window, operand 3, single buffered']
    #allocation3 [shape = 's32[1]{0}', space=sflag, size = 0x4, scoped, tag = 'scoped memory for tpu_custom_call.1']
    #allocation4 [shape = 's32[1]{0}', space=sflag, size = 0x4, scoped, tag = 'scoped memory for tpu_custom_call.1']
    #allocation5 [shape = 'u8[131072]{0}', space=vmem, size = 0x20000, scoped, tag = 'input window, operand 7, single buffered']
    #allocation6 [shape = 's32[1]{0}', space=sflag, size = 0x4, scoped, tag = 'scoped memory for tpu_custom_call.1']
    #allocation7 [shape = 'u8[65536]{0}', space=vmem, size = 0x10000, scoped, tag = 'input window, operand 8, single buffered']
    #allocation8 [shape = 'u8[65536]{0}', space=vmem, size = 0x10000, scoped, tag = 'input window, operand 10, single buffered']
    #allocation9 [shape = 's32[1]{0}', space=sflag, size = 0x4, scoped, tag = 'scoped memory for tpu_custom_call.1']
    #allocation10 [shape = 'u8[32768]{0}', space=vmem, size = 0x8000, scoped, tag = 'output window, operand 0, single buffered']
    %24 = vsyncpa [#allocation3], 0
    %25 = vsyncpa [#allocation6], 0
    %26 = vsyncpa [#allocation9], 0
    %27 = vsyncpa [#allocation4], 0
    // Predicated region
    $region2: #{tpu_custom_call.1} parent=1 // pred_check
      _
    $region3: #{tpu_custom_call.1} parent=1 // pred_check_branch
      %29 = sbr.rel (0) target = $region5
    $region4: #{tpu_custom_call.1} parent=1 // pred_region
      _
    $region5: #{tpu_custom_call.1} parent=1 // pred_fallthru
      _
    // Predicated region
    $region6: #{tpu_custom_call.1} parent=1 // pred_check
      _
    $region7: #{tpu_custom_call.1} parent=1 // pred_check_branch
      %31 = sbr.rel (0) target = $region9
    $region8: #{tpu_custom_call.1} parent=1 // pred_region
      _
    $region9: #{tpu_custom_call.1} parent=1 // pred_fallthru
      _
    // Predicated region
    $region10: #{tpu_custom_call.1} parent=1 // pred_check
      _
    $region11: #{tpu_custom_call.1} parent=1 // pred_check_branch
      %33 = sbr.rel (0) target = $region13
    $region12: #{tpu_custom_call.1} parent=1 // pred_region
      _
    $region13: #{tpu_custom_call.1} parent=1 // pred_fallthru
      _
    // Predicated region
    $region14: #{tpu_custom_call.1} parent=1 // pred_check
      _
    $region15: #{tpu_custom_call.1} parent=1 // pred_check_branch
      %35 = sbr.rel (0) target = $region17
    $region16: #{tpu_custom_call.1} parent=1 // pred_region
      %s37 = ssub.s32 2048, 2048
      %38 = vsyncadd [#allocation3], %s37
      %s39 = sshll.u32 [#allocation2], 4
      %s40 = int_to_ptr.vmem [resolvable:$true] %s39
      %45 = dma.hbm_to_vmem [thread:$0]  %s3, 2048, %s40, [#allocation3], 128, 128, 8
    $region17: #{tpu_custom_call.1} parent=1 // pred_fallthru
      _
    // Predicated region
    $region18: #{tpu_custom_call.1} parent=1 // pred_check
      _
    $region19: #{tpu_custom_call.1} parent=1 // pred_check_branch
      %47 = sbr.rel (0) target = $region21
    $region20: #{tpu_custom_call.1} parent=1 // pred_region
      _
    $region21: #{tpu_custom_call.1} parent=1 // pred_fallthru
      _
    // Predicated region
    $region22: #{tpu_custom_call.1} parent=1 // pred_check
      _
    $region23: #{tpu_custom_call.1} parent=1 // pred_check_branch
      %49 = sbr.rel (0) target = $region25
    $region24: #{tpu_custom_call.1} parent=1 // pred_region
      _
    $region25: #{tpu_custom_call.1} parent=1 // pred_fallthru
      _
    // Predicated region
    $region26: #{tpu_custom_call.1} parent=1 // pred_check
      _
    $region27: #{tpu_custom_call.1} parent=1 // pred_check_branch
      %51 = sbr.rel (0) target = $region29
    $region28: #{tpu_custom_call.1} parent=1 // pred_region
      _
    $region29: #{tpu_custom_call.1} parent=1 // pred_fallthru
      _
    // Predicated region
    $region30: #{tpu_custom_call.1} parent=1 // pred_check
      _
    $region31: #{tpu_custom_call.1} parent=1 // pred_check_branch
      %53 = sbr.rel (0) target = $region33
    $region32: #{tpu_custom_call.1} parent=1 // pred_region
      %s55 = ssub.s32 4096, 4096
      %56 = vsyncadd [#allocation6], %s55
      %s57 = sshll.u32 [#allocation5], 4
      %s58 = int_to_ptr.vmem [resolvable:$true] %s57
      %63 = dma.hbm_to_vmem [thread:$0]  %s7, 4096, %s58, [#allocation6], 256, 256, 16
    $region33: #{tpu_custom_call.1} parent=1 // pred_fallthru
      _
    // Predicated region
    $region34: #{tpu_custom_call.1} parent=1 // pred_check
      _
    $region35: #{tpu_custom_call.1} parent=1 // pred_check_branch
      %65 = sbr.rel (0) target = $region37
    $region36: #{tpu_custom_call.1} parent=1 // pred_region
      %s67 = ssub.s32 2048, 2048
      %68 = vsyncadd [#allocation6], %s67
      %s69 = sshll.u32 [#allocation7], 4
      %s70 = int_to_ptr.vmem [resolvable:$true] %s69
      %75 = dma.hbm_to_vmem [thread:$0]  %s8, 2048, %s70, [#allocation6], 128, 128, 8
    $region37: #{tpu_custom_call.1} parent=1 // pred_fallthru
      _
    // Predicated region
    $region38: #{tpu_custom_call.1} parent=1 // pred_check
      _
    $region39: #{tpu_custom_call.1} parent=1 // pred_check_branch
      %77 = sbr.rel (0) target = $region41
    $region40: #{tpu_custom_call.1} parent=1 // pred_region
      _
    $region41: #{tpu_custom_call.1} parent=1 // pred_fallthru
      _
    // Predicated region
    $region42: #{tpu_custom_call.1} parent=1 // pred_check
      _
    $region43: #{tpu_custom_call.1} parent=1 // pred_check_branch
      %79 = sbr.rel (0) target = $region45
    $region44: #{tpu_custom_call.1} parent=1 // pred_region
      %s81 = ssub.s32 2048, 2048
      %82 = vsyncadd [#allocation9], %s81
      %s83 = sshll.u32 [#allocation8], 4
      %s84 = int_to_ptr.vmem [resolvable:$true] %s83
      %89 = dma.hbm_to_vmem [thread:$0]  %s10, 2048, %s84, [#allocation9], 128, 128, 8
    $region45: #{tpu_custom_call.1} parent=1 // pred_fallthru
      _
    // Predicated region
    $region46: #{tpu_custom_call.1} parent=1 // pred_check
      _
    $region47: #{tpu_custom_call.1} parent=1 // pred_check_branch
      %91 = sbr.rel (0) target = $region49
    $region48: #{tpu_custom_call.1} parent=1 // pred_region
      _
    $region49: #{tpu_custom_call.1} parent=1 // pred_fallthru
      _
    // Predicated region
    $region50: #{tpu_custom_call.1} parent=1 // pred_check
      _
    $region51: #{tpu_custom_call.1} parent=1 // pred_check_branch
      %93 = sbr.rel (0) target = $region53
    $region52: #{tpu_custom_call.1} parent=1 // pred_region
      _
    $region53: #{tpu_custom_call.1} parent=1 // pred_fallthru
      _
    // Predicated region
    $region54: #{tpu_custom_call.1} parent=1 // pred_check
      _
    $region55: #{tpu_custom_call.1} parent=1 // pred_check_branch
      %95 = sbr.rel (0) target = $region57
    $region56: #{tpu_custom_call.1} parent=1 // pred_region
      _
    $region57: #{tpu_custom_call.1} parent=1 // pred_fallthru
      _
    // Predicated region
    $region58: #{tpu_custom_call.1} parent=1 // pred_check
      _
    $region59: #{tpu_custom_call.1} parent=1 // pred_check_branch
      %97 = sbr.rel (0) target = $region61
    $region60: #{tpu_custom_call.1} parent=1 // pred_region
      _
    $region61: #{tpu_custom_call.1} parent=1 // pred_fallthru
      _
    // Predicated region
    $region62: #{tpu_custom_call.1} parent=1 // pred_check
      _
    $region63: #{tpu_custom_call.1} parent=1 // pred_check_branch
      %99 = sbr.rel (0) target = $region65
    $region64: #{tpu_custom_call.1} parent=1 // pred_region
      _
    $region65: #{tpu_custom_call.1} parent=1 // pred_fallthru
      _
    // Predicated region
    $region66: #{tpu_custom_call.1} parent=1 // pred_check
      _
    $region67: #{tpu_custom_call.1} parent=1 // pred_check_branch
      %101 = sbr.rel (0) target = $region69
    $region68: #{tpu_custom_call.1} parent=1 // pred_region
      _
    $region69: #{tpu_custom_call.1} parent=1 // pred_fallthru
      _
    // Predicated region
    $region70: #{tpu_custom_call.1} parent=1 // pred_check
      _
    $region71: #{tpu_custom_call.1} parent=1 // pred_check_branch
      %103 = sbr.rel (0) target = $region73
    $region72: #{tpu_custom_call.1} parent=1 // pred_region
      _
    $region73: #{tpu_custom_call.1} parent=1 // pred_fallthru
      _
    // Predicated region
    $region74: #{tpu_custom_call.1} parent=1 // pred_check
      _
    $region75: #{tpu_custom_call.1} parent=1 // pred_check_branch
      %105 = sbr.rel (0) target = $region77
    $region76: #{tpu_custom_call.1} parent=1 // pred_region
      _
    $region77: #{tpu_custom_call.1} parent=1 // pred_fallthru
      _
    // Predicated region
    $region78: #{tpu_custom_call.1} parent=1 // pred_check
      _
    $region79: #{tpu_custom_call.1} parent=1 // pred_check_branch
      %107 = sbr.rel (0) target = $region81
    $region80: #{tpu_custom_call.1} parent=1 // pred_region
      %108 = dma.done [#allocation3], 2048
    $region81: #{tpu_custom_call.1} parent=1 // pred_fallthru
      _
    // Predicated region
    $region82: #{tpu_custom_call.1} parent=1 // pred_check
      _
    $region83: #{tpu_custom_call.1} parent=1 // pred_check_branch
      %110 = sbr.rel (0) target = $region85
    $region84: #{tpu_custom_call.1} parent=1 // pred_region
      %111 = dma.done [#allocation6], 4096
    $region85: #{tpu_custom_call.1} parent=1 // pred_fallthru
      _
    // Predicated region
    $region86: #{tpu_custom_call.1} parent=1 // pred_check
      _
    $region87: #{tpu_custom_call.1} parent=1 // pred_check_branch
      %113 = sbr.rel (0) target = $region89
    $region88: #{tpu_custom_call.1} parent=1 // pred_region
      %114 = dma.done [#allocation6], 2048
    $region89: #{tpu_custom_call.1} parent=1 // pred_fallthru
      _
    // Predicated region
    $region90: #{tpu_custom_call.1} parent=1 // pred_check
      _
    $region91: #{tpu_custom_call.1} parent=1 // pred_check_branch
      %116 = sbr.rel (0) target = $region93
    $region92: #{tpu_custom_call.1} parent=1 // pred_region
      %117 = dma.done [#allocation9], 2048
    $region93: #{tpu_custom_call.1} parent=1 // pred_fallthru
      _
    %v118 = vld [vmem:[%s0] sm:$0xff]
    %v119 = vld [vmem:[%s0 + $0x8] sm:$0xff]
    %v120 = vld [vmem:[%s0 + $0x10] sm:$0xff]
    %v121 = vld [vmem:[%s0 + $0x18] sm:$0xff]
    %v122 = vld [vmem:[%s0 + $0x20] sm:$0xff]
    %v123 = vld [vmem:[%s0 + $0x28] sm:$0xff]
    %v124 = vld [vmem:[%s0 + $0x30] sm:$0xff]
    %v125 = vld [vmem:[%s0 + $0x38] sm:$0xff]
    %v126 = vld [vmem:[%s1] sm:$0xff]
    %v127 = vld [vmem:[%s1 + $0x8] sm:$0xff]
    %v128 = vld [vmem:[%s1 + $0x10] sm:$0xff]
    %v129 = vld [vmem:[%s1 + $0x18] sm:$0xff]
    %v130 = vld [vmem:[%s1 + $0x20] sm:$0xff]
    %v131 = vld [vmem:[%s1 + $0x28] sm:$0xff]
    %v132 = vld [vmem:[%s1 + $0x30] sm:$0xff]
    %v133 = vld [vmem:[%s1 + $0x38] sm:$0xff]
    %v134 = vld [vmem:[%s1 + $0x40] sm:$0xff]
    %v135 = vld [vmem:[%s1 + $0x48] sm:$0xff]
    %v136 = vld [vmem:[%s1 + $0x50] sm:$0xff]
    %v137 = vld [vmem:[%s1 + $0x58] sm:$0xff]
    %v138 = vld [vmem:[%s1 + $0x60] sm:$0xff]
    %v139 = vld [vmem:[%s1 + $0x68] sm:$0xff]
    %v140 = vld [vmem:[%s1 + $0x70] sm:$0xff]
    %v141 = vld [vmem:[%s1 + $0x78] sm:$0xff]
    %v142 = vld [vmem:[%s1 + $0x80] sm:$0xff]
    %v143 = vld [vmem:[%s1 + $0x88] sm:$0xff]
    %v144 = vld [vmem:[%s1 + $0x90] sm:$0xff]
    %v145 = vld [vmem:[%s1 + $0x98] sm:$0xff]
    %v146 = vld [vmem:[%s1 + $0xa0] sm:$0xff]
    %v147 = vld [vmem:[%s1 + $0xa8] sm:$0xff]
    %v148 = vld [vmem:[%s1 + $0xb0] sm:$0xff]
    %v149 = vld [vmem:[%s1 + $0xb8] sm:$0xff]
    %v150 = vld [vmem:[%s1 + $0xc0] sm:$0xff]
    %v151 = vld [vmem:[%s1 + $0xc8] sm:$0xff]
    %v152 = vld [vmem:[%s1 + $0xd0] sm:$0xff]
    %v153 = vld [vmem:[%s1 + $0xd8] sm:$0xff]
    %v154 = vld [vmem:[%s1 + $0xe0] sm:$0xff]
    %v155 = vld [vmem:[%s1 + $0xe8] sm:$0xff]
    %v156 = vld [vmem:[%s1 + $0xf0] sm:$0xff]
    %v157 = vld [vmem:[%s1 + $0xf8] sm:$0xff]
    %v158 = vld [vmem:[%s1 + $0x100] sm:$0xff]
    %v159 = vld [vmem:[%s1 + $0x108] sm:$0xff]
    %v160 = vld [vmem:[%s1 + $0x110] sm:$0xff]
    %v161 = vld [vmem:[%s1 + $0x118] sm:$0xff]
    %v162 = vld [vmem:[%s1 + $0x120] sm:$0xff]
    %v163 = vld [vmem:[%s1 + $0x128] sm:$0xff]
    %v164 = vld [vmem:[%s1 + $0x130] sm:$0xff]
    %v165 = vld [vmem:[%s1 + $0x138] sm:$0xff]
    %v166 = vld [vmem:[%s1 + $0x140] sm:$0xff]
    %v167 = vld [vmem:[%s1 + $0x148] sm:$0xff]
    %v168 = vld [vmem:[%s1 + $0x150] sm:$0xff]
    %v169 = vld [vmem:[%s1 + $0x158] sm:$0xff]
    %v170 = vld [vmem:[%s1 + $0x160] sm:$0xff]
    %v171 = vld [vmem:[%s1 + $0x168] sm:$0xff]
    %v172 = vld [vmem:[%s1 + $0x170] sm:$0xff]
    %v173 = vld [vmem:[%s1 + $0x178] sm:$0xff]
    %v174 = vld [vmem:[%s2] sm:$0x7]
    %v176 = vlaneseq
    %v177 = vshrl.u32 %v176, 7
    %v178 = vsub.s32 0, %v177
    %v179 = vrot.slane %v174, %v178
    %v180 = vlaneseq
    %v181 = vshrl.u32 %v180, 7
    %v182 = vsub.s32 1, %v181
    %v183 = vrot.slane %v174, %v182
    %v184 = vlaneseq
    %v185 = vshrl.u32 %v184, 7
    %v186 = vsub.s32 2, %v185
    %v187 = vrot.slane %v174, %v186
    %191 = vmatprep.subr.mxu0 %v172
    %192 = vmatpush1.msra.mxu0 %v171
    %193 = vmatprep.subr.mxu0 %v169
    %194 = vmatpush1.msra.mxu0 %v168
    %195 = vmatprep.subr.mxu0 %v166
    %196 = vmatpush1.msra.mxu0 %v165
    %197 = vmatprep.subr.mxu0 %v163
    %198 = vmatpush1.msra.mxu0 %v162
    %199 = vmatprep.subr.mxu0 %v160
    %200 = vmatpush1.msra.mxu0 %v159
    %201 = vmatprep.subr.mxu0 %v157
    %202 = vmatpush1.msra.mxu0 %v156
    %203 = vmatprep.subr.mxu0 %v154
    %204 = vmatpush1.msra.mxu0 %v153
    %205 = vmatprep.subr.mxu0 %v151
    %206 = vmatpush1.msra.mxu0 %v150
    %207 = vmatprep.subr.mxu0 %v148
    %208 = vmatpush1.msra.mxu0 %v147
    %209 = vmatprep.subr.mxu0 %v145
    %210 = vmatpush1.msra.mxu0 %v144
    %211 = vmatprep.subr.mxu0 %v142
    %212 = vmatpush1.msra.mxu0 %v141
    %213 = vmatprep.subr.mxu0 %v139
    %214 = vmatpush1.msra.mxu0 %v138
    %215 = vmatprep.subr.mxu0 %v136
    %216 = vmatpush1.msra.mxu0 %v135
    %217 = vmatprep.subr.mxu0 %v133
    %218 = vmatpush1.msra.mxu0 %v132
    %219 = vmatprep.subr.mxu0 %v130
    %220 = vmatpush1.msra.mxu0 %v129
    %221 = vmatprep.subr.mxu0 %v127
    %222 = vmatpush1.msra.mxu0 %v126
    %223 = vmatprep.subr.mxu0 0.0
    %224 = vmatpush2.msra.mxu0 0.0
    %225 = vmatprep.subr.mxu0 0.0
    %226 = vmatpush2.msra.mxu0 0.0
    %227 = vmatprep.subr.mxu0 0.0
    %228 = vmatpush2.msra.mxu0 0.0
    %229 = vmatprep.subr.mxu0 0.0
    %230 = vmatpush2.msra.mxu0 0.0
    %231 = vmatprep.subr.mxu0 0.0
    %232 = vmatpush2.msra.mxu0 0.0
    %233 = vmatprep.subr.mxu0 0.0
    %234 = vmatpush2.msra.mxu0 0.0
    %235 = vmatprep.subr.mxu0 0.0
    %236 = vmatpush2.msra.mxu0 0.0
    %237 = vmatprep.subr.mxu0 0.0
    %238 = vmatpush2.msra.mxu0 0.0
    %239 = vmatprep.subr.mxu0 0.0
    %240 = vmatpush2.msra.mxu0 0.0
    %241 = vmatprep.subr.mxu0 0.0
    %242 = vmatpush2.msra.mxu0 0.0
    %243 = vmatprep.subr.mxu0 0.0
    %244 = vmatpush2.msra.mxu0 0.0
    %245 = vmatprep.subr.mxu0 0.0
    %246 = vmatpush2.msra.mxu0 0.0
    %247 = vmatprep.subr.mxu0 0.0
    %248 = vmatpush2.msra.mxu0 0.0
    %249 = vmatprep.subr.mxu0 0.0
    %250 = vmatpush2.msra.mxu0 0.0
    %251 = vmatprep.subr.mxu0 0.0
    %252 = vmatpush2.msra.mxu0 0.0
    %253 = vmatprep.subr.mxu0 0.0
    %254 = vmatpush2.msra.mxu0 0.0
    %255 = vmatprep.mubr.f32.mxu0 0.0
    %256 = vmatmul.mubr.f32.gmra.mxu0 %v118
    %v257 = vpop.f32.mrf.mxu0
    %v258 = vadd.f32 %v179, %v257
    %v259 = vpop.f32.mrf.mxu0
    %v260 = vadd.f32 %v183, %v259
    %261 = vmatprep.mubr.f32.mxu0 0.0
    %262 = vmatmul.mubr.f32.gmra.mxu0 %v119
    %v263 = vpop.f32.mrf.mxu0
    %v264 = vadd.f32 %v179, %v263
    %v265 = vpop.f32.mrf.mxu0
    %v266 = vadd.f32 %v183, %v265
    %267 = vmatprep.mubr.f32.mxu0 0.0
    %268 = vmatmul.mubr.f32.gmra.mxu0 %v120
    %v269 = vpop.f32.mrf.mxu0
    %v270 = vadd.f32 %v179, %v269
    %v271 = vpop.f32.mrf.mxu0
    %v272 = vadd.f32 %v183, %v271
    %273 = vmatprep.mubr.f32.mxu0 0.0
    %274 = vmatmul.mubr.f32.gmra.mxu0 %v121
    %v275 = vpop.f32.mrf.mxu0
    %v276 = vadd.f32 %v179, %v275
    %v277 = vpop.f32.mrf.mxu0
    %v278 = vadd.f32 %v183, %v277
    %279 = vmatprep.mubr.f32.mxu0 0.0
    %280 = vmatmul.mubr.f32.gmra.mxu0 %v122
    %v281 = vpop.f32.mrf.mxu0
    %v282 = vadd.f32 %v179, %v281
    %v283 = vpop.f32.mrf.mxu0
    %v284 = vadd.f32 %v183, %v283
    %285 = vmatprep.mubr.f32.mxu0 0.0
    %286 = vmatmul.mubr.f32.gmra.mxu0 %v123
    %v287 = vpop.f32.mrf.mxu0
    %v288 = vadd.f32 %v179, %v287
    %v289 = vpop.f32.mrf.mxu0
    %v290 = vadd.f32 %v183, %v289
    %291 = vmatprep.mubr.f32.mxu0 0.0
    %292 = vmatmul.mubr.f32.gmra.mxu0 %v124
    %v293 = vpop.f32.mrf.mxu0
    %v294 = vadd.f32 %v179, %v293
    %v295 = vpop.f32.mrf.mxu0
    %v296 = vadd.f32 %v183, %v295
    %297 = vmatprep.mubr.f32.mxu0 0.0
    %298 = vmatmul.mubr.f32.gmra.mxu0 %v125
    %v299 = vpop.f32.mrf.mxu0
    %v300 = vadd.f32 %v179, %v299
    %v301 = vpop.f32.mrf.mxu0
    %v302 = vadd.f32 %v183, %v301
    %303 = vdwg.mxu0
    %304 = vmatprep.subr.mxu0 0.0
    %305 = vmatpush1.msra.mxu0 %v173
    %306 = vmatprep.subr.mxu0 0.0
    %307 = vmatpush1.msra.mxu0 %v170
    %308 = vmatprep.subr.mxu0 0.0
    %309 = vmatpush1.msra.mxu0 %v167
    %310 = vmatprep.subr.mxu0 0.0
    %311 = vmatpush1.msra.mxu0 %v164
    %312 = vmatprep.subr.mxu0 0.0
    %313 = vmatpush1.msra.mxu0 %v161
    %314 = vmatprep.subr.mxu0 0.0
    %315 = vmatpush1.msra.mxu0 %v158
    %316 = vmatprep.subr.mxu0 0.0
    %317 = vmatpush1.msra.mxu0 %v155
    %318 = vmatprep.subr.mxu0 0.0
    %319 = vmatpush1.msra.mxu0 %v152
    %320 = vmatprep.subr.mxu0 0.0
    %321 = vmatpush1.msra.mxu0 %v149
    %322 = vmatprep.subr.mxu0 0.0
    %323 = vmatpush1.msra.mxu0 %v146
    %324 = vmatprep.subr.mxu0 0.0
    %325 = vmatpush1.msra.mxu0 %v143
    %326 = vmatprep.subr.mxu0 0.0
    %327 = vmatpush1.msra.mxu0 %v140
    %328 = vmatprep.subr.mxu0 0.0
    %329 = vmatpush1.msra.mxu0 %v137
    %330 = vmatprep.subr.mxu0 0.0
    %331 = vmatpush1.msra.mxu0 %v134
    %332 = vmatprep.subr.mxu0 0.0
    %333 = vmatpush1.msra.mxu0 %v131
    %334 = vmatprep.subr.mxu0 0.0
    %335 = vmatpush1.msra.mxu0 %v128
    %336 = vmatprep.subr.mxu0 0.0
    %337 = vmatpush2.msra.mxu0 0.0
    %338 = vmatprep.subr.mxu0 0.0
    %339 = vmatpush2.msra.mxu0 0.0
    %340 = vmatprep.subr.mxu0 0.0
    %341 = vmatpush2.msra.mxu0 0.0
    %342 = vmatprep.subr.mxu0 0.0
    %343 = vmatpush2.msra.mxu0 0.0
    %344 = vmatprep.subr.mxu0 0.0
    %345 = vmatpush2.msra.mxu0 0.0
    %346 = vmatprep.subr.mxu0 0.0
    %347 = vmatpush2.msra.mxu0 0.0
    %348 = vmatprep.subr.mxu0 0.0
    %349 = vmatpush2.msra.mxu0 0.0
    %350 = vmatprep.subr.mxu0 0.0
    %351 = vmatpush2.msra.mxu0 0.0
    %352 = vmatprep.subr.mxu0 0.0
    %353 = vmatpush2.msra.mxu0 0.0
    %354 = vmatprep.subr.mxu0 0.0
    %355 = vmatpush2.msra.mxu0 0.0
    %356 = vmatprep.subr.mxu0 0.0
    %357 = vmatpush2.msra.mxu0 0.0
    %358 = vmatprep.subr.mxu0 0.0
    %359 = vmatpush2.msra.mxu0 0.0
    %360 = vmatprep.subr.mxu0 0.0
    %361 = vmatpush2.msra.mxu0 0.0
    %362 = vmatprep.subr.mxu0 0.0
    %363 = vmatpush2.msra.mxu0 0.0
    %364 = vmatprep.subr.mxu0 0.0
    %365 = vmatpush2.msra.mxu0 0.0
    %366 = vmatprep.subr.mxu0 0.0
    %367 = vmatpush2.msra.mxu0 0.0
    %368 = vmatprep.mubr.f32.mxu0 0.0
    %369 = vmatmul.mubr.f32.gmra.mxu0 %v118
    %v370 = vpop.f32.mrf.mxu0
    %v371 = vadd.f32 %v187, %v370
    %v372 = vpop.f32.mrf.mxu0
    %373 = vmatprep.mubr.f32.mxu0 0.0
    %374 = vmatmul.mubr.f32.gmra.mxu0 %v119
    %v375 = vpop.f32.mrf.mxu0
    %v376 = vadd.f32 %v187, %v375
    %v377 = vpop.f32.mrf.mxu0
    %378 = vmatprep.mubr.f32.mxu0 0.0
    %379 = vmatmul.mubr.f32.gmra.mxu0 %v120
    %v380 = vpop.f32.mrf.mxu0
    %v381 = vadd.f32 %v187, %v380
    %v382 = vpop.f32.mrf.mxu0
    %383 = vmatprep.mubr.f32.mxu0 0.0
    %384 = vmatmul.mubr.f32.gmra.mxu0 %v121
    %v385 = vpop.f32.mrf.mxu0
    %v386 = vadd.f32 %v187, %v385
    %v387 = vpop.f32.mrf.mxu0
    %388 = vmatprep.mubr.f32.mxu0 0.0
    %389 = vmatmul.mubr.f32.gmra.mxu0 %v122
    %v390 = vpop.f32.mrf.mxu0
    %v391 = vadd.f32 %v187, %v390
    %v392 = vpop.f32.mrf.mxu0
    %393 = vmatprep.mubr.f32.mxu0 0.0
    %394 = vmatmul.mubr.f32.gmra.mxu0 %v123
    %v395 = vpop.f32.mrf.mxu0
    %v396 = vadd.f32 %v187, %v395
    %v397 = vpop.f32.mrf.mxu0
    %398 = vmatprep.mubr.f32.mxu0 0.0
    %399 = vmatmul.mubr.f32.gmra.mxu0 %v124
    %v400 = vpop.f32.mrf.mxu0
    %v401 = vadd.f32 %v187, %v400
    %v402 = vpop.f32.mrf.mxu0
    %403 = vmatprep.mubr.f32.mxu0 0.0
    %404 = vmatmul.mubr.f32.gmra.mxu0 %v125
    %v405 = vpop.f32.mrf.mxu0
    %v406 = vadd.f32 %v187, %v405
    %v407 = vpop.f32.mrf.mxu0
    %408 = vdwg.mxu0
    %v409 = vmul.f32 %v258, %v258
    %v410 = vmul.f32 %v264, %v264
    %v411 = vmul.f32 %v270, %v270
    %v412 = vmul.f32 %v276, %v276
    %v413 = vmul.f32 %v282, %v282
    %v414 = vmul.f32 %v288, %v288
    %v415 = vmul.f32 %v294, %v294
    %v416 = vmul.f32 %v300, %v300
    %v417 = vld [vmem:[#allocation2] sm:$0xff]
    %v418 = vld [vmem:[#allocation2 + $0x8] sm:$0xff]
    %v419 = vld [vmem:[#allocation2 + $0x10] sm:$0xff]
    %v420 = vld [vmem:[#allocation2 + $0x18] sm:$0xff]
    %v421 = vld [vmem:[#allocation2 + $0x20] sm:$0xff]
    %v422 = vld [vmem:[#allocation2 + $0x28] sm:$0xff]
    %v423 = vld [vmem:[#allocation2 + $0x30] sm:$0xff]
    %v424 = vld [vmem:[#allocation2 + $0x38] sm:$0xff]
    %v425 = vld [vmem:[#allocation2 + $0x40] sm:$0xff]
    %v426 = vld [vmem:[#allocation2 + $0x48] sm:$0xff]
    %v427 = vld [vmem:[#allocation2 + $0x50] sm:$0xff]
    %v428 = vld [vmem:[#allocation2 + $0x58] sm:$0xff]
    %v429 = vld [vmem:[#allocation2 + $0x60] sm:$0xff]
    %v430 = vld [vmem:[#allocation2 + $0x68] sm:$0xff]
    %v431 = vld [vmem:[#allocation2 + $0x70] sm:$0xff]
    %v432 = vld [vmem:[#allocation2 + $0x78] sm:$0xff]
    %433 = vmatprep.subr.mxu0 0.0
    %434 = vmatpush1.msra.mxu0 %v432
    %435 = vmatprep.subr.mxu0 0.0
    %436 = vmatpush1.msra.mxu0 %v431
    %437 = vmatprep.subr.mxu0 0.0
    %438 = vmatpush1.msra.mxu0 %v430
    %439 = vmatprep.subr.mxu0 0.0
    %440 = vmatpush1.msra.mxu0 %v429
    %441 = vmatprep.subr.mxu0 0.0
    %442 = vmatpush1.msra.mxu0 %v428
    %443 = vmatprep.subr.mxu0 0.0
    %444 = vmatpush1.msra.mxu0 %v427
    %445 = vmatprep.subr.mxu0 0.0
    %446 = vmatpush1.msra.mxu0 %v426
    %447 = vmatprep.subr.mxu0 0.0
    %448 = vmatpush1.msra.mxu0 %v425
    %449 = vmatprep.subr.mxu0 0.0
    %450 = vmatpush1.msra.mxu0 %v424
    %451 = vmatprep.subr.mxu0 0.0
    %452 = vmatpush1.msra.mxu0 %v423
    %453 = vmatprep.subr.mxu0 0.0
    %454 = vmatpush1.msra.mxu0 %v422
    %455 = vmatprep.subr.mxu0 0.0
    %456 = vmatpush1.msra.mxu0 %v421
    %457 = vmatprep.subr.mxu0 0.0
    %458 = vmatpush1.msra.mxu0 %v420
    %459 = vmatprep.subr.mxu0 0.0
    %460 = vmatpush1.msra.mxu0 %v419
    %461 = vmatprep.subr.mxu0 0.0
    %462 = vmatpush1.msra.mxu0 %v418
    %463 = vmatprep.subr.mxu0 0.0
    %464 = vmatpush1.msra.mxu0 %v417
    %465 = vmatprep.subr.mxu0 0.0
    %466 = vmatpush2.msra.mxu0 0.0
    %467 = vmatprep.subr.mxu0 0.0
    %468 = vmatpush2.msra.mxu0 0.0
    %469 = vmatprep.subr.mxu0 0.0
    %470 = vmatpush2.msra.mxu0 0.0
    %471 = vmatprep.subr.mxu0 0.0
    %472 = vmatpush2.msra.mxu0 0.0
    %473 = vmatprep.subr.mxu0 0.0
    %474 = vmatpush2.msra.mxu0 0.0
    %475 = vmatprep.subr.mxu0 0.0
    %476 = vmatpush2.msra.mxu0 0.0
    %477 = vmatprep.subr.mxu0 0.0
    %478 = vmatpush2.msra.mxu0 0.0
    %479 = vmatprep.subr.mxu0 0.0
    %480 = vmatpush2.msra.mxu0 0.0
    %481 = vmatprep.subr.mxu0 0.0
    %482 = vmatpush2.msra.mxu0 0.0
    %483 = vmatprep.subr.mxu0 0.0
    %484 = vmatpush2.msra.mxu0 0.0
    %485 = vmatprep.subr.mxu0 0.0
    %486 = vmatpush2.msra.mxu0 0.0
    %487 = vmatprep.subr.mxu0 0.0
    %488 = vmatpush2.msra.mxu0 0.0
    %489 = vmatprep.subr.mxu0 0.0
    %490 = vmatpush2.msra.mxu0 0.0
    %491 = vmatprep.subr.mxu0 0.0
    %492 = vmatpush2.msra.mxu0 0.0
    %493 = vmatprep.subr.mxu0 0.0
    %494 = vmatpush2.msra.mxu0 0.0
    %495 = vmatprep.subr.mxu0 0.0
    %496 = vmatpush2.msra.mxu0 0.0
    %497 = vmatprep.mubr.f32.mxu0 0.0
    %498 = vmatmul.mubr.f32.gmra.mxu0 %v409
    %v499 = vpop.f32.mrf.mxu0
    %v500 = vadd.f32 0.0, %v499
    %v501 = vpop.f32.mrf.mxu0
    %502 = vmatprep.mubr.f32.mxu0 0.0
    %503 = vmatmul.mubr.f32.gmra.mxu0 %v410
    %v504 = vpop.f32.mrf.mxu0
    %v505 = vadd.f32 0.0, %v504
    %v506 = vpop.f32.mrf.mxu0
    %507 = vmatprep.mubr.f32.mxu0 0.0
    %508 = vmatmul.mubr.f32.gmra.mxu0 %v411
    %v509 = vpop.f32.mrf.mxu0
    %v510 = vadd.f32 0.0, %v509
    %v511 = vpop.f32.mrf.mxu0
    %512 = vmatprep.mubr.f32.mxu0 0.0
    %513 = vmatmul.mubr.f32.gmra.mxu0 %v412
    %v514 = vpop.f32.mrf.mxu0
    %v515 = vadd.f32 0.0, %v514
    %v516 = vpop.f32.mrf.mxu0
    %517 = vmatprep.mubr.f32.mxu0 0.0
    %518 = vmatmul.mubr.f32.gmra.mxu0 %v413
    %v519 = vpop.f32.mrf.mxu0
    %v520 = vadd.f32 0.0, %v519
    %v521 = vpop.f32.mrf.mxu0
    %522 = vmatprep.mubr.f32.mxu0 0.0
    %523 = vmatmul.mubr.f32.gmra.mxu0 %v414
    %v524 = vpop.f32.mrf.mxu0
    %v525 = vadd.f32 0.0, %v524
    %v526 = vpop.f32.mrf.mxu0
    %527 = vmatprep.mubr.f32.mxu0 0.0
    %528 = vmatmul.mubr.f32.gmra.mxu0 %v415
    %v529 = vpop.f32.mrf.mxu0
    %v530 = vadd.f32 0.0, %v529
    %v531 = vpop.f32.mrf.mxu0
    %532 = vmatprep.mubr.f32.mxu0 0.0
    %533 = vmatmul.mubr.f32.gmra.mxu0 %v416
    %v534 = vpop.f32.mrf.mxu0
    %v535 = vadd.f32 0.0, %v534
    %v536 = vpop.f32.mrf.mxu0
    %537 = vdwg.mxu0
    %v538 = vmul.f32 %v260, %v260
    %v539 = vmul.f32 %v266, %v266
    %v540 = vmul.f32 %v272, %v272
    %v541 = vmul.f32 %v278, %v278
    %v542 = vmul.f32 %v284, %v284
    %v543 = vmul.f32 %v290, %v290
    %v544 = vmul.f32 %v296, %v296
    %v545 = vmul.f32 %v302, %v302
    %546 = vmatprep.subr.mxu0 0.0
    %547 = vmatpush1.msra.mxu0 %v432
    %548 = vmatprep.subr.mxu0 0.0
    %549 = vmatpush1.msra.mxu0 %v431
    %550 = vmatprep.subr.mxu0 0.0
    %551 = vmatpush1.msra.mxu0 %v430
    %552 = vmatprep.subr.mxu0 0.0
    %553 = vmatpush1.msra.mxu0 %v429
    %554 = vmatprep.subr.mxu0 0.0
    %555 = vmatpush1.msra.mxu0 %v428
    %556 = vmatprep.subr.mxu0 0.0
    %557 = vmatpush1.msra.mxu0 %v427
    %558 = vmatprep.subr.mxu0 0.0
    %559 = vmatpush1.msra.mxu0 %v426
    %560 = vmatprep.subr.mxu0 0.0
    %561 = vmatpush1.msra.mxu0 %v425
    %562 = vmatprep.subr.mxu0 0.0
    %563 = vmatpush1.msra.mxu0 %v424
    %564 = vmatprep.subr.mxu0 0.0
    %565 = vmatpush1.msra.mxu0 %v423
    %566 = vmatprep.subr.mxu0 0.0
    %567 = vmatpush1.msra.mxu0 %v422
    %568 = vmatprep.subr.mxu0 0.0
    %569 = vmatpush1.msra.mxu0 %v421
    %570 = vmatprep.subr.mxu0 0.0
    %571 = vmatpush1.msra.mxu0 %v420
    %572 = vmatprep.subr.mxu0 0.0
    %573 = vmatpush1.msra.mxu0 %v419
    %574 = vmatprep.subr.mxu0 0.0
    %575 = vmatpush1.msra.mxu0 %v418
    %576 = vmatprep.subr.mxu0 0.0
    %577 = vmatpush1.msra.mxu0 %v417
    %578 = vmatprep.subr.mxu0 0.0
    %579 = vmatpush2.msra.mxu0 0.0
    %580 = vmatprep.subr.mxu0 0.0
    %581 = vmatpush2.msra.mxu0 0.0
    %582 = vmatprep.subr.mxu0 0.0
    %583 = vmatpush2.msra.mxu0 0.0
    %584 = vmatprep.subr.mxu0 0.0
    %585 = vmatpush2.msra.mxu0 0.0
    %586 = vmatprep.subr.mxu0 0.0
    %587 = vmatpush2.msra.mxu0 0.0
    %588 = vmatprep.subr.mxu0 0.0
    %589 = vmatpush2.msra.mxu0 0.0
    %590 = vmatprep.subr.mxu0 0.0
    %591 = vmatpush2.msra.mxu0 0.0
    %592 = vmatprep.subr.mxu0 0.0
    %593 = vmatpush2.msra.mxu0 0.0
    %594 = vmatprep.subr.mxu0 0.0
    %595 = vmatpush2.msra.mxu0 0.0
    %596 = vmatprep.subr.mxu0 0.0
    %597 = vmatpush2.msra.mxu0 0.0
    %598 = vmatprep.subr.mxu0 0.0
    %599 = vmatpush2.msra.mxu0 0.0
    %600 = vmatprep.subr.mxu0 0.0
    %601 = vmatpush2.msra.mxu0 0.0
    %602 = vmatprep.subr.mxu0 0.0
    %603 = vmatpush2.msra.mxu0 0.0
    %604 = vmatprep.subr.mxu0 0.0
    %605 = vmatpush2.msra.mxu0 0.0
    %606 = vmatprep.subr.mxu0 0.0
    %607 = vmatpush2.msra.mxu0 0.0
    %608 = vmatprep.subr.mxu0 0.0
    %609 = vmatpush2.msra.mxu0 0.0
    %610 = vmatprep.mubr.f32.mxu0 0.0
    %611 = vmatmul.mubr.f32.gmra.mxu0 %v538
    %v612 = vpop.f32.mrf.mxu0
    %v613 = vadd.f32 0.0, %v612
    %v614 = vpop.f32.mrf.mxu0
    %615 = vmatprep.mubr.f32.mxu0 0.0
    %616 = vmatmul.mubr.f32.gmra.mxu0 %v539
    %v617 = vpop.f32.mrf.mxu0
    %v618 = vadd.f32 0.0, %v617
    %v619 = vpop.f32.mrf.mxu0
    %620 = vmatprep.mubr.f32.mxu0 0.0
    %621 = vmatmul.mubr.f32.gmra.mxu0 %v540
    %v622 = vpop.f32.mrf.mxu0
    %v623 = vadd.f32 0.0, %v622
    %v624 = vpop.f32.mrf.mxu0
    %625 = vmatprep.mubr.f32.mxu0 0.0
    %626 = vmatmul.mubr.f32.gmra.mxu0 %v541
    %v627 = vpop.f32.mrf.mxu0
    %v628 = vadd.f32 0.0, %v627
    %v629 = vpop.f32.mrf.mxu0
    %630 = vmatprep.mubr.f32.mxu0 0.0
    %631 = vmatmul.mubr.f32.gmra.mxu0 %v542
    %v632 = vpop.f32.mrf.mxu0
    %v633 = vadd.f32 0.0, %v632
    %v634 = vpop.f32.mrf.mxu0
    %635 = vmatprep.mubr.f32.mxu0 0.0
    %636 = vmatmul.mubr.f32.gmra.mxu0 %v543
    %v637 = vpop.f32.mrf.mxu0
    %v638 = vadd.f32 0.0, %v637
    %v639 = vpop.f32.mrf.mxu0
    %640 = vmatprep.mubr.f32.mxu0 0.0
    %641 = vmatmul.mubr.f32.gmra.mxu0 %v544
    %v642 = vpop.f32.mrf.mxu0
    %v643 = vadd.f32 0.0, %v642
    %v644 = vpop.f32.mrf.mxu0
    %645 = vmatprep.mubr.f32.mxu0 0.0
    %646 = vmatmul.mubr.f32.gmra.mxu0 %v545
    %v647 = vpop.f32.mrf.mxu0
    %v648 = vadd.f32 0.0, %v647
    %v649 = vpop.f32.mrf.mxu0
    %650 = vdwg.mxu0
    %v651 = vmax.f32 %v500, 1e-24
    %v652 = vmax.f32 %v505, 1e-24
    %v653 = vmax.f32 %v510, 1e-24
    %v654 = vmax.f32 %v515, 1e-24
    %v655 = vmax.f32 %v520, 1e-24
    %v656 = vmax.f32 %v525, 1e-24
    %v657 = vmax.f32 %v530, 1e-24
    %v658 = vmax.f32 %v535, 1e-24
    %v659 = vrsqrt.pop %v651
    %v660 = vrsqrt.pop %v652
    %v661 = vrsqrt.pop %v653
    %v662 = vrsqrt.pop %v654
    %v663 = vrsqrt.pop %v655
    %v664 = vrsqrt.pop %v656
    %v665 = vrsqrt.pop %v657
    %v666 = vrsqrt.pop %v658
    %v667 = vmul.f32 %v258, %v659
    %v668 = vmul.f32 %v264, %v660
    %v669 = vmul.f32 %v270, %v661
    %v670 = vmul.f32 %v276, %v662
    %v671 = vmul.f32 %v282, %v663
    %v672 = vmul.f32 %v288, %v664
    %v673 = vmul.f32 %v294, %v665
    %v674 = vmul.f32 %v300, %v666
    %v675 = vmax.f32 %v613, 1e-24
    %v676 = vmax.f32 %v618, 1e-24
    %v677 = vmax.f32 %v623, 1e-24
    %v678 = vmax.f32 %v628, 1e-24
    %v679 = vmax.f32 %v633, 1e-24
    %v680 = vmax.f32 %v638, 1e-24
    %v681 = vmax.f32 %v643, 1e-24
    %v682 = vmax.f32 %v648, 1e-24
    %v683 = vrsqrt.pop %v675
    %v684 = vrsqrt.pop %v676
    %v685 = vrsqrt.pop %v677
    %v686 = vrsqrt.pop %v678
    %v687 = vrsqrt.pop %v679
    %v688 = vrsqrt.pop %v680
    %v689 = vrsqrt.pop %v681
    %v690 = vrsqrt.pop %v682
    %v691 = vmul.f32 %v260, %v683
    %v692 = vmul.f32 %v266, %v684
    %v693 = vmul.f32 %v272, %v685
    %v694 = vmul.f32 %v278, %v686
    %v695 = vmul.f32 %v284, %v687
    %v696 = vmul.f32 %v290, %v688
    %v697 = vmul.f32 %v296, %v689
    %v698 = vmul.f32 %v302, %v690
    %v699 = vld [vmem:[%s6] sm:$0xff]
    %v700 = vld [vmem:[%s6 + $0x8] sm:$0xff]
    %v701 = vld [vmem:[%s6 + $0x10] sm:$0xff]
    %v702 = vld [vmem:[%s6 + $0x18] sm:$0xff]
    %v703 = vld [vmem:[%s6 + $0x20] sm:$0xff]
    %v704 = vld [vmem:[%s6 + $0x28] sm:$0xff]
    %v705 = vld [vmem:[%s6 + $0x30] sm:$0xff]
    %v706 = vld [vmem:[%s6 + $0x38] sm:$0xff]
    %v707 = vld [vmem:[%s6 + $0x40] sm:$0xff]
    %v708 = vld [vmem:[%s6 + $0x48] sm:$0xff]
    %v709 = vld [vmem:[%s6 + $0x50] sm:$0xff]
    %v710 = vld [vmem:[%s6 + $0x58] sm:$0xff]
    %v711 = vld [vmem:[%s6 + $0x60] sm:$0xff]
    %v712 = vld [vmem:[%s6 + $0x68] sm:$0xff]
    %v713 = vld [vmem:[%s6 + $0x70] sm:$0xff]
    %v714 = vld [vmem:[%s6 + $0x78] sm:$0xff]
    %v715 = vld [vmem:[%s6 + $0x80] sm:$0xff]
    %v716 = vld [vmem:[%s6 + $0x88] sm:$0xff]
    %v717 = vld [vmem:[%s6 + $0x90] sm:$0xff]
    %v718 = vld [vmem:[%s6 + $0x98] sm:$0xff]
    %v719 = vld [vmem:[%s6 + $0xa0] sm:$0xff]
    %v720 = vld [vmem:[%s6 + $0xa8] sm:$0xff]
    %v721 = vld [vmem:[%s6 + $0xb0] sm:$0xff]
    %v722 = vld [vmem:[%s6 + $0xb8] sm:$0xff]
    %v723 = vld [vmem:[%s6 + $0xc0] sm:$0xff]
    %v724 = vld [vmem:[%s6 + $0xc8] sm:$0xff]
    %v725 = vld [vmem:[%s6 + $0xd0] sm:$0xff]
    %v726 = vld [vmem:[%s6 + $0xd8] sm:$0xff]
    %v727 = vld [vmem:[%s6 + $0xe0] sm:$0xff]
    %v728 = vld [vmem:[%s6 + $0xe8] sm:$0xff]
    %v729 = vld [vmem:[%s6 + $0xf0] sm:$0xff]
    %v730 = vld [vmem:[%s6 + $0xf8] sm:$0xff]
    %v731 = vld [vmem:[%s4] sm:$0xff]
    %v732 = vld [vmem:[%s4 + $0x8] sm:$0xff]
    %v733 = vld [vmem:[%s4 + $0x10] sm:$0xff]
    %v734 = vld [vmem:[%s4 + $0x18] sm:$0xff]
    %v735 = vld [vmem:[%s4 + $0x20] sm:$0xff]
    %v736 = vld [vmem:[%s4 + $0x28] sm:$0xff]
    %v737 = vld [vmem:[%s4 + $0x30] sm:$0xff]
    %v738 = vld [vmem:[%s4 + $0x38] sm:$0xff]
    %v739 = vld [vmem:[%s4 + $0x40] sm:$0xff]
    %v740 = vld [vmem:[%s4 + $0x48] sm:$0xff]
    %v741 = vld [vmem:[%s4 + $0x50] sm:$0xff]
    %v742 = vld [vmem:[%s4 + $0x58] sm:$0xff]
    %v743 = vld [vmem:[%s4 + $0x60] sm:$0xff]
    %v744 = vld [vmem:[%s4 + $0x68] sm:$0xff]
    %v745 = vld [vmem:[%s4 + $0x70] sm:$0xff]
    %v746 = vld [vmem:[%s4 + $0x78] sm:$0xff]
    %v747 = vld [vmem:[%s4 + $0x80] sm:$0xff]
    %v748 = vld [vmem:[%s4 + $0x88] sm:$0xff]
    %v749 = vld [vmem:[%s4 + $0x90] sm:$0xff]
    %v750 = vld [vmem:[%s4 + $0x98] sm:$0xff]
    %v751 = vld [vmem:[%s4 + $0xa0] sm:$0xff]
    %v752 = vld [vmem:[%s4 + $0xa8] sm:$0xff]
    %v753 = vld [vmem:[%s4 + $0xb0] sm:$0xff]
    %v754 = vld [vmem:[%s4 + $0xb8] sm:$0xff]
    %v755 = vld [vmem:[%s4 + $0xc0] sm:$0xff]
    %v756 = vld [vmem:[%s4 + $0xc8] sm:$0xff]
    %v757 = vld [vmem:[%s4 + $0xd0] sm:$0xff]
    %v758 = vld [vmem:[%s4 + $0xd8] sm:$0xff]
    %v759 = vld [vmem:[%s4 + $0xe0] sm:$0xff]
    %v760 = vld [vmem:[%s4 + $0xe8] sm:$0xff]
    %v761 = vld [vmem:[%s4 + $0xf0] sm:$0xff]
    %v762 = vld [vmem:[%s4 + $0xf8] sm:$0xff]
    %v763 = vmul.f32 %v691, %v731
    %v764 = vmul.f32 %v692, %v732
    %v765 = vmul.f32 %v693, %v733
    %v766 = vmul.f32 %v694, %v734
    %v767 = vmul.f32 %v695, %v735
    %v768 = vmul.f32 %v696, %v736
    %v769 = vmul.f32 %v697, %v737
    %v770 = vmul.f32 %v698, %v738
    %v771 = vmul.f32 %v691, %v739
    %v772 = vmul.f32 %v692, %v740
    %v773 = vmul.f32 %v693, %v741
    %v774 = vmul.f32 %v694, %v742
    %v775 = vmul.f32 %v695, %v743
    %v776 = vmul.f32 %v696, %v744
    %v777 = vmul.f32 %v697, %v745
    %v778 = vmul.f32 %v698, %v746
    %v779 = vmul.f32 %v691, %v747
    %v780 = vmul.f32 %v692, %v748
    %v781 = vmul.f32 %v693, %v749
    %v782 = vmul.f32 %v694, %v750
    %v783 = vmul.f32 %v695, %v751
    %v784 = vmul.f32 %v696, %v752
    %v785 = vmul.f32 %v697, %v753
    %v786 = vmul.f32 %v698, %v754
    %v787 = vmul.f32 %v691, %v755
    %v788 = vmul.f32 %v692, %v756
    %v789 = vmul.f32 %v693, %v757
    %v790 = vmul.f32 %v694, %v758
    %v791 = vmul.f32 %v695, %v759
    %v792 = vmul.f32 %v696, %v760
    %v793 = vmul.f32 %v697, %v761
    %v794 = vmul.f32 %v698, %v762
    %v795 = vld [vmem:[%s5] sm:$0xff]
    %v796 = vld [vmem:[%s5 + $0x8] sm:$0xff]
    %v797 = vld [vmem:[%s5 + $0x10] sm:$0xff]
    %v798 = vld [vmem:[%s5 + $0x18] sm:$0xff]
    %v799 = vld [vmem:[%s5 + $0x20] sm:$0xff]
    %v800 = vld [vmem:[%s5 + $0x28] sm:$0xff]
    %v801 = vld [vmem:[%s5 + $0x30] sm:$0xff]
    %v802 = vld [vmem:[%s5 + $0x38] sm:$0xff]
    %v803 = vld [vmem:[%s5 + $0x40] sm:$0xff]
    %v804 = vld [vmem:[%s5 + $0x48] sm:$0xff]
    %v805 = vld [vmem:[%s5 + $0x50] sm:$0xff]
    %v806 = vld [vmem:[%s5 + $0x58] sm:$0xff]
    %v807 = vld [vmem:[%s5 + $0x60] sm:$0xff]
    %v808 = vld [vmem:[%s5 + $0x68] sm:$0xff]
    %v809 = vld [vmem:[%s5 + $0x70] sm:$0xff]
    %v810 = vld [vmem:[%s5 + $0x78] sm:$0xff]
    %v811 = vld [vmem:[%s5 + $0x80] sm:$0xff]
    %v812 = vld [vmem:[%s5 + $0x88] sm:$0xff]
    %v813 = vld [vmem:[%s5 + $0x90] sm:$0xff]
    %v814 = vld [vmem:[%s5 + $0x98] sm:$0xff]
    %v815 = vld [vmem:[%s5 + $0xa0] sm:$0xff]
    %v816 = vld [vmem:[%s5 + $0xa8] sm:$0xff]
    %v817 = vld [vmem:[%s5 + $0xb0] sm:$0xff]
    %v818 = vld [vmem:[%s5 + $0xb8] sm:$0xff]
    %v819 = vld [vmem:[%s5 + $0xc0] sm:$0xff]
    %v820 = vld [vmem:[%s5 + $0xc8] sm:$0xff]
    %v821 = vld [vmem:[%s5 + $0xd0] sm:$0xff]
    %v822 = vld [vmem:[%s5 + $0xd8] sm:$0xff]
    %v823 = vld [vmem:[%s5 + $0xe0] sm:$0xff]
    %v824 = vld [vmem:[%s5 + $0xe8] sm:$0xff]
    %v825 = vld [vmem:[%s5 + $0xf0] sm:$0xff]
    %v826 = vld [vmem:[%s5 + $0xf8] sm:$0xff]
    %859 = vrot.lane.b32.xlu0 %v795, 32
    %v860 = vpop.permute.xlu0 %859
    %861 = vrot.lane.b32.xlu0 %v796, 32
    %v862 = vpop.permute.xlu0 %861
    %863 = vrot.lane.b32.xlu0 %v797, 32
    %v864 = vpop.permute.xlu0 %863
    %865 = vrot.lane.b32.xlu0 %v798, 32
    %v866 = vpop.permute.xlu0 %865
    %867 = vrot.lane.b32.xlu0 %v799, 32
    %v868 = vpop.permute.xlu0 %867
    %869 = vrot.lane.b32.xlu0 %v800, 32
    %v870 = vpop.permute.xlu0 %869
    %871 = vrot.lane.b32.xlu0 %v801, 32
    %v872 = vpop.permute.xlu0 %871
    %873 = vrot.lane.b32.xlu0 %v802, 32
    %v874 = vpop.permute.xlu0 %873
    %875 = vrot.lane.b32.xlu0 %v803, 32
    %v876 = vpop.permute.xlu0 %875
    %877 = vrot.lane.b32.xlu0 %v804, 32
    %v878 = vpop.permute.xlu0 %877
    %879 = vrot.lane.b32.xlu0 %v805, 32
    %v880 = vpop.permute.xlu0 %879
    %881 = vrot.lane.b32.xlu0 %v806, 32
    %v882 = vpop.permute.xlu0 %881
    %883 = vrot.lane.b32.xlu0 %v807, 32
    %v884 = vpop.permute.xlu0 %883
    %885 = vrot.lane.b32.xlu0 %v808, 32
    %v886 = vpop.permute.xlu0 %885
    %887 = vrot.lane.b32.xlu0 %v809, 32
    %v888 = vpop.permute.xlu0 %887
    %889 = vrot.lane.b32.xlu0 %v810, 32
    %v890 = vpop.permute.xlu0 %889
    %891 = vrot.lane.b32.xlu0 %v811, 32
    %v892 = vpop.permute.xlu0 %891
    %893 = vrot.lane.b32.xlu0 %v812, 32
    %v894 = vpop.permute.xlu0 %893
    %895 = vrot.lane.b32.xlu0 %v813, 32
    %v896 = vpop.permute.xlu0 %895
    %897 = vrot.lane.b32.xlu0 %v814, 32
    %v898 = vpop.permute.xlu0 %897
    %899 = vrot.lane.b32.xlu0 %v815, 32
    %v900 = vpop.permute.xlu0 %899
    %901 = vrot.lane.b32.xlu0 %v816, 32
    %v902 = vpop.permute.xlu0 %901
    %903 = vrot.lane.b32.xlu0 %v817, 32
    %v904 = vpop.permute.xlu0 %903
    %905 = vrot.lane.b32.xlu0 %v818, 32
    %v906 = vpop.permute.xlu0 %905
    %907 = vrot.lane.b32.xlu0 %v819, 32
    %v908 = vpop.permute.xlu0 %907
    %909 = vrot.lane.b32.xlu0 %v820, 32
    %v910 = vpop.permute.xlu0 %909
    %911 = vrot.lane.b32.xlu0 %v821, 32
    %v912 = vpop.permute.xlu0 %911
    %913 = vrot.lane.b32.xlu0 %v822, 32
    %v914 = vpop.permute.xlu0 %913
    %915 = vrot.lane.b32.xlu0 %v823, 32
    %v916 = vpop.permute.xlu0 %915
    %917 = vrot.lane.b32.xlu0 %v824, 32
    %v918 = vpop.permute.xlu0 %917
    %919 = vrot.lane.b32.xlu0 %v825, 32
    %v920 = vpop.permute.xlu0 %919
    %921 = vrot.lane.b32.xlu0 %v826, 32
    %v922 = vpop.permute.xlu0 %921
    %v955 = vmul.f32 %v691, %v860
    %v956 = vmul.f32 %v692, %v862
    %v957 = vmul.f32 %v693, %v864
    %v958 = vmul.f32 %v694, %v866
    %v959 = vmul.f32 %v695, %v868
    %v960 = vmul.f32 %v696, %v870
    %v961 = vmul.f32 %v697, %v872
    %v962 = vmul.f32 %v698, %v874
    %v963 = vmul.f32 %v691, %v876
    %v964 = vmul.f32 %v692, %v878
    %v965 = vmul.f32 %v693, %v880
    %v966 = vmul.f32 %v694, %v882
    %v967 = vmul.f32 %v695, %v884
    %v968 = vmul.f32 %v696, %v886
    %v969 = vmul.f32 %v697, %v888
    %v970 = vmul.f32 %v698, %v890
    %v971 = vmul.f32 %v691, %v892
    %v972 = vmul.f32 %v692, %v894
    %v973 = vmul.f32 %v693, %v896
    %v974 = vmul.f32 %v694, %v898
    %v975 = vmul.f32 %v695, %v900
    %v976 = vmul.f32 %v696, %v902
    %v977 = vmul.f32 %v697, %v904
    %v978 = vmul.f32 %v698, %v906
    %v979 = vmul.f32 %v691, %v908
    %v980 = vmul.f32 %v692, %v910
    %v981 = vmul.f32 %v693, %v912
    %v982 = vmul.f32 %v694, %v914
    %v983 = vmul.f32 %v695, %v916
    %v984 = vmul.f32 %v696, %v918
    %v985 = vmul.f32 %v697, %v920
    %v986 = vmul.f32 %v698, %v922
    %1019 = vrot.lane.b32.xlu0 %v955, 96
    %v1020 = vpop.permute.xlu0 %1019
    %1021 = vrot.lane.b32.xlu0 %v956, 96
    %v1022 = vpop.permute.xlu0 %1021
    %1023 = vrot.lane.b32.xlu0 %v957, 96
    %v1024 = vpop.permute.xlu0 %1023
    %1025 = vrot.lane.b32.xlu0 %v958, 96
    %v1026 = vpop.permute.xlu0 %1025
    %1027 = vrot.lane.b32.xlu0 %v959, 96
    %v1028 = vpop.permute.xlu0 %1027
    %1029 = vrot.lane.b32.xlu0 %v960, 96
    %v1030 = vpop.permute.xlu0 %1029
    %1031 = vrot.lane.b32.xlu0 %v961, 96
    %v1032 = vpop.permute.xlu0 %1031
    %1033 = vrot.lane.b32.xlu0 %v962, 96
    %v1034 = vpop.permute.xlu0 %1033
    %1035 = vrot.lane.b32.xlu0 %v963, 96
    %v1036 = vpop.permute.xlu0 %1035
    %1037 = vrot.lane.b32.xlu0 %v964, 96
    %v1038 = vpop.permute.xlu0 %1037
    %1039 = vrot.lane.b32.xlu0 %v965, 96
    %v1040 = vpop.permute.xlu0 %1039
    %1041 = vrot.lane.b32.xlu0 %v966, 96
    %v1042 = vpop.permute.xlu0 %1041
    %1043 = vrot.lane.b32.xlu0 %v967, 96
    %v1044 = vpop.permute.xlu0 %1043
    %1045 = vrot.lane.b32.xlu0 %v968, 96
    %v1046 = vpop.permute.xlu0 %1045
    %1047 = vrot.lane.b32.xlu0 %v969, 96
    %v1048 = vpop.permute.xlu0 %1047
    %1049 = vrot.lane.b32.xlu0 %v970, 96
    %v1050 = vpop.permute.xlu0 %1049
    %1051 = vrot.lane.b32.xlu0 %v971, 96
    %v1052 = vpop.permute.xlu0 %1051
    %1053 = vrot.lane.b32.xlu0 %v972, 96
    %v1054 = vpop.permute.xlu0 %1053
    %1055 = vrot.lane.b32.xlu0 %v973, 96
    %v1056 = vpop.permute.xlu0 %1055
    %1057 = vrot.lane.b32.xlu0 %v974, 96
    %v1058 = vpop.permute.xlu0 %1057
    %1059 = vrot.lane.b32.xlu0 %v975, 96
    %v1060 = vpop.permute.xlu0 %1059
    %1061 = vrot.lane.b32.xlu0 %v976, 96
    %v1062 = vpop.permute.xlu0 %1061
    %1063 = vrot.lane.b32.xlu0 %v977, 96
    %v1064 = vpop.permute.xlu0 %1063
    %1065 = vrot.lane.b32.xlu0 %v978, 96
    %v1066 = vpop.permute.xlu0 %1065
    %1067 = vrot.lane.b32.xlu0 %v979, 96
    %v1068 = vpop.permute.xlu0 %1067
    %1069 = vrot.lane.b32.xlu0 %v980, 96
    %v1070 = vpop.permute.xlu0 %1069
    %1071 = vrot.lane.b32.xlu0 %v981, 96
    %v1072 = vpop.permute.xlu0 %1071
    %1073 = vrot.lane.b32.xlu0 %v982, 96
    %v1074 = vpop.permute.xlu0 %1073
    %1075 = vrot.lane.b32.xlu0 %v983, 96
    %v1076 = vpop.permute.xlu0 %1075
    %1077 = vrot.lane.b32.xlu0 %v984, 96
    %v1078 = vpop.permute.xlu0 %1077
    %1079 = vrot.lane.b32.xlu0 %v985, 96
    %v1080 = vpop.permute.xlu0 %1079
    %1081 = vrot.lane.b32.xlu0 %v986, 96
    %v1082 = vpop.permute.xlu0 %1081
    %v1115 = vadd.f32 %v763, %v1020
    %v1116 = vadd.f32 %v764, %v1022
    %v1117 = vadd.f32 %v765, %v1024
    %v1118 = vadd.f32 %v766, %v1026
    %v1119 = vadd.f32 %v767, %v1028
    %v1120 = vadd.f32 %v768, %v1030
    %v1121 = vadd.f32 %v769, %v1032
    %v1122 = vadd.f32 %v770, %v1034
    %v1123 = vadd.f32 %v771, %v1036
    %v1124 = vadd.f32 %v772, %v1038
    %v1125 = vadd.f32 %v773, %v1040
    %v1126 = vadd.f32 %v774, %v1042
    %v1127 = vadd.f32 %v775, %v1044
    %v1128 = vadd.f32 %v776, %v1046
    %v1129 = vadd.f32 %v777, %v1048
    %v1130 = vadd.f32 %v778, %v1050
    %v1131 = vadd.f32 %v779, %v1052
    %v1132 = vadd.f32 %v780, %v1054
    %v1133 = vadd.f32 %v781, %v1056
    %v1134 = vadd.f32 %v782, %v1058
    %v1135 = vadd.f32 %v783, %v1060
    %v1136 = vadd.f32 %v784, %v1062
    %v1137 = vadd.f32 %v785, %v1064
    %v1138 = vadd.f32 %v786, %v1066
    %v1139 = vadd.f32 %v787, %v1068
    %v1140 = vadd.f32 %v788, %v1070
    %v1141 = vadd.f32 %v789, %v1072
    %v1142 = vadd.f32 %v790, %v1074
    %v1143 = vadd.f32 %v791, %v1076
    %v1144 = vadd.f32 %v792, %v1078
    %v1145 = vadd.f32 %v793, %v1080
    %v1146 = vadd.f32 %v794, %v1082
    %v1147 = vld [vmem:[#allocation5] sm:$0xff]
    %v1148 = vld [vmem:[#allocation5 + $0x8] sm:$0xff]
    %v1149 = vld [vmem:[#allocation5 + $0x10] sm:$0xff]
    %v1150 = vld [vmem:[#allocation5 + $0x18] sm:$0xff]
    %v1151 = vld [vmem:[#allocation5 + $0x20] sm:$0xff]
    %v1152 = vld [vmem:[#allocation5 + $0x28] sm:$0xff]
    %v1153 = vld [vmem:[#allocation5 + $0x30] sm:$0xff]
    %v1154 = vld [vmem:[#allocation5 + $0x38] sm:$0xff]
    %v1155 = vld [vmem:[#allocation5 + $0x40] sm:$0xff]
    %v1156 = vld [vmem:[#allocation5 + $0x48] sm:$0xff]
    %v1157 = vld [vmem:[#allocation5 + $0x50] sm:$0xff]
    %v1158 = vld [vmem:[#allocation5 + $0x58] sm:$0xff]
    %v1159 = vld [vmem:[#allocation5 + $0x60] sm:$0xff]
    %v1160 = vld [vmem:[#allocation5 + $0x68] sm:$0xff]
    %v1161 = vld [vmem:[#allocation5 + $0x70] sm:$0xff]
    %v1162 = vld [vmem:[#allocation5 + $0x78] sm:$0xff]
    %vm1163 = vcmask 261120
    %v1165 = vsel %vm1163, %v667, 0
    %v1168 = vsel %vm1163, %v668, 0
    %v1171 = vsel %vm1163, %v669, 0
    %v1174 = vsel %vm1163, %v670, 0
    %v1177 = vsel %vm1163, %v671, 0
    %v1180 = vsel %vm1163, %v672, 0
    %v1183 = vsel %vm1163, %v673, 0
    %v1186 = vsel %vm1163, %v674, 0
    %v1189 = vsel %vm1163, %v1115, 0
    %v1192 = vsel %vm1163, %v1116, 0
    %v1195 = vsel %vm1163, %v1117, 0
    %v1198 = vsel %vm1163, %v1118, 0
    %v1201 = vsel %vm1163, %v1119, 0
    %v1204 = vsel %vm1163, %v1120, 0
    %v1207 = vsel %vm1163, %v1121, 0
    %v1210 = vsel %vm1163, %v1122, 0
    %v1213 = vsel %vm1163, %v1123, 0
    %v1216 = vsel %vm1163, %v1124, 0
    %v1219 = vsel %vm1163, %v1125, 0
    %v1222 = vsel %vm1163, %v1126, 0
    %v1225 = vsel %vm1163, %v1127, 0
    %v1228 = vsel %vm1163, %v1128, 0
    %v1231 = vsel %vm1163, %v1129, 0
    %v1234 = vsel %vm1163, %v1130, 0
    %v1237 = vsel %vm1163, %v1131, 0
    %v1240 = vsel %vm1163, %v1132, 0
    %v1243 = vsel %vm1163, %v1133, 0
    %v1246 = vsel %vm1163, %v1134, 0
    %v1249 = vsel %vm1163, %v1135, 0
    %v1252 = vsel %vm1163, %v1136, 0
    %v1255 = vsel %vm1163, %v1137, 0
    %v1258 = vsel %vm1163, %v1138, 0
    %v1261 = vsel %vm1163, %v1139, 0
    %v1264 = vsel %vm1163, %v1140, 0
    %v1267 = vsel %vm1163, %v1141, 0
    %v1270 = vsel %vm1163, %v1142, 0
    %v1273 = vsel %vm1163, %v1143, 0
    %v1276 = vsel %vm1163, %v1144, 0
    %v1279 = vsel %vm1163, %v1145, 0
    %v1282 = vsel %vm1163, %v1146, 0
    %1284 = vmatprep.subr.mxu0 0.0
    %1285 = vmatpush1.xpose.msra.mxu0 %v1234
    %1286 = vmatprep.subr.mxu0 0.0
    %1287 = vmatpush1.xpose.msra.mxu0 %v1231
    %1288 = vmatprep.subr.mxu0 0.0
    %1289 = vmatpush1.xpose.msra.mxu0 %v1228
    %1290 = vmatprep.subr.mxu0 0.0
    %1291 = vmatpush1.xpose.msra.mxu0 %v1225
    %1292 = vmatprep.subr.mxu0 0.0
    %1293 = vmatpush1.xpose.msra.mxu0 %v1222
    %1294 = vmatprep.subr.mxu0 0.0
    %1295 = vmatpush1.xpose.msra.mxu0 %v1219
    %1296 = vmatprep.subr.mxu0 0.0
    %1297 = vmatpush1.xpose.msra.mxu0 %v1216
    %1298 = vmatprep.subr.mxu0 0.0
    %1299 = vmatpush1.xpose.msra.mxu0 %v1213
    %1300 = vmatprep.subr.mxu0 0.0
    %1301 = vmatpush1.xpose.msra.mxu0 %v1210
    %1302 = vmatprep.subr.mxu0 0.0
    %1303 = vmatpush1.xpose.msra.mxu0 %v1207
    %1304 = vmatprep.subr.mxu0 0.0
    %1305 = vmatpush1.xpose.msra.mxu0 %v1204
    %1306 = vmatprep.subr.mxu0 0.0
    %1307 = vmatpush1.xpose.msra.mxu0 %v1201
    %1308 = vmatprep.subr.mxu0 0.0
    %1309 = vmatpush1.xpose.msra.mxu0 %v1198
    %1310 = vmatprep.subr.mxu0 0.0
    %1311 = vmatpush1.xpose.msra.mxu0 %v1195
    %1312 = vmatprep.subr.mxu0 0.0
    %1313 = vmatpush1.xpose.msra.mxu0 %v1192
    %1314 = vmatprep.subr.mxu0 0.0
    %1315 = vmatpush1.xpose.msra.mxu0 %v1189
    %1316 = vmatprep.subr.mxu0 0.0
    %1317 = vmatpush2.xpose.msra.mxu0 %v1282
    %1318 = vmatprep.subr.mxu0 0.0
    %1319 = vmatpush2.xpose.msra.mxu0 %v1279
    %1320 = vmatprep.subr.mxu0 0.0
    %1321 = vmatpush2.xpose.msra.mxu0 %v1276
    %1322 = vmatprep.subr.mxu0 0.0
    %1323 = vmatpush2.xpose.msra.mxu0 %v1273
    %1324 = vmatprep.subr.mxu0 0.0
    %1325 = vmatpush2.xpose.msra.mxu0 %v1270
    %1326 = vmatprep.subr.mxu0 0.0
    %1327 = vmatpush2.xpose.msra.mxu0 %v1267
    %1328 = vmatprep.subr.mxu0 0.0
    %1329 = vmatpush2.xpose.msra.mxu0 %v1264
    %1330 = vmatprep.subr.mxu0 0.0
    %1331 = vmatpush2.xpose.msra.mxu0 %v1261
    %1332 = vmatprep.subr.mxu0 0.0
    %1333 = vmatpush2.xpose.msra.mxu0 %v1258
    %1334 = vmatprep.subr.mxu0 0.0
    %1335 = vmatpush2.xpose.msra.mxu0 %v1255
    %1336 = vmatprep.subr.mxu0 0.0
    %1337 = vmatpush2.xpose.msra.mxu0 %v1252
    %1338 = vmatprep.subr.mxu0 0.0
    %1339 = vmatpush2.xpose.msra.mxu0 %v1249
    %1340 = vmatprep.subr.mxu0 0.0
    %1341 = vmatpush2.xpose.msra.mxu0 %v1246
    %1342 = vmatprep.subr.mxu0 0.0
    %1343 = vmatpush2.xpose.msra.mxu0 %v1243
    %1344 = vmatprep.subr.mxu0 0.0
    %1345 = vmatpush2.xpose.msra.mxu0 %v1240
    %1346 = vmatprep.subr.mxu0 0.0
    %1347 = vmatpush2.xpose.msra.mxu0 %v1237
    %1348 = vmatprep.mubr.f32.mxu0 0.0
    %1349 = vmatmul.mubr.f32.gmra.mxu0 %v1165
    %v1350 = vpop.f32.mrf.mxu0
    %v1351 = vadd.f32 %v1147, %v1350
    %v1352 = vpop.f32.mrf.mxu0
    %v1353 = vadd.f32 %v1148, %v1352
    %1354 = vmatprep.mubr.f32.mxu0 0.0
    %1355 = vmatmul.mubr.f32.gmra.mxu0 %v1168
    %v1356 = vpop.f32.mrf.mxu0
    %v1357 = vadd.f32 %v1149, %v1356
    %v1358 = vpop.f32.mrf.mxu0
    %v1359 = vadd.f32 %v1150, %v1358
    %1360 = vmatprep.mubr.f32.mxu0 0.0
    %1361 = vmatmul.mubr.f32.gmra.mxu0 %v1171
    %v1362 = vpop.f32.mrf.mxu0
    %v1363 = vadd.f32 %v1151, %v1362
    %v1364 = vpop.f32.mrf.mxu0
    %v1365 = vadd.f32 %v1152, %v1364
    %1366 = vmatprep.mubr.f32.mxu0 0.0
    %1367 = vmatmul.mubr.f32.gmra.mxu0 %v1174
    %v1368 = vpop.f32.mrf.mxu0
    %v1369 = vadd.f32 %v1153, %v1368
    %v1370 = vpop.f32.mrf.mxu0
    %v1371 = vadd.f32 %v1154, %v1370
    %1372 = vmatprep.mubr.f32.mxu0 0.0
    %1373 = vmatmul.mubr.f32.gmra.mxu0 %v1177
    %v1374 = vpop.f32.mrf.mxu0
    %v1375 = vadd.f32 %v1155, %v1374
    %v1376 = vpop.f32.mrf.mxu0
    %v1377 = vadd.f32 %v1156, %v1376
    %1378 = vmatprep.mubr.f32.mxu0 0.0
    %1379 = vmatmul.mubr.f32.gmra.mxu0 %v1180
    %v1380 = vpop.f32.mrf.mxu0
    %v1381 = vadd.f32 %v1157, %v1380
    %v1382 = vpop.f32.mrf.mxu0
    %v1383 = vadd.f32 %v1158, %v1382
    %1384 = vmatprep.mubr.f32.mxu0 0.0
    %1385 = vmatmul.mubr.f32.gmra.mxu0 %v1183
    %v1386 = vpop.f32.mrf.mxu0
    %v1387 = vadd.f32 %v1159, %v1386
    %v1388 = vpop.f32.mrf.mxu0
    %v1389 = vadd.f32 %v1160, %v1388
    %1390 = vmatprep.mubr.f32.mxu0 0.0
    %1391 = vmatmul.mubr.f32.gmra.mxu0 %v1186
    %v1392 = vpop.f32.mrf.mxu0
    %v1393 = vadd.f32 %v1161, %v1392
    %v1394 = vpop.f32.mrf.mxu0
    %v1395 = vadd.f32 %v1162, %v1394
    %1396 = vdwg.mxu0
    %v1397 = vmax.f32 %v1351, %v1353
    %1398 = vmax.xlane.f32.xlu0 %v1397
    %v1399 = vpop.xlane.xlu0 %1398
    %v1400 = vmax.f32 %v1357, %v1359
    %1401 = vmax.xlane.f32.xlu0 %v1400
    %v1402 = vpop.xlane.xlu0 %1401
    %v1403 = vmax.f32 %v1363, %v1365
    %1404 = vmax.xlane.f32.xlu0 %v1403
    %v1405 = vpop.xlane.xlu0 %1404
    %v1406 = vmax.f32 %v1369, %v1371
    %1407 = vmax.xlane.f32.xlu0 %v1406
    %v1408 = vpop.xlane.xlu0 %1407
    %v1409 = vmax.f32 %v1375, %v1377
    %1410 = vmax.xlane.f32.xlu0 %v1409
    %v1411 = vpop.xlane.xlu0 %1410
    %v1412 = vmax.f32 %v1381, %v1383
    %1413 = vmax.xlane.f32.xlu0 %v1412
    %v1414 = vpop.xlane.xlu0 %1413
    %v1415 = vmax.f32 %v1387, %v1389
    %1416 = vmax.xlane.f32.xlu0 %v1415
    %v1417 = vpop.xlane.xlu0 %1416
    %v1418 = vmax.f32 %v1393, %v1395
    %1419 = vmax.xlane.f32.xlu0 %v1418
    %v1420 = vpop.xlane.xlu0 %1419
    %v1421 = vsub.f32 %v1351, %v1399
    %v1422 = vsub.f32 %v1353, %v1399
    %v1423 = vsub.f32 %v1357, %v1402
    %v1424 = vsub.f32 %v1359, %v1402
    %v1425 = vsub.f32 %v1363, %v1405
    %v1426 = vsub.f32 %v1365, %v1405
    %v1427 = vsub.f32 %v1369, %v1408
    %v1428 = vsub.f32 %v1371, %v1408
    %v1429 = vsub.f32 %v1375, %v1411
    %v1430 = vsub.f32 %v1377, %v1411
    %v1431 = vsub.f32 %v1381, %v1414
    %v1432 = vsub.f32 %v1383, %v1414
    %v1433 = vsub.f32 %v1387, %v1417
    %v1434 = vsub.f32 %v1389, %v1417
    %v1435 = vsub.f32 %v1393, %v1420
    %v1436 = vsub.f32 %v1395, %v1420
    %v1437 = vmul.f32 %v1421, 1.442695
    %v1438 = vpow.pop %v1437
    %v1439 = vmul.f32 %v1422, 1.442695
    %v1440 = vpow.pop %v1439
    %v1441 = vmul.f32 %v1423, 1.442695
    %v1442 = vpow.pop %v1441
    %v1443 = vmul.f32 %v1424, 1.442695
    %v1444 = vpow.pop %v1443
    %v1445 = vmul.f32 %v1425, 1.442695
    %v1446 = vpow.pop %v1445
    %v1447 = vmul.f32 %v1426, 1.442695
    %v1448 = vpow.pop %v1447
    %v1449 = vmul.f32 %v1427, 1.442695
    %v1450 = vpow.pop %v1449
    %v1451 = vmul.f32 %v1428, 1.442695
    %v1452 = vpow.pop %v1451
    %v1453 = vmul.f32 %v1429, 1.442695
    %v1454 = vpow.pop %v1453
    %v1455 = vmul.f32 %v1430, 1.442695
    %v1456 = vpow.pop %v1455
    %v1457 = vmul.f32 %v1431, 1.442695
    %v1458 = vpow.pop %v1457
    %v1459 = vmul.f32 %v1432, 1.442695
    %v1460 = vpow.pop %v1459
    %v1461 = vmul.f32 %v1433, 1.442695
    %v1462 = vpow.pop %v1461
    %v1463 = vmul.f32 %v1434, 1.442695
    %v1464 = vpow.pop %v1463
    %v1465 = vmul.f32 %v1435, 1.442695
    %v1466 = vpow.pop %v1465
    %v1467 = vmul.f32 %v1436, 1.442695
    %v1468 = vpow.pop %v1467
    %v1469 = vmul.f32 %v371, %v699
    %v1470 = vmul.f32 %v376, %v700
    %v1471 = vmul.f32 %v381, %v701
    %v1472 = vmul.f32 %v386, %v702
    %v1473 = vmul.f32 %v391, %v703
    %v1474 = vmul.f32 %v396, %v704
    %v1475 = vmul.f32 %v401, %v705
    %v1476 = vmul.f32 %v406, %v706
    %v1477 = vmul.f32 %v371, %v707
    %v1478 = vmul.f32 %v376, %v708
    %v1479 = vmul.f32 %v381, %v709
    %v1480 = vmul.f32 %v386, %v710
    %v1481 = vmul.f32 %v391, %v711
    %v1482 = vmul.f32 %v396, %v712
    %v1483 = vmul.f32 %v401, %v713
    %v1484 = vmul.f32 %v406, %v714
    %v1485 = vmul.f32 %v371, %v715
    %v1486 = vmul.f32 %v376, %v716
    %v1487 = vmul.f32 %v381, %v717
    %v1488 = vmul.f32 %v386, %v718
    %v1489 = vmul.f32 %v391, %v719
    %v1490 = vmul.f32 %v396, %v720
    %v1491 = vmul.f32 %v401, %v721
    %v1492 = vmul.f32 %v406, %v722
    %v1493 = vmul.f32 %v371, %v723
    %v1494 = vmul.f32 %v376, %v724
    %v1495 = vmul.f32 %v381, %v725
    %v1496 = vmul.f32 %v386, %v726
    %v1497 = vmul.f32 %v391, %v727
    %v1498 = vmul.f32 %v396, %v728
    %v1499 = vmul.f32 %v401, %v729
    %v1500 = vmul.f32 %v406, %v730
    %1501 = vmatprep.subr.mxu0 0.0
    %1502 = vmatpush1.msra.mxu0 %v1484
    %1503 = vmatprep.subr.mxu0 0.0
    %1504 = vmatpush1.msra.mxu0 %v1483
    %1505 = vmatprep.subr.mxu0 0.0
    %1506 = vmatpush1.msra.mxu0 %v1482
    %1507 = vmatprep.subr.mxu0 0.0
    %1508 = vmatpush1.msra.mxu0 %v1481
    %1509 = vmatprep.subr.mxu0 0.0
    %1510 = vmatpush1.msra.mxu0 %v1480
    %1511 = vmatprep.subr.mxu0 0.0
    %1512 = vmatpush1.msra.mxu0 %v1479
    %1513 = vmatprep.subr.mxu0 0.0
    %1514 = vmatpush1.msra.mxu0 %v1478
    %1515 = vmatprep.subr.mxu0 0.0
    %1516 = vmatpush1.msra.mxu0 %v1477
    %1517 = vmatprep.subr.mxu0 0.0
    %1518 = vmatpush1.msra.mxu0 %v1476
    %1519 = vmatprep.subr.mxu0 0.0
    %1520 = vmatpush1.msra.mxu0 %v1475
    %1521 = vmatprep.subr.mxu0 0.0
    %1522 = vmatpush1.msra.mxu0 %v1474
    %1523 = vmatprep.subr.mxu0 0.0
    %1524 = vmatpush1.msra.mxu0 %v1473
    %1525 = vmatprep.subr.mxu0 0.0
    %1526 = vmatpush1.msra.mxu0 %v1472
    %1527 = vmatprep.subr.mxu0 0.0
    %1528 = vmatpush1.msra.mxu0 %v1471
    %1529 = vmatprep.subr.mxu0 0.0
    %1530 = vmatpush1.msra.mxu0 %v1470
    %1531 = vmatprep.subr.mxu0 0.0
    %1532 = vmatpush1.msra.mxu0 %v1469
    %1533 = vmatprep.subr.mxu0 0.0
    %1534 = vmatpush2.msra.mxu0 %v1500
    %1535 = vmatprep.subr.mxu0 0.0
    %1536 = vmatpush2.msra.mxu0 %v1499
    %1537 = vmatprep.subr.mxu0 0.0
    %1538 = vmatpush2.msra.mxu0 %v1498
    %1539 = vmatprep.subr.mxu0 0.0
    %1540 = vmatpush2.msra.mxu0 %v1497
    %1541 = vmatprep.subr.mxu0 0.0
    %1542 = vmatpush2.msra.mxu0 %v1496
    %1543 = vmatprep.subr.mxu0 0.0
    %1544 = vmatpush2.msra.mxu0 %v1495
    %1545 = vmatprep.subr.mxu0 0.0
    %1546 = vmatpush2.msra.mxu0 %v1494
    %1547 = vmatprep.subr.mxu0 0.0
    %1548 = vmatpush2.msra.mxu0 %v1493
    %1549 = vmatprep.subr.mxu0 0.0
    %1550 = vmatpush2.msra.mxu0 %v1492
    %1551 = vmatprep.subr.mxu0 0.0
    %1552 = vmatpush2.msra.mxu0 %v1491
    %1553 = vmatprep.subr.mxu0 0.0
    %1554 = vmatpush2.msra.mxu0 %v1490
    %1555 = vmatprep.subr.mxu0 0.0
    %1556 = vmatpush2.msra.mxu0 %v1489
    %1557 = vmatprep.subr.mxu0 0.0
    %1558 = vmatpush2.msra.mxu0 %v1488
    %1559 = vmatprep.subr.mxu0 0.0
    %1560 = vmatpush2.msra.mxu0 %v1487
    %1561 = vmatprep.subr.mxu0 0.0
    %1562 = vmatpush2.msra.mxu0 %v1486
    %1563 = vmatprep.subr.mxu0 0.0
    %1564 = vmatpush2.msra.mxu0 %v1485
    %1565 = vmatprep.mubr.f32.mxu0 %v1440
    %1566 = vmatmul.mubr.f32.gmra.mxu0 %v1438
    %v1567 = vpop.f32.mrf.mxu0
    %v1568 = vadd.f32 0.0, %v1567
    %v1569 = vpop.f32.mrf.mxu0
    %1570 = vmatprep.mubr.f32.mxu0 %v1444
    %1571 = vmatmul.mubr.f32.gmra.mxu0 %v1442
    %v1572 = vpop.f32.mrf.mxu0
    %v1573 = vadd.f32 0.0, %v1572
    %v1574 = vpop.f32.mrf.mxu0
    %1575 = vmatprep.mubr.f32.mxu0 %v1448
    %1576 = vmatmul.mubr.f32.gmra.mxu0 %v1446
    %v1577 = vpop.f32.mrf.mxu0
    %v1578 = vadd.f32 0.0, %v1577
    %v1579 = vpop.f32.mrf.mxu0
    %1580 = vmatprep.mubr.f32.mxu0 %v1452
    %1581 = vmatmul.mubr.f32.gmra.mxu0 %v1450
    %v1582 = vpop.f32.mrf.mxu0
    %v1583 = vadd.f32 0.0, %v1582
    %v1584 = vpop.f32.mrf.mxu0
    %1585 = vmatprep.mubr.f32.mxu0 %v1456
    %1586 = vmatmul.mubr.f32.gmra.mxu0 %v1454
    %v1587 = vpop.f32.mrf.mxu0
    %v1588 = vadd.f32 0.0, %v1587
    %v1589 = vpop.f32.mrf.mxu0
    %1590 = vmatprep.mubr.f32.mxu0 %v1460
    %1591 = vmatmul.mubr.f32.gmra.mxu0 %v1458
    %v1592 = vpop.f32.mrf.mxu0
    %v1593 = vadd.f32 0.0, %v1592
    %v1594 = vpop.f32.mrf.mxu0
    %1595 = vmatprep.mubr.f32.mxu0 %v1464
    %1596 = vmatmul.mubr.f32.gmra.mxu0 %v1462
    %v1597 = vpop.f32.mrf.mxu0
    %v1598 = vadd.f32 0.0, %v1597
    %v1599 = vpop.f32.mrf.mxu0
    %1600 = vmatprep.mubr.f32.mxu0 %v1468
    %1601 = vmatmul.mubr.f32.gmra.mxu0 %v1466
    %v1602 = vpop.f32.mrf.mxu0
    %v1603 = vadd.f32 0.0, %v1602
    %v1604 = vpop.f32.mrf.mxu0
    %1605 = vdwg.mxu0
    %1606 = vmatprep.subr.mxu0 0.0
    %1607 = vmatpush1.msra.mxu0 %v714
    %1608 = vmatprep.subr.mxu0 0.0
    %1609 = vmatpush1.msra.mxu0 %v713
    %1610 = vmatprep.subr.mxu0 0.0
    %1611 = vmatpush1.msra.mxu0 %v712
    %1612 = vmatprep.subr.mxu0 0.0
    %1613 = vmatpush1.msra.mxu0 %v711
    %1614 = vmatprep.subr.mxu0 0.0
    %1615 = vmatpush1.msra.mxu0 %v710
    %1616 = vmatprep.subr.mxu0 0.0
    %1617 = vmatpush1.msra.mxu0 %v709
    %1618 = vmatprep.subr.mxu0 0.0
    %1619 = vmatpush1.msra.mxu0 %v708
    %1620 = vmatprep.subr.mxu0 0.0
    %1621 = vmatpush1.msra.mxu0 %v707
    %1622 = vmatprep.subr.mxu0 0.0
    %1623 = vmatpush1.msra.mxu0 %v706
    %1624 = vmatprep.subr.mxu0 0.0
    %1625 = vmatpush1.msra.mxu0 %v705
    %1626 = vmatprep.subr.mxu0 0.0
    %1627 = vmatpush1.msra.mxu0 %v704
    %1628 = vmatprep.subr.mxu0 0.0
    %1629 = vmatpush1.msra.mxu0 %v703
    %1630 = vmatprep.subr.mxu0 0.0
    %1631 = vmatpush1.msra.mxu0 %v702
    %1632 = vmatprep.subr.mxu0 0.0
    %1633 = vmatpush1.msra.mxu0 %v701
    %1634 = vmatprep.subr.mxu0 0.0
    %1635 = vmatpush1.msra.mxu0 %v700
    %1636 = vmatprep.subr.mxu0 0.0
    %1637 = vmatpush1.msra.mxu0 %v699
    %1638 = vmatprep.subr.mxu0 0.0
    %1639 = vmatpush2.msra.mxu0 %v730
    %1640 = vmatprep.subr.mxu0 0.0
    %1641 = vmatpush2.msra.mxu0 %v729
    %1642 = vmatprep.subr.mxu0 0.0
    %1643 = vmatpush2.msra.mxu0 %v728
    %1644 = vmatprep.subr.mxu0 0.0
    %1645 = vmatpush2.msra.mxu0 %v727
    %1646 = vmatprep.subr.mxu0 0.0
    %1647 = vmatpush2.msra.mxu0 %v726
    %1648 = vmatprep.subr.mxu0 0.0
    %1649 = vmatpush2.msra.mxu0 %v725
    %1650 = vmatprep.subr.mxu0 0.0
    %1651 = vmatpush2.msra.mxu0 %v724
    %1652 = vmatprep.subr.mxu0 0.0
    %1653 = vmatpush2.msra.mxu0 %v723
    %1654 = vmatprep.subr.mxu0 0.0
    %1655 = vmatpush2.msra.mxu0 %v722
    %1656 = vmatprep.subr.mxu0 0.0
    %1657 = vmatpush2.msra.mxu0 %v721
    %1658 = vmatprep.subr.mxu0 0.0
    %1659 = vmatpush2.msra.mxu0 %v720
    %1660 = vmatprep.subr.mxu0 0.0
    %1661 = vmatpush2.msra.mxu0 %v719
    %1662 = vmatprep.subr.mxu0 0.0
    %1663 = vmatpush2.msra.mxu0 %v718
    %1664 = vmatprep.subr.mxu0 0.0
    %1665 = vmatpush2.msra.mxu0 %v717
    %1666 = vmatprep.subr.mxu0 0.0
    %1667 = vmatpush2.msra.mxu0 %v716
    %1668 = vmatprep.subr.mxu0 0.0
    %1669 = vmatpush2.msra.mxu0 %v715
    %1670 = vmatprep.mubr.f32.mxu0 %v1440
    %1671 = vmatmul.mubr.f32.gmra.mxu0 %v1438
    %v1672 = vpop.f32.mrf.mxu0
    %v1673 = vadd.f32 0.0, %v1672
    %v1674 = vpop.f32.mrf.mxu0
    %1675 = vmatprep.mubr.f32.mxu0 %v1444
    %1676 = vmatmul.mubr.f32.gmra.mxu0 %v1442
    %v1677 = vpop.f32.mrf.mxu0
    %v1678 = vadd.f32 0.0, %v1677
    %v1679 = vpop.f32.mrf.mxu0
    %1680 = vmatprep.mubr.f32.mxu0 %v1448
    %1681 = vmatmul.mubr.f32.gmra.mxu0 %v1446
    %v1682 = vpop.f32.mrf.mxu0
    %v1683 = vadd.f32 0.0, %v1682
    %v1684 = vpop.f32.mrf.mxu0
    %1685 = vmatprep.mubr.f32.mxu0 %v1452
    %1686 = vmatmul.mubr.f32.gmra.mxu0 %v1450
    %v1687 = vpop.f32.mrf.mxu0
    %v1688 = vadd.f32 0.0, %v1687
    %v1689 = vpop.f32.mrf.mxu0
    %1690 = vmatprep.mubr.f32.mxu0 %v1456
    %1691 = vmatmul.mubr.f32.gmra.mxu0 %v1454
    %v1692 = vpop.f32.mrf.mxu0
    %v1693 = vadd.f32 0.0, %v1692
    %v1694 = vpop.f32.mrf.mxu0
    %1695 = vmatprep.mubr.f32.mxu0 %v1460
    %1696 = vmatmul.mubr.f32.gmra.mxu0 %v1458
    %v1697 = vpop.f32.mrf.mxu0
    %v1698 = vadd.f32 0.0, %v1697
    %v1699 = vpop.f32.mrf.mxu0
    %1700 = vmatprep.mubr.f32.mxu0 %v1464
    %1701 = vmatmul.mubr.f32.gmra.mxu0 %v1462
    %v1702 = vpop.f32.mrf.mxu0
    %v1703 = vadd.f32 0.0, %v1702
    %v1704 = vpop.f32.mrf.mxu0
    %1705 = vmatprep.mubr.f32.mxu0 %v1468
    %1706 = vmatmul.mubr.f32.gmra.mxu0 %v1466
    %v1707 = vpop.f32.mrf.mxu0
    %v1708 = vadd.f32 0.0, %v1707
    %v1709 = vpop.f32.mrf.mxu0
    %1710 = vdwg.mxu0
    %v1711 = vmax.f32 %v1673, 1e-30
    %v1712 = vmax.f32 %v1678, 1e-30
    %v1713 = vmax.f32 %v1683, 1e-30
    %v1714 = vmax.f32 %v1688, 1e-30
    %v1715 = vmax.f32 %v1693, 1e-30
    %v1716 = vmax.f32 %v1698, 1e-30
    %v1717 = vmax.f32 %v1703, 1e-30
    %v1718 = vmax.f32 %v1708, 1e-30
    %v1719 = vrcp.pop %v1711
    %v1720 = vrcp.pop %v1712
    %v1721 = vrcp.pop %v1713
    %v1722 = vrcp.pop %v1714
    %v1723 = vrcp.pop %v1715
    %v1724 = vrcp.pop %v1716
    %v1725 = vrcp.pop %v1717
    %v1726 = vrcp.pop %v1718
    %v1727 = vmul.f32 %v1568, %v1719
    %v1728 = vmul.f32 %v1573, %v1720
    %v1729 = vmul.f32 %v1578, %v1721
    %v1730 = vmul.f32 %v1583, %v1722
    %v1731 = vmul.f32 %v1588, %v1723
    %v1732 = vmul.f32 %v1593, %v1724
    %v1733 = vmul.f32 %v1598, %v1725
    %v1734 = vmul.f32 %v1603, %v1726
    %s1735 = scalar_lea.vmem %s4, 256
    %v1736 = vld [vmem:[%s1735] sm:$0xff]
    %v1737 = vld [vmem:[%s1735 + $0x8] sm:$0xff]
    %v1738 = vld [vmem:[%s1735 + $0x10] sm:$0xff]
    %v1739 = vld [vmem:[%s1735 + $0x18] sm:$0xff]
    %v1740 = vld [vmem:[%s1735 + $0x20] sm:$0xff]
    %v1741 = vld [vmem:[%s1735 + $0x28] sm:$0xff]
    %v1742 = vld [vmem:[%s1735 + $0x30] sm:$0xff]
    %v1743 = vld [vmem:[%s1735 + $0x38] sm:$0xff]
    %v1744 = vld [vmem:[%s1735 + $0x40] sm:$0xff]
    %v1745 = vld [vmem:[%s1735 + $0x48] sm:$0xff]
    %v1746 = vld [vmem:[%s1735 + $0x50] sm:$0xff]
    %v1747 = vld [vmem:[%s1735 + $0x58] sm:$0xff]
    %v1748 = vld [vmem:[%s1735 + $0x60] sm:$0xff]
    %v1749 = vld [vmem:[%s1735 + $0x68] sm:$0xff]
    %v1750 = vld [vmem:[%s1735 + $0x70] sm:$0xff]
    %v1751 = vld [vmem:[%s1735 + $0x78] sm:$0xff]
    %v1752 = vld [vmem:[%s1735 + $0x80] sm:$0xff]
    %v1753 = vld [vmem:[%s1735 + $0x88] sm:$0xff]
    %v1754 = vld [vmem:[%s1735 + $0x90] sm:$0xff]
    %v1755 = vld [vmem:[%s1735 + $0x98] sm:$0xff]
    %v1756 = vld [vmem:[%s1735 + $0xa0] sm:$0xff]
    %v1757 = vld [vmem:[%s1735 + $0xa8] sm:$0xff]
    %v1758 = vld [vmem:[%s1735 + $0xb0] sm:$0xff]
    %v1759 = vld [vmem:[%s1735 + $0xb8] sm:$0xff]
    %v1760 = vld [vmem:[%s1735 + $0xc0] sm:$0xff]
    %v1761 = vld [vmem:[%s1735 + $0xc8] sm:$0xff]
    %v1762 = vld [vmem:[%s1735 + $0xd0] sm:$0xff]
    %v1763 = vld [vmem:[%s1735 + $0xd8] sm:$0xff]
    %v1764 = vld [vmem:[%s1735 + $0xe0] sm:$0xff]
    %v1765 = vld [vmem:[%s1735 + $0xe8] sm:$0xff]
    %v1766 = vld [vmem:[%s1735 + $0xf0] sm:$0xff]
    %v1767 = vld [vmem:[%s1735 + $0xf8] sm:$0xff]
    %1800 = vrot.lane.b32.xlu0 %v1736, 32
    %v1801 = vpop.permute.xlu0 %1800
    %1802 = vrot.lane.b32.xlu0 %v1737, 32
    %v1803 = vpop.permute.xlu0 %1802
    %1804 = vrot.lane.b32.xlu0 %v1738, 32
    %v1805 = vpop.permute.xlu0 %1804
    %1806 = vrot.lane.b32.xlu0 %v1739, 32
    %v1807 = vpop.permute.xlu0 %1806
    %1808 = vrot.lane.b32.xlu0 %v1740, 32
    %v1809 = vpop.permute.xlu0 %1808
    %1810 = vrot.lane.b32.xlu0 %v1741, 32
    %v1811 = vpop.permute.xlu0 %1810
    %1812 = vrot.lane.b32.xlu0 %v1742, 32
    %v1813 = vpop.permute.xlu0 %1812
    %1814 = vrot.lane.b32.xlu0 %v1743, 32
    %v1815 = vpop.permute.xlu0 %1814
    %1816 = vrot.lane.b32.xlu0 %v1744, 32
    %v1817 = vpop.permute.xlu0 %1816
    %1818 = vrot.lane.b32.xlu0 %v1745, 32
    %v1819 = vpop.permute.xlu0 %1818
    %1820 = vrot.lane.b32.xlu0 %v1746, 32
    %v1821 = vpop.permute.xlu0 %1820
    %1822 = vrot.lane.b32.xlu0 %v1747, 32
    %v1823 = vpop.permute.xlu0 %1822
    %1824 = vrot.lane.b32.xlu0 %v1748, 32
    %v1825 = vpop.permute.xlu0 %1824
    %1826 = vrot.lane.b32.xlu0 %v1749, 32
    %v1827 = vpop.permute.xlu0 %1826
    %1828 = vrot.lane.b32.xlu0 %v1750, 32
    %v1829 = vpop.permute.xlu0 %1828
    %1830 = vrot.lane.b32.xlu0 %v1751, 32
    %v1831 = vpop.permute.xlu0 %1830
    %1832 = vrot.lane.b32.xlu0 %v1752, 32
    %v1833 = vpop.permute.xlu0 %1832
    %1834 = vrot.lane.b32.xlu0 %v1753, 32
    %v1835 = vpop.permute.xlu0 %1834
    %1836 = vrot.lane.b32.xlu0 %v1754, 32
    %v1837 = vpop.permute.xlu0 %1836
    %1838 = vrot.lane.b32.xlu0 %v1755, 32
    %v1839 = vpop.permute.xlu0 %1838
    %1840 = vrot.lane.b32.xlu0 %v1756, 32
    %v1841 = vpop.permute.xlu0 %1840
    %1842 = vrot.lane.b32.xlu0 %v1757, 32
    %v1843 = vpop.permute.xlu0 %1842
    %1844 = vrot.lane.b32.xlu0 %v1758, 32
    %v1845 = vpop.permute.xlu0 %1844
    %1846 = vrot.lane.b32.xlu0 %v1759, 32
    %v1847 = vpop.permute.xlu0 %1846
    %1848 = vrot.lane.b32.xlu0 %v1760, 32
    %v1849 = vpop.permute.xlu0 %1848
    %1850 = vrot.lane.b32.xlu0 %v1761, 32
    %v1851 = vpop.permute.xlu0 %1850
    %1852 = vrot.lane.b32.xlu0 %v1762, 32
    %v1853 = vpop.permute.xlu0 %1852
    %1854 = vrot.lane.b32.xlu0 %v1763, 32
    %v1855 = vpop.permute.xlu0 %1854
    %1856 = vrot.lane.b32.xlu0 %v1764, 32
    %v1857 = vpop.permute.xlu0 %1856
    %1858 = vrot.lane.b32.xlu0 %v1765, 32
    %v1859 = vpop.permute.xlu0 %1858
    %1860 = vrot.lane.b32.xlu0 %v1766, 32
    %v1861 = vpop.permute.xlu0 %1860
    %1862 = vrot.lane.b32.xlu0 %v1767, 32
    %v1863 = vpop.permute.xlu0 %1862
    %v1896 = vmul.f32 %v691, %v1801
    %v1897 = vmul.f32 %v692, %v1803
    %v1898 = vmul.f32 %v693, %v1805
    %v1899 = vmul.f32 %v694, %v1807
    %v1900 = vmul.f32 %v695, %v1809
    %v1901 = vmul.f32 %v696, %v1811
    %v1902 = vmul.f32 %v697, %v1813
    %v1903 = vmul.f32 %v698, %v1815
    %v1904 = vmul.f32 %v691, %v1817
    %v1905 = vmul.f32 %v692, %v1819
    %v1906 = vmul.f32 %v693, %v1821
    %v1907 = vmul.f32 %v694, %v1823
    %v1908 = vmul.f32 %v695, %v1825
    %v1909 = vmul.f32 %v696, %v1827
    %v1910 = vmul.f32 %v697, %v1829
    %v1911 = vmul.f32 %v698, %v1831
    %v1912 = vmul.f32 %v691, %v1833
    %v1913 = vmul.f32 %v692, %v1835
    %v1914 = vmul.f32 %v693, %v1837
    %v1915 = vmul.f32 %v694, %v1839
    %v1916 = vmul.f32 %v695, %v1841
    %v1917 = vmul.f32 %v696, %v1843
    %v1918 = vmul.f32 %v697, %v1845
    %v1919 = vmul.f32 %v698, %v1847
    %v1920 = vmul.f32 %v691, %v1849
    %v1921 = vmul.f32 %v692, %v1851
    %v1922 = vmul.f32 %v693, %v1853
    %v1923 = vmul.f32 %v694, %v1855
    %v1924 = vmul.f32 %v695, %v1857
    %v1925 = vmul.f32 %v696, %v1859
    %v1926 = vmul.f32 %v697, %v1861
    %v1927 = vmul.f32 %v698, %v1863
    %s1928 = scalar_lea.vmem %s5, 256
    %v1929 = vld [vmem:[%s1928] sm:$0xff]
    %v1930 = vld [vmem:[%s1928 + $0x8] sm:$0xff]
    %v1931 = vld [vmem:[%s1928 + $0x10] sm:$0xff]
    %v1932 = vld [vmem:[%s1928 + $0x18] sm:$0xff]
    %v1933 = vld [vmem:[%s1928 + $0x20] sm:$0xff]
    %v1934 = vld [vmem:[%s1928 + $0x28] sm:$0xff]
    %v1935 = vld [vmem:[%s1928 + $0x30] sm:$0xff]
    %v1936 = vld [vmem:[%s1928 + $0x38] sm:$0xff]
    %v1937 = vld [vmem:[%s1928 + $0x40] sm:$0xff]
    %v1938 = vld [vmem:[%s1928 + $0x48] sm:$0xff]
    %v1939 = vld [vmem:[%s1928 + $0x50] sm:$0xff]
    %v1940 = vld [vmem:[%s1928 + $0x58] sm:$0xff]
    %v1941 = vld [vmem:[%s1928 + $0x60] sm:$0xff]
    %v1942 = vld [vmem:[%s1928 + $0x68] sm:$0xff]
    %v1943 = vld [vmem:[%s1928 + $0x70] sm:$0xff]
    %v1944 = vld [vmem:[%s1928 + $0x78] sm:$0xff]
    %v1945 = vld [vmem:[%s1928 + $0x80] sm:$0xff]
    %v1946 = vld [vmem:[%s1928 + $0x88] sm:$0xff]
    %v1947 = vld [vmem:[%s1928 + $0x90] sm:$0xff]
    %v1948 = vld [vmem:[%s1928 + $0x98] sm:$0xff]
    %v1949 = vld [vmem:[%s1928 + $0xa0] sm:$0xff]
    %v1950 = vld [vmem:[%s1928 + $0xa8] sm:$0xff]
    %v1951 = vld [vmem:[%s1928 + $0xb0] sm:$0xff]
    %v1952 = vld [vmem:[%s1928 + $0xb8] sm:$0xff]
    %v1953 = vld [vmem:[%s1928 + $0xc0] sm:$0xff]
    %v1954 = vld [vmem:[%s1928 + $0xc8] sm:$0xff]
    %v1955 = vld [vmem:[%s1928 + $0xd0] sm:$0xff]
    %v1956 = vld [vmem:[%s1928 + $0xd8] sm:$0xff]
    %v1957 = vld [vmem:[%s1928 + $0xe0] sm:$0xff]
    %v1958 = vld [vmem:[%s1928 + $0xe8] sm:$0xff]
    %v1959 = vld [vmem:[%s1928 + $0xf0] sm:$0xff]
    %v1960 = vld [vmem:[%s1928 + $0xf8] sm:$0xff]
    %v1961 = vmul.f32 %v691, %v1929
    %v1962 = vmul.f32 %v692, %v1930
    %v1963 = vmul.f32 %v693, %v1931
    %v1964 = vmul.f32 %v694, %v1932
    %v1965 = vmul.f32 %v695, %v1933
    %v1966 = vmul.f32 %v696, %v1934
    %v1967 = vmul.f32 %v697, %v1935
    %v1968 = vmul.f32 %v698, %v1936
    %v1969 = vmul.f32 %v691, %v1937
    %v1970 = vmul.f32 %v692, %v1938
    %v1971 = vmul.f32 %v693, %v1939
    %v1972 = vmul.f32 %v694, %v1940
    %v1973 = vmul.f32 %v695, %v1941
    %v1974 = vmul.f32 %v696, %v1942
    %v1975 = vmul.f32 %v697, %v1943
    %v1976 = vmul.f32 %v698, %v1944
    %v1977 = vmul.f32 %v691, %v1945
    %v1978 = vmul.f32 %v692, %v1946
    %v1979 = vmul.f32 %v693, %v1947
    %v1980 = vmul.f32 %v694, %v1948
    %v1981 = vmul.f32 %v695, %v1949
    %v1982 = vmul.f32 %v696, %v1950
    %v1983 = vmul.f32 %v697, %v1951
    %v1984 = vmul.f32 %v698, %v1952
    %v1985 = vmul.f32 %v691, %v1953
    %v1986 = vmul.f32 %v692, %v1954
    %v1987 = vmul.f32 %v693, %v1955
    %v1988 = vmul.f32 %v694, %v1956
    %v1989 = vmul.f32 %v695, %v1957
    %v1990 = vmul.f32 %v696, %v1958
    %v1991 = vmul.f32 %v697, %v1959
    %v1992 = vmul.f32 %v698, %v1960
    %2025 = vrot.lane.b32.xlu0 %v1961, 32
    %v2026 = vpop.permute.xlu0 %2025
    %2027 = vrot.lane.b32.xlu0 %v1962, 32
    %v2028 = vpop.permute.xlu0 %2027
    %2029 = vrot.lane.b32.xlu0 %v1963, 32
    %v2030 = vpop.permute.xlu0 %2029
    %2031 = vrot.lane.b32.xlu0 %v1964, 32
    %v2032 = vpop.permute.xlu0 %2031
    %2033 = vrot.lane.b32.xlu0 %v1965, 32
    %v2034 = vpop.permute.xlu0 %2033
    %2035 = vrot.lane.b32.xlu0 %v1966, 32
    %v2036 = vpop.permute.xlu0 %2035
    %2037 = vrot.lane.b32.xlu0 %v1967, 32
    %v2038 = vpop.permute.xlu0 %2037
    %2039 = vrot.lane.b32.xlu0 %v1968, 32
    %v2040 = vpop.permute.xlu0 %2039
    %2041 = vrot.lane.b32.xlu0 %v1969, 32
    %v2042 = vpop.permute.xlu0 %2041
    %2043 = vrot.lane.b32.xlu0 %v1970, 32
    %v2044 = vpop.permute.xlu0 %2043
    %2045 = vrot.lane.b32.xlu0 %v1971, 32
    %v2046 = vpop.permute.xlu0 %2045
    %2047 = vrot.lane.b32.xlu0 %v1972, 32
    %v2048 = vpop.permute.xlu0 %2047
    %2049 = vrot.lane.b32.xlu0 %v1973, 32
    %v2050 = vpop.permute.xlu0 %2049
    %2051 = vrot.lane.b32.xlu0 %v1974, 32
    %v2052 = vpop.permute.xlu0 %2051
    %2053 = vrot.lane.b32.xlu0 %v1975, 32
    %v2054 = vpop.permute.xlu0 %2053
    %2055 = vrot.lane.b32.xlu0 %v1976, 32
    %v2056 = vpop.permute.xlu0 %2055
    %2057 = vrot.lane.b32.xlu0 %v1977, 32
    %v2058 = vpop.permute.xlu0 %2057
    %2059 = vrot.lane.b32.xlu0 %v1978, 32
    %v2060 = vpop.permute.xlu0 %2059
    %2061 = vrot.lane.b32.xlu0 %v1979, 32
    %v2062 = vpop.permute.xlu0 %2061
    %2063 = vrot.lane.b32.xlu0 %v1980, 32
    %v2064 = vpop.permute.xlu0 %2063
    %2065 = vrot.lane.b32.xlu0 %v1981, 32
    %v2066 = vpop.permute.xlu0 %2065
    %2067 = vrot.lane.b32.xlu0 %v1982, 32
    %v2068 = vpop.permute.xlu0 %2067
    %2069 = vrot.lane.b32.xlu0 %v1983, 32
    %v2070 = vpop.permute.xlu0 %2069
    %2071 = vrot.lane.b32.xlu0 %v1984, 32
    %v2072 = vpop.permute.xlu0 %2071
    %2073 = vrot.lane.b32.xlu0 %v1985, 32
    %v2074 = vpop.permute.xlu0 %2073
    %2075 = vrot.lane.b32.xlu0 %v1986, 32
    %v2076 = vpop.permute.xlu0 %2075
    %2077 = vrot.lane.b32.xlu0 %v1987, 32
    %v2078 = vpop.permute.xlu0 %2077
    %2079 = vrot.lane.b32.xlu0 %v1988, 32
    %v2080 = vpop.permute.xlu0 %2079
    %2081 = vrot.lane.b32.xlu0 %v1989, 32
    %v2082 = vpop.permute.xlu0 %2081
    %2083 = vrot.lane.b32.xlu0 %v1990, 32
    %v2084 = vpop.permute.xlu0 %2083
    %2085 = vrot.lane.b32.xlu0 %v1991, 32
    %v2086 = vpop.permute.xlu0 %2085
    %2087 = vrot.lane.b32.xlu0 %v1992, 32
    %v2088 = vpop.permute.xlu0 %2087
    %v2121 = vadd.f32 %v1896, %v2026
    %v2122 = vadd.f32 %v1897, %v2028
    %v2123 = vadd.f32 %v1898, %v2030
    %v2124 = vadd.f32 %v1899, %v2032
    %v2125 = vadd.f32 %v1900, %v2034
    %v2126 = vadd.f32 %v1901, %v2036
    %v2127 = vadd.f32 %v1902, %v2038
    %v2128 = vadd.f32 %v1903, %v2040
    %v2129 = vadd.f32 %v1904, %v2042
    %v2130 = vadd.f32 %v1905, %v2044
    %v2131 = vadd.f32 %v1906, %v2046
    %v2132 = vadd.f32 %v1907, %v2048
    %v2133 = vadd.f32 %v1908, %v2050
    %v2134 = vadd.f32 %v1909, %v2052
    %v2135 = vadd.f32 %v1910, %v2054
    %v2136 = vadd.f32 %v1911, %v2056
    %v2137 = vadd.f32 %v1912, %v2058
    %v2138 = vadd.f32 %v1913, %v2060
    %v2139 = vadd.f32 %v1914, %v2062
    %v2140 = vadd.f32 %v1915, %v2064
    %v2141 = vadd.f32 %v1916, %v2066
    %v2142 = vadd.f32 %v1917, %v2068
    %v2143 = vadd.f32 %v1918, %v2070
    %v2144 = vadd.f32 %v1919, %v2072
    %v2145 = vadd.f32 %v1920, %v2074
    %v2146 = vadd.f32 %v1921, %v2076
    %v2147 = vadd.f32 %v1922, %v2078
    %v2148 = vadd.f32 %v1923, %v2080
    %v2149 = vadd.f32 %v1924, %v2082
    %v2150 = vadd.f32 %v1925, %v2084
    %v2151 = vadd.f32 %v1926, %v2086
    %v2152 = vadd.f32 %v1927, %v2088
    %s2153 = scalar_lea.vmem [#allocation5], 128
    %v2154 = vld [vmem:[%s2153] sm:$0xff]
    %v2155 = vld [vmem:[%s2153 + $0x8] sm:$0xff]
    %v2156 = vld [vmem:[%s2153 + $0x10] sm:$0xff]
    %v2157 = vld [vmem:[%s2153 + $0x18] sm:$0xff]
    %v2158 = vld [vmem:[%s2153 + $0x20] sm:$0xff]
    %v2159 = vld [vmem:[%s2153 + $0x28] sm:$0xff]
    %v2160 = vld [vmem:[%s2153 + $0x30] sm:$0xff]
    %v2161 = vld [vmem:[%s2153 + $0x38] sm:$0xff]
    %v2162 = vld [vmem:[%s2153 + $0x40] sm:$0xff]
    %v2163 = vld [vmem:[%s2153 + $0x48] sm:$0xff]
    %v2164 = vld [vmem:[%s2153 + $0x50] sm:$0xff]
    %v2165 = vld [vmem:[%s2153 + $0x58] sm:$0xff]
    %v2166 = vld [vmem:[%s2153 + $0x60] sm:$0xff]
    %v2167 = vld [vmem:[%s2153 + $0x68] sm:$0xff]
    %v2168 = vld [vmem:[%s2153 + $0x70] sm:$0xff]
    %v2169 = vld [vmem:[%s2153 + $0x78] sm:$0xff]
    %2170 = vrot.lane.b32.xlu0 %v667, 96
    %v2171 = vpop.permute.xlu0 %2170
    %2172 = vrot.lane.b32.xlu0 %v668, 96
    %v2173 = vpop.permute.xlu0 %2172
    %2174 = vrot.lane.b32.xlu0 %v669, 96
    %v2175 = vpop.permute.xlu0 %2174
    %2176 = vrot.lane.b32.xlu0 %v670, 96
    %v2177 = vpop.permute.xlu0 %2176
    %2178 = vrot.lane.b32.xlu0 %v671, 96
    %v2179 = vpop.permute.xlu0 %2178
    %2180 = vrot.lane.b32.xlu0 %v672, 96
    %v2181 = vpop.permute.xlu0 %2180
    %2182 = vrot.lane.b32.xlu0 %v673, 96
    %v2183 = vpop.permute.xlu0 %2182
    %2184 = vrot.lane.b32.xlu0 %v674, 96
    %v2185 = vpop.permute.xlu0 %2184
    %2218 = vrot.lane.b32.xlu0 %v2121, 96
    %v2219 = vpop.permute.xlu0 %2218
    %2220 = vrot.lane.b32.xlu0 %v2122, 96
    %v2221 = vpop.permute.xlu0 %2220
    %2222 = vrot.lane.b32.xlu0 %v2123, 96
    %v2223 = vpop.permute.xlu0 %2222
    %2224 = vrot.lane.b32.xlu0 %v2124, 96
    %v2225 = vpop.permute.xlu0 %2224
    %2226 = vrot.lane.b32.xlu0 %v2125, 96
    %v2227 = vpop.permute.xlu0 %2226
    %2228 = vrot.lane.b32.xlu0 %v2126, 96
    %v2229 = vpop.permute.xlu0 %2228
    %2230 = vrot.lane.b32.xlu0 %v2127, 96
    %v2231 = vpop.permute.xlu0 %2230
    %2232 = vrot.lane.b32.xlu0 %v2128, 96
    %v2233 = vpop.permute.xlu0 %2232
    %2234 = vrot.lane.b32.xlu0 %v2129, 96
    %v2235 = vpop.permute.xlu0 %2234
    %2236 = vrot.lane.b32.xlu0 %v2130, 96
    %v2237 = vpop.permute.xlu0 %2236
    %2238 = vrot.lane.b32.xlu0 %v2131, 96
    %v2239 = vpop.permute.xlu0 %2238
    %2240 = vrot.lane.b32.xlu0 %v2132, 96
    %v2241 = vpop.permute.xlu0 %2240
    %2242 = vrot.lane.b32.xlu0 %v2133, 96
    %v2243 = vpop.permute.xlu0 %2242
    %2244 = vrot.lane.b32.xlu0 %v2134, 96
    %v2245 = vpop.permute.xlu0 %2244
    %2246 = vrot.lane.b32.xlu0 %v2135, 96
    %v2247 = vpop.permute.xlu0 %2246
    %2248 = vrot.lane.b32.xlu0 %v2136, 96
    %v2249 = vpop.permute.xlu0 %2248
    %2250 = vrot.lane.b32.xlu0 %v2137, 96
    %v2251 = vpop.permute.xlu0 %2250
    %2252 = vrot.lane.b32.xlu0 %v2138, 96
    %v2253 = vpop.permute.xlu0 %2252
    %2254 = vrot.lane.b32.xlu0 %v2139, 96
    %v2255 = vpop.permute.xlu0 %2254
    %2256 = vrot.lane.b32.xlu0 %v2140, 96
    %v2257 = vpop.permute.xlu0 %2256
    %2258 = vrot.lane.b32.xlu0 %v2141, 96
    %v2259 = vpop.permute.xlu0 %2258
    %2260 = vrot.lane.b32.xlu0 %v2142, 96
    %v2261 = vpop.permute.xlu0 %2260
    %2262 = vrot.lane.b32.xlu0 %v2143, 96
    %v2263 = vpop.permute.xlu0 %2262
    %2264 = vrot.lane.b32.xlu0 %v2144, 96
    %v2265 = vpop.permute.xlu0 %2264
    %2266 = vrot.lane.b32.xlu0 %v2145, 96
    %v2267 = vpop.permute.xlu0 %2266
    %2268 = vrot.lane.b32.xlu0 %v2146, 96
    %v2269 = vpop.permute.xlu0 %2268
    %2270 = vrot.lane.b32.xlu0 %v2147, 96
    %v2271 = vpop.permute.xlu0 %2270
    %2272 = vrot.lane.b32.xlu0 %v2148, 96
    %v2273 = vpop.permute.xlu0 %2272
    %2274 = vrot.lane.b32.xlu0 %v2149, 96
    %v2275 = vpop.permute.xlu0 %2274
    %2276 = vrot.lane.b32.xlu0 %v2150, 96
    %v2277 = vpop.permute.xlu0 %2276
    %2278 = vrot.lane.b32.xlu0 %v2151, 96
    %v2279 = vpop.permute.xlu0 %2278
    %2280 = vrot.lane.b32.xlu0 %v2152, 96
    %v2281 = vpop.permute.xlu0 %2280
    %v2282 = vsel %vm1163, %v2171, 0
    %v2284 = vsel %vm1163, %v2173, 0
    %v2286 = vsel %vm1163, %v2175, 0
    %v2288 = vsel %vm1163, %v2177, 0
    %v2290 = vsel %vm1163, %v2179, 0
    %v2292 = vsel %vm1163, %v2181, 0
    %v2294 = vsel %vm1163, %v2183, 0
    %v2296 = vsel %vm1163, %v2185, 0
    %v2298 = vsel %vm1163, %v2219, 0
    %v2300 = vsel %vm1163, %v2221, 0
    %v2302 = vsel %vm1163, %v2223, 0
    %v2304 = vsel %vm1163, %v2225, 0
    %v2306 = vsel %vm1163, %v2227, 0
    %v2308 = vsel %vm1163, %v2229, 0
    %v2310 = vsel %vm1163, %v2231, 0
    %v2312 = vsel %vm1163, %v2233, 0
    %v2314 = vsel %vm1163, %v2235, 0
    %v2316 = vsel %vm1163, %v2237, 0
    %v2318 = vsel %vm1163, %v2239, 0
    %v2320 = vsel %vm1163, %v2241, 0
    %v2322 = vsel %vm1163, %v2243, 0
    %v2324 = vsel %vm1163, %v2245, 0
    %v2326 = vsel %vm1163, %v2247, 0
    %v2328 = vsel %vm1163, %v2249, 0
    %v2330 = vsel %vm1163, %v2251, 0
    %v2332 = vsel %vm1163, %v2253, 0
    %v2334 = vsel %vm1163, %v2255, 0
    %v2336 = vsel %vm1163, %v2257, 0
    %v2338 = vsel %vm1163, %v2259, 0
    %v2340 = vsel %vm1163, %v2261, 0
    %v2342 = vsel %vm1163, %v2263, 0
    %v2344 = vsel %vm1163, %v2265, 0
    %v2346 = vsel %vm1163, %v2267, 0
    %v2348 = vsel %vm1163, %v2269, 0
    %v2350 = vsel %vm1163, %v2271, 0
    %v2352 = vsel %vm1163, %v2273, 0
    %v2354 = vsel %vm1163, %v2275, 0
    %v2356 = vsel %vm1163, %v2277, 0
    %v2358 = vsel %vm1163, %v2279, 0
    %v2360 = vsel %vm1163, %v2281, 0
    %2362 = vmatprep.subr.mxu0 0.0
    %2363 = vmatpush1.xpose.msra.mxu0 %v2328
    %2364 = vmatprep.subr.mxu0 0.0
    %2365 = vmatpush1.xpose.msra.mxu0 %v2326
    %2366 = vmatprep.subr.mxu0 0.0
    %2367 = vmatpush1.xpose.msra.mxu0 %v2324
    %2368 = vmatprep.subr.mxu0 0.0
    %2369 = vmatpush1.xpose.msra.mxu0 %v2322
    %2370 = vmatprep.subr.mxu0 0.0
    %2371 = vmatpush1.xpose.msra.mxu0 %v2320
    %2372 = vmatprep.subr.mxu0 0.0
    %2373 = vmatpush1.xpose.msra.mxu0 %v2318
    %2374 = vmatprep.subr.mxu0 0.0
    %2375 = vmatpush1.xpose.msra.mxu0 %v2316
    %2376 = vmatprep.subr.mxu0 0.0
    %2377 = vmatpush1.xpose.msra.mxu0 %v2314
    %2378 = vmatprep.subr.mxu0 0.0
    %2379 = vmatpush1.xpose.msra.mxu0 %v2312
    %2380 = vmatprep.subr.mxu0 0.0
    %2381 = vmatpush1.xpose.msra.mxu0 %v2310
    %2382 = vmatprep.subr.mxu0 0.0
    %2383 = vmatpush1.xpose.msra.mxu0 %v2308
    %2384 = vmatprep.subr.mxu0 0.0
    %2385 = vmatpush1.xpose.msra.mxu0 %v2306
    %2386 = vmatprep.subr.mxu0 0.0
    %2387 = vmatpush1.xpose.msra.mxu0 %v2304
    %2388 = vmatprep.subr.mxu0 0.0
    %2389 = vmatpush1.xpose.msra.mxu0 %v2302
    %2390 = vmatprep.subr.mxu0 0.0
    %2391 = vmatpush1.xpose.msra.mxu0 %v2300
    %2392 = vmatprep.subr.mxu0 0.0
    %2393 = vmatpush1.xpose.msra.mxu0 %v2298
    %2394 = vmatprep.subr.mxu0 0.0
    %2395 = vmatpush2.xpose.msra.mxu0 %v2360
    %2396 = vmatprep.subr.mxu0 0.0
    %2397 = vmatpush2.xpose.msra.mxu0 %v2358
    %2398 = vmatprep.subr.mxu0 0.0
    %2399 = vmatpush2.xpose.msra.mxu0 %v2356
    %2400 = vmatprep.subr.mxu0 0.0
    %2401 = vmatpush2.xpose.msra.mxu0 %v2354
    %2402 = vmatprep.subr.mxu0 0.0
    %2403 = vmatpush2.xpose.msra.mxu0 %v2352
    %2404 = vmatprep.subr.mxu0 0.0
    %2405 = vmatpush2.xpose.msra.mxu0 %v2350
    %2406 = vmatprep.subr.mxu0 0.0
    %2407 = vmatpush2.xpose.msra.mxu0 %v2348
    %2408 = vmatprep.subr.mxu0 0.0
    %2409 = vmatpush2.xpose.msra.mxu0 %v2346
    %2410 = vmatprep.subr.mxu0 0.0
    %2411 = vmatpush2.xpose.msra.mxu0 %v2344
    %2412 = vmatprep.subr.mxu0 0.0
    %2413 = vmatpush2.xpose.msra.mxu0 %v2342
    %2414 = vmatprep.subr.mxu0 0.0
    %2415 = vmatpush2.xpose.msra.mxu0 %v2340
    %2416 = vmatprep.subr.mxu0 0.0
    %2417 = vmatpush2.xpose.msra.mxu0 %v2338
    %2418 = vmatprep.subr.mxu0 0.0
    %2419 = vmatpush2.xpose.msra.mxu0 %v2336
    %2420 = vmatprep.subr.mxu0 0.0
    %2421 = vmatpush2.xpose.msra.mxu0 %v2334
    %2422 = vmatprep.subr.mxu0 0.0
    %2423 = vmatpush2.xpose.msra.mxu0 %v2332
    %2424 = vmatprep.subr.mxu0 0.0
    %2425 = vmatpush2.xpose.msra.mxu0 %v2330
    %2426 = vmatprep.mubr.f32.mxu0 0.0
    %2427 = vmatmul.mubr.f32.gmra.mxu0 %v2282
    %v2428 = vpop.f32.mrf.mxu0
    %v2429 = vadd.f32 %v2154, %v2428
    %v2430 = vpop.f32.mrf.mxu0
    %v2431 = vadd.f32 %v2155, %v2430
    %2432 = vmatprep.mubr.f32.mxu0 0.0
    %2433 = vmatmul.mubr.f32.gmra.mxu0 %v2284
    %v2434 = vpop.f32.mrf.mxu0
    %v2435 = vadd.f32 %v2156, %v2434
    %v2436 = vpop.f32.mrf.mxu0
    %v2437 = vadd.f32 %v2157, %v2436
    %2438 = vmatprep.mubr.f32.mxu0 0.0
    %2439 = vmatmul.mubr.f32.gmra.mxu0 %v2286
    %v2440 = vpop.f32.mrf.mxu0
    %v2441 = vadd.f32 %v2158, %v2440
    %v2442 = vpop.f32.mrf.mxu0
    %v2443 = vadd.f32 %v2159, %v2442
    %2444 = vmatprep.mubr.f32.mxu0 0.0
    %2445 = vmatmul.mubr.f32.gmra.mxu0 %v2288
    %v2446 = vpop.f32.mrf.mxu0
    %v2447 = vadd.f32 %v2160, %v2446
    %v2448 = vpop.f32.mrf.mxu0
    %v2449 = vadd.f32 %v2161, %v2448
    %2450 = vmatprep.mubr.f32.mxu0 0.0
    %2451 = vmatmul.mubr.f32.gmra.mxu0 %v2290
    %v2452 = vpop.f32.mrf.mxu0
    %v2453 = vadd.f32 %v2162, %v2452
    %v2454 = vpop.f32.mrf.mxu0
    %v2455 = vadd.f32 %v2163, %v2454
    %2456 = vmatprep.mubr.f32.mxu0 0.0
    %2457 = vmatmul.mubr.f32.gmra.mxu0 %v2292
    %v2458 = vpop.f32.mrf.mxu0
    %v2459 = vadd.f32 %v2164, %v2458
    %v2460 = vpop.f32.mrf.mxu0
    %v2461 = vadd.f32 %v2165, %v2460
    %2462 = vmatprep.mubr.f32.mxu0 0.0
    %2463 = vmatmul.mubr.f32.gmra.mxu0 %v2294
    %v2464 = vpop.f32.mrf.mxu0
    %v2465 = vadd.f32 %v2166, %v2464
    %v2466 = vpop.f32.mrf.mxu0
    %v2467 = vadd.f32 %v2167, %v2466
    %2468 = vmatprep.mubr.f32.mxu0 0.0
    %2469 = vmatmul.mubr.f32.gmra.mxu0 %v2296
    %v2470 = vpop.f32.mrf.mxu0
    %v2471 = vadd.f32 %v2168, %v2470
    %v2472 = vpop.f32.mrf.mxu0
    %v2473 = vadd.f32 %v2169, %v2472
    %2474 = vdwg.mxu0
    %v2475 = vmax.f32 %v2429, %v2431
    %2476 = vmax.xlane.f32.xlu0 %v2475
    %v2477 = vpop.xlane.xlu0 %2476
    %v2478 = vmax.f32 %v2435, %v2437
    %2479 = vmax.xlane.f32.xlu0 %v2478
    %v2480 = vpop.xlane.xlu0 %2479
    %v2481 = vmax.f32 %v2441, %v2443
    %2482 = vmax.xlane.f32.xlu0 %v2481
    %v2483 = vpop.xlane.xlu0 %2482
    %v2484 = vmax.f32 %v2447, %v2449
    %2485 = vmax.xlane.f32.xlu0 %v2484
    %v2486 = vpop.xlane.xlu0 %2485
    %v2487 = vmax.f32 %v2453, %v2455
    %2488 = vmax.xlane.f32.xlu0 %v2487
    %v2489 = vpop.xlane.xlu0 %2488
    %v2490 = vmax.f32 %v2459, %v2461
    %2491 = vmax.xlane.f32.xlu0 %v2490
    %v2492 = vpop.xlane.xlu0 %2491
    %v2493 = vmax.f32 %v2465, %v2467
    %2494 = vmax.xlane.f32.xlu0 %v2493
    %v2495 = vpop.xlane.xlu0 %2494
    %v2496 = vmax.f32 %v2471, %v2473
    %2497 = vmax.xlane.f32.xlu0 %v2496
    %v2498 = vpop.xlane.xlu0 %2497
    %v2499 = vsub.f32 %v2429, %v2477
    %v2500 = vsub.f32 %v2431, %v2477
    %v2501 = vsub.f32 %v2435, %v2480
    %v2502 = vsub.f32 %v2437, %v2480
    %v2503 = vsub.f32 %v2441, %v2483
    %v2504 = vsub.f32 %v2443, %v2483
    %v2505 = vsub.f32 %v2447, %v2486
    %v2506 = vsub.f32 %v2449, %v2486
    %v2507 = vsub.f32 %v2453, %v2489
    %v2508 = vsub.f32 %v2455, %v2489
    %v2509 = vsub.f32 %v2459, %v2492
    %v2510 = vsub.f32 %v2461, %v2492
    %v2511 = vsub.f32 %v2465, %v2495
    %v2512 = vsub.f32 %v2467, %v2495
    %v2513 = vsub.f32 %v2471, %v2498
    %v2514 = vsub.f32 %v2473, %v2498
    %v2515 = vmul.f32 %v2499, 1.442695
    %v2516 = vpow.pop %v2515
    %v2517 = vmul.f32 %v2500, 1.442695
    %v2518 = vpow.pop %v2517
    %v2519 = vmul.f32 %v2501, 1.442695
    %v2520 = vpow.pop %v2519
    %v2521 = vmul.f32 %v2502, 1.442695
    %v2522 = vpow.pop %v2521
    %v2523 = vmul.f32 %v2503, 1.442695
    %v2524 = vpow.pop %v2523
    %v2525 = vmul.f32 %v2504, 1.442695
    %v2526 = vpow.pop %v2525
    %v2527 = vmul.f32 %v2505, 1.442695
    %v2528 = vpow.pop %v2527
    %v2529 = vmul.f32 %v2506, 1.442695
    %v2530 = vpow.pop %v2529
    %v2531 = vmul.f32 %v2507, 1.442695
    %v2532 = vpow.pop %v2531
    %v2533 = vmul.f32 %v2508, 1.442695
    %v2534 = vpow.pop %v2533
    %v2535 = vmul.f32 %v2509, 1.442695
    %v2536 = vpow.pop %v2535
    %v2537 = vmul.f32 %v2510, 1.442695
    %v2538 = vpow.pop %v2537
    %v2539 = vmul.f32 %v2511, 1.442695
    %v2540 = vpow.pop %v2539
    %v2541 = vmul.f32 %v2512, 1.442695
    %v2542 = vpow.pop %v2541
    %v2543 = vmul.f32 %v2513, 1.442695
    %v2544 = vpow.pop %v2543
    %v2545 = vmul.f32 %v2514, 1.442695
    %v2546 = vpow.pop %v2545
    %2579 = vrot.lane.b32.xlu0 %v699, 32
    %v2580 = vpop.permute.xlu0 %2579
    %2581 = vrot.lane.b32.xlu0 %v700, 32
    %v2582 = vpop.permute.xlu0 %2581
    %2583 = vrot.lane.b32.xlu0 %v701, 32
    %v2584 = vpop.permute.xlu0 %2583
    %2585 = vrot.lane.b32.xlu0 %v702, 32
    %v2586 = vpop.permute.xlu0 %2585
    %2587 = vrot.lane.b32.xlu0 %v703, 32
    %v2588 = vpop.permute.xlu0 %2587
    %2589 = vrot.lane.b32.xlu0 %v704, 32
    %v2590 = vpop.permute.xlu0 %2589
    %2591 = vrot.lane.b32.xlu0 %v705, 32
    %v2592 = vpop.permute.xlu0 %2591
    %2593 = vrot.lane.b32.xlu0 %v706, 32
    %v2594 = vpop.permute.xlu0 %2593
    %2595 = vrot.lane.b32.xlu0 %v707, 32
    %v2596 = vpop.permute.xlu0 %2595
    %2597 = vrot.lane.b32.xlu0 %v708, 32
    %v2598 = vpop.permute.xlu0 %2597
    %2599 = vrot.lane.b32.xlu0 %v709, 32
    %v2600 = vpop.permute.xlu0 %2599
    %2601 = vrot.lane.b32.xlu0 %v710, 32
    %v2602 = vpop.permute.xlu0 %2601
    %2603 = vrot.lane.b32.xlu0 %v711, 32
    %v2604 = vpop.permute.xlu0 %2603
    %2605 = vrot.lane.b32.xlu0 %v712, 32
    %v2606 = vpop.permute.xlu0 %2605
    %2607 = vrot.lane.b32.xlu0 %v713, 32
    %v2608 = vpop.permute.xlu0 %2607
    %2609 = vrot.lane.b32.xlu0 %v714, 32
    %v2610 = vpop.permute.xlu0 %2609
    %2611 = vrot.lane.b32.xlu0 %v715, 32
    %v2612 = vpop.permute.xlu0 %2611
    %2613 = vrot.lane.b32.xlu0 %v716, 32
    %v2614 = vpop.permute.xlu0 %2613
    %2615 = vrot.lane.b32.xlu0 %v717, 32
    %v2616 = vpop.permute.xlu0 %2615
    %2617 = vrot.lane.b32.xlu0 %v718, 32
    %v2618 = vpop.permute.xlu0 %2617
    %2619 = vrot.lane.b32.xlu0 %v719, 32
    %v2620 = vpop.permute.xlu0 %2619
    %2621 = vrot.lane.b32.xlu0 %v720, 32
    %v2622 = vpop.permute.xlu0 %2621
    %2623 = vrot.lane.b32.xlu0 %v721, 32
    %v2624 = vpop.permute.xlu0 %2623
    %2625 = vrot.lane.b32.xlu0 %v722, 32
    %v2626 = vpop.permute.xlu0 %2625
    %2627 = vrot.lane.b32.xlu0 %v723, 32
    %v2628 = vpop.permute.xlu0 %2627
    %2629 = vrot.lane.b32.xlu0 %v724, 32
    %v2630 = vpop.permute.xlu0 %2629
    %2631 = vrot.lane.b32.xlu0 %v725, 32
    %v2632 = vpop.permute.xlu0 %2631
    %2633 = vrot.lane.b32.xlu0 %v726, 32
    %v2634 = vpop.permute.xlu0 %2633
    %2635 = vrot.lane.b32.xlu0 %v727, 32
    %v2636 = vpop.permute.xlu0 %2635
    %2637 = vrot.lane.b32.xlu0 %v728, 32
    %v2638 = vpop.permute.xlu0 %2637
    %2639 = vrot.lane.b32.xlu0 %v729, 32
    %v2640 = vpop.permute.xlu0 %2639
    %2641 = vrot.lane.b32.xlu0 %v730, 32
    %v2642 = vpop.permute.xlu0 %2641
    %v2675 = vmul.f32 %v371, %v2580
    %v2676 = vmul.f32 %v376, %v2582
    %v2677 = vmul.f32 %v381, %v2584
    %v2678 = vmul.f32 %v386, %v2586
    %v2679 = vmul.f32 %v391, %v2588
    %v2680 = vmul.f32 %v396, %v2590
    %v2681 = vmul.f32 %v401, %v2592
    %v2682 = vmul.f32 %v406, %v2594
    %v2683 = vmul.f32 %v371, %v2596
    %v2684 = vmul.f32 %v376, %v2598
    %v2685 = vmul.f32 %v381, %v2600
    %v2686 = vmul.f32 %v386, %v2602
    %v2687 = vmul.f32 %v391, %v2604
    %v2688 = vmul.f32 %v396, %v2606
    %v2689 = vmul.f32 %v401, %v2608
    %v2690 = vmul.f32 %v406, %v2610
    %v2691 = vmul.f32 %v371, %v2612
    %v2692 = vmul.f32 %v376, %v2614
    %v2693 = vmul.f32 %v381, %v2616
    %v2694 = vmul.f32 %v386, %v2618
    %v2695 = vmul.f32 %v391, %v2620
    %v2696 = vmul.f32 %v396, %v2622
    %v2697 = vmul.f32 %v401, %v2624
    %v2698 = vmul.f32 %v406, %v2626
    %v2699 = vmul.f32 %v371, %v2628
    %v2700 = vmul.f32 %v376, %v2630
    %v2701 = vmul.f32 %v381, %v2632
    %v2702 = vmul.f32 %v386, %v2634
    %v2703 = vmul.f32 %v391, %v2636
    %v2704 = vmul.f32 %v396, %v2638
    %v2705 = vmul.f32 %v401, %v2640
    %v2706 = vmul.f32 %v406, %v2642
    %2739 = vrot.lane.b32.xlu0 %v2675, 96
    %v2740 = vpop.permute.xlu0 %2739
    %2741 = vrot.lane.b32.xlu0 %v2676, 96
    %v2742 = vpop.permute.xlu0 %2741
    %2743 = vrot.lane.b32.xlu0 %v2677, 96
    %v2744 = vpop.permute.xlu0 %2743
    %2745 = vrot.lane.b32.xlu0 %v2678, 96
    %v2746 = vpop.permute.xlu0 %2745
    %2747 = vrot.lane.b32.xlu0 %v2679, 96
    %v2748 = vpop.permute.xlu0 %2747
    %2749 = vrot.lane.b32.xlu0 %v2680, 96
    %v2750 = vpop.permute.xlu0 %2749
    %2751 = vrot.lane.b32.xlu0 %v2681, 96
    %v2752 = vpop.permute.xlu0 %2751
    %2753 = vrot.lane.b32.xlu0 %v2682, 96
    %v2754 = vpop.permute.xlu0 %2753
    %2755 = vrot.lane.b32.xlu0 %v2683, 96
    %v2756 = vpop.permute.xlu0 %2755
    %2757 = vrot.lane.b32.xlu0 %v2684, 96
    %v2758 = vpop.permute.xlu0 %2757
    %2759 = vrot.lane.b32.xlu0 %v2685, 96
    %v2760 = vpop.permute.xlu0 %2759
    %2761 = vrot.lane.b32.xlu0 %v2686, 96
    %v2762 = vpop.permute.xlu0 %2761
    %2763 = vrot.lane.b32.xlu0 %v2687, 96
    %v2764 = vpop.permute.xlu0 %2763
    %2765 = vrot.lane.b32.xlu0 %v2688, 96
    %v2766 = vpop.permute.xlu0 %2765
    %2767 = vrot.lane.b32.xlu0 %v2689, 96
    %v2768 = vpop.permute.xlu0 %2767
    %2769 = vrot.lane.b32.xlu0 %v2690, 96
    %v2770 = vpop.permute.xlu0 %2769
    %2771 = vrot.lane.b32.xlu0 %v2691, 96
    %v2772 = vpop.permute.xlu0 %2771
    %2773 = vrot.lane.b32.xlu0 %v2692, 96
    %v2774 = vpop.permute.xlu0 %2773
    %2775 = vrot.lane.b32.xlu0 %v2693, 96
    %v2776 = vpop.permute.xlu0 %2775
    %2777 = vrot.lane.b32.xlu0 %v2694, 96
    %v2778 = vpop.permute.xlu0 %2777
    %2779 = vrot.lane.b32.xlu0 %v2695, 96
    %v2780 = vpop.permute.xlu0 %2779
    %2781 = vrot.lane.b32.xlu0 %v2696, 96
    %v2782 = vpop.permute.xlu0 %2781
    %2783 = vrot.lane.b32.xlu0 %v2697, 96
    %v2784 = vpop.permute.xlu0 %2783
    %2785 = vrot.lane.b32.xlu0 %v2698, 96
    %v2786 = vpop.permute.xlu0 %2785
    %2787 = vrot.lane.b32.xlu0 %v2699, 96
    %v2788 = vpop.permute.xlu0 %2787
    %2789 = vrot.lane.b32.xlu0 %v2700, 96
    %v2790 = vpop.permute.xlu0 %2789
    %2791 = vrot.lane.b32.xlu0 %v2701, 96
    %v2792 = vpop.permute.xlu0 %2791
    %2793 = vrot.lane.b32.xlu0 %v2702, 96
    %v2794 = vpop.permute.xlu0 %2793
    %2795 = vrot.lane.b32.xlu0 %v2703, 96
    %v2796 = vpop.permute.xlu0 %2795
    %2797 = vrot.lane.b32.xlu0 %v2704, 96
    %v2798 = vpop.permute.xlu0 %2797
    %2799 = vrot.lane.b32.xlu0 %v2705, 96
    %v2800 = vpop.permute.xlu0 %2799
    %2801 = vrot.lane.b32.xlu0 %v2706, 96
    %v2802 = vpop.permute.xlu0 %2801
    %2835 = vmatprep.subr.mxu0 0.0
    %2836 = vmatpush1.msra.mxu0 %v2770
    %2837 = vmatprep.subr.mxu0 0.0
    %2838 = vmatpush1.msra.mxu0 %v2768
    %2839 = vmatprep.subr.mxu0 0.0
    %2840 = vmatpush1.msra.mxu0 %v2766
    %2841 = vmatprep.subr.mxu0 0.0
    %2842 = vmatpush1.msra.mxu0 %v2764
    %2843 = vmatprep.subr.mxu0 0.0
    %2844 = vmatpush1.msra.mxu0 %v2762
    %2845 = vmatprep.subr.mxu0 0.0
    %2846 = vmatpush1.msra.mxu0 %v2760
    %2847 = vmatprep.subr.mxu0 0.0
    %2848 = vmatpush1.msra.mxu0 %v2758
    %2849 = vmatprep.subr.mxu0 0.0
    %2850 = vmatpush1.msra.mxu0 %v2756
    %2851 = vmatprep.subr.mxu0 0.0
    %2852 = vmatpush1.msra.mxu0 %v2754
    %2853 = vmatprep.subr.mxu0 0.0
    %2854 = vmatpush1.msra.mxu0 %v2752
    %2855 = vmatprep.subr.mxu0 0.0
    %2856 = vmatpush1.msra.mxu0 %v2750
    %2857 = vmatprep.subr.mxu0 0.0
    %2858 = vmatpush1.msra.mxu0 %v2748
    %2859 = vmatprep.subr.mxu0 0.0
    %2860 = vmatpush1.msra.mxu0 %v2746
    %2861 = vmatprep.subr.mxu0 0.0
    %2862 = vmatpush1.msra.mxu0 %v2744
    %2863 = vmatprep.subr.mxu0 0.0
    %2864 = vmatpush1.msra.mxu0 %v2742
    %2865 = vmatprep.subr.mxu0 0.0
    %2866 = vmatpush1.msra.mxu0 %v2740
    %2867 = vmatprep.subr.mxu0 0.0
    %2868 = vmatpush2.msra.mxu0 %v2802
    %2869 = vmatprep.subr.mxu0 0.0
    %2870 = vmatpush2.msra.mxu0 %v2800
    %2871 = vmatprep.subr.mxu0 0.0
    %2872 = vmatpush2.msra.mxu0 %v2798
    %2873 = vmatprep.subr.mxu0 0.0
    %2874 = vmatpush2.msra.mxu0 %v2796
    %2875 = vmatprep.subr.mxu0 0.0
    %2876 = vmatpush2.msra.mxu0 %v2794
    %2877 = vmatprep.subr.mxu0 0.0
    %2878 = vmatpush2.msra.mxu0 %v2792
    %2879 = vmatprep.subr.mxu0 0.0
    %2880 = vmatpush2.msra.mxu0 %v2790
    %2881 = vmatprep.subr.mxu0 0.0
    %2882 = vmatpush2.msra.mxu0 %v2788
    %2883 = vmatprep.subr.mxu0 0.0
    %2884 = vmatpush2.msra.mxu0 %v2786
    %2885 = vmatprep.subr.mxu0 0.0
    %2886 = vmatpush2.msra.mxu0 %v2784
    %2887 = vmatprep.subr.mxu0 0.0
    %2888 = vmatpush2.msra.mxu0 %v2782
    %2889 = vmatprep.subr.mxu0 0.0
    %2890 = vmatpush2.msra.mxu0 %v2780
    %2891 = vmatprep.subr.mxu0 0.0
    %2892 = vmatpush2.msra.mxu0 %v2778
    %2893 = vmatprep.subr.mxu0 0.0
    %2894 = vmatpush2.msra.mxu0 %v2776
    %2895 = vmatprep.subr.mxu0 0.0
    %2896 = vmatpush2.msra.mxu0 %v2774
    %2897 = vmatprep.subr.mxu0 0.0
    %2898 = vmatpush2.msra.mxu0 %v2772
    %2899 = vmatprep.mubr.f32.mxu0 %v2518
    %2900 = vmatmul.mubr.f32.gmra.mxu0 %v2516
    %v2901 = vpop.f32.mrf.mxu0
    %v2902 = vadd.f32 0.0, %v2901
    %v2903 = vpop.f32.mrf.mxu0
    %2904 = vmatprep.mubr.f32.mxu0 %v2522
    %2905 = vmatmul.mubr.f32.gmra.mxu0 %v2520
    %v2906 = vpop.f32.mrf.mxu0
    %v2907 = vadd.f32 0.0, %v2906
    %v2908 = vpop.f32.mrf.mxu0
    %2909 = vmatprep.mubr.f32.mxu0 %v2526
    %2910 = vmatmul.mubr.f32.gmra.mxu0 %v2524
    %v2911 = vpop.f32.mrf.mxu0
    %v2912 = vadd.f32 0.0, %v2911
    %v2913 = vpop.f32.mrf.mxu0
    %2914 = vmatprep.mubr.f32.mxu0 %v2530
    %2915 = vmatmul.mubr.f32.gmra.mxu0 %v2528
    %v2916 = vpop.f32.mrf.mxu0
    %v2917 = vadd.f32 0.0, %v2916
    %v2918 = vpop.f32.mrf.mxu0
    %2919 = vmatprep.mubr.f32.mxu0 %v2534
    %2920 = vmatmul.mubr.f32.gmra.mxu0 %v2532
    %v2921 = vpop.f32.mrf.mxu0
    %v2922 = vadd.f32 0.0, %v2921
    %v2923 = vpop.f32.mrf.mxu0
    %2924 = vmatprep.mubr.f32.mxu0 %v2538
    %2925 = vmatmul.mubr.f32.gmra.mxu0 %v2536
    %v2926 = vpop.f32.mrf.mxu0
    %v2927 = vadd.f32 0.0, %v2926
    %v2928 = vpop.f32.mrf.mxu0
    %2929 = vmatprep.mubr.f32.mxu0 %v2542
    %2930 = vmatmul.mubr.f32.gmra.mxu0 %v2540
    %v2931 = vpop.f32.mrf.mxu0
    %v2932 = vadd.f32 0.0, %v2931
    %v2933 = vpop.f32.mrf.mxu0
    %2934 = vmatprep.mubr.f32.mxu0 %v2546
    %2935 = vmatmul.mubr.f32.gmra.mxu0 %v2544
    %v2936 = vpop.f32.mrf.mxu0
    %v2937 = vadd.f32 0.0, %v2936
    %v2938 = vpop.f32.mrf.mxu0
    %2939 = vdwg.mxu0
    %2940 = vmatprep.subr.mxu0 0.0
    %2941 = vmatpush1.msra.mxu0 %v714
    %2942 = vmatprep.subr.mxu0 0.0
    %2943 = vmatpush1.msra.mxu0 %v713
    %2944 = vmatprep.subr.mxu0 0.0
    %2945 = vmatpush1.msra.mxu0 %v712
    %2946 = vmatprep.subr.mxu0 0.0
    %2947 = vmatpush1.msra.mxu0 %v711
    %2948 = vmatprep.subr.mxu0 0.0
    %2949 = vmatpush1.msra.mxu0 %v710
    %2950 = vmatprep.subr.mxu0 0.0
    %2951 = vmatpush1.msra.mxu0 %v709
    %2952 = vmatprep.subr.mxu0 0.0
    %2953 = vmatpush1.msra.mxu0 %v708
    %2954 = vmatprep.subr.mxu0 0.0
    %2955 = vmatpush1.msra.mxu0 %v707
    %2956 = vmatprep.subr.mxu0 0.0
    %2957 = vmatpush1.msra.mxu0 %v706
    %2958 = vmatprep.subr.mxu0 0.0
    %2959 = vmatpush1.msra.mxu0 %v705
    %2960 = vmatprep.subr.mxu0 0.0
    %2961 = vmatpush1.msra.mxu0 %v704
    %2962 = vmatprep.subr.mxu0 0.0
    %2963 = vmatpush1.msra.mxu0 %v703
    %2964 = vmatprep.subr.mxu0 0.0
    %2965 = vmatpush1.msra.mxu0 %v702
    %2966 = vmatprep.subr.mxu0 0.0
    %2967 = vmatpush1.msra.mxu0 %v701
    %2968 = vmatprep.subr.mxu0 0.0
    %2969 = vmatpush1.msra.mxu0 %v700
    %2970 = vmatprep.subr.mxu0 0.0
    %2971 = vmatpush1.msra.mxu0 %v699
    %2972 = vmatprep.subr.mxu0 0.0
    %2973 = vmatpush2.msra.mxu0 %v730
    %2974 = vmatprep.subr.mxu0 0.0
    %2975 = vmatpush2.msra.mxu0 %v729
    %2976 = vmatprep.subr.mxu0 0.0
    %2977 = vmatpush2.msra.mxu0 %v728
    %2978 = vmatprep.subr.mxu0 0.0
    %2979 = vmatpush2.msra.mxu0 %v727
    %2980 = vmatprep.subr.mxu0 0.0
    %2981 = vmatpush2.msra.mxu0 %v726
    %2982 = vmatprep.subr.mxu0 0.0
    %2983 = vmatpush2.msra.mxu0 %v725
    %2984 = vmatprep.subr.mxu0 0.0
    %2985 = vmatpush2.msra.mxu0 %v724
    %2986 = vmatprep.subr.mxu0 0.0
    %2987 = vmatpush2.msra.mxu0 %v723
    %2988 = vmatprep.subr.mxu0 0.0
    %2989 = vmatpush2.msra.mxu0 %v722
    %2990 = vmatprep.subr.mxu0 0.0
    %2991 = vmatpush2.msra.mxu0 %v721
    %2992 = vmatprep.subr.mxu0 0.0
    %2993 = vmatpush2.msra.mxu0 %v720
    %2994 = vmatprep.subr.mxu0 0.0
    %2995 = vmatpush2.msra.mxu0 %v719
    %2996 = vmatprep.subr.mxu0 0.0
    %2997 = vmatpush2.msra.mxu0 %v718
    %2998 = vmatprep.subr.mxu0 0.0
    %2999 = vmatpush2.msra.mxu0 %v717
    %3000 = vmatprep.subr.mxu0 0.0
    %3001 = vmatpush2.msra.mxu0 %v716
    %3002 = vmatprep.subr.mxu0 0.0
    %3003 = vmatpush2.msra.mxu0 %v715
    %3004 = vmatprep.mubr.f32.mxu0 %v2518
    %3005 = vmatmul.mubr.f32.gmra.mxu0 %v2516
    %v3006 = vpop.f32.mrf.mxu0
    %v3007 = vadd.f32 0.0, %v3006
    %v3008 = vpop.f32.mrf.mxu0
    %3009 = vmatprep.mubr.f32.mxu0 %v2522
    %3010 = vmatmul.mubr.f32.gmra.mxu0 %v2520
    %v3011 = vpop.f32.mrf.mxu0
    %v3012 = vadd.f32 0.0, %v3011
    %v3013 = vpop.f32.mrf.mxu0
    %3014 = vmatprep.mubr.f32.mxu0 %v2526
    %3015 = vmatmul.mubr.f32.gmra.mxu0 %v2524
    %v3016 = vpop.f32.mrf.mxu0
    %v3017 = vadd.f32 0.0, %v3016
    %v3018 = vpop.f32.mrf.mxu0
    %3019 = vmatprep.mubr.f32.mxu0 %v2530
    %3020 = vmatmul.mubr.f32.gmra.mxu0 %v2528
    %v3021 = vpop.f32.mrf.mxu0
    %v3022 = vadd.f32 0.0, %v3021
    %v3023 = vpop.f32.mrf.mxu0
    %3024 = vmatprep.mubr.f32.mxu0 %v2534
    %3025 = vmatmul.mubr.f32.gmra.mxu0 %v2532
    %v3026 = vpop.f32.mrf.mxu0
    %v3027 = vadd.f32 0.0, %v3026
    %v3028 = vpop.f32.mrf.mxu0
    %3029 = vmatprep.mubr.f32.mxu0 %v2538
    %3030 = vmatmul.mubr.f32.gmra.mxu0 %v2536
    %v3031 = vpop.f32.mrf.mxu0
    %v3032 = vadd.f32 0.0, %v3031
    %v3033 = vpop.f32.mrf.mxu0
    %3034 = vmatprep.mubr.f32.mxu0 %v2542
    %3035 = vmatmul.mubr.f32.gmra.mxu0 %v2540
    %v3036 = vpop.f32.mrf.mxu0
    %v3037 = vadd.f32 0.0, %v3036
    %v3038 = vpop.f32.mrf.mxu0
    %3039 = vmatprep.mubr.f32.mxu0 %v2546
    %3040 = vmatmul.mubr.f32.gmra.mxu0 %v2544
    %v3041 = vpop.f32.mrf.mxu0
    %v3042 = vadd.f32 0.0, %v3041
    %v3043 = vpop.f32.mrf.mxu0
    %3044 = vdwg.mxu0
    %v3045 = vmax.f32 %v3007, 1e-30
    %v3046 = vmax.f32 %v3012, 1e-30
    %v3047 = vmax.f32 %v3017, 1e-30
    %v3048 = vmax.f32 %v3022, 1e-30
    %v3049 = vmax.f32 %v3027, 1e-30
    %v3050 = vmax.f32 %v3032, 1e-30
    %v3051 = vmax.f32 %v3037, 1e-30
    %v3052 = vmax.f32 %v3042, 1e-30
    %v3053 = vrcp.pop %v3045
    %v3054 = vrcp.pop %v3046
    %v3055 = vrcp.pop %v3047
    %v3056 = vrcp.pop %v3048
    %v3057 = vrcp.pop %v3049
    %v3058 = vrcp.pop %v3050
    %v3059 = vrcp.pop %v3051
    %v3060 = vrcp.pop %v3052
    %v3061 = vmul.f32 %v2902, %v3053
    %v3062 = vmul.f32 %v2907, %v3054
    %v3063 = vmul.f32 %v2912, %v3055
    %v3064 = vmul.f32 %v2917, %v3056
    %v3065 = vmul.f32 %v2922, %v3057
    %v3066 = vmul.f32 %v2927, %v3058
    %v3067 = vmul.f32 %v2932, %v3059
    %v3068 = vmul.f32 %v2937, %v3060
    %3101 = vrot.lane.b32.xlu0 %v731, 64
    %v3102 = vpop.permute.xlu0 %3101
    %3103 = vrot.lane.b32.xlu0 %v732, 64
    %v3104 = vpop.permute.xlu0 %3103
    %3105 = vrot.lane.b32.xlu0 %v733, 64
    %v3106 = vpop.permute.xlu0 %3105
    %3107 = vrot.lane.b32.xlu0 %v734, 64
    %v3108 = vpop.permute.xlu0 %3107
    %3109 = vrot.lane.b32.xlu0 %v735, 64
    %v3110 = vpop.permute.xlu0 %3109
    %3111 = vrot.lane.b32.xlu0 %v736, 64
    %v3112 = vpop.permute.xlu0 %3111
    %3113 = vrot.lane.b32.xlu0 %v737, 64
    %v3114 = vpop.permute.xlu0 %3113
    %3115 = vrot.lane.b32.xlu0 %v738, 64
    %v3116 = vpop.permute.xlu0 %3115
    %3117 = vrot.lane.b32.xlu0 %v739, 64
    %v3118 = vpop.permute.xlu0 %3117
    %3119 = vrot.lane.b32.xlu0 %v740, 64
    %v3120 = vpop.permute.xlu0 %3119
    %3121 = vrot.lane.b32.xlu0 %v741, 64
    %v3122 = vpop.permute.xlu0 %3121
    %3123 = vrot.lane.b32.xlu0 %v742, 64
    %v3124 = vpop.permute.xlu0 %3123
    %3125 = vrot.lane.b32.xlu0 %v743, 64
    %v3126 = vpop.permute.xlu0 %3125
    %3127 = vrot.lane.b32.xlu0 %v744, 64
    %v3128 = vpop.permute.xlu0 %3127
    %3129 = vrot.lane.b32.xlu0 %v745, 64
    %v3130 = vpop.permute.xlu0 %3129
    %3131 = vrot.lane.b32.xlu0 %v746, 64
    %v3132 = vpop.permute.xlu0 %3131
    %3133 = vrot.lane.b32.xlu0 %v747, 64
    %v3134 = vpop.permute.xlu0 %3133
    %3135 = vrot.lane.b32.xlu0 %v748, 64
    %v3136 = vpop.permute.xlu0 %3135
    %3137 = vrot.lane.b32.xlu0 %v749, 64
    %v3138 = vpop.permute.xlu0 %3137
    %3139 = vrot.lane.b32.xlu0 %v750, 64
    %v3140 = vpop.permute.xlu0 %3139
    %3141 = vrot.lane.b32.xlu0 %v751, 64
    %v3142 = vpop.permute.xlu0 %3141
    %3143 = vrot.lane.b32.xlu0 %v752, 64
    %v3144 = vpop.permute.xlu0 %3143
    %3145 = vrot.lane.b32.xlu0 %v753, 64
    %v3146 = vpop.permute.xlu0 %3145
    %3147 = vrot.lane.b32.xlu0 %v754, 64
    %v3148 = vpop.permute.xlu0 %3147
    %3149 = vrot.lane.b32.xlu0 %v755, 64
    %v3150 = vpop.permute.xlu0 %3149
    %3151 = vrot.lane.b32.xlu0 %v756, 64
    %v3152 = vpop.permute.xlu0 %3151
    %3153 = vrot.lane.b32.xlu0 %v757, 64
    %v3154 = vpop.permute.xlu0 %3153
    %3155 = vrot.lane.b32.xlu0 %v758, 64
    %v3156 = vpop.permute.xlu0 %3155
    %3157 = vrot.lane.b32.xlu0 %v759, 64
    %v3158 = vpop.permute.xlu0 %3157
    %3159 = vrot.lane.b32.xlu0 %v760, 64
    %v3160 = vpop.permute.xlu0 %3159
    %3161 = vrot.lane.b32.xlu0 %v761, 64
    %v3162 = vpop.permute.xlu0 %3161
    %3163 = vrot.lane.b32.xlu0 %v762, 64
    %v3164 = vpop.permute.xlu0 %3163
    %v3197 = vmul.f32 %v691, %v3102
    %v3198 = vmul.f32 %v692, %v3104
    %v3199 = vmul.f32 %v693, %v3106
    %v3200 = vmul.f32 %v694, %v3108
    %v3201 = vmul.f32 %v695, %v3110
    %v3202 = vmul.f32 %v696, %v3112
    %v3203 = vmul.f32 %v697, %v3114
    %v3204 = vmul.f32 %v698, %v3116
    %v3205 = vmul.f32 %v691, %v3118
    %v3206 = vmul.f32 %v692, %v3120
    %v3207 = vmul.f32 %v693, %v3122
    %v3208 = vmul.f32 %v694, %v3124
    %v3209 = vmul.f32 %v695, %v3126
    %v3210 = vmul.f32 %v696, %v3128
    %v3211 = vmul.f32 %v697, %v3130
    %v3212 = vmul.f32 %v698, %v3132
    %v3213 = vmul.f32 %v691, %v3134
    %v3214 = vmul.f32 %v692, %v3136
    %v3215 = vmul.f32 %v693, %v3138
    %v3216 = vmul.f32 %v694, %v3140
    %v3217 = vmul.f32 %v695, %v3142
    %v3218 = vmul.f32 %v696, %v3144
    %v3219 = vmul.f32 %v697, %v3146
    %v3220 = vmul.f32 %v698, %v3148
    %v3221 = vmul.f32 %v691, %v3150
    %v3222 = vmul.f32 %v692, %v3152
    %v3223 = vmul.f32 %v693, %v3154
    %v3224 = vmul.f32 %v694, %v3156
    %v3225 = vmul.f32 %v695, %v3158
    %v3226 = vmul.f32 %v696, %v3160
    %v3227 = vmul.f32 %v697, %v3162
    %v3228 = vmul.f32 %v698, %v3164
    %3229 = vrot.lane.b32.xlu0 %v795, 96
    %v3230 = vpop.permute.xlu0 %3229
    %3231 = vrot.lane.b32.xlu0 %v796, 96
    %v3232 = vpop.permute.xlu0 %3231
    %3233 = vrot.lane.b32.xlu0 %v797, 96
    %v3234 = vpop.permute.xlu0 %3233
    %3235 = vrot.lane.b32.xlu0 %v798, 96
    %v3236 = vpop.permute.xlu0 %3235
    %3237 = vrot.lane.b32.xlu0 %v799, 96
    %v3238 = vpop.permute.xlu0 %3237
    %3239 = vrot.lane.b32.xlu0 %v800, 96
    %v3240 = vpop.permute.xlu0 %3239
    %3241 = vrot.lane.b32.xlu0 %v801, 96
    %v3242 = vpop.permute.xlu0 %3241
    %3243 = vrot.lane.b32.xlu0 %v802, 96
    %v3244 = vpop.permute.xlu0 %3243
    %3245 = vrot.lane.b32.xlu0 %v803, 96
    %v3246 = vpop.permute.xlu0 %3245
    %3247 = vrot.lane.b32.xlu0 %v804, 96
    %v3248 = vpop.permute.xlu0 %3247
    %3249 = vrot.lane.b32.xlu0 %v805, 96
    %v3250 = vpop.permute.xlu0 %3249
    %3251 = vrot.lane.b32.xlu0 %v806, 96
    %v3252 = vpop.permute.xlu0 %3251
    %3253 = vrot.lane.b32.xlu0 %v807, 96
    %v3254 = vpop.permute.xlu0 %3253
    %3255 = vrot.lane.b32.xlu0 %v808, 96
    %v3256 = vpop.permute.xlu0 %3255
    %3257 = vrot.lane.b32.xlu0 %v809, 96
    %v3258 = vpop.permute.xlu0 %3257
    %3259 = vrot.lane.b32.xlu0 %v810, 96
    %v3260 = vpop.permute.xlu0 %3259
    %3261 = vrot.lane.b32.xlu0 %v811, 96
    %v3262 = vpop.permute.xlu0 %3261
    %3263 = vrot.lane.b32.xlu0 %v812, 96
    %v3264 = vpop.permute.xlu0 %3263
    %3265 = vrot.lane.b32.xlu0 %v813, 96
    %v3266 = vpop.permute.xlu0 %3265
    %3267 = vrot.lane.b32.xlu0 %v814, 96
    %v3268 = vpop.permute.xlu0 %3267
    %3269 = vrot.lane.b32.xlu0 %v815, 96
    %v3270 = vpop.permute.xlu0 %3269
    %3271 = vrot.lane.b32.xlu0 %v816, 96
    %v3272 = vpop.permute.xlu0 %3271
    %3273 = vrot.lane.b32.xlu0 %v817, 96
    %v3274 = vpop.permute.xlu0 %3273
    %3275 = vrot.lane.b32.xlu0 %v818, 96
    %v3276 = vpop.permute.xlu0 %3275
    %3277 = vrot.lane.b32.xlu0 %v819, 96
    %v3278 = vpop.permute.xlu0 %3277
    %3279 = vrot.lane.b32.xlu0 %v820, 96
    %v3280 = vpop.permute.xlu0 %3279
    %3281 = vrot.lane.b32.xlu0 %v821, 96
    %v3282 = vpop.permute.xlu0 %3281
    %3283 = vrot.lane.b32.xlu0 %v822, 96
    %v3284 = vpop.permute.xlu0 %3283
    %3285 = vrot.lane.b32.xlu0 %v823, 96
    %v3286 = vpop.permute.xlu0 %3285
    %3287 = vrot.lane.b32.xlu0 %v824, 96
    %v3288 = vpop.permute.xlu0 %3287
    %3289 = vrot.lane.b32.xlu0 %v825, 96
    %v3290 = vpop.permute.xlu0 %3289
    %3291 = vrot.lane.b32.xlu0 %v826, 96
    %v3292 = vpop.permute.xlu0 %3291
    %v3325 = vmul.f32 %v691, %v3230
    %v3326 = vmul.f32 %v692, %v3232
    %v3327 = vmul.f32 %v693, %v3234
    %v3328 = vmul.f32 %v694, %v3236
    %v3329 = vmul.f32 %v695, %v3238
    %v3330 = vmul.f32 %v696, %v3240
    %v3331 = vmul.f32 %v697, %v3242
    %v3332 = vmul.f32 %v698, %v3244
    %v3333 = vmul.f32 %v691, %v3246
    %v3334 = vmul.f32 %v692, %v3248
    %v3335 = vmul.f32 %v693, %v3250
    %v3336 = vmul.f32 %v694, %v3252
    %v3337 = vmul.f32 %v695, %v3254
    %v3338 = vmul.f32 %v696, %v3256
    %v3339 = vmul.f32 %v697, %v3258
    %v3340 = vmul.f32 %v698, %v3260
    %v3341 = vmul.f32 %v691, %v3262
    %v3342 = vmul.f32 %v692, %v3264
    %v3343 = vmul.f32 %v693, %v3266
    %v3344 = vmul.f32 %v694, %v3268
    %v3345 = vmul.f32 %v695, %v3270
    %v3346 = vmul.f32 %v696, %v3272
    %v3347 = vmul.f32 %v697, %v3274
    %v3348 = vmul.f32 %v698, %v3276
    %v3349 = vmul.f32 %v691, %v3278
    %v3350 = vmul.f32 %v692, %v3280
    %v3351 = vmul.f32 %v693, %v3282
    %v3352 = vmul.f32 %v694, %v3284
    %v3353 = vmul.f32 %v695, %v3286
    %v3354 = vmul.f32 %v696, %v3288
    %v3355 = vmul.f32 %v697, %v3290
    %v3356 = vmul.f32 %v698, %v3292
    %3389 = vrot.lane.b32.xlu0 %v3325, 96
    %v3390 = vpop.permute.xlu0 %3389
    %3391 = vrot.lane.b32.xlu0 %v3326, 96
    %v3392 = vpop.permute.xlu0 %3391
    %3393 = vrot.lane.b32.xlu0 %v3327, 96
    %v3394 = vpop.permute.xlu0 %3393
    %3395 = vrot.lane.b32.xlu0 %v3328, 96
    %v3396 = vpop.permute.xlu0 %3395
    %3397 = vrot.lane.b32.xlu0 %v3329, 96
    %v3398 = vpop.permute.xlu0 %3397
    %3399 = vrot.lane.b32.xlu0 %v3330, 96
    %v3400 = vpop.permute.xlu0 %3399
    %3401 = vrot.lane.b32.xlu0 %v3331, 96
    %v3402 = vpop.permute.xlu0 %3401
    %3403 = vrot.lane.b32.xlu0 %v3332, 96
    %v3404 = vpop.permute.xlu0 %3403
    %3405 = vrot.lane.b32.xlu0 %v3333, 96
    %v3406 = vpop.permute.xlu0 %3405
    %3407 = vrot.lane.b32.xlu0 %v3334, 96
    %v3408 = vpop.permute.xlu0 %3407
    %3409 = vrot.lane.b32.xlu0 %v3335, 96
    %v3410 = vpop.permute.xlu0 %3409
    %3411 = vrot.lane.b32.xlu0 %v3336, 96
    %v3412 = vpop.permute.xlu0 %3411
    %3413 = vrot.lane.b32.xlu0 %v3337, 96
    %v3414 = vpop.permute.xlu0 %3413
    %3415 = vrot.lane.b32.xlu0 %v3338, 96
    %v3416 = vpop.permute.xlu0 %3415
    %3417 = vrot.lane.b32.xlu0 %v3339, 96
    %v3418 = vpop.permute.xlu0 %3417
    %3419 = vrot.lane.b32.xlu0 %v3340, 96
    %v3420 = vpop.permute.xlu0 %3419
    %3421 = vrot.lane.b32.xlu0 %v3341, 96
    %v3422 = vpop.permute.xlu0 %3421
    %3423 = vrot.lane.b32.xlu0 %v3342, 96
    %v3424 = vpop.permute.xlu0 %3423
    %3425 = vrot.lane.b32.xlu0 %v3343, 96
    %v3426 = vpop.permute.xlu0 %3425
    %3427 = vrot.lane.b32.xlu0 %v3344, 96
    %v3428 = vpop.permute.xlu0 %3427
    %3429 = vrot.lane.b32.xlu0 %v3345, 96
    %v3430 = vpop.permute.xlu0 %3429
    %3431 = vrot.lane.b32.xlu0 %v3346, 96
    %v3432 = vpop.permute.xlu0 %3431
    %3433 = vrot.lane.b32.xlu0 %v3347, 96
    %v3434 = vpop.permute.xlu0 %3433
    %3435 = vrot.lane.b32.xlu0 %v3348, 96
    %v3436 = vpop.permute.xlu0 %3435
    %3437 = vrot.lane.b32.xlu0 %v3349, 96
    %v3438 = vpop.permute.xlu0 %3437
    %3439 = vrot.lane.b32.xlu0 %v3350, 96
    %v3440 = vpop.permute.xlu0 %3439
    %3441 = vrot.lane.b32.xlu0 %v3351, 96
    %v3442 = vpop.permute.xlu0 %3441
    %3443 = vrot.lane.b32.xlu0 %v3352, 96
    %v3444 = vpop.permute.xlu0 %3443
    %3445 = vrot.lane.b32.xlu0 %v3353, 96
    %v3446 = vpop.permute.xlu0 %3445
    %3447 = vrot.lane.b32.xlu0 %v3354, 96
    %v3448 = vpop.permute.xlu0 %3447
    %3449 = vrot.lane.b32.xlu0 %v3355, 96
    %v3450 = vpop.permute.xlu0 %3449
    %3451 = vrot.lane.b32.xlu0 %v3356, 96
    %v3452 = vpop.permute.xlu0 %3451
    %v3485 = vadd.f32 %v3197, %v3390
    %v3486 = vadd.f32 %v3198, %v3392
    %v3487 = vadd.f32 %v3199, %v3394
    %v3488 = vadd.f32 %v3200, %v3396
    %v3489 = vadd.f32 %v3201, %v3398
    %v3490 = vadd.f32 %v3202, %v3400
    %v3491 = vadd.f32 %v3203, %v3402
    %v3492 = vadd.f32 %v3204, %v3404
    %v3493 = vadd.f32 %v3205, %v3406
    %v3494 = vadd.f32 %v3206, %v3408
    %v3495 = vadd.f32 %v3207, %v3410
    %v3496 = vadd.f32 %v3208, %v3412
    %v3497 = vadd.f32 %v3209, %v3414
    %v3498 = vadd.f32 %v3210, %v3416
    %v3499 = vadd.f32 %v3211, %v3418
    %v3500 = vadd.f32 %v3212, %v3420
    %v3501 = vadd.f32 %v3213, %v3422
    %v3502 = vadd.f32 %v3214, %v3424
    %v3503 = vadd.f32 %v3215, %v3426
    %v3504 = vadd.f32 %v3216, %v3428
    %v3505 = vadd.f32 %v3217, %v3430
    %v3506 = vadd.f32 %v3218, %v3432
    %v3507 = vadd.f32 %v3219, %v3434
    %v3508 = vadd.f32 %v3220, %v3436
    %v3509 = vadd.f32 %v3221, %v3438
    %v3510 = vadd.f32 %v3222, %v3440
    %v3511 = vadd.f32 %v3223, %v3442
    %v3512 = vadd.f32 %v3224, %v3444
    %v3513 = vadd.f32 %v3225, %v3446
    %v3514 = vadd.f32 %v3226, %v3448
    %v3515 = vadd.f32 %v3227, %v3450
    %v3516 = vadd.f32 %v3228, %v3452
    %3517 = vrot.lane.b32.xlu0 %v667, 64
    %v3518 = vpop.permute.xlu0 %3517
    %3519 = vrot.lane.b32.xlu0 %v668, 64
    %v3520 = vpop.permute.xlu0 %3519
    %3521 = vrot.lane.b32.xlu0 %v669, 64
    %v3522 = vpop.permute.xlu0 %3521
    %3523 = vrot.lane.b32.xlu0 %v670, 64
    %v3524 = vpop.permute.xlu0 %3523
    %3525 = vrot.lane.b32.xlu0 %v671, 64
    %v3526 = vpop.permute.xlu0 %3525
    %3527 = vrot.lane.b32.xlu0 %v672, 64
    %v3528 = vpop.permute.xlu0 %3527
    %3529 = vrot.lane.b32.xlu0 %v673, 64
    %v3530 = vpop.permute.xlu0 %3529
    %3531 = vrot.lane.b32.xlu0 %v674, 64
    %v3532 = vpop.permute.xlu0 %3531
    %3565 = vrot.lane.b32.xlu0 %v3485, 64
    %v3566 = vpop.permute.xlu0 %3565
    %3567 = vrot.lane.b32.xlu0 %v3486, 64
    %v3568 = vpop.permute.xlu0 %3567
    %3569 = vrot.lane.b32.xlu0 %v3487, 64
    %v3570 = vpop.permute.xlu0 %3569
    %3571 = vrot.lane.b32.xlu0 %v3488, 64
    %v3572 = vpop.permute.xlu0 %3571
    %3573 = vrot.lane.b32.xlu0 %v3489, 64
    %v3574 = vpop.permute.xlu0 %3573
    %3575 = vrot.lane.b32.xlu0 %v3490, 64
    %v3576 = vpop.permute.xlu0 %3575
    %3577 = vrot.lane.b32.xlu0 %v3491, 64
    %v3578 = vpop.permute.xlu0 %3577
    %3579 = vrot.lane.b32.xlu0 %v3492, 64
    %v3580 = vpop.permute.xlu0 %3579
    %3581 = vrot.lane.b32.xlu0 %v3493, 64
    %v3582 = vpop.permute.xlu0 %3581
    %3583 = vrot.lane.b32.xlu0 %v3494, 64
    %v3584 = vpop.permute.xlu0 %3583
    %3585 = vrot.lane.b32.xlu0 %v3495, 64
    %v3586 = vpop.permute.xlu0 %3585
    %3587 = vrot.lane.b32.xlu0 %v3496, 64
    %v3588 = vpop.permute.xlu0 %3587
    %3589 = vrot.lane.b32.xlu0 %v3497, 64
    %v3590 = vpop.permute.xlu0 %3589
    %3591 = vrot.lane.b32.xlu0 %v3498, 64
    %v3592 = vpop.permute.xlu0 %3591
    %3593 = vrot.lane.b32.xlu0 %v3499, 64
    %v3594 = vpop.permute.xlu0 %3593
    %3595 = vrot.lane.b32.xlu0 %v3500, 64
    %v3596 = vpop.permute.xlu0 %3595
    %3597 = vrot.lane.b32.xlu0 %v3501, 64
    %v3598 = vpop.permute.xlu0 %3597
    %3599 = vrot.lane.b32.xlu0 %v3502, 64
    %v3600 = vpop.permute.xlu0 %3599
    %3601 = vrot.lane.b32.xlu0 %v3503, 64
    %v3602 = vpop.permute.xlu0 %3601
    %3603 = vrot.lane.b32.xlu0 %v3504, 64
    %v3604 = vpop.permute.xlu0 %3603
    %3605 = vrot.lane.b32.xlu0 %v3505, 64
    %v3606 = vpop.permute.xlu0 %3605
    %3607 = vrot.lane.b32.xlu0 %v3506, 64
    %v3608 = vpop.permute.xlu0 %3607
    %3609 = vrot.lane.b32.xlu0 %v3507, 64
    %v3610 = vpop.permute.xlu0 %3609
    %3611 = vrot.lane.b32.xlu0 %v3508, 64
    %v3612 = vpop.permute.xlu0 %3611
    %3613 = vrot.lane.b32.xlu0 %v3509, 64
    %v3614 = vpop.permute.xlu0 %3613
    %3615 = vrot.lane.b32.xlu0 %v3510, 64
    %v3616 = vpop.permute.xlu0 %3615
    %3617 = vrot.lane.b32.xlu0 %v3511, 64
    %v3618 = vpop.permute.xlu0 %3617
    %3619 = vrot.lane.b32.xlu0 %v3512, 64
    %v3620 = vpop.permute.xlu0 %3619
    %3621 = vrot.lane.b32.xlu0 %v3513, 64
    %v3622 = vpop.permute.xlu0 %3621
    %3623 = vrot.lane.b32.xlu0 %v3514, 64
    %v3624 = vpop.permute.xlu0 %3623
    %3625 = vrot.lane.b32.xlu0 %v3515, 64
    %v3626 = vpop.permute.xlu0 %3625
    %3627 = vrot.lane.b32.xlu0 %v3516, 64
    %v3628 = vpop.permute.xlu0 %3627
    %v3629 = vsel %vm1163, %v3518, 0
    %v3631 = vsel %vm1163, %v3520, 0
    %v3633 = vsel %vm1163, %v3522, 0
    %v3635 = vsel %vm1163, %v3524, 0
    %v3637 = vsel %vm1163, %v3526, 0
    %v3639 = vsel %vm1163, %v3528, 0
    %v3641 = vsel %vm1163, %v3530, 0
    %v3643 = vsel %vm1163, %v3532, 0
    %v3645 = vsel %vm1163, %v3566, 0
    %v3647 = vsel %vm1163, %v3568, 0
    %v3649 = vsel %vm1163, %v3570, 0
    %v3651 = vsel %vm1163, %v3572, 0
    %v3653 = vsel %vm1163, %v3574, 0
    %v3655 = vsel %vm1163, %v3576, 0
    %v3657 = vsel %vm1163, %v3578, 0
    %v3659 = vsel %vm1163, %v3580, 0
    %v3661 = vsel %vm1163, %v3582, 0
    %v3663 = vsel %vm1163, %v3584, 0
    %v3665 = vsel %vm1163, %v3586, 0
    %v3667 = vsel %vm1163, %v3588, 0
    %v3669 = vsel %vm1163, %v3590, 0
    %v3671 = vsel %vm1163, %v3592, 0
    %v3673 = vsel %vm1163, %v3594, 0
    %v3675 = vsel %vm1163, %v3596, 0
    %v3677 = vsel %vm1163, %v3598, 0
    %v3679 = vsel %vm1163, %v3600, 0
    %v3681 = vsel %vm1163, %v3602, 0
    %v3683 = vsel %vm1163, %v3604, 0
    %v3685 = vsel %vm1163, %v3606, 0
    %v3687 = vsel %vm1163, %v3608, 0
    %v3689 = vsel %vm1163, %v3610, 0
    %v3691 = vsel %vm1163, %v3612, 0
    %v3693 = vsel %vm1163, %v3614, 0
    %v3695 = vsel %vm1163, %v3616, 0
    %v3697 = vsel %vm1163, %v3618, 0
    %v3699 = vsel %vm1163, %v3620, 0
    %v3701 = vsel %vm1163, %v3622, 0
    %v3703 = vsel %vm1163, %v3624, 0
    %v3705 = vsel %vm1163, %v3626, 0
    %v3707 = vsel %vm1163, %v3628, 0
    %3709 = vmatprep.subr.mxu0 0.0
    %3710 = vmatpush1.xpose.msra.mxu0 %v3675
    %3711 = vmatprep.subr.mxu0 0.0
    %3712 = vmatpush1.xpose.msra.mxu0 %v3673
    %3713 = vmatprep.subr.mxu0 0.0
    %3714 = vmatpush1.xpose.msra.mxu0 %v3671
    %3715 = vmatprep.subr.mxu0 0.0
    %3716 = vmatpush1.xpose.msra.mxu0 %v3669
    %3717 = vmatprep.subr.mxu0 0.0
    %3718 = vmatpush1.xpose.msra.mxu0 %v3667
    %3719 = vmatprep.subr.mxu0 0.0
    %3720 = vmatpush1.xpose.msra.mxu0 %v3665
    %3721 = vmatprep.subr.mxu0 0.0
    %3722 = vmatpush1.xpose.msra.mxu0 %v3663
    %3723 = vmatprep.subr.mxu0 0.0
    %3724 = vmatpush1.xpose.msra.mxu0 %v3661
    %3725 = vmatprep.subr.mxu0 0.0
    %3726 = vmatpush1.xpose.msra.mxu0 %v3659
    %3727 = vmatprep.subr.mxu0 0.0
    %3728 = vmatpush1.xpose.msra.mxu0 %v3657
    %3729 = vmatprep.subr.mxu0 0.0
    %3730 = vmatpush1.xpose.msra.mxu0 %v3655
    %3731 = vmatprep.subr.mxu0 0.0
    %3732 = vmatpush1.xpose.msra.mxu0 %v3653
    %3733 = vmatprep.subr.mxu0 0.0
    %3734 = vmatpush1.xpose.msra.mxu0 %v3651
    %3735 = vmatprep.subr.mxu0 0.0
    %3736 = vmatpush1.xpose.msra.mxu0 %v3649
    %3737 = vmatprep.subr.mxu0 0.0
    %3738 = vmatpush1.xpose.msra.mxu0 %v3647
    %3739 = vmatprep.subr.mxu0 0.0
    %3740 = vmatpush1.xpose.msra.mxu0 %v3645
    %3741 = vmatprep.subr.mxu0 0.0
    %3742 = vmatpush2.xpose.msra.mxu0 %v3707
    %3743 = vmatprep.subr.mxu0 0.0
    %3744 = vmatpush2.xpose.msra.mxu0 %v3705
    %3745 = vmatprep.subr.mxu0 0.0
    %3746 = vmatpush2.xpose.msra.mxu0 %v3703
    %3747 = vmatprep.subr.mxu0 0.0
    %3748 = vmatpush2.xpose.msra.mxu0 %v3701
    %3749 = vmatprep.subr.mxu0 0.0
    %3750 = vmatpush2.xpose.msra.mxu0 %v3699
    %3751 = vmatprep.subr.mxu0 0.0
    %3752 = vmatpush2.xpose.msra.mxu0 %v3697
    %3753 = vmatprep.subr.mxu0 0.0
    %3754 = vmatpush2.xpose.msra.mxu0 %v3695
    %3755 = vmatprep.subr.mxu0 0.0
    %3756 = vmatpush2.xpose.msra.mxu0 %v3693
    %3757 = vmatprep.subr.mxu0 0.0
    %3758 = vmatpush2.xpose.msra.mxu0 %v3691
    %3759 = vmatprep.subr.mxu0 0.0
    %3760 = vmatpush2.xpose.msra.mxu0 %v3689
    %3761 = vmatprep.subr.mxu0 0.0
    %3762 = vmatpush2.xpose.msra.mxu0 %v3687
    %3763 = vmatprep.subr.mxu0 0.0
    %3764 = vmatpush2.xpose.msra.mxu0 %v3685
    %3765 = vmatprep.subr.mxu0 0.0
    %3766 = vmatpush2.xpose.msra.mxu0 %v3683
    %3767 = vmatprep.subr.mxu0 0.0
    %3768 = vmatpush2.xpose.msra.mxu0 %v3681
    %3769 = vmatprep.subr.mxu0 0.0
    %3770 = vmatpush2.xpose.msra.mxu0 %v3679
    %3771 = vmatprep.subr.mxu0 0.0
    %3772 = vmatpush2.xpose.msra.mxu0 %v3677
    %3773 = vmatprep.mubr.f32.mxu0 0.0
    %3774 = vmatmul.mubr.f32.gmra.mxu0 %v3629
    %v3775 = vpop.f32.mrf.mxu0
    %v3776 = vadd.f32 %v1147, %v3775
    %v3777 = vpop.f32.mrf.mxu0
    %v3778 = vadd.f32 %v1148, %v3777
    %3779 = vmatprep.mubr.f32.mxu0 0.0
    %3780 = vmatmul.mubr.f32.gmra.mxu0 %v3631
    %v3781 = vpop.f32.mrf.mxu0
    %v3782 = vadd.f32 %v1149, %v3781
    %v3783 = vpop.f32.mrf.mxu0
    %v3784 = vadd.f32 %v1150, %v3783
    %3785 = vmatprep.mubr.f32.mxu0 0.0
    %3786 = vmatmul.mubr.f32.gmra.mxu0 %v3633
    %v3787 = vpop.f32.mrf.mxu0
    %v3788 = vadd.f32 %v1151, %v3787
    %v3789 = vpop.f32.mrf.mxu0
    %v3790 = vadd.f32 %v1152, %v3789
    %3791 = vmatprep.mubr.f32.mxu0 0.0
    %3792 = vmatmul.mubr.f32.gmra.mxu0 %v3635
    %v3793 = vpop.f32.mrf.mxu0
    %v3794 = vadd.f32 %v1153, %v3793
    %v3795 = vpop.f32.mrf.mxu0
    %v3796 = vadd.f32 %v1154, %v3795
    %3797 = vmatprep.mubr.f32.mxu0 0.0
    %3798 = vmatmul.mubr.f32.gmra.mxu0 %v3637
    %v3799 = vpop.f32.mrf.mxu0
    %v3800 = vadd.f32 %v1155, %v3799
    %v3801 = vpop.f32.mrf.mxu0
    %v3802 = vadd.f32 %v1156, %v3801
    %3803 = vmatprep.mubr.f32.mxu0 0.0
    %3804 = vmatmul.mubr.f32.gmra.mxu0 %v3639
    %v3805 = vpop.f32.mrf.mxu0
    %v3806 = vadd.f32 %v1157, %v3805
    %v3807 = vpop.f32.mrf.mxu0
    %v3808 = vadd.f32 %v1158, %v3807
    %3809 = vmatprep.mubr.f32.mxu0 0.0
    %3810 = vmatmul.mubr.f32.gmra.mxu0 %v3641
    %v3811 = vpop.f32.mrf.mxu0
    %v3812 = vadd.f32 %v1159, %v3811
    %v3813 = vpop.f32.mrf.mxu0
    %v3814 = vadd.f32 %v1160, %v3813
    %3815 = vmatprep.mubr.f32.mxu0 0.0
    %3816 = vmatmul.mubr.f32.gmra.mxu0 %v3643
    %v3817 = vpop.f32.mrf.mxu0
    %v3818 = vadd.f32 %v1161, %v3817
    %v3819 = vpop.f32.mrf.mxu0
    %v3820 = vadd.f32 %v1162, %v3819
    %3821 = vdwg.mxu0
    %v3822 = vmax.f32 %v3776, %v3778
    %3823 = vmax.xlane.f32.xlu0 %v3822
    %v3824 = vpop.xlane.xlu0 %3823
    %v3825 = vmax.f32 %v3782, %v3784
    %3826 = vmax.xlane.f32.xlu0 %v3825
    %v3827 = vpop.xlane.xlu0 %3826
    %v3828 = vmax.f32 %v3788, %v3790
    %3829 = vmax.xlane.f32.xlu0 %v3828
    %v3830 = vpop.xlane.xlu0 %3829
    %v3831 = vmax.f32 %v3794, %v3796
    %3832 = vmax.xlane.f32.xlu0 %v3831
    %v3833 = vpop.xlane.xlu0 %3832
    %v3834 = vmax.f32 %v3800, %v3802
    %3835 = vmax.xlane.f32.xlu0 %v3834
    %v3836 = vpop.xlane.xlu0 %3835
    %v3837 = vmax.f32 %v3806, %v3808
    %3838 = vmax.xlane.f32.xlu0 %v3837
    %v3839 = vpop.xlane.xlu0 %3838
    %v3840 = vmax.f32 %v3812, %v3814
    %3841 = vmax.xlane.f32.xlu0 %v3840
    %v3842 = vpop.xlane.xlu0 %3841
    %v3843 = vmax.f32 %v3818, %v3820
    %3844 = vmax.xlane.f32.xlu0 %v3843
    %v3845 = vpop.xlane.xlu0 %3844
    %v3846 = vsub.f32 %v3776, %v3824
    %v3847 = vsub.f32 %v3778, %v3824
    %v3848 = vsub.f32 %v3782, %v3827
    %v3849 = vsub.f32 %v3784, %v3827
    %v3850 = vsub.f32 %v3788, %v3830
    %v3851 = vsub.f32 %v3790, %v3830
    %v3852 = vsub.f32 %v3794, %v3833
    %v3853 = vsub.f32 %v3796, %v3833
    %v3854 = vsub.f32 %v3800, %v3836
    %v3855 = vsub.f32 %v3802, %v3836
    %v3856 = vsub.f32 %v3806, %v3839
    %v3857 = vsub.f32 %v3808, %v3839
    %v3858 = vsub.f32 %v3812, %v3842
    %v3859 = vsub.f32 %v3814, %v3842
    %v3860 = vsub.f32 %v3818, %v3845
    %v3861 = vsub.f32 %v3820, %v3845
    %v3862 = vmul.f32 %v3846, 1.442695
    %v3863 = vpow.pop %v3862
    %v3864 = vmul.f32 %v3847, 1.442695
    %v3865 = vpow.pop %v3864
    %v3866 = vmul.f32 %v3848, 1.442695
    %v3867 = vpow.pop %v3866
    %v3868 = vmul.f32 %v3849, 1.442695
    %v3869 = vpow.pop %v3868
    %v3870 = vmul.f32 %v3850, 1.442695
    %v3871 = vpow.pop %v3870
    %v3872 = vmul.f32 %v3851, 1.442695
    %v3873 = vpow.pop %v3872
    %v3874 = vmul.f32 %v3852, 1.442695
    %v3875 = vpow.pop %v3874
    %v3876 = vmul.f32 %v3853, 1.442695
    %v3877 = vpow.pop %v3876
    %v3878 = vmul.f32 %v3854, 1.442695
    %v3879 = vpow.pop %v3878
    %v3880 = vmul.f32 %v3855, 1.442695
    %v3881 = vpow.pop %v3880
    %v3882 = vmul.f32 %v3856, 1.442695
    %v3883 = vpow.pop %v3882
    %v3884 = vmul.f32 %v3857, 1.442695
    %v3885 = vpow.pop %v3884
    %v3886 = vmul.f32 %v3858, 1.442695
    %v3887 = vpow.pop %v3886
    %v3888 = vmul.f32 %v3859, 1.442695
    %v3889 = vpow.pop %v3888
    %v3890 = vmul.f32 %v3860, 1.442695
    %v3891 = vpow.pop %v3890
    %v3892 = vmul.f32 %v3861, 1.442695
    %v3893 = vpow.pop %v3892
    %3894 = vrot.lane.b32.xlu0 %v699, 64
    %v3895 = vpop.permute.xlu0 %3894
    %3896 = vrot.lane.b32.xlu0 %v700, 64
    %v3897 = vpop.permute.xlu0 %3896
    %3898 = vrot.lane.b32.xlu0 %v701, 64
    %v3899 = vpop.permute.xlu0 %3898
    %3900 = vrot.lane.b32.xlu0 %v702, 64
    %v3901 = vpop.permute.xlu0 %3900
    %3902 = vrot.lane.b32.xlu0 %v703, 64
    %v3903 = vpop.permute.xlu0 %3902
    %3904 = vrot.lane.b32.xlu0 %v704, 64
    %v3905 = vpop.permute.xlu0 %3904
    %3906 = vrot.lane.b32.xlu0 %v705, 64
    %v3907 = vpop.permute.xlu0 %3906
    %3908 = vrot.lane.b32.xlu0 %v706, 64
    %v3909 = vpop.permute.xlu0 %3908
    %3910 = vrot.lane.b32.xlu0 %v707, 64
    %v3911 = vpop.permute.xlu0 %3910
    %3912 = vrot.lane.b32.xlu0 %v708, 64
    %v3913 = vpop.permute.xlu0 %3912
    %3914 = vrot.lane.b32.xlu0 %v709, 64
    %v3915 = vpop.permute.xlu0 %3914
    %3916 = vrot.lane.b32.xlu0 %v710, 64
    %v3917 = vpop.permute.xlu0 %3916
    %3918 = vrot.lane.b32.xlu0 %v711, 64
    %v3919 = vpop.permute.xlu0 %3918
    %3920 = vrot.lane.b32.xlu0 %v712, 64
    %v3921 = vpop.permute.xlu0 %3920
    %3922 = vrot.lane.b32.xlu0 %v713, 64
    %v3923 = vpop.permute.xlu0 %3922
    %3924 = vrot.lane.b32.xlu0 %v714, 64
    %v3925 = vpop.permute.xlu0 %3924
    %3926 = vrot.lane.b32.xlu0 %v715, 64
    %v3927 = vpop.permute.xlu0 %3926
    %3928 = vrot.lane.b32.xlu0 %v716, 64
    %v3929 = vpop.permute.xlu0 %3928
    %3930 = vrot.lane.b32.xlu0 %v717, 64
    %v3931 = vpop.permute.xlu0 %3930
    %3932 = vrot.lane.b32.xlu0 %v718, 64
    %v3933 = vpop.permute.xlu0 %3932
    %3934 = vrot.lane.b32.xlu0 %v719, 64
    %v3935 = vpop.permute.xlu0 %3934
    %3936 = vrot.lane.b32.xlu0 %v720, 64
    %v3937 = vpop.permute.xlu0 %3936
    %3938 = vrot.lane.b32.xlu0 %v721, 64
    %v3939 = vpop.permute.xlu0 %3938
    %3940 = vrot.lane.b32.xlu0 %v722, 64
    %v3941 = vpop.permute.xlu0 %3940
    %3942 = vrot.lane.b32.xlu0 %v723, 64
    %v3943 = vpop.permute.xlu0 %3942
    %3944 = vrot.lane.b32.xlu0 %v724, 64
    %v3945 = vpop.permute.xlu0 %3944
    %3946 = vrot.lane.b32.xlu0 %v725, 64
    %v3947 = vpop.permute.xlu0 %3946
    %3948 = vrot.lane.b32.xlu0 %v726, 64
    %v3949 = vpop.permute.xlu0 %3948
    %3950 = vrot.lane.b32.xlu0 %v727, 64
    %v3951 = vpop.permute.xlu0 %3950
    %3952 = vrot.lane.b32.xlu0 %v728, 64
    %v3953 = vpop.permute.xlu0 %3952
    %3954 = vrot.lane.b32.xlu0 %v729, 64
    %v3955 = vpop.permute.xlu0 %3954
    %3956 = vrot.lane.b32.xlu0 %v730, 64
    %v3957 = vpop.permute.xlu0 %3956
    %v3990 = vmul.f32 %v371, %v3895
    %v3991 = vmul.f32 %v376, %v3897
    %v3992 = vmul.f32 %v381, %v3899
    %v3993 = vmul.f32 %v386, %v3901
    %v3994 = vmul.f32 %v391, %v3903
    %v3995 = vmul.f32 %v396, %v3905
    %v3996 = vmul.f32 %v401, %v3907
    %v3997 = vmul.f32 %v406, %v3909
    %v3998 = vmul.f32 %v371, %v3911
    %v3999 = vmul.f32 %v376, %v3913
    %v4000 = vmul.f32 %v381, %v3915
    %v4001 = vmul.f32 %v386, %v3917
    %v4002 = vmul.f32 %v391, %v3919
    %v4003 = vmul.f32 %v396, %v3921
    %v4004 = vmul.f32 %v401, %v3923
    %v4005 = vmul.f32 %v406, %v3925
    %v4006 = vmul.f32 %v371, %v3927
    %v4007 = vmul.f32 %v376, %v3929
    %v4008 = vmul.f32 %v381, %v3931
    %v4009 = vmul.f32 %v386, %v3933
    %v4010 = vmul.f32 %v391, %v3935
    %v4011 = vmul.f32 %v396, %v3937
    %v4012 = vmul.f32 %v401, %v3939
    %v4013 = vmul.f32 %v406, %v3941
    %v4014 = vmul.f32 %v371, %v3943
    %v4015 = vmul.f32 %v376, %v3945
    %v4016 = vmul.f32 %v381, %v3947
    %v4017 = vmul.f32 %v386, %v3949
    %v4018 = vmul.f32 %v391, %v3951
    %v4019 = vmul.f32 %v396, %v3953
    %v4020 = vmul.f32 %v401, %v3955
    %v4021 = vmul.f32 %v406, %v3957
    %4054 = vrot.lane.b32.xlu0 %v3990, 64
    %v4055 = vpop.permute.xlu0 %4054
    %4056 = vrot.lane.b32.xlu0 %v3991, 64
    %v4057 = vpop.permute.xlu0 %4056
    %4058 = vrot.lane.b32.xlu0 %v3992, 64
    %v4059 = vpop.permute.xlu0 %4058
    %4060 = vrot.lane.b32.xlu0 %v3993, 64
    %v4061 = vpop.permute.xlu0 %4060
    %4062 = vrot.lane.b32.xlu0 %v3994, 64
    %v4063 = vpop.permute.xlu0 %4062
    %4064 = vrot.lane.b32.xlu0 %v3995, 64
    %v4065 = vpop.permute.xlu0 %4064
    %4066 = vrot.lane.b32.xlu0 %v3996, 64
    %v4067 = vpop.permute.xlu0 %4066
    %4068 = vrot.lane.b32.xlu0 %v3997, 64
    %v4069 = vpop.permute.xlu0 %4068
    %4070 = vrot.lane.b32.xlu0 %v3998, 64
    %v4071 = vpop.permute.xlu0 %4070
    %4072 = vrot.lane.b32.xlu0 %v3999, 64
    %v4073 = vpop.permute.xlu0 %4072
    %4074 = vrot.lane.b32.xlu0 %v4000, 64
    %v4075 = vpop.permute.xlu0 %4074
    %4076 = vrot.lane.b32.xlu0 %v4001, 64
    %v4077 = vpop.permute.xlu0 %4076
    %4078 = vrot.lane.b32.xlu0 %v4002, 64
    %v4079 = vpop.permute.xlu0 %4078
    %4080 = vrot.lane.b32.xlu0 %v4003, 64
    %v4081 = vpop.permute.xlu0 %4080
    %4082 = vrot.lane.b32.xlu0 %v4004, 64
    %v4083 = vpop.permute.xlu0 %4082
    %4084 = vrot.lane.b32.xlu0 %v4005, 64
    %v4085 = vpop.permute.xlu0 %4084
    %4086 = vrot.lane.b32.xlu0 %v4006, 64
    %v4087 = vpop.permute.xlu0 %4086
    %4088 = vrot.lane.b32.xlu0 %v4007, 64
    %v4089 = vpop.permute.xlu0 %4088
    %4090 = vrot.lane.b32.xlu0 %v4008, 64
    %v4091 = vpop.permute.xlu0 %4090
    %4092 = vrot.lane.b32.xlu0 %v4009, 64
    %v4093 = vpop.permute.xlu0 %4092
    %4094 = vrot.lane.b32.xlu0 %v4010, 64
    %v4095 = vpop.permute.xlu0 %4094
    %4096 = vrot.lane.b32.xlu0 %v4011, 64
    %v4097 = vpop.permute.xlu0 %4096
    %4098 = vrot.lane.b32.xlu0 %v4012, 64
    %v4099 = vpop.permute.xlu0 %4098
    %4100 = vrot.lane.b32.xlu0 %v4013, 64
    %v4101 = vpop.permute.xlu0 %4100
    %4102 = vrot.lane.b32.xlu0 %v4014, 64
    %v4103 = vpop.permute.xlu0 %4102
    %4104 = vrot.lane.b32.xlu0 %v4015, 64
    %v4105 = vpop.permute.xlu0 %4104
    %4106 = vrot.lane.b32.xlu0 %v4016, 64
    %v4107 = vpop.permute.xlu0 %4106
    %4108 = vrot.lane.b32.xlu0 %v4017, 64
    %v4109 = vpop.permute.xlu0 %4108
    %4110 = vrot.lane.b32.xlu0 %v4018, 64
    %v4111 = vpop.permute.xlu0 %4110
    %4112 = vrot.lane.b32.xlu0 %v4019, 64
    %v4113 = vpop.permute.xlu0 %4112
    %4114 = vrot.lane.b32.xlu0 %v4020, 64
    %v4115 = vpop.permute.xlu0 %4114
    %4116 = vrot.lane.b32.xlu0 %v4021, 64
    %v4117 = vpop.permute.xlu0 %4116
    %4150 = vmatprep.subr.mxu0 0.0
    %4151 = vmatpush1.msra.mxu0 %v4085
    %4152 = vmatprep.subr.mxu0 0.0
    %4153 = vmatpush1.msra.mxu0 %v4083
    %4154 = vmatprep.subr.mxu0 0.0
    %4155 = vmatpush1.msra.mxu0 %v4081
    %4156 = vmatprep.subr.mxu0 0.0
    %4157 = vmatpush1.msra.mxu0 %v4079
    %4158 = vmatprep.subr.mxu0 0.0
    %4159 = vmatpush1.msra.mxu0 %v4077
    %4160 = vmatprep.subr.mxu0 0.0
    %4161 = vmatpush1.msra.mxu0 %v4075
    %4162 = vmatprep.subr.mxu0 0.0
    %4163 = vmatpush1.msra.mxu0 %v4073
    %4164 = vmatprep.subr.mxu0 0.0
    %4165 = vmatpush1.msra.mxu0 %v4071
    %4166 = vmatprep.subr.mxu0 0.0
    %4167 = vmatpush1.msra.mxu0 %v4069
    %4168 = vmatprep.subr.mxu0 0.0
    %4169 = vmatpush1.msra.mxu0 %v4067
    %4170 = vmatprep.subr.mxu0 0.0
    %4171 = vmatpush1.msra.mxu0 %v4065
    %4172 = vmatprep.subr.mxu0 0.0
    %4173 = vmatpush1.msra.mxu0 %v4063
    %4174 = vmatprep.subr.mxu0 0.0
    %4175 = vmatpush1.msra.mxu0 %v4061
    %4176 = vmatprep.subr.mxu0 0.0
    %4177 = vmatpush1.msra.mxu0 %v4059
    %4178 = vmatprep.subr.mxu0 0.0
    %4179 = vmatpush1.msra.mxu0 %v4057
    %4180 = vmatprep.subr.mxu0 0.0
    %4181 = vmatpush1.msra.mxu0 %v4055
    %4182 = vmatprep.subr.mxu0 0.0
    %4183 = vmatpush2.msra.mxu0 %v4117
    %4184 = vmatprep.subr.mxu0 0.0
    %4185 = vmatpush2.msra.mxu0 %v4115
    %4186 = vmatprep.subr.mxu0 0.0
    %4187 = vmatpush2.msra.mxu0 %v4113
    %4188 = vmatprep.subr.mxu0 0.0
    %4189 = vmatpush2.msra.mxu0 %v4111
    %4190 = vmatprep.subr.mxu0 0.0
    %4191 = vmatpush2.msra.mxu0 %v4109
    %4192 = vmatprep.subr.mxu0 0.0
    %4193 = vmatpush2.msra.mxu0 %v4107
    %4194 = vmatprep.subr.mxu0 0.0
    %4195 = vmatpush2.msra.mxu0 %v4105
    %4196 = vmatprep.subr.mxu0 0.0
    %4197 = vmatpush2.msra.mxu0 %v4103
    %4198 = vmatprep.subr.mxu0 0.0
    %4199 = vmatpush2.msra.mxu0 %v4101
    %4200 = vmatprep.subr.mxu0 0.0
    %4201 = vmatpush2.msra.mxu0 %v4099
    %4202 = vmatprep.subr.mxu0 0.0
    %4203 = vmatpush2.msra.mxu0 %v4097
    %4204 = vmatprep.subr.mxu0 0.0
    %4205 = vmatpush2.msra.mxu0 %v4095
    %4206 = vmatprep.subr.mxu0 0.0
    %4207 = vmatpush2.msra.mxu0 %v4093
    %4208 = vmatprep.subr.mxu0 0.0
    %4209 = vmatpush2.msra.mxu0 %v4091
    %4210 = vmatprep.subr.mxu0 0.0
    %4211 = vmatpush2.msra.mxu0 %v4089
    %4212 = vmatprep.subr.mxu0 0.0
    %4213 = vmatpush2.msra.mxu0 %v4087
    %4214 = vmatprep.mubr.f32.mxu0 %v3865
    %4215 = vmatmul.mubr.f32.gmra.mxu0 %v3863
    %v4216 = vpop.f32.mrf.mxu0
    %v4217 = vadd.f32 0.0, %v4216
    %v4218 = vpop.f32.mrf.mxu0
    %4219 = vmatprep.mubr.f32.mxu0 %v3869
    %4220 = vmatmul.mubr.f32.gmra.mxu0 %v3867
    %v4221 = vpop.f32.mrf.mxu0
    %v4222 = vadd.f32 0.0, %v4221
    %v4223 = vpop.f32.mrf.mxu0
    %4224 = vmatprep.mubr.f32.mxu0 %v3873
    %4225 = vmatmul.mubr.f32.gmra.mxu0 %v3871
    %v4226 = vpop.f32.mrf.mxu0
    %v4227 = vadd.f32 0.0, %v4226
    %v4228 = vpop.f32.mrf.mxu0
    %4229 = vmatprep.mubr.f32.mxu0 %v3877
    %4230 = vmatmul.mubr.f32.gmra.mxu0 %v3875
    %v4231 = vpop.f32.mrf.mxu0
    %v4232 = vadd.f32 0.0, %v4231
    %v4233 = vpop.f32.mrf.mxu0
    %4234 = vmatprep.mubr.f32.mxu0 %v3881
    %4235 = vmatmul.mubr.f32.gmra.mxu0 %v3879
    %v4236 = vpop.f32.mrf.mxu0
    %v4237 = vadd.f32 0.0, %v4236
    %v4238 = vpop.f32.mrf.mxu0
    %4239 = vmatprep.mubr.f32.mxu0 %v3885
    %4240 = vmatmul.mubr.f32.gmra.mxu0 %v3883
    %v4241 = vpop.f32.mrf.mxu0
    %v4242 = vadd.f32 0.0, %v4241
    %v4243 = vpop.f32.mrf.mxu0
    %4244 = vmatprep.mubr.f32.mxu0 %v3889
    %4245 = vmatmul.mubr.f32.gmra.mxu0 %v3887
    %v4246 = vpop.f32.mrf.mxu0
    %v4247 = vadd.f32 0.0, %v4246
    %v4248 = vpop.f32.mrf.mxu0
    %4249 = vmatprep.mubr.f32.mxu0 %v3893
    %4250 = vmatmul.mubr.f32.gmra.mxu0 %v3891
    %v4251 = vpop.f32.mrf.mxu0
    %v4252 = vadd.f32 0.0, %v4251
    %v4253 = vpop.f32.mrf.mxu0
    %4254 = vdwg.mxu0
    %4255 = vmatprep.subr.mxu0 0.0
    %4256 = vmatpush1.msra.mxu0 %v714
    %4257 = vmatprep.subr.mxu0 0.0
    %4258 = vmatpush1.msra.mxu0 %v713
    %4259 = vmatprep.subr.mxu0 0.0
    %4260 = vmatpush1.msra.mxu0 %v712
    %4261 = vmatprep.subr.mxu0 0.0
    %4262 = vmatpush1.msra.mxu0 %v711
    %4263 = vmatprep.subr.mxu0 0.0
    %4264 = vmatpush1.msra.mxu0 %v710
    %4265 = vmatprep.subr.mxu0 0.0
    %4266 = vmatpush1.msra.mxu0 %v709
    %4267 = vmatprep.subr.mxu0 0.0
    %4268 = vmatpush1.msra.mxu0 %v708
    %4269 = vmatprep.subr.mxu0 0.0
    %4270 = vmatpush1.msra.mxu0 %v707
    %4271 = vmatprep.subr.mxu0 0.0
    %4272 = vmatpush1.msra.mxu0 %v706
    %4273 = vmatprep.subr.mxu0 0.0
    %4274 = vmatpush1.msra.mxu0 %v705
    %4275 = vmatprep.subr.mxu0 0.0
    %4276 = vmatpush1.msra.mxu0 %v704
    %4277 = vmatprep.subr.mxu0 0.0
    %4278 = vmatpush1.msra.mxu0 %v703
    %4279 = vmatprep.subr.mxu0 0.0
    %4280 = vmatpush1.msra.mxu0 %v702
    %4281 = vmatprep.subr.mxu0 0.0
    %4282 = vmatpush1.msra.mxu0 %v701
    %4283 = vmatprep.subr.mxu0 0.0
    %4284 = vmatpush1.msra.mxu0 %v700
    %4285 = vmatprep.subr.mxu0 0.0
    %4286 = vmatpush1.msra.mxu0 %v699
    %4287 = vmatprep.subr.mxu0 0.0
    %4288 = vmatpush2.msra.mxu0 %v730
    %4289 = vmatprep.subr.mxu0 0.0
    %4290 = vmatpush2.msra.mxu0 %v729
    %4291 = vmatprep.subr.mxu0 0.0
    %4292 = vmatpush2.msra.mxu0 %v728
    %4293 = vmatprep.subr.mxu0 0.0
    %4294 = vmatpush2.msra.mxu0 %v727
    %4295 = vmatprep.subr.mxu0 0.0
    %4296 = vmatpush2.msra.mxu0 %v726
    %4297 = vmatprep.subr.mxu0 0.0
    %4298 = vmatpush2.msra.mxu0 %v725
    %4299 = vmatprep.subr.mxu0 0.0
    %4300 = vmatpush2.msra.mxu0 %v724
    %4301 = vmatprep.subr.mxu0 0.0
    %4302 = vmatpush2.msra.mxu0 %v723
    %4303 = vmatprep.subr.mxu0 0.0
    %4304 = vmatpush2.msra.mxu0 %v722
    %4305 = vmatprep.subr.mxu0 0.0
    %4306 = vmatpush2.msra.mxu0 %v721
    %4307 = vmatprep.subr.mxu0 0.0
    %4308 = vmatpush2.msra.mxu0 %v720
    %4309 = vmatprep.subr.mxu0 0.0
    %4310 = vmatpush2.msra.mxu0 %v719
    %4311 = vmatprep.subr.mxu0 0.0
    %4312 = vmatpush2.msra.mxu0 %v718
    %4313 = vmatprep.subr.mxu0 0.0
    %4314 = vmatpush2.msra.mxu0 %v717
    %4315 = vmatprep.subr.mxu0 0.0
    %4316 = vmatpush2.msra.mxu0 %v716
    %4317 = vmatprep.subr.mxu0 0.0
    %4318 = vmatpush2.msra.mxu0 %v715
    %4319 = vmatprep.mubr.f32.mxu0 %v3865
    %4320 = vmatmul.mubr.f32.gmra.mxu0 %v3863
    %v4321 = vpop.f32.mrf.mxu0
    %v4322 = vadd.f32 0.0, %v4321
    %v4323 = vpop.f32.mrf.mxu0
    %4324 = vmatprep.mubr.f32.mxu0 %v3869
    %4325 = vmatmul.mubr.f32.gmra.mxu0 %v3867
    %v4326 = vpop.f32.mrf.mxu0
    %v4327 = vadd.f32 0.0, %v4326
    %v4328 = vpop.f32.mrf.mxu0
    %4329 = vmatprep.mubr.f32.mxu0 %v3873
    %4330 = vmatmul.mubr.f32.gmra.mxu0 %v3871
    %v4331 = vpop.f32.mrf.mxu0
    %v4332 = vadd.f32 0.0, %v4331
    %v4333 = vpop.f32.mrf.mxu0
    %4334 = vmatprep.mubr.f32.mxu0 %v3877
    %4335 = vmatmul.mubr.f32.gmra.mxu0 %v3875
    %v4336 = vpop.f32.mrf.mxu0
    %v4337 = vadd.f32 0.0, %v4336
    %v4338 = vpop.f32.mrf.mxu0
    %4339 = vmatprep.mubr.f32.mxu0 %v3881
    %4340 = vmatmul.mubr.f32.gmra.mxu0 %v3879
    %v4341 = vpop.f32.mrf.mxu0
    %v4342 = vadd.f32 0.0, %v4341
    %v4343 = vpop.f32.mrf.mxu0
    %4344 = vmatprep.mubr.f32.mxu0 %v3885
    %4345 = vmatmul.mubr.f32.gmra.mxu0 %v3883
    %v4346 = vpop.f32.mrf.mxu0
    %v4347 = vadd.f32 0.0, %v4346
    %v4348 = vpop.f32.mrf.mxu0
    %4349 = vmatprep.mubr.f32.mxu0 %v3889
    %4350 = vmatmul.mubr.f32.gmra.mxu0 %v3887
    %v4351 = vpop.f32.mrf.mxu0
    %v4352 = vadd.f32 0.0, %v4351
    %v4353 = vpop.f32.mrf.mxu0
    %4354 = vmatprep.mubr.f32.mxu0 %v3893
    %4355 = vmatmul.mubr.f32.gmra.mxu0 %v3891
    %v4356 = vpop.f32.mrf.mxu0
    %v4357 = vadd.f32 0.0, %v4356
    %v4358 = vpop.f32.mrf.mxu0
    %4359 = vdwg.mxu0
    %v4360 = vmax.f32 %v4322, 1e-30
    %v4361 = vmax.f32 %v4327, 1e-30
    %v4362 = vmax.f32 %v4332, 1e-30
    %v4363 = vmax.f32 %v4337, 1e-30
    %v4364 = vmax.f32 %v4342, 1e-30
    %v4365 = vmax.f32 %v4347, 1e-30
    %v4366 = vmax.f32 %v4352, 1e-30
    %v4367 = vmax.f32 %v4357, 1e-30
    %v4368 = vrcp.pop %v4360
    %v4369 = vrcp.pop %v4361
    %v4370 = vrcp.pop %v4362
    %v4371 = vrcp.pop %v4363
    %v4372 = vrcp.pop %v4364
    %v4373 = vrcp.pop %v4365
    %v4374 = vrcp.pop %v4366
    %v4375 = vrcp.pop %v4367
    %v4376 = vmul.f32 %v4217, %v4368
    %v4377 = vmul.f32 %v4222, %v4369
    %v4378 = vmul.f32 %v4227, %v4370
    %v4379 = vmul.f32 %v4232, %v4371
    %v4380 = vmul.f32 %v4237, %v4372
    %v4381 = vmul.f32 %v4242, %v4373
    %v4382 = vmul.f32 %v4247, %v4374
    %v4383 = vmul.f32 %v4252, %v4375
    %4384 = vrot.lane.b32.xlu0 %v1736, 96
    %v4385 = vpop.permute.xlu0 %4384
    %4386 = vrot.lane.b32.xlu0 %v1737, 96
    %v4387 = vpop.permute.xlu0 %4386
    %4388 = vrot.lane.b32.xlu0 %v1738, 96
    %v4389 = vpop.permute.xlu0 %4388
    %4390 = vrot.lane.b32.xlu0 %v1739, 96
    %v4391 = vpop.permute.xlu0 %4390
    %4392 = vrot.lane.b32.xlu0 %v1740, 96
    %v4393 = vpop.permute.xlu0 %4392
    %4394 = vrot.lane.b32.xlu0 %v1741, 96
    %v4395 = vpop.permute.xlu0 %4394
    %4396 = vrot.lane.b32.xlu0 %v1742, 96
    %v4397 = vpop.permute.xlu0 %4396
    %4398 = vrot.lane.b32.xlu0 %v1743, 96
    %v4399 = vpop.permute.xlu0 %4398
    %4400 = vrot.lane.b32.xlu0 %v1744, 96
    %v4401 = vpop.permute.xlu0 %4400
    %4402 = vrot.lane.b32.xlu0 %v1745, 96
    %v4403 = vpop.permute.xlu0 %4402
    %4404 = vrot.lane.b32.xlu0 %v1746, 96
    %v4405 = vpop.permute.xlu0 %4404
    %4406 = vrot.lane.b32.xlu0 %v1747, 96
    %v4407 = vpop.permute.xlu0 %4406
    %4408 = vrot.lane.b32.xlu0 %v1748, 96
    %v4409 = vpop.permute.xlu0 %4408
    %4410 = vrot.lane.b32.xlu0 %v1749, 96
    %v4411 = vpop.permute.xlu0 %4410
    %4412 = vrot.lane.b32.xlu0 %v1750, 96
    %v4413 = vpop.permute.xlu0 %4412
    %4414 = vrot.lane.b32.xlu0 %v1751, 96
    %v4415 = vpop.permute.xlu0 %4414
    %4416 = vrot.lane.b32.xlu0 %v1752, 96
    %v4417 = vpop.permute.xlu0 %4416
    %4418 = vrot.lane.b32.xlu0 %v1753, 96
    %v4419 = vpop.permute.xlu0 %4418
    %4420 = vrot.lane.b32.xlu0 %v1754, 96
    %v4421 = vpop.permute.xlu0 %4420
    %4422 = vrot.lane.b32.xlu0 %v1755, 96
    %v4423 = vpop.permute.xlu0 %4422
    %4424 = vrot.lane.b32.xlu0 %v1756, 96
    %v4425 = vpop.permute.xlu0 %4424
    %4426 = vrot.lane.b32.xlu0 %v1757, 96
    %v4427 = vpop.permute.xlu0 %4426
    %4428 = vrot.lane.b32.xlu0 %v1758, 96
    %v4429 = vpop.permute.xlu0 %4428
    %4430 = vrot.lane.b32.xlu0 %v1759, 96
    %v4431 = vpop.permute.xlu0 %4430
    %4432 = vrot.lane.b32.xlu0 %v1760, 96
    %v4433 = vpop.permute.xlu0 %4432
    %4434 = vrot.lane.b32.xlu0 %v1761, 96
    %v4435 = vpop.permute.xlu0 %4434
    %4436 = vrot.lane.b32.xlu0 %v1762, 96
    %v4437 = vpop.permute.xlu0 %4436
    %4438 = vrot.lane.b32.xlu0 %v1763, 96
    %v4439 = vpop.permute.xlu0 %4438
    %4440 = vrot.lane.b32.xlu0 %v1764, 96
    %v4441 = vpop.permute.xlu0 %4440
    %4442 = vrot.lane.b32.xlu0 %v1765, 96
    %v4443 = vpop.permute.xlu0 %4442
    %4444 = vrot.lane.b32.xlu0 %v1766, 96
    %v4445 = vpop.permute.xlu0 %4444
    %4446 = vrot.lane.b32.xlu0 %v1767, 96
    %v4447 = vpop.permute.xlu0 %4446
    %v4480 = vmul.f32 %v691, %v4385
    %v4481 = vmul.f32 %v692, %v4387
    %v4482 = vmul.f32 %v693, %v4389
    %v4483 = vmul.f32 %v694, %v4391
    %v4484 = vmul.f32 %v695, %v4393
    %v4485 = vmul.f32 %v696, %v4395
    %v4486 = vmul.f32 %v697, %v4397
    %v4487 = vmul.f32 %v698, %v4399
    %v4488 = vmul.f32 %v691, %v4401
    %v4489 = vmul.f32 %v692, %v4403
    %v4490 = vmul.f32 %v693, %v4405
    %v4491 = vmul.f32 %v694, %v4407
    %v4492 = vmul.f32 %v695, %v4409
    %v4493 = vmul.f32 %v696, %v4411
    %v4494 = vmul.f32 %v697, %v4413
    %v4495 = vmul.f32 %v698, %v4415
    %v4496 = vmul.f32 %v691, %v4417
    %v4497 = vmul.f32 %v692, %v4419
    %v4498 = vmul.f32 %v693, %v4421
    %v4499 = vmul.f32 %v694, %v4423
    %v4500 = vmul.f32 %v695, %v4425
    %v4501 = vmul.f32 %v696, %v4427
    %v4502 = vmul.f32 %v697, %v4429
    %v4503 = vmul.f32 %v698, %v4431
    %v4504 = vmul.f32 %v691, %v4433
    %v4505 = vmul.f32 %v692, %v4435
    %v4506 = vmul.f32 %v693, %v4437
    %v4507 = vmul.f32 %v694, %v4439
    %v4508 = vmul.f32 %v695, %v4441
    %v4509 = vmul.f32 %v696, %v4443
    %v4510 = vmul.f32 %v697, %v4445
    %v4511 = vmul.f32 %v698, %v4447
    %4544 = vrot.lane.b32.xlu0 %v1929, 64
    %v4545 = vpop.permute.xlu0 %4544
    %4546 = vrot.lane.b32.xlu0 %v1930, 64
    %v4547 = vpop.permute.xlu0 %4546
    %4548 = vrot.lane.b32.xlu0 %v1931, 64
    %v4549 = vpop.permute.xlu0 %4548
    %4550 = vrot.lane.b32.xlu0 %v1932, 64
    %v4551 = vpop.permute.xlu0 %4550
    %4552 = vrot.lane.b32.xlu0 %v1933, 64
    %v4553 = vpop.permute.xlu0 %4552
    %4554 = vrot.lane.b32.xlu0 %v1934, 64
    %v4555 = vpop.permute.xlu0 %4554
    %4556 = vrot.lane.b32.xlu0 %v1935, 64
    %v4557 = vpop.permute.xlu0 %4556
    %4558 = vrot.lane.b32.xlu0 %v1936, 64
    %v4559 = vpop.permute.xlu0 %4558
    %4560 = vrot.lane.b32.xlu0 %v1937, 64
    %v4561 = vpop.permute.xlu0 %4560
    %4562 = vrot.lane.b32.xlu0 %v1938, 64
    %v4563 = vpop.permute.xlu0 %4562
    %4564 = vrot.lane.b32.xlu0 %v1939, 64
    %v4565 = vpop.permute.xlu0 %4564
    %4566 = vrot.lane.b32.xlu0 %v1940, 64
    %v4567 = vpop.permute.xlu0 %4566
    %4568 = vrot.lane.b32.xlu0 %v1941, 64
    %v4569 = vpop.permute.xlu0 %4568
    %4570 = vrot.lane.b32.xlu0 %v1942, 64
    %v4571 = vpop.permute.xlu0 %4570
    %4572 = vrot.lane.b32.xlu0 %v1943, 64
    %v4573 = vpop.permute.xlu0 %4572
    %4574 = vrot.lane.b32.xlu0 %v1944, 64
    %v4575 = vpop.permute.xlu0 %4574
    %4576 = vrot.lane.b32.xlu0 %v1945, 64
    %v4577 = vpop.permute.xlu0 %4576
    %4578 = vrot.lane.b32.xlu0 %v1946, 64
    %v4579 = vpop.permute.xlu0 %4578
    %4580 = vrot.lane.b32.xlu0 %v1947, 64
    %v4581 = vpop.permute.xlu0 %4580
    %4582 = vrot.lane.b32.xlu0 %v1948, 64
    %v4583 = vpop.permute.xlu0 %4582
    %4584 = vrot.lane.b32.xlu0 %v1949, 64
    %v4585 = vpop.permute.xlu0 %4584
    %4586 = vrot.lane.b32.xlu0 %v1950, 64
    %v4587 = vpop.permute.xlu0 %4586
    %4588 = vrot.lane.b32.xlu0 %v1951, 64
    %v4589 = vpop.permute.xlu0 %4588
    %4590 = vrot.lane.b32.xlu0 %v1952, 64
    %v4591 = vpop.permute.xlu0 %4590
    %4592 = vrot.lane.b32.xlu0 %v1953, 64
    %v4593 = vpop.permute.xlu0 %4592
    %4594 = vrot.lane.b32.xlu0 %v1954, 64
    %v4595 = vpop.permute.xlu0 %4594
    %4596 = vrot.lane.b32.xlu0 %v1955, 64
    %v4597 = vpop.permute.xlu0 %4596
    %4598 = vrot.lane.b32.xlu0 %v1956, 64
    %v4599 = vpop.permute.xlu0 %4598
    %4600 = vrot.lane.b32.xlu0 %v1957, 64
    %v4601 = vpop.permute.xlu0 %4600
    %4602 = vrot.lane.b32.xlu0 %v1958, 64
    %v4603 = vpop.permute.xlu0 %4602
    %4604 = vrot.lane.b32.xlu0 %v1959, 64
    %v4605 = vpop.permute.xlu0 %4604
    %4606 = vrot.lane.b32.xlu0 %v1960, 64
    %v4607 = vpop.permute.xlu0 %4606
    %v4640 = vmul.f32 %v691, %v4545
    %v4641 = vmul.f32 %v692, %v4547
    %v4642 = vmul.f32 %v693, %v4549
    %v4643 = vmul.f32 %v694, %v4551
    %v4644 = vmul.f32 %v695, %v4553
    %v4645 = vmul.f32 %v696, %v4555
    %v4646 = vmul.f32 %v697, %v4557
    %v4647 = vmul.f32 %v698, %v4559
    %v4648 = vmul.f32 %v691, %v4561
    %v4649 = vmul.f32 %v692, %v4563
    %v4650 = vmul.f32 %v693, %v4565
    %v4651 = vmul.f32 %v694, %v4567
    %v4652 = vmul.f32 %v695, %v4569
    %v4653 = vmul.f32 %v696, %v4571
    %v4654 = vmul.f32 %v697, %v4573
    %v4655 = vmul.f32 %v698, %v4575
    %v4656 = vmul.f32 %v691, %v4577
    %v4657 = vmul.f32 %v692, %v4579
    %v4658 = vmul.f32 %v693, %v4581
    %v4659 = vmul.f32 %v694, %v4583
    %v4660 = vmul.f32 %v695, %v4585
    %v4661 = vmul.f32 %v696, %v4587
    %v4662 = vmul.f32 %v697, %v4589
    %v4663 = vmul.f32 %v698, %v4591
    %v4664 = vmul.f32 %v691, %v4593
    %v4665 = vmul.f32 %v692, %v4595
    %v4666 = vmul.f32 %v693, %v4597
    %v4667 = vmul.f32 %v694, %v4599
    %v4668 = vmul.f32 %v695, %v4601
    %v4669 = vmul.f32 %v696, %v4603
    %v4670 = vmul.f32 %v697, %v4605
    %v4671 = vmul.f32 %v698, %v4607
    %4704 = vrot.lane.b32.xlu0 %v4640, 32
    %v4705 = vpop.permute.xlu0 %4704
    %4706 = vrot.lane.b32.xlu0 %v4641, 32
    %v4707 = vpop.permute.xlu0 %4706
    %4708 = vrot.lane.b32.xlu0 %v4642, 32
    %v4709 = vpop.permute.xlu0 %4708
    %4710 = vrot.lane.b32.xlu0 %v4643, 32
    %v4711 = vpop.permute.xlu0 %4710
    %4712 = vrot.lane.b32.xlu0 %v4644, 32
    %v4713 = vpop.permute.xlu0 %4712
    %4714 = vrot.lane.b32.xlu0 %v4645, 32
    %v4715 = vpop.permute.xlu0 %4714
    %4716 = vrot.lane.b32.xlu0 %v4646, 32
    %v4717 = vpop.permute.xlu0 %4716
    %4718 = vrot.lane.b32.xlu0 %v4647, 32
    %v4719 = vpop.permute.xlu0 %4718
    %4720 = vrot.lane.b32.xlu0 %v4648, 32
    %v4721 = vpop.permute.xlu0 %4720
    %4722 = vrot.lane.b32.xlu0 %v4649, 32
    %v4723 = vpop.permute.xlu0 %4722
    %4724 = vrot.lane.b32.xlu0 %v4650, 32
    %v4725 = vpop.permute.xlu0 %4724
    %4726 = vrot.lane.b32.xlu0 %v4651, 32
    %v4727 = vpop.permute.xlu0 %4726
    %4728 = vrot.lane.b32.xlu0 %v4652, 32
    %v4729 = vpop.permute.xlu0 %4728
    %4730 = vrot.lane.b32.xlu0 %v4653, 32
    %v4731 = vpop.permute.xlu0 %4730
    %4732 = vrot.lane.b32.xlu0 %v4654, 32
    %v4733 = vpop.permute.xlu0 %4732
    %4734 = vrot.lane.b32.xlu0 %v4655, 32
    %v4735 = vpop.permute.xlu0 %4734
    %4736 = vrot.lane.b32.xlu0 %v4656, 32
    %v4737 = vpop.permute.xlu0 %4736
    %4738 = vrot.lane.b32.xlu0 %v4657, 32
    %v4739 = vpop.permute.xlu0 %4738
    %4740 = vrot.lane.b32.xlu0 %v4658, 32
    %v4741 = vpop.permute.xlu0 %4740
    %4742 = vrot.lane.b32.xlu0 %v4659, 32
    %v4743 = vpop.permute.xlu0 %4742
    %4744 = vrot.lane.b32.xlu0 %v4660, 32
    %v4745 = vpop.permute.xlu0 %4744
    %4746 = vrot.lane.b32.xlu0 %v4661, 32
    %v4747 = vpop.permute.xlu0 %4746
    %4748 = vrot.lane.b32.xlu0 %v4662, 32
    %v4749 = vpop.permute.xlu0 %4748
    %4750 = vrot.lane.b32.xlu0 %v4663, 32
    %v4751 = vpop.permute.xlu0 %4750
    %4752 = vrot.lane.b32.xlu0 %v4664, 32
    %v4753 = vpop.permute.xlu0 %4752
    %4754 = vrot.lane.b32.xlu0 %v4665, 32
    %v4755 = vpop.permute.xlu0 %4754
    %4756 = vrot.lane.b32.xlu0 %v4666, 32
    %v4757 = vpop.permute.xlu0 %4756
    %4758 = vrot.lane.b32.xlu0 %v4667, 32
    %v4759 = vpop.permute.xlu0 %4758
    %4760 = vrot.lane.b32.xlu0 %v4668, 32
    %v4761 = vpop.permute.xlu0 %4760
    %4762 = vrot.lane.b32.xlu0 %v4669, 32
    %v4763 = vpop.permute.xlu0 %4762
    %4764 = vrot.lane.b32.xlu0 %v4670, 32
    %v4765 = vpop.permute.xlu0 %4764
    %4766 = vrot.lane.b32.xlu0 %v4671, 32
    %v4767 = vpop.permute.xlu0 %4766
    %v4800 = vadd.f32 %v4480, %v4705
    %v4801 = vadd.f32 %v4481, %v4707
    %v4802 = vadd.f32 %v4482, %v4709
    %v4803 = vadd.f32 %v4483, %v4711
    %v4804 = vadd.f32 %v4484, %v4713
    %v4805 = vadd.f32 %v4485, %v4715
    %v4806 = vadd.f32 %v4486, %v4717
    %v4807 = vadd.f32 %v4487, %v4719
    %v4808 = vadd.f32 %v4488, %v4721
    %v4809 = vadd.f32 %v4489, %v4723
    %v4810 = vadd.f32 %v4490, %v4725
    %v4811 = vadd.f32 %v4491, %v4727
    %v4812 = vadd.f32 %v4492, %v4729
    %v4813 = vadd.f32 %v4493, %v4731
    %v4814 = vadd.f32 %v4494, %v4733
    %v4815 = vadd.f32 %v4495, %v4735
    %v4816 = vadd.f32 %v4496, %v4737
    %v4817 = vadd.f32 %v4497, %v4739
    %v4818 = vadd.f32 %v4498, %v4741
    %v4819 = vadd.f32 %v4499, %v4743
    %v4820 = vadd.f32 %v4500, %v4745
    %v4821 = vadd.f32 %v4501, %v4747
    %v4822 = vadd.f32 %v4502, %v4749
    %v4823 = vadd.f32 %v4503, %v4751
    %v4824 = vadd.f32 %v4504, %v4753
    %v4825 = vadd.f32 %v4505, %v4755
    %v4826 = vadd.f32 %v4506, %v4757
    %v4827 = vadd.f32 %v4507, %v4759
    %v4828 = vadd.f32 %v4508, %v4761
    %v4829 = vadd.f32 %v4509, %v4763
    %v4830 = vadd.f32 %v4510, %v4765
    %v4831 = vadd.f32 %v4511, %v4767
    %4832 = vrot.lane.b32.xlu0 %v667, 32
    %v4833 = vpop.permute.xlu0 %4832
    %4834 = vrot.lane.b32.xlu0 %v668, 32
    %v4835 = vpop.permute.xlu0 %4834
    %4836 = vrot.lane.b32.xlu0 %v669, 32
    %v4837 = vpop.permute.xlu0 %4836
    %4838 = vrot.lane.b32.xlu0 %v670, 32
    %v4839 = vpop.permute.xlu0 %4838
    %4840 = vrot.lane.b32.xlu0 %v671, 32
    %v4841 = vpop.permute.xlu0 %4840
    %4842 = vrot.lane.b32.xlu0 %v672, 32
    %v4843 = vpop.permute.xlu0 %4842
    %4844 = vrot.lane.b32.xlu0 %v673, 32
    %v4845 = vpop.permute.xlu0 %4844
    %4846 = vrot.lane.b32.xlu0 %v674, 32
    %v4847 = vpop.permute.xlu0 %4846
    %4880 = vrot.lane.b32.xlu0 %v4800, 32
    %v4881 = vpop.permute.xlu0 %4880
    %4882 = vrot.lane.b32.xlu0 %v4801, 32
    %v4883 = vpop.permute.xlu0 %4882
    %4884 = vrot.lane.b32.xlu0 %v4802, 32
    %v4885 = vpop.permute.xlu0 %4884
    %4886 = vrot.lane.b32.xlu0 %v4803, 32
    %v4887 = vpop.permute.xlu0 %4886
    %4888 = vrot.lane.b32.xlu0 %v4804, 32
    %v4889 = vpop.permute.xlu0 %4888
    %4890 = vrot.lane.b32.xlu0 %v4805, 32
    %v4891 = vpop.permute.xlu0 %4890
    %4892 = vrot.lane.b32.xlu0 %v4806, 32
    %v4893 = vpop.permute.xlu0 %4892
    %4894 = vrot.lane.b32.xlu0 %v4807, 32
    %v4895 = vpop.permute.xlu0 %4894
    %4896 = vrot.lane.b32.xlu0 %v4808, 32
    %v4897 = vpop.permute.xlu0 %4896
    %4898 = vrot.lane.b32.xlu0 %v4809, 32
    %v4899 = vpop.permute.xlu0 %4898
    %4900 = vrot.lane.b32.xlu0 %v4810, 32
    %v4901 = vpop.permute.xlu0 %4900
    %4902 = vrot.lane.b32.xlu0 %v4811, 32
    %v4903 = vpop.permute.xlu0 %4902
    %4904 = vrot.lane.b32.xlu0 %v4812, 32
    %v4905 = vpop.permute.xlu0 %4904
    %4906 = vrot.lane.b32.xlu0 %v4813, 32
    %v4907 = vpop.permute.xlu0 %4906
    %4908 = vrot.lane.b32.xlu0 %v4814, 32
    %v4909 = vpop.permute.xlu0 %4908
    %4910 = vrot.lane.b32.xlu0 %v4815, 32
    %v4911 = vpop.permute.xlu0 %4910
    %4912 = vrot.lane.b32.xlu0 %v4816, 32
    %v4913 = vpop.permute.xlu0 %4912
    %4914 = vrot.lane.b32.xlu0 %v4817, 32
    %v4915 = vpop.permute.xlu0 %4914
    %4916 = vrot.lane.b32.xlu0 %v4818, 32
    %v4917 = vpop.permute.xlu0 %4916
    %4918 = vrot.lane.b32.xlu0 %v4819, 32
    %v4919 = vpop.permute.xlu0 %4918
    %4920 = vrot.lane.b32.xlu0 %v4820, 32
    %v4921 = vpop.permute.xlu0 %4920
    %4922 = vrot.lane.b32.xlu0 %v4821, 32
    %v4923 = vpop.permute.xlu0 %4922
    %4924 = vrot.lane.b32.xlu0 %v4822, 32
    %v4925 = vpop.permute.xlu0 %4924
    %4926 = vrot.lane.b32.xlu0 %v4823, 32
    %v4927 = vpop.permute.xlu0 %4926
    %4928 = vrot.lane.b32.xlu0 %v4824, 32
    %v4929 = vpop.permute.xlu0 %4928
    %4930 = vrot.lane.b32.xlu0 %v4825, 32
    %v4931 = vpop.permute.xlu0 %4930
    %4932 = vrot.lane.b32.xlu0 %v4826, 32
    %v4933 = vpop.permute.xlu0 %4932
    %4934 = vrot.lane.b32.xlu0 %v4827, 32
    %v4935 = vpop.permute.xlu0 %4934
    %4936 = vrot.lane.b32.xlu0 %v4828, 32
    %v4937 = vpop.permute.xlu0 %4936
    %4938 = vrot.lane.b32.xlu0 %v4829, 32
    %v4939 = vpop.permute.xlu0 %4938
    %4940 = vrot.lane.b32.xlu0 %v4830, 32
    %v4941 = vpop.permute.xlu0 %4940
    %4942 = vrot.lane.b32.xlu0 %v4831, 32
    %v4943 = vpop.permute.xlu0 %4942
    %v4944 = vsel %vm1163, %v4833, 0
    %v4946 = vsel %vm1163, %v4835, 0
    %v4948 = vsel %vm1163, %v4837, 0
    %v4950 = vsel %vm1163, %v4839, 0
    %v4952 = vsel %vm1163, %v4841, 0
    %v4954 = vsel %vm1163, %v4843, 0
    %v4956 = vsel %vm1163, %v4845, 0
    %v4958 = vsel %vm1163, %v4847, 0
    %v4960 = vsel %vm1163, %v4881, 0
    %v4962 = vsel %vm1163, %v4883, 0
    %v4964 = vsel %vm1163, %v4885, 0
    %v4966 = vsel %vm1163, %v4887, 0
    %v4968 = vsel %vm1163, %v4889, 0
    %v4970 = vsel %vm1163, %v4891, 0
    %v4972 = vsel %vm1163, %v4893, 0
    %v4974 = vsel %vm1163, %v4895, 0
    %v4976 = vsel %vm1163, %v4897, 0
    %v4978 = vsel %vm1163, %v4899, 0
    %v4980 = vsel %vm1163, %v4901, 0
    %v4982 = vsel %vm1163, %v4903, 0
    %v4984 = vsel %vm1163, %v4905, 0
    %v4986 = vsel %vm1163, %v4907, 0
    %v4988 = vsel %vm1163, %v4909, 0
    %v4990 = vsel %vm1163, %v4911, 0
    %v4992 = vsel %vm1163, %v4913, 0
    %v4994 = vsel %vm1163, %v4915, 0
    %v4996 = vsel %vm1163, %v4917, 0
    %v4998 = vsel %vm1163, %v4919, 0
    %v5000 = vsel %vm1163, %v4921, 0
    %v5002 = vsel %vm1163, %v4923, 0
    %v5004 = vsel %vm1163, %v4925, 0
    %v5006 = vsel %vm1163, %v4927, 0
    %v5008 = vsel %vm1163, %v4929, 0
    %v5010 = vsel %vm1163, %v4931, 0
    %v5012 = vsel %vm1163, %v4933, 0
    %v5014 = vsel %vm1163, %v4935, 0
    %v5016 = vsel %vm1163, %v4937, 0
    %v5018 = vsel %vm1163, %v4939, 0
    %v5020 = vsel %vm1163, %v4941, 0
    %v5022 = vsel %vm1163, %v4943, 0
    %5024 = vmatprep.subr.mxu0 0.0
    %5025 = vmatpush1.xpose.msra.mxu0 %v4990
    %5026 = vmatprep.subr.mxu0 0.0
    %5027 = vmatpush1.xpose.msra.mxu0 %v4988
    %5028 = vmatprep.subr.mxu0 0.0
    %5029 = vmatpush1.xpose.msra.mxu0 %v4986
    %5030 = vmatprep.subr.mxu0 0.0
    %5031 = vmatpush1.xpose.msra.mxu0 %v4984
    %5032 = vmatprep.subr.mxu0 0.0
    %5033 = vmatpush1.xpose.msra.mxu0 %v4982
    %5034 = vmatprep.subr.mxu0 0.0
    %5035 = vmatpush1.xpose.msra.mxu0 %v4980
    %5036 = vmatprep.subr.mxu0 0.0
    %5037 = vmatpush1.xpose.msra.mxu0 %v4978
    %5038 = vmatprep.subr.mxu0 0.0
    %5039 = vmatpush1.xpose.msra.mxu0 %v4976
    %5040 = vmatprep.subr.mxu0 0.0
    %5041 = vmatpush1.xpose.msra.mxu0 %v4974
    %5042 = vmatprep.subr.mxu0 0.0
    %5043 = vmatpush1.xpose.msra.mxu0 %v4972
    %5044 = vmatprep.subr.mxu0 0.0
    %5045 = vmatpush1.xpose.msra.mxu0 %v4970
    %5046 = vmatprep.subr.mxu0 0.0
    %5047 = vmatpush1.xpose.msra.mxu0 %v4968
    %5048 = vmatprep.subr.mxu0 0.0
    %5049 = vmatpush1.xpose.msra.mxu0 %v4966
    %5050 = vmatprep.subr.mxu0 0.0
    %5051 = vmatpush1.xpose.msra.mxu0 %v4964
    %5052 = vmatprep.subr.mxu0 0.0
    %5053 = vmatpush1.xpose.msra.mxu0 %v4962
    %5054 = vmatprep.subr.mxu0 0.0
    %5055 = vmatpush1.xpose.msra.mxu0 %v4960
    %5056 = vmatprep.subr.mxu0 0.0
    %5057 = vmatpush2.xpose.msra.mxu0 %v5022
    %5058 = vmatprep.subr.mxu0 0.0
    %5059 = vmatpush2.xpose.msra.mxu0 %v5020
    %5060 = vmatprep.subr.mxu0 0.0
    %5061 = vmatpush2.xpose.msra.mxu0 %v5018
    %5062 = vmatprep.subr.mxu0 0.0
    %5063 = vmatpush2.xpose.msra.mxu0 %v5016
    %5064 = vmatprep.subr.mxu0 0.0
    %5065 = vmatpush2.xpose.msra.mxu0 %v5014
    %5066 = vmatprep.subr.mxu0 0.0
    %5067 = vmatpush2.xpose.msra.mxu0 %v5012
    %5068 = vmatprep.subr.mxu0 0.0
    %5069 = vmatpush2.xpose.msra.mxu0 %v5010
    %5070 = vmatprep.subr.mxu0 0.0
    %5071 = vmatpush2.xpose.msra.mxu0 %v5008
    %5072 = vmatprep.subr.mxu0 0.0
    %5073 = vmatpush2.xpose.msra.mxu0 %v5006
    %5074 = vmatprep.subr.mxu0 0.0
    %5075 = vmatpush2.xpose.msra.mxu0 %v5004
    %5076 = vmatprep.subr.mxu0 0.0
    %5077 = vmatpush2.xpose.msra.mxu0 %v5002
    %5078 = vmatprep.subr.mxu0 0.0
    %5079 = vmatpush2.xpose.msra.mxu0 %v5000
    %5080 = vmatprep.subr.mxu0 0.0
    %5081 = vmatpush2.xpose.msra.mxu0 %v4998
    %5082 = vmatprep.subr.mxu0 0.0
    %5083 = vmatpush2.xpose.msra.mxu0 %v4996
    %5084 = vmatprep.subr.mxu0 0.0
    %5085 = vmatpush2.xpose.msra.mxu0 %v4994
    %5086 = vmatprep.subr.mxu0 0.0
    %5087 = vmatpush2.xpose.msra.mxu0 %v4992
    %5088 = vmatprep.mubr.f32.mxu0 0.0
    %5089 = vmatmul.mubr.f32.gmra.mxu0 %v4944
    %v5090 = vpop.f32.mrf.mxu0
    %v5091 = vadd.f32 %v2154, %v5090
    %v5092 = vpop.f32.mrf.mxu0
    %v5093 = vadd.f32 %v2155, %v5092
    %5094 = vmatprep.mubr.f32.mxu0 0.0
    %5095 = vmatmul.mubr.f32.gmra.mxu0 %v4946
    %v5096 = vpop.f32.mrf.mxu0
    %v5097 = vadd.f32 %v2156, %v5096
    %v5098 = vpop.f32.mrf.mxu0
    %v5099 = vadd.f32 %v2157, %v5098
    %5100 = vmatprep.mubr.f32.mxu0 0.0
    %5101 = vmatmul.mubr.f32.gmra.mxu0 %v4948
    %v5102 = vpop.f32.mrf.mxu0
    %v5103 = vadd.f32 %v2158, %v5102
    %v5104 = vpop.f32.mrf.mxu0
    %v5105 = vadd.f32 %v2159, %v5104
    %5106 = vmatprep.mubr.f32.mxu0 0.0
    %5107 = vmatmul.mubr.f32.gmra.mxu0 %v4950
    %v5108 = vpop.f32.mrf.mxu0
    %v5109 = vadd.f32 %v2160, %v5108
    %v5110 = vpop.f32.mrf.mxu0
    %v5111 = vadd.f32 %v2161, %v5110
    %5112 = vmatprep.mubr.f32.mxu0 0.0
    %5113 = vmatmul.mubr.f32.gmra.mxu0 %v4952
    %v5114 = vpop.f32.mrf.mxu0
    %v5115 = vadd.f32 %v2162, %v5114
    %v5116 = vpop.f32.mrf.mxu0
    %v5117 = vadd.f32 %v2163, %v5116
    %5118 = vmatprep.mubr.f32.mxu0 0.0
    %5119 = vmatmul.mubr.f32.gmra.mxu0 %v4954
    %v5120 = vpop.f32.mrf.mxu0
    %v5121 = vadd.f32 %v2164, %v5120
    %v5122 = vpop.f32.mrf.mxu0
    %v5123 = vadd.f32 %v2165, %v5122
    %5124 = vmatprep.mubr.f32.mxu0 0.0
    %5125 = vmatmul.mubr.f32.gmra.mxu0 %v4956
    %v5126 = vpop.f32.mrf.mxu0
    %v5127 = vadd.f32 %v2166, %v5126
    %v5128 = vpop.f32.mrf.mxu0
    %v5129 = vadd.f32 %v2167, %v5128
    %5130 = vmatprep.mubr.f32.mxu0 0.0
    %5131 = vmatmul.mubr.f32.gmra.mxu0 %v4958
    %v5132 = vpop.f32.mrf.mxu0
    %v5133 = vadd.f32 %v2168, %v5132
    %v5134 = vpop.f32.mrf.mxu0
    %v5135 = vadd.f32 %v2169, %v5134
    %5136 = vdwg.mxu0
    %v5137 = vmax.f32 %v5091, %v5093
    %5138 = vmax.xlane.f32.xlu0 %v5137
    %v5139 = vpop.xlane.xlu0 %5138
    %v5140 = vmax.f32 %v5097, %v5099
    %5141 = vmax.xlane.f32.xlu0 %v5140
    %v5142 = vpop.xlane.xlu0 %5141
    %v5143 = vmax.f32 %v5103, %v5105
    %5144 = vmax.xlane.f32.xlu0 %v5143
    %v5145 = vpop.xlane.xlu0 %5144
    %v5146 = vmax.f32 %v5109, %v5111
    %5147 = vmax.xlane.f32.xlu0 %v5146
    %v5148 = vpop.xlane.xlu0 %5147
    %v5149 = vmax.f32 %v5115, %v5117
    %5150 = vmax.xlane.f32.xlu0 %v5149
    %v5151 = vpop.xlane.xlu0 %5150
    %v5152 = vmax.f32 %v5121, %v5123
    %5153 = vmax.xlane.f32.xlu0 %v5152
    %v5154 = vpop.xlane.xlu0 %5153
    %v5155 = vmax.f32 %v5127, %v5129
    %5156 = vmax.xlane.f32.xlu0 %v5155
    %v5157 = vpop.xlane.xlu0 %5156
    %v5158 = vmax.f32 %v5133, %v5135
    %5159 = vmax.xlane.f32.xlu0 %v5158
    %v5160 = vpop.xlane.xlu0 %5159
    %v5161 = vsub.f32 %v5091, %v5139
    %v5162 = vsub.f32 %v5093, %v5139
    %v5163 = vsub.f32 %v5097, %v5142
    %v5164 = vsub.f32 %v5099, %v5142
    %v5165 = vsub.f32 %v5103, %v5145
    %v5166 = vsub.f32 %v5105, %v5145
    %v5167 = vsub.f32 %v5109, %v5148
    %v5168 = vsub.f32 %v5111, %v5148
    %v5169 = vsub.f32 %v5115, %v5151
    %v5170 = vsub.f32 %v5117, %v5151
    %v5171 = vsub.f32 %v5121, %v5154
    %v5172 = vsub.f32 %v5123, %v5154
    %v5173 = vsub.f32 %v5127, %v5157
    %v5174 = vsub.f32 %v5129, %v5157
    %v5175 = vsub.f32 %v5133, %v5160
    %v5176 = vsub.f32 %v5135, %v5160
    %v5177 = vmul.f32 %v5161, 1.442695
    %v5178 = vpow.pop %v5177
    %v5179 = vmul.f32 %v5162, 1.442695
    %v5180 = vpow.pop %v5179
    %v5181 = vmul.f32 %v5163, 1.442695
    %v5182 = vpow.pop %v5181
    %v5183 = vmul.f32 %v5164, 1.442695
    %v5184 = vpow.pop %v5183
    %v5185 = vmul.f32 %v5165, 1.442695
    %v5186 = vpow.pop %v5185
    %v5187 = vmul.f32 %v5166, 1.442695
    %v5188 = vpow.pop %v5187
    %v5189 = vmul.f32 %v5167, 1.442695
    %v5190 = vpow.pop %v5189
    %v5191 = vmul.f32 %v5168, 1.442695
    %v5192 = vpow.pop %v5191
    %v5193 = vmul.f32 %v5169, 1.442695
    %v5194 = vpow.pop %v5193
    %v5195 = vmul.f32 %v5170, 1.442695
    %v5196 = vpow.pop %v5195
    %v5197 = vmul.f32 %v5171, 1.442695
    %v5198 = vpow.pop %v5197
    %v5199 = vmul.f32 %v5172, 1.442695
    %v5200 = vpow.pop %v5199
    %v5201 = vmul.f32 %v5173, 1.442695
    %v5202 = vpow.pop %v5201
    %v5203 = vmul.f32 %v5174, 1.442695
    %v5204 = vpow.pop %v5203
    %v5205 = vmul.f32 %v5175, 1.442695
    %v5206 = vpow.pop %v5205
    %v5207 = vmul.f32 %v5176, 1.442695
    %v5208 = vpow.pop %v5207
    %5209 = vrot.lane.b32.xlu0 %v699, 96
    %v5210 = vpop.permute.xlu0 %5209
    %5211 = vrot.lane.b32.xlu0 %v700, 96
    %v5212 = vpop.permute.xlu0 %5211
    %5213 = vrot.lane.b32.xlu0 %v701, 96
    %v5214 = vpop.permute.xlu0 %5213
    %5215 = vrot.lane.b32.xlu0 %v702, 96
    %v5216 = vpop.permute.xlu0 %5215
    %5217 = vrot.lane.b32.xlu0 %v703, 96
    %v5218 = vpop.permute.xlu0 %5217
    %5219 = vrot.lane.b32.xlu0 %v704, 96
    %v5220 = vpop.permute.xlu0 %5219
    %5221 = vrot.lane.b32.xlu0 %v705, 96
    %v5222 = vpop.permute.xlu0 %5221
    %5223 = vrot.lane.b32.xlu0 %v706, 96
    %v5224 = vpop.permute.xlu0 %5223
    %5225 = vrot.lane.b32.xlu0 %v707, 96
    %v5226 = vpop.permute.xlu0 %5225
    %5227 = vrot.lane.b32.xlu0 %v708, 96
    %v5228 = vpop.permute.xlu0 %5227
    %5229 = vrot.lane.b32.xlu0 %v709, 96
    %v5230 = vpop.permute.xlu0 %5229
    %5231 = vrot.lane.b32.xlu0 %v710, 96
    %v5232 = vpop.permute.xlu0 %5231
    %5233 = vrot.lane.b32.xlu0 %v711, 96
    %v5234 = vpop.permute.xlu0 %5233
    %5235 = vrot.lane.b32.xlu0 %v712, 96
    %v5236 = vpop.permute.xlu0 %5235
    %5237 = vrot.lane.b32.xlu0 %v713, 96
    %v5238 = vpop.permute.xlu0 %5237
    %5239 = vrot.lane.b32.xlu0 %v714, 96
    %v5240 = vpop.permute.xlu0 %5239
    %5241 = vrot.lane.b32.xlu0 %v715, 96
    %v5242 = vpop.permute.xlu0 %5241
    %5243 = vrot.lane.b32.xlu0 %v716, 96
    %v5244 = vpop.permute.xlu0 %5243
    %5245 = vrot.lane.b32.xlu0 %v717, 96
    %v5246 = vpop.permute.xlu0 %5245
    %5247 = vrot.lane.b32.xlu0 %v718, 96
    %v5248 = vpop.permute.xlu0 %5247
    %5249 = vrot.lane.b32.xlu0 %v719, 96
    %v5250 = vpop.permute.xlu0 %5249
    %5251 = vrot.lane.b32.xlu0 %v720, 96
    %v5252 = vpop.permute.xlu0 %5251
    %5253 = vrot.lane.b32.xlu0 %v721, 96
    %v5254 = vpop.permute.xlu0 %5253
    %5255 = vrot.lane.b32.xlu0 %v722, 96
    %v5256 = vpop.permute.xlu0 %5255
    %5257 = vrot.lane.b32.xlu0 %v723, 96
    %v5258 = vpop.permute.xlu0 %5257
    %5259 = vrot.lane.b32.xlu0 %v724, 96
    %v5260 = vpop.permute.xlu0 %5259
    %5261 = vrot.lane.b32.xlu0 %v725, 96
    %v5262 = vpop.permute.xlu0 %5261
    %5263 = vrot.lane.b32.xlu0 %v726, 96
    %v5264 = vpop.permute.xlu0 %5263
    %5265 = vrot.lane.b32.xlu0 %v727, 96
    %v5266 = vpop.permute.xlu0 %5265
    %5267 = vrot.lane.b32.xlu0 %v728, 96
    %v5268 = vpop.permute.xlu0 %5267
    %5269 = vrot.lane.b32.xlu0 %v729, 96
    %v5270 = vpop.permute.xlu0 %5269
    %5271 = vrot.lane.b32.xlu0 %v730, 96
    %v5272 = vpop.permute.xlu0 %5271
    %v5305 = vmul.f32 %v371, %v5210
    %v5306 = vmul.f32 %v376, %v5212
    %v5307 = vmul.f32 %v381, %v5214
    %v5308 = vmul.f32 %v386, %v5216
    %v5309 = vmul.f32 %v391, %v5218
    %v5310 = vmul.f32 %v396, %v5220
    %v5311 = vmul.f32 %v401, %v5222
    %v5312 = vmul.f32 %v406, %v5224
    %v5313 = vmul.f32 %v371, %v5226
    %v5314 = vmul.f32 %v376, %v5228
    %v5315 = vmul.f32 %v381, %v5230
    %v5316 = vmul.f32 %v386, %v5232
    %v5317 = vmul.f32 %v391, %v5234
    %v5318 = vmul.f32 %v396, %v5236
    %v5319 = vmul.f32 %v401, %v5238
    %v5320 = vmul.f32 %v406, %v5240
    %v5321 = vmul.f32 %v371, %v5242
    %v5322 = vmul.f32 %v376, %v5244
    %v5323 = vmul.f32 %v381, %v5246
    %v5324 = vmul.f32 %v386, %v5248
    %v5325 = vmul.f32 %v391, %v5250
    %v5326 = vmul.f32 %v396, %v5252
    %v5327 = vmul.f32 %v401, %v5254
    %v5328 = vmul.f32 %v406, %v5256
    %v5329 = vmul.f32 %v371, %v5258
    %v5330 = vmul.f32 %v376, %v5260
    %v5331 = vmul.f32 %v381, %v5262
    %v5332 = vmul.f32 %v386, %v5264
    %v5333 = vmul.f32 %v391, %v5266
    %v5334 = vmul.f32 %v396, %v5268
    %v5335 = vmul.f32 %v401, %v5270
    %v5336 = vmul.f32 %v406, %v5272
    %5369 = vrot.lane.b32.xlu0 %v5305, 32
    %v5370 = vpop.permute.xlu0 %5369
    %5371 = vrot.lane.b32.xlu0 %v5306, 32
    %v5372 = vpop.permute.xlu0 %5371
    %5373 = vrot.lane.b32.xlu0 %v5307, 32
    %v5374 = vpop.permute.xlu0 %5373
    %5375 = vrot.lane.b32.xlu0 %v5308, 32
    %v5376 = vpop.permute.xlu0 %5375
    %5377 = vrot.lane.b32.xlu0 %v5309, 32
    %v5378 = vpop.permute.xlu0 %5377
    %5379 = vrot.lane.b32.xlu0 %v5310, 32
    %v5380 = vpop.permute.xlu0 %5379
    %5381 = vrot.lane.b32.xlu0 %v5311, 32
    %v5382 = vpop.permute.xlu0 %5381
    %5383 = vrot.lane.b32.xlu0 %v5312, 32
    %v5384 = vpop.permute.xlu0 %5383
    %5385 = vrot.lane.b32.xlu0 %v5313, 32
    %v5386 = vpop.permute.xlu0 %5385
    %5387 = vrot.lane.b32.xlu0 %v5314, 32
    %v5388 = vpop.permute.xlu0 %5387
    %5389 = vrot.lane.b32.xlu0 %v5315, 32
    %v5390 = vpop.permute.xlu0 %5389
    %5391 = vrot.lane.b32.xlu0 %v5316, 32
    %v5392 = vpop.permute.xlu0 %5391
    %5393 = vrot.lane.b32.xlu0 %v5317, 32
    %v5394 = vpop.permute.xlu0 %5393
    %5395 = vrot.lane.b32.xlu0 %v5318, 32
    %v5396 = vpop.permute.xlu0 %5395
    %5397 = vrot.lane.b32.xlu0 %v5319, 32
    %v5398 = vpop.permute.xlu0 %5397
    %5399 = vrot.lane.b32.xlu0 %v5320, 32
    %v5400 = vpop.permute.xlu0 %5399
    %5401 = vrot.lane.b32.xlu0 %v5321, 32
    %v5402 = vpop.permute.xlu0 %5401
    %5403 = vrot.lane.b32.xlu0 %v5322, 32
    %v5404 = vpop.permute.xlu0 %5403
    %5405 = vrot.lane.b32.xlu0 %v5323, 32
    %v5406 = vpop.permute.xlu0 %5405
    %5407 = vrot.lane.b32.xlu0 %v5324, 32
    %v5408 = vpop.permute.xlu0 %5407
    %5409 = vrot.lane.b32.xlu0 %v5325, 32
    %v5410 = vpop.permute.xlu0 %5409
    %5411 = vrot.lane.b32.xlu0 %v5326, 32
    %v5412 = vpop.permute.xlu0 %5411
    %5413 = vrot.lane.b32.xlu0 %v5327, 32
    %v5414 = vpop.permute.xlu0 %5413
    %5415 = vrot.lane.b32.xlu0 %v5328, 32
    %v5416 = vpop.permute.xlu0 %5415
    %5417 = vrot.lane.b32.xlu0 %v5329, 32
    %v5418 = vpop.permute.xlu0 %5417
    %5419 = vrot.lane.b32.xlu0 %v5330, 32
    %v5420 = vpop.permute.xlu0 %5419
    %5421 = vrot.lane.b32.xlu0 %v5331, 32
    %v5422 = vpop.permute.xlu0 %5421
    %5423 = vrot.lane.b32.xlu0 %v5332, 32
    %v5424 = vpop.permute.xlu0 %5423
    %5425 = vrot.lane.b32.xlu0 %v5333, 32
    %v5426 = vpop.permute.xlu0 %5425
    %5427 = vrot.lane.b32.xlu0 %v5334, 32
    %v5428 = vpop.permute.xlu0 %5427
    %5429 = vrot.lane.b32.xlu0 %v5335, 32
    %v5430 = vpop.permute.xlu0 %5429
    %5431 = vrot.lane.b32.xlu0 %v5336, 32
    %v5432 = vpop.permute.xlu0 %5431
    %5465 = vmatprep.subr.mxu0 0.0
    %5466 = vmatpush1.msra.mxu0 %v5400
    %5467 = vmatprep.subr.mxu0 0.0
    %5468 = vmatpush1.msra.mxu0 %v5398
    %5469 = vmatprep.subr.mxu0 0.0
    %5470 = vmatpush1.msra.mxu0 %v5396
    %5471 = vmatprep.subr.mxu0 0.0
    %5472 = vmatpush1.msra.mxu0 %v5394
    %5473 = vmatprep.subr.mxu0 0.0
    %5474 = vmatpush1.msra.mxu0 %v5392
    %5475 = vmatprep.subr.mxu0 0.0
    %5476 = vmatpush1.msra.mxu0 %v5390
    %5477 = vmatprep.subr.mxu0 0.0
    %5478 = vmatpush1.msra.mxu0 %v5388
    %5479 = vmatprep.subr.mxu0 0.0
    %5480 = vmatpush1.msra.mxu0 %v5386
    %5481 = vmatprep.subr.mxu0 0.0
    %5482 = vmatpush1.msra.mxu0 %v5384
    %5483 = vmatprep.subr.mxu0 0.0
    %5484 = vmatpush1.msra.mxu0 %v5382
    %5485 = vmatprep.subr.mxu0 0.0
    %5486 = vmatpush1.msra.mxu0 %v5380
    %5487 = vmatprep.subr.mxu0 0.0
    %5488 = vmatpush1.msra.mxu0 %v5378
    %5489 = vmatprep.subr.mxu0 0.0
    %5490 = vmatpush1.msra.mxu0 %v5376
    %5491 = vmatprep.subr.mxu0 0.0
    %5492 = vmatpush1.msra.mxu0 %v5374
    %5493 = vmatprep.subr.mxu0 0.0
    %5494 = vmatpush1.msra.mxu0 %v5372
    %5495 = vmatprep.subr.mxu0 0.0
    %5496 = vmatpush1.msra.mxu0 %v5370
    %5497 = vmatprep.subr.mxu0 0.0
    %5498 = vmatpush2.msra.mxu0 %v5432
    %5499 = vmatprep.subr.mxu0 0.0
    %5500 = vmatpush2.msra.mxu0 %v5430
    %5501 = vmatprep.subr.mxu0 0.0
    %5502 = vmatpush2.msra.mxu0 %v5428
    %5503 = vmatprep.subr.mxu0 0.0
    %5504 = vmatpush2.msra.mxu0 %v5426
    %5505 = vmatprep.subr.mxu0 0.0
    %5506 = vmatpush2.msra.mxu0 %v5424
    %5507 = vmatprep.subr.mxu0 0.0
    %5508 = vmatpush2.msra.mxu0 %v5422
    %5509 = vmatprep.subr.mxu0 0.0
    %5510 = vmatpush2.msra.mxu0 %v5420
    %5511 = vmatprep.subr.mxu0 0.0
    %5512 = vmatpush2.msra.mxu0 %v5418
    %5513 = vmatprep.subr.mxu0 0.0
    %5514 = vmatpush2.msra.mxu0 %v5416
    %5515 = vmatprep.subr.mxu0 0.0
    %5516 = vmatpush2.msra.mxu0 %v5414
    %5517 = vmatprep.subr.mxu0 0.0
    %5518 = vmatpush2.msra.mxu0 %v5412
    %5519 = vmatprep.subr.mxu0 0.0
    %5520 = vmatpush2.msra.mxu0 %v5410
    %5521 = vmatprep.subr.mxu0 0.0
    %5522 = vmatpush2.msra.mxu0 %v5408
    %5523 = vmatprep.subr.mxu0 0.0
    %5524 = vmatpush2.msra.mxu0 %v5406
    %5525 = vmatprep.subr.mxu0 0.0
    %5526 = vmatpush2.msra.mxu0 %v5404
    %5527 = vmatprep.subr.mxu0 0.0
    %5528 = vmatpush2.msra.mxu0 %v5402
    %5529 = vmatprep.mubr.f32.mxu0 %v5180
    %5530 = vmatmul.mubr.f32.gmra.mxu0 %v5178
    %v5531 = vpop.f32.mrf.mxu0
    %v5532 = vadd.f32 0.0, %v5531
    %v5533 = vpop.f32.mrf.mxu0
    %5534 = vmatprep.mubr.f32.mxu0 %v5184
    %5535 = vmatmul.mubr.f32.gmra.mxu0 %v5182
    %v5536 = vpop.f32.mrf.mxu0
    %v5537 = vadd.f32 0.0, %v5536
    %v5538 = vpop.f32.mrf.mxu0
    %5539 = vmatprep.mubr.f32.mxu0 %v5188
    %5540 = vmatmul.mubr.f32.gmra.mxu0 %v5186
    %v5541 = vpop.f32.mrf.mxu0
    %v5542 = vadd.f32 0.0, %v5541
    %v5543 = vpop.f32.mrf.mxu0
    %5544 = vmatprep.mubr.f32.mxu0 %v5192
    %5545 = vmatmul.mubr.f32.gmra.mxu0 %v5190
    %v5546 = vpop.f32.mrf.mxu0
    %v5547 = vadd.f32 0.0, %v5546
    %v5548 = vpop.f32.mrf.mxu0
    %5549 = vmatprep.mubr.f32.mxu0 %v5196
    %5550 = vmatmul.mubr.f32.gmra.mxu0 %v5194
    %v5551 = vpop.f32.mrf.mxu0
    %v5552 = vadd.f32 0.0, %v5551
    %v5553 = vpop.f32.mrf.mxu0
    %5554 = vmatprep.mubr.f32.mxu0 %v5200
    %5555 = vmatmul.mubr.f32.gmra.mxu0 %v5198
    %v5556 = vpop.f32.mrf.mxu0
    %v5557 = vadd.f32 0.0, %v5556
    %v5558 = vpop.f32.mrf.mxu0
    %5559 = vmatprep.mubr.f32.mxu0 %v5204
    %5560 = vmatmul.mubr.f32.gmra.mxu0 %v5202
    %v5561 = vpop.f32.mrf.mxu0
    %v5562 = vadd.f32 0.0, %v5561
    %v5563 = vpop.f32.mrf.mxu0
    %5564 = vmatprep.mubr.f32.mxu0 %v5208
    %5565 = vmatmul.mubr.f32.gmra.mxu0 %v5206
    %v5566 = vpop.f32.mrf.mxu0
    %v5567 = vadd.f32 0.0, %v5566
    %v5568 = vpop.f32.mrf.mxu0
    %5569 = vdwg.mxu0
    %5570 = vmatprep.subr.mxu0 0.0
    %5571 = vmatpush1.msra.mxu0 %v714
    %5572 = vmatprep.subr.mxu0 0.0
    %5573 = vmatpush1.msra.mxu0 %v713
    %5574 = vmatprep.subr.mxu0 0.0
    %5575 = vmatpush1.msra.mxu0 %v712
    %5576 = vmatprep.subr.mxu0 0.0
    %5577 = vmatpush1.msra.mxu0 %v711
    %5578 = vmatprep.subr.mxu0 0.0
    %5579 = vmatpush1.msra.mxu0 %v710
    %5580 = vmatprep.subr.mxu0 0.0
    %5581 = vmatpush1.msra.mxu0 %v709
    %5582 = vmatprep.subr.mxu0 0.0
    %5583 = vmatpush1.msra.mxu0 %v708
    %5584 = vmatprep.subr.mxu0 0.0
    %5585 = vmatpush1.msra.mxu0 %v707
    %5586 = vmatprep.subr.mxu0 0.0
    %5587 = vmatpush1.msra.mxu0 %v706
    %5588 = vmatprep.subr.mxu0 0.0
    %5589 = vmatpush1.msra.mxu0 %v705
    %5590 = vmatprep.subr.mxu0 0.0
    %5591 = vmatpush1.msra.mxu0 %v704
    %5592 = vmatprep.subr.mxu0 0.0
    %5593 = vmatpush1.msra.mxu0 %v703
    %5594 = vmatprep.subr.mxu0 0.0
    %5595 = vmatpush1.msra.mxu0 %v702
    %5596 = vmatprep.subr.mxu0 0.0
    %5597 = vmatpush1.msra.mxu0 %v701
    %5598 = vmatprep.subr.mxu0 0.0
    %5599 = vmatpush1.msra.mxu0 %v700
    %5600 = vmatprep.subr.mxu0 0.0
    %5601 = vmatpush1.msra.mxu0 %v699
    %5602 = vmatprep.subr.mxu0 0.0
    %5603 = vmatpush2.msra.mxu0 %v730
    %5604 = vmatprep.subr.mxu0 0.0
    %5605 = vmatpush2.msra.mxu0 %v729
    %5606 = vmatprep.subr.mxu0 0.0
    %5607 = vmatpush2.msra.mxu0 %v728
    %5608 = vmatprep.subr.mxu0 0.0
    %5609 = vmatpush2.msra.mxu0 %v727
    %5610 = vmatprep.subr.mxu0 0.0
    %5611 = vmatpush2.msra.mxu0 %v726
    %5612 = vmatprep.subr.mxu0 0.0
    %5613 = vmatpush2.msra.mxu0 %v725
    %5614 = vmatprep.subr.mxu0 0.0
    %5615 = vmatpush2.msra.mxu0 %v724
    %5616 = vmatprep.subr.mxu0 0.0
    %5617 = vmatpush2.msra.mxu0 %v723
    %5618 = vmatprep.subr.mxu0 0.0
    %5619 = vmatpush2.msra.mxu0 %v722
    %5620 = vmatprep.subr.mxu0 0.0
    %5621 = vmatpush2.msra.mxu0 %v721
    %5622 = vmatprep.subr.mxu0 0.0
    %5623 = vmatpush2.msra.mxu0 %v720
    %5624 = vmatprep.subr.mxu0 0.0
    %5625 = vmatpush2.msra.mxu0 %v719
    %5626 = vmatprep.subr.mxu0 0.0
    %5627 = vmatpush2.msra.mxu0 %v718
    %5628 = vmatprep.subr.mxu0 0.0
    %5629 = vmatpush2.msra.mxu0 %v717
    %5630 = vmatprep.subr.mxu0 0.0
    %5631 = vmatpush2.msra.mxu0 %v716
    %5632 = vmatprep.subr.mxu0 0.0
    %5633 = vmatpush2.msra.mxu0 %v715
    %5634 = vmatprep.mubr.f32.mxu0 %v5180
    %5635 = vmatmul.mubr.f32.gmra.mxu0 %v5178
    %v5636 = vpop.f32.mrf.mxu0
    %v5637 = vadd.f32 0.0, %v5636
    %v5638 = vpop.f32.mrf.mxu0
    %5639 = vmatprep.mubr.f32.mxu0 %v5184
    %5640 = vmatmul.mubr.f32.gmra.mxu0 %v5182
    %v5641 = vpop.f32.mrf.mxu0
    %v5642 = vadd.f32 0.0, %v5641
    %v5643 = vpop.f32.mrf.mxu0
    %5644 = vmatprep.mubr.f32.mxu0 %v5188
    %5645 = vmatmul.mubr.f32.gmra.mxu0 %v5186
    %v5646 = vpop.f32.mrf.mxu0
    %v5647 = vadd.f32 0.0, %v5646
    %v5648 = vpop.f32.mrf.mxu0
    %5649 = vmatprep.mubr.f32.mxu0 %v5192
    %5650 = vmatmul.mubr.f32.gmra.mxu0 %v5190
    %v5651 = vpop.f32.mrf.mxu0
    %v5652 = vadd.f32 0.0, %v5651
    %v5653 = vpop.f32.mrf.mxu0
    %5654 = vmatprep.mubr.f32.mxu0 %v5196
    %5655 = vmatmul.mubr.f32.gmra.mxu0 %v5194
    %v5656 = vpop.f32.mrf.mxu0
    %v5657 = vadd.f32 0.0, %v5656
    %v5658 = vpop.f32.mrf.mxu0
    %5659 = vmatprep.mubr.f32.mxu0 %v5200
    %5660 = vmatmul.mubr.f32.gmra.mxu0 %v5198
    %v5661 = vpop.f32.mrf.mxu0
    %v5662 = vadd.f32 0.0, %v5661
    %v5663 = vpop.f32.mrf.mxu0
    %5664 = vmatprep.mubr.f32.mxu0 %v5204
    %5665 = vmatmul.mubr.f32.gmra.mxu0 %v5202
    %v5666 = vpop.f32.mrf.mxu0
    %v5667 = vadd.f32 0.0, %v5666
    %v5668 = vpop.f32.mrf.mxu0
    %5669 = vmatprep.mubr.f32.mxu0 %v5208
    %5670 = vmatmul.mubr.f32.gmra.mxu0 %v5206
    %v5671 = vpop.f32.mrf.mxu0
    %v5672 = vadd.f32 0.0, %v5671
    %v5673 = vpop.f32.mrf.mxu0
    %5674 = vdwg.mxu0
    %v5675 = vmax.f32 %v5637, 1e-30
    %v5676 = vmax.f32 %v5642, 1e-30
    %v5677 = vmax.f32 %v5647, 1e-30
    %v5678 = vmax.f32 %v5652, 1e-30
    %v5679 = vmax.f32 %v5657, 1e-30
    %v5680 = vmax.f32 %v5662, 1e-30
    %v5681 = vmax.f32 %v5667, 1e-30
    %v5682 = vmax.f32 %v5672, 1e-30
    %v5683 = vrcp.pop %v5675
    %v5684 = vrcp.pop %v5676
    %v5685 = vrcp.pop %v5677
    %v5686 = vrcp.pop %v5678
    %v5687 = vrcp.pop %v5679
    %v5688 = vrcp.pop %v5680
    %v5689 = vrcp.pop %v5681
    %v5690 = vrcp.pop %v5682
    %v5691 = vmul.f32 %v5532, %v5683
    %v5692 = vmul.f32 %v5537, %v5684
    %v5693 = vmul.f32 %v5542, %v5685
    %v5694 = vmul.f32 %v5547, %v5686
    %v5695 = vmul.f32 %v5552, %v5687
    %v5696 = vmul.f32 %v5557, %v5688
    %v5697 = vmul.f32 %v5562, %v5689
    %v5698 = vmul.f32 %v5567, %v5690
    %5707 = vrot.lane.b32.xlu0 %v3061, 32
    %v5708 = vpop.permute.xlu0 %5707
    %5709 = vrot.lane.b32.xlu0 %v3062, 32
    %v5710 = vpop.permute.xlu0 %5709
    %5711 = vrot.lane.b32.xlu0 %v3063, 32
    %v5712 = vpop.permute.xlu0 %5711
    %5713 = vrot.lane.b32.xlu0 %v3064, 32
    %v5714 = vpop.permute.xlu0 %5713
    %5715 = vrot.lane.b32.xlu0 %v3065, 32
    %v5716 = vpop.permute.xlu0 %5715
    %5717 = vrot.lane.b32.xlu0 %v3066, 32
    %v5718 = vpop.permute.xlu0 %5717
    %5719 = vrot.lane.b32.xlu0 %v3067, 32
    %v5720 = vpop.permute.xlu0 %5719
    %5721 = vrot.lane.b32.xlu0 %v3068, 32
    %v5722 = vpop.permute.xlu0 %5721
    %5739 = vrot.lane.b32.xlu0 %v4376, 64
    %v5740 = vpop.permute.xlu0 %5739
    %5741 = vrot.lane.b32.xlu0 %v4377, 64
    %v5742 = vpop.permute.xlu0 %5741
    %5743 = vrot.lane.b32.xlu0 %v4378, 64
    %v5744 = vpop.permute.xlu0 %5743
    %5745 = vrot.lane.b32.xlu0 %v4379, 64
    %v5746 = vpop.permute.xlu0 %5745
    %5747 = vrot.lane.b32.xlu0 %v4380, 64
    %v5748 = vpop.permute.xlu0 %5747
    %5749 = vrot.lane.b32.xlu0 %v4381, 64
    %v5750 = vpop.permute.xlu0 %5749
    %5751 = vrot.lane.b32.xlu0 %v4382, 64
    %v5752 = vpop.permute.xlu0 %5751
    %5753 = vrot.lane.b32.xlu0 %v4383, 64
    %v5754 = vpop.permute.xlu0 %5753
    %5771 = vrot.lane.b32.xlu0 %v5691, 96
    %v5772 = vpop.permute.xlu0 %5771
    %5773 = vrot.lane.b32.xlu0 %v5692, 96
    %v5774 = vpop.permute.xlu0 %5773
    %5775 = vrot.lane.b32.xlu0 %v5693, 96
    %v5776 = vpop.permute.xlu0 %5775
    %5777 = vrot.lane.b32.xlu0 %v5694, 96
    %v5778 = vpop.permute.xlu0 %5777
    %5779 = vrot.lane.b32.xlu0 %v5695, 96
    %v5780 = vpop.permute.xlu0 %5779
    %5781 = vrot.lane.b32.xlu0 %v5696, 96
    %v5782 = vpop.permute.xlu0 %5781
    %5783 = vrot.lane.b32.xlu0 %v5697, 96
    %v5784 = vpop.permute.xlu0 %5783
    %5785 = vrot.lane.b32.xlu0 %v5698, 96
    %v5786 = vpop.permute.xlu0 %5785
    %v5795 = vsel %vm1163, %v1727, %v5708
    %v5796 = vsel %vm1163, %v1728, %v5710
    %v5797 = vsel %vm1163, %v1729, %v5712
    %v5798 = vsel %vm1163, %v1730, %v5714
    %v5799 = vsel %vm1163, %v1731, %v5716
    %v5800 = vsel %vm1163, %v1732, %v5718
    %v5801 = vsel %vm1163, %v1733, %v5720
    %v5802 = vsel %vm1163, %v1734, %v5722
    %vm5803 = vcmask 523264
    %v5804 = vsel %vm5803, %v5795, %v5740
    %v5805 = vsel %vm5803, %v5796, %v5742
    %v5806 = vsel %vm5803, %v5797, %v5744
    %v5807 = vsel %vm5803, %v5798, %v5746
    %v5808 = vsel %vm5803, %v5799, %v5748
    %v5809 = vsel %vm5803, %v5800, %v5750
    %v5810 = vsel %vm5803, %v5801, %v5752
    %v5811 = vsel %vm5803, %v5802, %v5754
    %vm5812 = vcmask 785408
    %v5813 = vsel %vm5812, %v5804, %v5772
    %v5814 = vsel %vm5812, %v5805, %v5774
    %v5815 = vsel %vm5812, %v5806, %v5776
    %v5816 = vsel %vm5812, %v5807, %v5778
    %v5817 = vsel %vm5812, %v5808, %v5780
    %v5818 = vsel %vm5812, %v5809, %v5782
    %v5819 = vsel %vm5812, %v5810, %v5784
    %v5820 = vsel %vm5812, %v5811, %v5786
    %v5821 = vld [vmem:[#allocation7] sm:$0xff]
    %v5822 = vld [vmem:[#allocation7 + $0x8] sm:$0xff]
    %v5823 = vld [vmem:[#allocation7 + $0x10] sm:$0xff]
    %v5824 = vld [vmem:[#allocation7 + $0x18] sm:$0xff]
    %v5825 = vld [vmem:[#allocation7 + $0x20] sm:$0xff]
    %v5826 = vld [vmem:[#allocation7 + $0x28] sm:$0xff]
    %v5827 = vld [vmem:[#allocation7 + $0x30] sm:$0xff]
    %v5828 = vld [vmem:[#allocation7 + $0x38] sm:$0xff]
    %v5829 = vld [vmem:[#allocation7 + $0x40] sm:$0xff]
    %v5830 = vld [vmem:[#allocation7 + $0x48] sm:$0xff]
    %v5831 = vld [vmem:[#allocation7 + $0x50] sm:$0xff]
    %v5832 = vld [vmem:[#allocation7 + $0x58] sm:$0xff]
    %v5833 = vld [vmem:[#allocation7 + $0x60] sm:$0xff]
    %v5834 = vld [vmem:[#allocation7 + $0x68] sm:$0xff]
    %v5835 = vld [vmem:[#allocation7 + $0x70] sm:$0xff]
    %v5836 = vld [vmem:[#allocation7 + $0x78] sm:$0xff]
    %v5837 = vld [vmem:[%s9] sm:$0x1]
    %v5839 = vlaneseq
    %v5840 = vshrl.u32 %v5839, 7
    %v5841 = vsub.s32 0, %v5840
    %v5842 = vrot.slane %v5837, %v5841
    %5844 = vmatprep.subr.mxu0 0.0
    %5845 = vmatpush1.msra.mxu0 %v5836
    %5846 = vmatprep.subr.mxu0 0.0
    %5847 = vmatpush1.msra.mxu0 %v5835
    %5848 = vmatprep.subr.mxu0 0.0
    %5849 = vmatpush1.msra.mxu0 %v5834
    %5850 = vmatprep.subr.mxu0 0.0
    %5851 = vmatpush1.msra.mxu0 %v5833
    %5852 = vmatprep.subr.mxu0 0.0
    %5853 = vmatpush1.msra.mxu0 %v5832
    %5854 = vmatprep.subr.mxu0 0.0
    %5855 = vmatpush1.msra.mxu0 %v5831
    %5856 = vmatprep.subr.mxu0 0.0
    %5857 = vmatpush1.msra.mxu0 %v5830
    %5858 = vmatprep.subr.mxu0 0.0
    %5859 = vmatpush1.msra.mxu0 %v5829
    %5860 = vmatprep.subr.mxu0 0.0
    %5861 = vmatpush1.msra.mxu0 %v5828
    %5862 = vmatprep.subr.mxu0 0.0
    %5863 = vmatpush1.msra.mxu0 %v5827
    %5864 = vmatprep.subr.mxu0 0.0
    %5865 = vmatpush1.msra.mxu0 %v5826
    %5866 = vmatprep.subr.mxu0 0.0
    %5867 = vmatpush1.msra.mxu0 %v5825
    %5868 = vmatprep.subr.mxu0 0.0
    %5869 = vmatpush1.msra.mxu0 %v5824
    %5870 = vmatprep.subr.mxu0 0.0
    %5871 = vmatpush1.msra.mxu0 %v5823
    %5872 = vmatprep.subr.mxu0 0.0
    %5873 = vmatpush1.msra.mxu0 %v5822
    %5874 = vmatprep.subr.mxu0 0.0
    %5875 = vmatpush1.msra.mxu0 %v5821
    %5876 = vmatprep.subr.mxu0 0.0
    %5877 = vmatpush2.msra.mxu0 0.0
    %5878 = vmatprep.subr.mxu0 0.0
    %5879 = vmatpush2.msra.mxu0 0.0
    %5880 = vmatprep.subr.mxu0 0.0
    %5881 = vmatpush2.msra.mxu0 0.0
    %5882 = vmatprep.subr.mxu0 0.0
    %5883 = vmatpush2.msra.mxu0 0.0
    %5884 = vmatprep.subr.mxu0 0.0
    %5885 = vmatpush2.msra.mxu0 0.0
    %5886 = vmatprep.subr.mxu0 0.0
    %5887 = vmatpush2.msra.mxu0 0.0
    %5888 = vmatprep.subr.mxu0 0.0
    %5889 = vmatpush2.msra.mxu0 0.0
    %5890 = vmatprep.subr.mxu0 0.0
    %5891 = vmatpush2.msra.mxu0 0.0
    %5892 = vmatprep.subr.mxu0 0.0
    %5893 = vmatpush2.msra.mxu0 0.0
    %5894 = vmatprep.subr.mxu0 0.0
    %5895 = vmatpush2.msra.mxu0 0.0
    %5896 = vmatprep.subr.mxu0 0.0
    %5897 = vmatpush2.msra.mxu0 0.0
    %5898 = vmatprep.subr.mxu0 0.0
    %5899 = vmatpush2.msra.mxu0 0.0
    %5900 = vmatprep.subr.mxu0 0.0
    %5901 = vmatpush2.msra.mxu0 0.0
    %5902 = vmatprep.subr.mxu0 0.0
    %5903 = vmatpush2.msra.mxu0 0.0
    %5904 = vmatprep.subr.mxu0 0.0
    %5905 = vmatpush2.msra.mxu0 0.0
    %5906 = vmatprep.subr.mxu0 0.0
    %5907 = vmatpush2.msra.mxu0 0.0
    %5908 = vmatprep.mubr.f32.mxu0 0.0
    %5909 = vmatmul.mubr.f32.gmra.mxu0 %v5813
    %v5910 = vpop.f32.mrf.mxu0
    %v5911 = vadd.f32 %v5842, %v5910
    %v5912 = vpop.f32.mrf.mxu0
    %5913 = vmatprep.mubr.f32.mxu0 0.0
    %5914 = vmatmul.mubr.f32.gmra.mxu0 %v5814
    %v5915 = vpop.f32.mrf.mxu0
    %v5916 = vadd.f32 %v5842, %v5915
    %v5917 = vpop.f32.mrf.mxu0
    %5918 = vmatprep.mubr.f32.mxu0 0.0
    %5919 = vmatmul.mubr.f32.gmra.mxu0 %v5815
    %v5920 = vpop.f32.mrf.mxu0
    %v5921 = vadd.f32 %v5842, %v5920
    %v5922 = vpop.f32.mrf.mxu0
    %5923 = vmatprep.mubr.f32.mxu0 0.0
    %5924 = vmatmul.mubr.f32.gmra.mxu0 %v5816
    %v5925 = vpop.f32.mrf.mxu0
    %v5926 = vadd.f32 %v5842, %v5925
    %v5927 = vpop.f32.mrf.mxu0
    %5928 = vmatprep.mubr.f32.mxu0 0.0
    %5929 = vmatmul.mubr.f32.gmra.mxu0 %v5817
    %v5930 = vpop.f32.mrf.mxu0
    %v5931 = vadd.f32 %v5842, %v5930
    %v5932 = vpop.f32.mrf.mxu0
    %5933 = vmatprep.mubr.f32.mxu0 0.0
    %5934 = vmatmul.mubr.f32.gmra.mxu0 %v5818
    %v5935 = vpop.f32.mrf.mxu0
    %v5936 = vadd.f32 %v5842, %v5935
    %v5937 = vpop.f32.mrf.mxu0
    %5938 = vmatprep.mubr.f32.mxu0 0.0
    %5939 = vmatmul.mubr.f32.gmra.mxu0 %v5819
    %v5940 = vpop.f32.mrf.mxu0
    %v5941 = vadd.f32 %v5842, %v5940
    %v5942 = vpop.f32.mrf.mxu0
    %5943 = vmatprep.mubr.f32.mxu0 0.0
    %5944 = vmatmul.mubr.f32.gmra.mxu0 %v5820
    %v5945 = vpop.f32.mrf.mxu0
    %v5946 = vadd.f32 %v5842, %v5945
    %v5947 = vpop.f32.mrf.mxu0
    %5948 = vdwg.mxu0
    %v5949 = vld [vmem:[%s11] sm:$0x1]
    %v5950 = vld [vmem:[%s12] sm:$0x1]
    %v5951 = vld [vmem:[#allocation8] sm:$0xff]
    %v5952 = vld [vmem:[#allocation8 + $0x8] sm:$0xff]
    %v5953 = vld [vmem:[#allocation8 + $0x10] sm:$0xff]
    %v5954 = vld [vmem:[#allocation8 + $0x18] sm:$0xff]
    %v5955 = vld [vmem:[#allocation8 + $0x20] sm:$0xff]
    %v5956 = vld [vmem:[#allocation8 + $0x28] sm:$0xff]
    %v5957 = vld [vmem:[#allocation8 + $0x30] sm:$0xff]
    %v5958 = vld [vmem:[#allocation8 + $0x38] sm:$0xff]
    %v5959 = vld [vmem:[#allocation8 + $0x40] sm:$0xff]
    %v5960 = vld [vmem:[#allocation8 + $0x48] sm:$0xff]
    %v5961 = vld [vmem:[#allocation8 + $0x50] sm:$0xff]
    %v5962 = vld [vmem:[#allocation8 + $0x58] sm:$0xff]
    %v5963 = vld [vmem:[#allocation8 + $0x60] sm:$0xff]
    %v5964 = vld [vmem:[#allocation8 + $0x68] sm:$0xff]
    %v5965 = vld [vmem:[#allocation8 + $0x70] sm:$0xff]
    %v5966 = vld [vmem:[#allocation8 + $0x78] sm:$0xff]
    %5967 = vmatprep.subr.mxu0 0.0
    %5968 = vmatpush1.msra.mxu0 %v5966
    %5969 = vmatprep.subr.mxu0 0.0
    %5970 = vmatpush1.msra.mxu0 %v5965
    %5971 = vmatprep.subr.mxu0 0.0
    %5972 = vmatpush1.msra.mxu0 %v5964
    %5973 = vmatprep.subr.mxu0 0.0
    %5974 = vmatpush1.msra.mxu0 %v5963
    %5975 = vmatprep.subr.mxu0 0.0
    %5976 = vmatpush1.msra.mxu0 %v5962
    %5977 = vmatprep.subr.mxu0 0.0
    %5978 = vmatpush1.msra.mxu0 %v5961
    %5979 = vmatprep.subr.mxu0 0.0
    %5980 = vmatpush1.msra.mxu0 %v5960
    %5981 = vmatprep.subr.mxu0 0.0
    %5982 = vmatpush1.msra.mxu0 %v5959
    %5983 = vmatprep.subr.mxu0 0.0
    %5984 = vmatpush1.msra.mxu0 %v5958
    %5985 = vmatprep.subr.mxu0 0.0
    %5986 = vmatpush1.msra.mxu0 %v5957
    %5987 = vmatprep.subr.mxu0 0.0
    %5988 = vmatpush1.msra.mxu0 %v5956
    %5989 = vmatprep.subr.mxu0 0.0
    %5990 = vmatpush1.msra.mxu0 %v5955
    %5991 = vmatprep.subr.mxu0 0.0
    %5992 = vmatpush1.msra.mxu0 %v5954
    %5993 = vmatprep.subr.mxu0 0.0
    %5994 = vmatpush1.msra.mxu0 %v5953
    %5995 = vmatprep.subr.mxu0 0.0
    %5996 = vmatpush1.msra.mxu0 %v5952
    %5997 = vmatprep.subr.mxu0 0.0
    %5998 = vmatpush1.msra.mxu0 %v5951
    %5999 = vmatprep.subr.mxu0 0.0
    %6000 = vmatpush2.msra.mxu0 0.0
    %6001 = vmatprep.subr.mxu0 0.0
    %6002 = vmatpush2.msra.mxu0 0.0
    %6003 = vmatprep.subr.mxu0 0.0
    %6004 = vmatpush2.msra.mxu0 0.0
    %6005 = vmatprep.subr.mxu0 0.0
    %6006 = vmatpush2.msra.mxu0 0.0
    %6007 = vmatprep.subr.mxu0 0.0
    %6008 = vmatpush2.msra.mxu0 0.0
    %6009 = vmatprep.subr.mxu0 0.0
    %6010 = vmatpush2.msra.mxu0 0.0
    %6011 = vmatprep.subr.mxu0 0.0
    %6012 = vmatpush2.msra.mxu0 0.0
    %6013 = vmatprep.subr.mxu0 0.0
    %6014 = vmatpush2.msra.mxu0 0.0
    %6015 = vmatprep.subr.mxu0 0.0
    %6016 = vmatpush2.msra.mxu0 0.0
    %6017 = vmatprep.subr.mxu0 0.0
    %6018 = vmatpush2.msra.mxu0 0.0
    %6019 = vmatprep.subr.mxu0 0.0
    %6020 = vmatpush2.msra.mxu0 0.0
    %6021 = vmatprep.subr.mxu0 0.0
    %6022 = vmatpush2.msra.mxu0 0.0
    %6023 = vmatprep.subr.mxu0 0.0
    %6024 = vmatpush2.msra.mxu0 0.0
    %6025 = vmatprep.subr.mxu0 0.0
    %6026 = vmatpush2.msra.mxu0 0.0
    %6027 = vmatprep.subr.mxu0 0.0
    %6028 = vmatpush2.msra.mxu0 0.0
    %6029 = vmatprep.subr.mxu0 0.0
    %6030 = vmatpush2.msra.mxu0 0.0
    %6031 = vmatprep.mubr.f32.mxu0 0.0
    %6032 = vmatmul.mubr.f32.gmra.mxu0 %v5911
    %v6033 = vpop.f32.mrf.mxu0
    %v6034 = vadd.f32 0.0, %v6033
    %v6035 = vpop.f32.mrf.mxu0
    %6036 = vmatprep.mubr.f32.mxu0 0.0
    %6037 = vmatmul.mubr.f32.gmra.mxu0 %v5916
    %v6038 = vpop.f32.mrf.mxu0
    %v6039 = vadd.f32 0.0, %v6038
    %v6040 = vpop.f32.mrf.mxu0
    %6041 = vmatprep.mubr.f32.mxu0 0.0
    %6042 = vmatmul.mubr.f32.gmra.mxu0 %v5921
    %v6043 = vpop.f32.mrf.mxu0
    %v6044 = vadd.f32 0.0, %v6043
    %v6045 = vpop.f32.mrf.mxu0
    %6046 = vmatprep.mubr.f32.mxu0 0.0
    %6047 = vmatmul.mubr.f32.gmra.mxu0 %v5926
    %v6048 = vpop.f32.mrf.mxu0
    %v6049 = vadd.f32 0.0, %v6048
    %v6050 = vpop.f32.mrf.mxu0
    %6051 = vmatprep.mubr.f32.mxu0 0.0
    %6052 = vmatmul.mubr.f32.gmra.mxu0 %v5931
    %v6053 = vpop.f32.mrf.mxu0
    %v6054 = vadd.f32 0.0, %v6053
    %v6055 = vpop.f32.mrf.mxu0
    %6056 = vmatprep.mubr.f32.mxu0 0.0
    %6057 = vmatmul.mubr.f32.gmra.mxu0 %v5936
    %v6058 = vpop.f32.mrf.mxu0
    %v6059 = vadd.f32 0.0, %v6058
    %v6060 = vpop.f32.mrf.mxu0
    %6061 = vmatprep.mubr.f32.mxu0 0.0
    %6062 = vmatmul.mubr.f32.gmra.mxu0 %v5941
    %v6063 = vpop.f32.mrf.mxu0
    %v6064 = vadd.f32 0.0, %v6063
    %v6065 = vpop.f32.mrf.mxu0
    %6066 = vmatprep.mubr.f32.mxu0 0.0
    %6067 = vmatmul.mubr.f32.gmra.mxu0 %v5946
    %v6068 = vpop.f32.mrf.mxu0
    %v6069 = vadd.f32 0.0, %v6068
    %v6070 = vpop.f32.mrf.mxu0
    %6071 = vdwg.mxu0
    %v6072 = vsub.f32 %v5911, %v6034
    %v6073 = vsub.f32 %v5916, %v6039
    %v6074 = vsub.f32 %v5921, %v6044
    %v6075 = vsub.f32 %v5926, %v6049
    %v6076 = vsub.f32 %v5931, %v6054
    %v6077 = vsub.f32 %v5936, %v6059
    %v6078 = vsub.f32 %v5941, %v6064
    %v6079 = vsub.f32 %v5946, %v6069
    %v6080 = vmul.f32 %v6072, %v6072
    %v6081 = vmul.f32 %v6073, %v6073
    %v6082 = vmul.f32 %v6074, %v6074
    %v6083 = vmul.f32 %v6075, %v6075
    %v6084 = vmul.f32 %v6076, %v6076
    %v6085 = vmul.f32 %v6077, %v6077
    %v6086 = vmul.f32 %v6078, %v6078
    %v6087 = vmul.f32 %v6079, %v6079
    %6088 = vmatprep.subr.mxu0 0.0
    %6089 = vmatpush1.msra.mxu0 %v5966
    %6090 = vmatprep.subr.mxu0 0.0
    %6091 = vmatpush1.msra.mxu0 %v5965
    %6092 = vmatprep.subr.mxu0 0.0
    %6093 = vmatpush1.msra.mxu0 %v5964
    %6094 = vmatprep.subr.mxu0 0.0
    %6095 = vmatpush1.msra.mxu0 %v5963
    %6096 = vmatprep.subr.mxu0 0.0
    %6097 = vmatpush1.msra.mxu0 %v5962
    %6098 = vmatprep.subr.mxu0 0.0
    %6099 = vmatpush1.msra.mxu0 %v5961
    %6100 = vmatprep.subr.mxu0 0.0
    %6101 = vmatpush1.msra.mxu0 %v5960
    %6102 = vmatprep.subr.mxu0 0.0
    %6103 = vmatpush1.msra.mxu0 %v5959
    %6104 = vmatprep.subr.mxu0 0.0
    %6105 = vmatpush1.msra.mxu0 %v5958
    %6106 = vmatprep.subr.mxu0 0.0
    %6107 = vmatpush1.msra.mxu0 %v5957
    %6108 = vmatprep.subr.mxu0 0.0
    %6109 = vmatpush1.msra.mxu0 %v5956
    %6110 = vmatprep.subr.mxu0 0.0
    %6111 = vmatpush1.msra.mxu0 %v5955
    %6112 = vmatprep.subr.mxu0 0.0
    %6113 = vmatpush1.msra.mxu0 %v5954
    %6114 = vmatprep.subr.mxu0 0.0
    %6115 = vmatpush1.msra.mxu0 %v5953
    %6116 = vmatprep.subr.mxu0 0.0
    %6117 = vmatpush1.msra.mxu0 %v5952
    %6118 = vmatprep.subr.mxu0 0.0
    %6119 = vmatpush1.msra.mxu0 %v5951
    %6120 = vmatprep.subr.mxu0 0.0
    %6121 = vmatpush2.msra.mxu0 0.0
    %6122 = vmatprep.subr.mxu0 0.0
    %6123 = vmatpush2.msra.mxu0 0.0
    %6124 = vmatprep.subr.mxu0 0.0
    %6125 = vmatpush2.msra.mxu0 0.0
    %6126 = vmatprep.subr.mxu0 0.0
    %6127 = vmatpush2.msra.mxu0 0.0
    %6128 = vmatprep.subr.mxu0 0.0
    %6129 = vmatpush2.msra.mxu0 0.0
    %6130 = vmatprep.subr.mxu0 0.0
    %6131 = vmatpush2.msra.mxu0 0.0
    %6132 = vmatprep.subr.mxu0 0.0
    %6133 = vmatpush2.msra.mxu0 0.0
    %6134 = vmatprep.subr.mxu0 0.0
    %6135 = vmatpush2.msra.mxu0 0.0
    %6136 = vmatprep.subr.mxu0 0.0
    %6137 = vmatpush2.msra.mxu0 0.0
    %6138 = vmatprep.subr.mxu0 0.0
    %6139 = vmatpush2.msra.mxu0 0.0
    %6140 = vmatprep.subr.mxu0 0.0
    %6141 = vmatpush2.msra.mxu0 0.0
    %6142 = vmatprep.subr.mxu0 0.0
    %6143 = vmatpush2.msra.mxu0 0.0
    %6144 = vmatprep.subr.mxu0 0.0
    %6145 = vmatpush2.msra.mxu0 0.0
    %6146 = vmatprep.subr.mxu0 0.0
    %6147 = vmatpush2.msra.mxu0 0.0
    %6148 = vmatprep.subr.mxu0 0.0
    %6149 = vmatpush2.msra.mxu0 0.0
    %6150 = vmatprep.subr.mxu0 0.0
    %6151 = vmatpush2.msra.mxu0 0.0
    %6152 = vmatprep.mubr.f32.mxu0 0.0
    %6153 = vmatmul.mubr.f32.gmra.mxu0 %v6080
    %v6154 = vpop.f32.mrf.mxu0
    %v6155 = vadd.f32 1e-05, %v6154
    %v6156 = vpop.f32.mrf.mxu0
    %6157 = vmatprep.mubr.f32.mxu0 0.0
    %6158 = vmatmul.mubr.f32.gmra.mxu0 %v6081
    %v6159 = vpop.f32.mrf.mxu0
    %v6160 = vadd.f32 1e-05, %v6159
    %v6161 = vpop.f32.mrf.mxu0
    %6162 = vmatprep.mubr.f32.mxu0 0.0
    %6163 = vmatmul.mubr.f32.gmra.mxu0 %v6082
    %v6164 = vpop.f32.mrf.mxu0
    %v6165 = vadd.f32 1e-05, %v6164
    %v6166 = vpop.f32.mrf.mxu0
    %6167 = vmatprep.mubr.f32.mxu0 0.0
    %6168 = vmatmul.mubr.f32.gmra.mxu0 %v6083
    %v6169 = vpop.f32.mrf.mxu0
    %v6170 = vadd.f32 1e-05, %v6169
    %v6171 = vpop.f32.mrf.mxu0
    %6172 = vmatprep.mubr.f32.mxu0 0.0
    %6173 = vmatmul.mubr.f32.gmra.mxu0 %v6084
    %v6174 = vpop.f32.mrf.mxu0
    %v6175 = vadd.f32 1e-05, %v6174
    %v6176 = vpop.f32.mrf.mxu0
    %6177 = vmatprep.mubr.f32.mxu0 0.0
    %6178 = vmatmul.mubr.f32.gmra.mxu0 %v6085
    %v6179 = vpop.f32.mrf.mxu0
    %v6180 = vadd.f32 1e-05, %v6179
    %v6181 = vpop.f32.mrf.mxu0
    %6182 = vmatprep.mubr.f32.mxu0 0.0
    %6183 = vmatmul.mubr.f32.gmra.mxu0 %v6086
    %v6184 = vpop.f32.mrf.mxu0
    %v6185 = vadd.f32 1e-05, %v6184
    %v6186 = vpop.f32.mrf.mxu0
    %6187 = vmatprep.mubr.f32.mxu0 0.0
    %6188 = vmatmul.mubr.f32.gmra.mxu0 %v6087
    %v6189 = vpop.f32.mrf.mxu0
    %v6190 = vadd.f32 1e-05, %v6189
    %v6191 = vpop.f32.mrf.mxu0
    %6192 = vdwg.mxu0
    %v6193 = vrsqrt.pop %v6155
    %v6194 = vrsqrt.pop %v6160
    %v6195 = vrsqrt.pop %v6165
    %v6196 = vrsqrt.pop %v6170
    %v6197 = vrsqrt.pop %v6175
    %v6198 = vrsqrt.pop %v6180
    %v6199 = vrsqrt.pop %v6185
    %v6200 = vrsqrt.pop %v6190
    %v6201 = vmul.f32 %v6072, %v6193
    %v6202 = vmul.f32 %v6073, %v6194
    %v6203 = vmul.f32 %v6074, %v6195
    %v6204 = vmul.f32 %v6075, %v6196
    %v6205 = vmul.f32 %v6076, %v6197
    %v6206 = vmul.f32 %v6077, %v6198
    %v6207 = vmul.f32 %v6078, %v6199
    %v6208 = vmul.f32 %v6079, %v6200
    %v6210 = vlaneseq
    %v6211 = vshrl.u32 %v6210, 7
    %v6212 = vsub.s32 0, %v6211
    %v6213 = vrot.slane %v5949, %v6212
    %v6215 = vmul.f32 %v6201, %v6213
    %v6216 = vmul.f32 %v6202, %v6213
    %v6217 = vmul.f32 %v6203, %v6213
    %v6218 = vmul.f32 %v6204, %v6213
    %v6219 = vmul.f32 %v6205, %v6213
    %v6220 = vmul.f32 %v6206, %v6213
    %v6221 = vmul.f32 %v6207, %v6213
    %v6222 = vmul.f32 %v6208, %v6213
    %v6224 = vlaneseq
    %v6225 = vshrl.u32 %v6224, 7
    %v6226 = vsub.s32 0, %v6225
    %v6227 = vrot.slane %v5950, %v6226
    %v6229 = vadd.f32 %v6215, %v6227
    %v6230 = vadd.f32 %v6216, %v6227
    %v6231 = vadd.f32 %v6217, %v6227
    %v6232 = vadd.f32 %v6218, %v6227
    %v6233 = vadd.f32 %v6219, %v6227
    %v6234 = vadd.f32 %v6220, %v6227
    %v6235 = vadd.f32 %v6221, %v6227
    %v6236 = vadd.f32 %v6222, %v6227
    %v6237 = vadd.f32 %v118, %v6229
    %v6238 = vadd.f32 %v119, %v6230
    %v6239 = vadd.f32 %v120, %v6231
    %v6240 = vadd.f32 %v121, %v6232
    %v6241 = vadd.f32 %v122, %v6233
    %v6242 = vadd.f32 %v123, %v6234
    %v6243 = vadd.f32 %v124, %v6235
    %v6244 = vadd.f32 %v125, %v6236
    %v6245 = vld [vmem:[%s15] sm:$0xff]
    %v6246 = vld [vmem:[%s15 + $0x8] sm:$0xff]
    %v6247 = vld [vmem:[%s15 + $0x10] sm:$0xff]
    %v6248 = vld [vmem:[%s15 + $0x18] sm:$0xff]
    %v6249 = vld [vmem:[%s15 + $0x20] sm:$0xff]
    %v6250 = vld [vmem:[%s15 + $0x28] sm:$0xff]
    %v6251 = vld [vmem:[%s15 + $0x30] sm:$0xff]
    %v6252 = vld [vmem:[%s15 + $0x38] sm:$0xff]
    %v6253 = vld [vmem:[%s15 + $0x40] sm:$0xff]
    %v6254 = vld [vmem:[%s15 + $0x48] sm:$0xff]
    %v6255 = vld [vmem:[%s15 + $0x50] sm:$0xff]
    %v6256 = vld [vmem:[%s15 + $0x58] sm:$0xff]
    %v6257 = vld [vmem:[%s15 + $0x60] sm:$0xff]
    %v6258 = vld [vmem:[%s15 + $0x68] sm:$0xff]
    %v6259 = vld [vmem:[%s15 + $0x70] sm:$0xff]
    %v6260 = vld [vmem:[%s15 + $0x78] sm:$0xff]
    %v6261 = vld [vmem:[%s15 + $0x80] sm:$0xff]
    %v6262 = vld [vmem:[%s15 + $0x88] sm:$0xff]
    %v6263 = vld [vmem:[%s15 + $0x90] sm:$0xff]
    %v6264 = vld [vmem:[%s15 + $0x98] sm:$0xff]
    %v6265 = vld [vmem:[%s15 + $0xa0] sm:$0xff]
    %v6266 = vld [vmem:[%s15 + $0xa8] sm:$0xff]
    %v6267 = vld [vmem:[%s15 + $0xb0] sm:$0xff]
    %v6268 = vld [vmem:[%s15 + $0xb8] sm:$0xff]
    %v6269 = vld [vmem:[%s15 + $0xc0] sm:$0xff]
    %v6270 = vld [vmem:[%s15 + $0xc8] sm:$0xff]
    %v6271 = vld [vmem:[%s15 + $0xd0] sm:$0xff]
    %v6272 = vld [vmem:[%s15 + $0xd8] sm:$0xff]
    %v6273 = vld [vmem:[%s15 + $0xe0] sm:$0xff]
    %v6274 = vld [vmem:[%s15 + $0xe8] sm:$0xff]
    %v6275 = vld [vmem:[%s15 + $0xf0] sm:$0xff]
    %v6276 = vld [vmem:[%s15 + $0xf8] sm:$0xff]
    %v6277 = vld [vmem:[%s15 + $0x100] sm:$0xff]
    %v6278 = vld [vmem:[%s15 + $0x108] sm:$0xff]
    %v6279 = vld [vmem:[%s15 + $0x110] sm:$0xff]
    %v6280 = vld [vmem:[%s15 + $0x118] sm:$0xff]
    %v6281 = vld [vmem:[%s15 + $0x120] sm:$0xff]
    %v6282 = vld [vmem:[%s15 + $0x128] sm:$0xff]
    %v6283 = vld [vmem:[%s15 + $0x130] sm:$0xff]
    %v6284 = vld [vmem:[%s15 + $0x138] sm:$0xff]
    %v6285 = vld [vmem:[%s15 + $0x140] sm:$0xff]
    %v6286 = vld [vmem:[%s15 + $0x148] sm:$0xff]
    %v6287 = vld [vmem:[%s15 + $0x150] sm:$0xff]
    %v6288 = vld [vmem:[%s15 + $0x158] sm:$0xff]
    %v6289 = vld [vmem:[%s15 + $0x160] sm:$0xff]
    %v6290 = vld [vmem:[%s15 + $0x168] sm:$0xff]
    %v6291 = vld [vmem:[%s15 + $0x170] sm:$0xff]
    %v6292 = vld [vmem:[%s15 + $0x178] sm:$0xff]
    %v6293 = vld [vmem:[%s15 + $0x180] sm:$0xff]
    %v6294 = vld [vmem:[%s15 + $0x188] sm:$0xff]
    %v6295 = vld [vmem:[%s15 + $0x190] sm:$0xff]
    %v6296 = vld [vmem:[%s15 + $0x198] sm:$0xff]
    %v6297 = vld [vmem:[%s15 + $0x1a0] sm:$0xff]
    %v6298 = vld [vmem:[%s15 + $0x1a8] sm:$0xff]
    %v6299 = vld [vmem:[%s15 + $0x1b0] sm:$0xff]
    %v6300 = vld [vmem:[%s15 + $0x1b8] sm:$0xff]
    %v6301 = vld [vmem:[%s15 + $0x1c0] sm:$0xff]
    %v6302 = vld [vmem:[%s15 + $0x1c8] sm:$0xff]
    %v6303 = vld [vmem:[%s15 + $0x1d0] sm:$0xff]
    %v6304 = vld [vmem:[%s15 + $0x1d8] sm:$0xff]
    %v6305 = vld [vmem:[%s15 + $0x1e0] sm:$0xff]
    %v6306 = vld [vmem:[%s15 + $0x1e8] sm:$0xff]
    %v6307 = vld [vmem:[%s15 + $0x1f0] sm:$0xff]
    %v6308 = vld [vmem:[%s15 + $0x1f8] sm:$0xff]
    %v6309 = vld [vmem:[%s16] sm:$0xf]
    %v6311 = vlaneseq
    %v6312 = vshrl.u32 %v6311, 7
    %v6313 = vsub.s32 0, %v6312
    %v6314 = vrot.slane %v6309, %v6313
    %v6315 = vlaneseq
    %v6316 = vshrl.u32 %v6315, 7
    %v6317 = vsub.s32 1, %v6316
    %v6318 = vrot.slane %v6309, %v6317
    %v6319 = vlaneseq
    %v6320 = vshrl.u32 %v6319, 7
    %v6321 = vsub.s32 2, %v6320
    %v6322 = vrot.slane %v6309, %v6321
    %v6323 = vlaneseq
    %v6324 = vshrl.u32 %v6323, 7
    %v6325 = vsub.s32 3, %v6324
    %v6326 = vrot.slane %v6309, %v6325
    %6331 = vmatprep.subr.mxu0 %v6306
    %6332 = vmatpush1.msra.mxu0 %v6305
    %6333 = vmatprep.subr.mxu0 %v6302
    %6334 = vmatpush1.msra.mxu0 %v6301
    %6335 = vmatprep.subr.mxu0 %v6298
    %6336 = vmatpush1.msra.mxu0 %v6297
    %6337 = vmatprep.subr.mxu0 %v6294
    %6338 = vmatpush1.msra.mxu0 %v6293
    %6339 = vmatprep.subr.mxu0 %v6290
    %6340 = vmatpush1.msra.mxu0 %v6289
    %6341 = vmatprep.subr.mxu0 %v6286
    %6342 = vmatpush1.msra.mxu0 %v6285
    %6343 = vmatprep.subr.mxu0 %v6282
    %6344 = vmatpush1.msra.mxu0 %v6281
    %6345 = vmatprep.subr.mxu0 %v6278
    %6346 = vmatpush1.msra.mxu0 %v6277
    %6347 = vmatprep.subr.mxu0 %v6274
    %6348 = vmatpush1.msra.mxu0 %v6273
    %6349 = vmatprep.subr.mxu0 %v6270
    %6350 = vmatpush1.msra.mxu0 %v6269
    %6351 = vmatprep.subr.mxu0 %v6266
    %6352 = vmatpush1.msra.mxu0 %v6265
    %6353 = vmatprep.subr.mxu0 %v6262
    %6354 = vmatpush1.msra.mxu0 %v6261
    %6355 = vmatprep.subr.mxu0 %v6258
    %6356 = vmatpush1.msra.mxu0 %v6257
    %6357 = vmatprep.subr.mxu0 %v6254
    %6358 = vmatpush1.msra.mxu0 %v6253
    %6359 = vmatprep.subr.mxu0 %v6250
    %6360 = vmatpush1.msra.mxu0 %v6249
    %6361 = vmatprep.subr.mxu0 %v6246
    %6362 = vmatpush1.msra.mxu0 %v6245
    %6363 = vmatprep.subr.mxu0 0.0
    %6364 = vmatpush2.msra.mxu0 0.0
    %6365 = vmatprep.subr.mxu0 0.0
    %6366 = vmatpush2.msra.mxu0 0.0
    %6367 = vmatprep.subr.mxu0 0.0
    %6368 = vmatpush2.msra.mxu0 0.0
    %6369 = vmatprep.subr.mxu0 0.0
    %6370 = vmatpush2.msra.mxu0 0.0
    %6371 = vmatprep.subr.mxu0 0.0
    %6372 = vmatpush2.msra.mxu0 0.0
    %6373 = vmatprep.subr.mxu0 0.0
    %6374 = vmatpush2.msra.mxu0 0.0
    %6375 = vmatprep.subr.mxu0 0.0
    %6376 = vmatpush2.msra.mxu0 0.0
    %6377 = vmatprep.subr.mxu0 0.0
    %6378 = vmatpush2.msra.mxu0 0.0
    %6379 = vmatprep.subr.mxu0 0.0
    %6380 = vmatpush2.msra.mxu0 0.0
    %6381 = vmatprep.subr.mxu0 0.0
    %6382 = vmatpush2.msra.mxu0 0.0
    %6383 = vmatprep.subr.mxu0 0.0
    %6384 = vmatpush2.msra.mxu0 0.0
    %6385 = vmatprep.subr.mxu0 0.0
    %6386 = vmatpush2.msra.mxu0 0.0
    %6387 = vmatprep.subr.mxu0 0.0
    %6388 = vmatpush2.msra.mxu0 0.0
    %6389 = vmatprep.subr.mxu0 0.0
    %6390 = vmatpush2.msra.mxu0 0.0
    %6391 = vmatprep.subr.mxu0 0.0
    %6392 = vmatpush2.msra.mxu0 0.0
    %6393 = vmatprep.subr.mxu0 0.0
    %6394 = vmatpush2.msra.mxu0 0.0
    %6395 = vmatprep.mubr.f32.mxu0 0.0
    %6396 = vmatmul.mubr.f32.gmra.mxu0 %v6237
    %v6397 = vpop.f32.mrf.mxu0
    %v6398 = vadd.f32 %v6314, %v6397
    %v6399 = vpop.f32.mrf.mxu0
    %v6400 = vadd.f32 %v6318, %v6399
    %6401 = vmatprep.mubr.f32.mxu0 0.0
    %6402 = vmatmul.mubr.f32.gmra.mxu0 %v6238
    %v6403 = vpop.f32.mrf.mxu0
    %v6404 = vadd.f32 %v6314, %v6403
    %v6405 = vpop.f32.mrf.mxu0
    %v6406 = vadd.f32 %v6318, %v6405
    %6407 = vmatprep.mubr.f32.mxu0 0.0
    %6408 = vmatmul.mubr.f32.gmra.mxu0 %v6239
    %v6409 = vpop.f32.mrf.mxu0
    %v6410 = vadd.f32 %v6314, %v6409
    %v6411 = vpop.f32.mrf.mxu0
    %v6412 = vadd.f32 %v6318, %v6411
    %6413 = vmatprep.mubr.f32.mxu0 0.0
    %6414 = vmatmul.mubr.f32.gmra.mxu0 %v6240
    %v6415 = vpop.f32.mrf.mxu0
    %v6416 = vadd.f32 %v6314, %v6415
    %v6417 = vpop.f32.mrf.mxu0
    %v6418 = vadd.f32 %v6318, %v6417
    %6419 = vmatprep.mubr.f32.mxu0 0.0
    %6420 = vmatmul.mubr.f32.gmra.mxu0 %v6241
    %v6421 = vpop.f32.mrf.mxu0
    %v6422 = vadd.f32 %v6314, %v6421
    %v6423 = vpop.f32.mrf.mxu0
    %v6424 = vadd.f32 %v6318, %v6423
    %6425 = vmatprep.mubr.f32.mxu0 0.0
    %6426 = vmatmul.mubr.f32.gmra.mxu0 %v6242
    %v6427 = vpop.f32.mrf.mxu0
    %v6428 = vadd.f32 %v6314, %v6427
    %v6429 = vpop.f32.mrf.mxu0
    %v6430 = vadd.f32 %v6318, %v6429
    %6431 = vmatprep.mubr.f32.mxu0 0.0
    %6432 = vmatmul.mubr.f32.gmra.mxu0 %v6243
    %v6433 = vpop.f32.mrf.mxu0
    %v6434 = vadd.f32 %v6314, %v6433
    %v6435 = vpop.f32.mrf.mxu0
    %v6436 = vadd.f32 %v6318, %v6435
    %6437 = vmatprep.mubr.f32.mxu0 0.0
    %6438 = vmatmul.mubr.f32.gmra.mxu0 %v6244
    %v6439 = vpop.f32.mrf.mxu0
    %v6440 = vadd.f32 %v6314, %v6439
    %v6441 = vpop.f32.mrf.mxu0
    %v6442 = vadd.f32 %v6318, %v6441
    %6443 = vdwg.mxu0
    %6444 = vmatprep.subr.mxu0 %v6308
    %6445 = vmatpush1.msra.mxu0 %v6307
    %6446 = vmatprep.subr.mxu0 %v6304
    %6447 = vmatpush1.msra.mxu0 %v6303
    %6448 = vmatprep.subr.mxu0 %v6300
    %6449 = vmatpush1.msra.mxu0 %v6299
    %6450 = vmatprep.subr.mxu0 %v6296
    %6451 = vmatpush1.msra.mxu0 %v6295
    %6452 = vmatprep.subr.mxu0 %v6292
    %6453 = vmatpush1.msra.mxu0 %v6291
    %6454 = vmatprep.subr.mxu0 %v6288
    %6455 = vmatpush1.msra.mxu0 %v6287
    %6456 = vmatprep.subr.mxu0 %v6284
    %6457 = vmatpush1.msra.mxu0 %v6283
    %6458 = vmatprep.subr.mxu0 %v6280
    %6459 = vmatpush1.msra.mxu0 %v6279
    %6460 = vmatprep.subr.mxu0 %v6276
    %6461 = vmatpush1.msra.mxu0 %v6275
    %6462 = vmatprep.subr.mxu0 %v6272
    %6463 = vmatpush1.msra.mxu0 %v6271
    %6464 = vmatprep.subr.mxu0 %v6268
    %6465 = vmatpush1.msra.mxu0 %v6267
    %6466 = vmatprep.subr.mxu0 %v6264
    %6467 = vmatpush1.msra.mxu0 %v6263
    %6468 = vmatprep.subr.mxu0 %v6260
    %6469 = vmatpush1.msra.mxu0 %v6259
    %6470 = vmatprep.subr.mxu0 %v6256
    %6471 = vmatpush1.msra.mxu0 %v6255
    %6472 = vmatprep.subr.mxu0 %v6252
    %6473 = vmatpush1.msra.mxu0 %v6251
    %6474 = vmatprep.subr.mxu0 %v6248
    %6475 = vmatpush1.msra.mxu0 %v6247
    %6476 = vmatprep.subr.mxu0 0.0
    %6477 = vmatpush2.msra.mxu0 0.0
    %6478 = vmatprep.subr.mxu0 0.0
    %6479 = vmatpush2.msra.mxu0 0.0
    %6480 = vmatprep.subr.mxu0 0.0
    %6481 = vmatpush2.msra.mxu0 0.0
    %6482 = vmatprep.subr.mxu0 0.0
    %6483 = vmatpush2.msra.mxu0 0.0
    %6484 = vmatprep.subr.mxu0 0.0
    %6485 = vmatpush2.msra.mxu0 0.0
    %6486 = vmatprep.subr.mxu0 0.0
    %6487 = vmatpush2.msra.mxu0 0.0
    %6488 = vmatprep.subr.mxu0 0.0
    %6489 = vmatpush2.msra.mxu0 0.0
    %6490 = vmatprep.subr.mxu0 0.0
    %6491 = vmatpush2.msra.mxu0 0.0
    %6492 = vmatprep.subr.mxu0 0.0
    %6493 = vmatpush2.msra.mxu0 0.0
    %6494 = vmatprep.subr.mxu0 0.0
    %6495 = vmatpush2.msra.mxu0 0.0
    %6496 = vmatprep.subr.mxu0 0.0
    %6497 = vmatpush2.msra.mxu0 0.0
    %6498 = vmatprep.subr.mxu0 0.0
    %6499 = vmatpush2.msra.mxu0 0.0
    %6500 = vmatprep.subr.mxu0 0.0
    %6501 = vmatpush2.msra.mxu0 0.0
    %6502 = vmatprep.subr.mxu0 0.0
    %6503 = vmatpush2.msra.mxu0 0.0
    %6504 = vmatprep.subr.mxu0 0.0
    %6505 = vmatpush2.msra.mxu0 0.0
    %6506 = vmatprep.subr.mxu0 0.0
    %6507 = vmatpush2.msra.mxu0 0.0
    %6508 = vmatprep.mubr.f32.mxu0 0.0
    %6509 = vmatmul.mubr.f32.gmra.mxu0 %v6237
    %v6510 = vpop.f32.mrf.mxu0
    %v6511 = vadd.f32 %v6322, %v6510
    %v6512 = vpop.f32.mrf.mxu0
    %v6513 = vadd.f32 %v6326, %v6512
    %6514 = vmatprep.mubr.f32.mxu0 0.0
    %6515 = vmatmul.mubr.f32.gmra.mxu0 %v6238
    %v6516 = vpop.f32.mrf.mxu0
    %v6517 = vadd.f32 %v6322, %v6516
    %v6518 = vpop.f32.mrf.mxu0
    %v6519 = vadd.f32 %v6326, %v6518
    %6520 = vmatprep.mubr.f32.mxu0 0.0
    %6521 = vmatmul.mubr.f32.gmra.mxu0 %v6239
    %v6522 = vpop.f32.mrf.mxu0
    %v6523 = vadd.f32 %v6322, %v6522
    %v6524 = vpop.f32.mrf.mxu0
    %v6525 = vadd.f32 %v6326, %v6524
    %6526 = vmatprep.mubr.f32.mxu0 0.0
    %6527 = vmatmul.mubr.f32.gmra.mxu0 %v6240
    %v6528 = vpop.f32.mrf.mxu0
    %v6529 = vadd.f32 %v6322, %v6528
    %v6530 = vpop.f32.mrf.mxu0
    %v6531 = vadd.f32 %v6326, %v6530
    %6532 = vmatprep.mubr.f32.mxu0 0.0
    %6533 = vmatmul.mubr.f32.gmra.mxu0 %v6241
    %v6534 = vpop.f32.mrf.mxu0
    %v6535 = vadd.f32 %v6322, %v6534
    %v6536 = vpop.f32.mrf.mxu0
    %v6537 = vadd.f32 %v6326, %v6536
    %6538 = vmatprep.mubr.f32.mxu0 0.0
    %6539 = vmatmul.mubr.f32.gmra.mxu0 %v6242
    %v6540 = vpop.f32.mrf.mxu0
    %v6541 = vadd.f32 %v6322, %v6540
    %v6542 = vpop.f32.mrf.mxu0
    %v6543 = vadd.f32 %v6326, %v6542
    %6544 = vmatprep.mubr.f32.mxu0 0.0
    %6545 = vmatmul.mubr.f32.gmra.mxu0 %v6243
    %v6546 = vpop.f32.mrf.mxu0
    %v6547 = vadd.f32 %v6322, %v6546
    %v6548 = vpop.f32.mrf.mxu0
    %v6549 = vadd.f32 %v6326, %v6548
    %6550 = vmatprep.mubr.f32.mxu0 0.0
    %6551 = vmatmul.mubr.f32.gmra.mxu0 %v6244
    %v6552 = vpop.f32.mrf.mxu0
    %v6553 = vadd.f32 %v6322, %v6552
    %v6554 = vpop.f32.mrf.mxu0
    %v6555 = vadd.f32 %v6326, %v6554
    %6556 = vdwg.mxu0
    %v6557 = vmax.f32 %v6398, 0.0
    %v6558 = vmax.f32 %v6400, 0.0
    %v6559 = vmax.f32 %v6511, 0.0
    %v6560 = vmax.f32 %v6513, 0.0
    %v6561 = vmax.f32 %v6404, 0.0
    %v6562 = vmax.f32 %v6406, 0.0
    %v6563 = vmax.f32 %v6517, 0.0
    %v6564 = vmax.f32 %v6519, 0.0
    %v6565 = vmax.f32 %v6410, 0.0
    %v6566 = vmax.f32 %v6412, 0.0
    %v6567 = vmax.f32 %v6523, 0.0
    %v6568 = vmax.f32 %v6525, 0.0
    %v6569 = vmax.f32 %v6416, 0.0
    %v6570 = vmax.f32 %v6418, 0.0
    %v6571 = vmax.f32 %v6529, 0.0
    %v6572 = vmax.f32 %v6531, 0.0
    %v6573 = vmax.f32 %v6422, 0.0
    %v6574 = vmax.f32 %v6424, 0.0
    %v6575 = vmax.f32 %v6535, 0.0
    %v6576 = vmax.f32 %v6537, 0.0
    %v6577 = vmax.f32 %v6428, 0.0
    %v6578 = vmax.f32 %v6430, 0.0
    %v6579 = vmax.f32 %v6541, 0.0
    %v6580 = vmax.f32 %v6543, 0.0
    %v6581 = vmax.f32 %v6434, 0.0
    %v6582 = vmax.f32 %v6436, 0.0
    %v6583 = vmax.f32 %v6547, 0.0
    %v6584 = vmax.f32 %v6549, 0.0
    %v6585 = vmax.f32 %v6440, 0.0
    %v6586 = vmax.f32 %v6442, 0.0
    %v6587 = vmax.f32 %v6553, 0.0
    %v6588 = vmax.f32 %v6555, 0.0
    %v6589 = vld [vmem:[%s17] sm:$0xff]
    %v6590 = vld [vmem:[%s17 + $0x8] sm:$0xff]
    %v6591 = vld [vmem:[%s17 + $0x10] sm:$0xff]
    %v6592 = vld [vmem:[%s17 + $0x18] sm:$0xff]
    %v6593 = vld [vmem:[%s17 + $0x20] sm:$0xff]
    %v6594 = vld [vmem:[%s17 + $0x28] sm:$0xff]
    %v6595 = vld [vmem:[%s17 + $0x30] sm:$0xff]
    %v6596 = vld [vmem:[%s17 + $0x38] sm:$0xff]
    %v6597 = vld [vmem:[%s17 + $0x40] sm:$0xff]
    %v6598 = vld [vmem:[%s17 + $0x48] sm:$0xff]
    %v6599 = vld [vmem:[%s17 + $0x50] sm:$0xff]
    %v6600 = vld [vmem:[%s17 + $0x58] sm:$0xff]
    %v6601 = vld [vmem:[%s17 + $0x60] sm:$0xff]
    %v6602 = vld [vmem:[%s17 + $0x68] sm:$0xff]
    %v6603 = vld [vmem:[%s17 + $0x70] sm:$0xff]
    %v6604 = vld [vmem:[%s17 + $0x78] sm:$0xff]
    %v6605 = vld [vmem:[%s17 + $0x80] sm:$0xff]
    %v6606 = vld [vmem:[%s17 + $0x88] sm:$0xff]
    %v6607 = vld [vmem:[%s17 + $0x90] sm:$0xff]
    %v6608 = vld [vmem:[%s17 + $0x98] sm:$0xff]
    %v6609 = vld [vmem:[%s17 + $0xa0] sm:$0xff]
    %v6610 = vld [vmem:[%s17 + $0xa8] sm:$0xff]
    %v6611 = vld [vmem:[%s17 + $0xb0] sm:$0xff]
    %v6612 = vld [vmem:[%s17 + $0xb8] sm:$0xff]
    %v6613 = vld [vmem:[%s17 + $0xc0] sm:$0xff]
    %v6614 = vld [vmem:[%s17 + $0xc8] sm:$0xff]
    %v6615 = vld [vmem:[%s17 + $0xd0] sm:$0xff]
    %v6616 = vld [vmem:[%s17 + $0xd8] sm:$0xff]
    %v6617 = vld [vmem:[%s17 + $0xe0] sm:$0xff]
    %v6618 = vld [vmem:[%s17 + $0xe8] sm:$0xff]
    %v6619 = vld [vmem:[%s17 + $0xf0] sm:$0xff]
    %v6620 = vld [vmem:[%s17 + $0xf8] sm:$0xff]
    %v6621 = vld [vmem:[%s17 + $0x100] sm:$0xff]
    %v6622 = vld [vmem:[%s17 + $0x108] sm:$0xff]
    %v6623 = vld [vmem:[%s17 + $0x110] sm:$0xff]
    %v6624 = vld [vmem:[%s17 + $0x118] sm:$0xff]
    %v6625 = vld [vmem:[%s17 + $0x120] sm:$0xff]
    %v6626 = vld [vmem:[%s17 + $0x128] sm:$0xff]
    %v6627 = vld [vmem:[%s17 + $0x130] sm:$0xff]
    %v6628 = vld [vmem:[%s17 + $0x138] sm:$0xff]
    %v6629 = vld [vmem:[%s17 + $0x140] sm:$0xff]
    %v6630 = vld [vmem:[%s17 + $0x148] sm:$0xff]
    %v6631 = vld [vmem:[%s17 + $0x150] sm:$0xff]
    %v6632 = vld [vmem:[%s17 + $0x158] sm:$0xff]
    %v6633 = vld [vmem:[%s17 + $0x160] sm:$0xff]
    %v6634 = vld [vmem:[%s17 + $0x168] sm:$0xff]
    %v6635 = vld [vmem:[%s17 + $0x170] sm:$0xff]
    %v6636 = vld [vmem:[%s17 + $0x178] sm:$0xff]
    %v6637 = vld [vmem:[%s17 + $0x180] sm:$0xff]
    %v6638 = vld [vmem:[%s17 + $0x188] sm:$0xff]
    %v6639 = vld [vmem:[%s17 + $0x190] sm:$0xff]
    %v6640 = vld [vmem:[%s17 + $0x198] sm:$0xff]
    %v6641 = vld [vmem:[%s17 + $0x1a0] sm:$0xff]
    %v6642 = vld [vmem:[%s17 + $0x1a8] sm:$0xff]
    %v6643 = vld [vmem:[%s17 + $0x1b0] sm:$0xff]
    %v6644 = vld [vmem:[%s17 + $0x1b8] sm:$0xff]
    %v6645 = vld [vmem:[%s17 + $0x1c0] sm:$0xff]
    %v6646 = vld [vmem:[%s17 + $0x1c8] sm:$0xff]
    %v6647 = vld [vmem:[%s17 + $0x1d0] sm:$0xff]
    %v6648 = vld [vmem:[%s17 + $0x1d8] sm:$0xff]
    %v6649 = vld [vmem:[%s17 + $0x1e0] sm:$0xff]
    %v6650 = vld [vmem:[%s17 + $0x1e8] sm:$0xff]
    %v6651 = vld [vmem:[%s17 + $0x1f0] sm:$0xff]
    %v6652 = vld [vmem:[%s17 + $0x1f8] sm:$0xff]
    %v6653 = vld [vmem:[%s18] sm:$0x1]
    %v6655 = vlaneseq
    %v6656 = vshrl.u32 %v6655, 7
    %v6657 = vsub.s32 0, %v6656
    %v6658 = vrot.slane %v6653, %v6657
    %6660 = vmatprep.subr.mxu0 0.0
    %6661 = vmatpush1.msra.mxu0 %v6604
    %6662 = vmatprep.subr.mxu0 0.0
    %6663 = vmatpush1.msra.mxu0 %v6603
    %6664 = vmatprep.subr.mxu0 0.0
    %6665 = vmatpush1.msra.mxu0 %v6602
    %6666 = vmatprep.subr.mxu0 0.0
    %6667 = vmatpush1.msra.mxu0 %v6601
    %6668 = vmatprep.subr.mxu0 0.0
    %6669 = vmatpush1.msra.mxu0 %v6600
    %6670 = vmatprep.subr.mxu0 0.0
    %6671 = vmatpush1.msra.mxu0 %v6599
    %6672 = vmatprep.subr.mxu0 0.0
    %6673 = vmatpush1.msra.mxu0 %v6598
    %6674 = vmatprep.subr.mxu0 0.0
    %6675 = vmatpush1.msra.mxu0 %v6597
    %6676 = vmatprep.subr.mxu0 0.0
    %6677 = vmatpush1.msra.mxu0 %v6596
    %6678 = vmatprep.subr.mxu0 0.0
    %6679 = vmatpush1.msra.mxu0 %v6595
    %6680 = vmatprep.subr.mxu0 0.0
    %6681 = vmatpush1.msra.mxu0 %v6594
    %6682 = vmatprep.subr.mxu0 0.0
    %6683 = vmatpush1.msra.mxu0 %v6593
    %6684 = vmatprep.subr.mxu0 0.0
    %6685 = vmatpush1.msra.mxu0 %v6592
    %6686 = vmatprep.subr.mxu0 0.0
    %6687 = vmatpush1.msra.mxu0 %v6591
    %6688 = vmatprep.subr.mxu0 0.0
    %6689 = vmatpush1.msra.mxu0 %v6590
    %6690 = vmatprep.subr.mxu0 0.0
    %6691 = vmatpush1.msra.mxu0 %v6589
    %6692 = vmatprep.subr.mxu0 0.0
    %6693 = vmatpush2.msra.mxu0 %v6620
    %6694 = vmatprep.subr.mxu0 0.0
    %6695 = vmatpush2.msra.mxu0 %v6619
    %6696 = vmatprep.subr.mxu0 0.0
    %6697 = vmatpush2.msra.mxu0 %v6618
    %6698 = vmatprep.subr.mxu0 0.0
    %6699 = vmatpush2.msra.mxu0 %v6617
    %6700 = vmatprep.subr.mxu0 0.0
    %6701 = vmatpush2.msra.mxu0 %v6616
    %6702 = vmatprep.subr.mxu0 0.0
    %6703 = vmatpush2.msra.mxu0 %v6615
    %6704 = vmatprep.subr.mxu0 0.0
    %6705 = vmatpush2.msra.mxu0 %v6614
    %6706 = vmatprep.subr.mxu0 0.0
    %6707 = vmatpush2.msra.mxu0 %v6613
    %6708 = vmatprep.subr.mxu0 0.0
    %6709 = vmatpush2.msra.mxu0 %v6612
    %6710 = vmatprep.subr.mxu0 0.0
    %6711 = vmatpush2.msra.mxu0 %v6611
    %6712 = vmatprep.subr.mxu0 0.0
    %6713 = vmatpush2.msra.mxu0 %v6610
    %6714 = vmatprep.subr.mxu0 0.0
    %6715 = vmatpush2.msra.mxu0 %v6609
    %6716 = vmatprep.subr.mxu0 0.0
    %6717 = vmatpush2.msra.mxu0 %v6608
    %6718 = vmatprep.subr.mxu0 0.0
    %6719 = vmatpush2.msra.mxu0 %v6607
    %6720 = vmatprep.subr.mxu0 0.0
    %6721 = vmatpush2.msra.mxu0 %v6606
    %6722 = vmatprep.subr.mxu0 0.0
    %6723 = vmatpush2.msra.mxu0 %v6605
    %6724 = vmatprep.mubr.f32.mxu0 %v6558
    %6725 = vmatmul.mubr.f32.gmra.mxu0 %v6557
    %v6726 = vpop.f32.mrf.mxu0
    %v6727 = vadd.f32 %v6658, %v6726
    %v6728 = vpop.f32.mrf.mxu0
    %6729 = vmatprep.mubr.f32.mxu0 %v6562
    %6730 = vmatmul.mubr.f32.gmra.mxu0 %v6561
    %v6731 = vpop.f32.mrf.mxu0
    %v6732 = vadd.f32 %v6658, %v6731
    %v6733 = vpop.f32.mrf.mxu0
    %6734 = vmatprep.mubr.f32.mxu0 %v6566
    %6735 = vmatmul.mubr.f32.gmra.mxu0 %v6565
    %v6736 = vpop.f32.mrf.mxu0
    %v6737 = vadd.f32 %v6658, %v6736
    %v6738 = vpop.f32.mrf.mxu0
    %6739 = vmatprep.mubr.f32.mxu0 %v6570
    %6740 = vmatmul.mubr.f32.gmra.mxu0 %v6569
    %v6741 = vpop.f32.mrf.mxu0
    %v6742 = vadd.f32 %v6658, %v6741
    %v6743 = vpop.f32.mrf.mxu0
    %6744 = vmatprep.mubr.f32.mxu0 %v6574
    %6745 = vmatmul.mubr.f32.gmra.mxu0 %v6573
    %v6746 = vpop.f32.mrf.mxu0
    %v6747 = vadd.f32 %v6658, %v6746
    %v6748 = vpop.f32.mrf.mxu0
    %6749 = vmatprep.mubr.f32.mxu0 %v6578
    %6750 = vmatmul.mubr.f32.gmra.mxu0 %v6577
    %v6751 = vpop.f32.mrf.mxu0
    %v6752 = vadd.f32 %v6658, %v6751
    %v6753 = vpop.f32.mrf.mxu0
    %6754 = vmatprep.mubr.f32.mxu0 %v6582
    %6755 = vmatmul.mubr.f32.gmra.mxu0 %v6581
    %v6756 = vpop.f32.mrf.mxu0
    %v6757 = vadd.f32 %v6658, %v6756
    %v6758 = vpop.f32.mrf.mxu0
    %6759 = vmatprep.mubr.f32.mxu0 %v6586
    %6760 = vmatmul.mubr.f32.gmra.mxu0 %v6585
    %v6761 = vpop.f32.mrf.mxu0
    %v6762 = vadd.f32 %v6658, %v6761
    %v6763 = vpop.f32.mrf.mxu0
    %6764 = vdwg.mxu0
    %6765 = vmatprep.subr.mxu0 0.0
    %6766 = vmatpush1.msra.mxu0 %v6636
    %6767 = vmatprep.subr.mxu0 0.0
    %6768 = vmatpush1.msra.mxu0 %v6635
    %6769 = vmatprep.subr.mxu0 0.0
    %6770 = vmatpush1.msra.mxu0 %v6634
    %6771 = vmatprep.subr.mxu0 0.0
    %6772 = vmatpush1.msra.mxu0 %v6633
    %6773 = vmatprep.subr.mxu0 0.0
    %6774 = vmatpush1.msra.mxu0 %v6632
    %6775 = vmatprep.subr.mxu0 0.0
    %6776 = vmatpush1.msra.mxu0 %v6631
    %6777 = vmatprep.subr.mxu0 0.0
    %6778 = vmatpush1.msra.mxu0 %v6630
    %6779 = vmatprep.subr.mxu0 0.0
    %6780 = vmatpush1.msra.mxu0 %v6629
    %6781 = vmatprep.subr.mxu0 0.0
    %6782 = vmatpush1.msra.mxu0 %v6628
    %6783 = vmatprep.subr.mxu0 0.0
    %6784 = vmatpush1.msra.mxu0 %v6627
    %6785 = vmatprep.subr.mxu0 0.0
    %6786 = vmatpush1.msra.mxu0 %v6626
    %6787 = vmatprep.subr.mxu0 0.0
    %6788 = vmatpush1.msra.mxu0 %v6625
    %6789 = vmatprep.subr.mxu0 0.0
    %6790 = vmatpush1.msra.mxu0 %v6624
    %6791 = vmatprep.subr.mxu0 0.0
    %6792 = vmatpush1.msra.mxu0 %v6623
    %6793 = vmatprep.subr.mxu0 0.0
    %6794 = vmatpush1.msra.mxu0 %v6622
    %6795 = vmatprep.subr.mxu0 0.0
    %6796 = vmatpush1.msra.mxu0 %v6621
    %6797 = vmatprep.subr.mxu0 0.0
    %6798 = vmatpush2.msra.mxu0 %v6652
    %6799 = vmatprep.subr.mxu0 0.0
    %6800 = vmatpush2.msra.mxu0 %v6651
    %6801 = vmatprep.subr.mxu0 0.0
    %6802 = vmatpush2.msra.mxu0 %v6650
    %6803 = vmatprep.subr.mxu0 0.0
    %6804 = vmatpush2.msra.mxu0 %v6649
    %6805 = vmatprep.subr.mxu0 0.0
    %6806 = vmatpush2.msra.mxu0 %v6648
    %6807 = vmatprep.subr.mxu0 0.0
    %6808 = vmatpush2.msra.mxu0 %v6647
    %6809 = vmatprep.subr.mxu0 0.0
    %6810 = vmatpush2.msra.mxu0 %v6646
    %6811 = vmatprep.subr.mxu0 0.0
    %6812 = vmatpush2.msra.mxu0 %v6645
    %6813 = vmatprep.subr.mxu0 0.0
    %6814 = vmatpush2.msra.mxu0 %v6644
    %6815 = vmatprep.subr.mxu0 0.0
    %6816 = vmatpush2.msra.mxu0 %v6643
    %6817 = vmatprep.subr.mxu0 0.0
    %6818 = vmatpush2.msra.mxu0 %v6642
    %6819 = vmatprep.subr.mxu0 0.0
    %6820 = vmatpush2.msra.mxu0 %v6641
    %6821 = vmatprep.subr.mxu0 0.0
    %6822 = vmatpush2.msra.mxu0 %v6640
    %6823 = vmatprep.subr.mxu0 0.0
    %6824 = vmatpush2.msra.mxu0 %v6639
    %6825 = vmatprep.subr.mxu0 0.0
    %6826 = vmatpush2.msra.mxu0 %v6638
    %6827 = vmatprep.subr.mxu0 0.0
    %6828 = vmatpush2.msra.mxu0 %v6637
    %6829 = vmatprep.mubr.f32.mxu0 %v6560
    %6830 = vmatmul.mubr.f32.gmra.mxu0 %v6559
    %v6831 = vpop.f32.mrf.mxu0
    %v6832 = vadd.f32 %v6727, %v6831
    %v6833 = vpop.f32.mrf.mxu0
    %6834 = vmatprep.mubr.f32.mxu0 %v6564
    %6835 = vmatmul.mubr.f32.gmra.mxu0 %v6563
    %v6836 = vpop.f32.mrf.mxu0
    %v6837 = vadd.f32 %v6732, %v6836
    %v6838 = vpop.f32.mrf.mxu0
    %6839 = vmatprep.mubr.f32.mxu0 %v6568
    %6840 = vmatmul.mubr.f32.gmra.mxu0 %v6567
    %v6841 = vpop.f32.mrf.mxu0
    %v6842 = vadd.f32 %v6737, %v6841
    %v6843 = vpop.f32.mrf.mxu0
    %6844 = vmatprep.mubr.f32.mxu0 %v6572
    %6845 = vmatmul.mubr.f32.gmra.mxu0 %v6571
    %v6846 = vpop.f32.mrf.mxu0
    %v6847 = vadd.f32 %v6742, %v6846
    %v6848 = vpop.f32.mrf.mxu0
    %6849 = vmatprep.mubr.f32.mxu0 %v6576
    %6850 = vmatmul.mubr.f32.gmra.mxu0 %v6575
    %v6851 = vpop.f32.mrf.mxu0
    %v6852 = vadd.f32 %v6747, %v6851
    %v6853 = vpop.f32.mrf.mxu0
    %6854 = vmatprep.mubr.f32.mxu0 %v6580
    %6855 = vmatmul.mubr.f32.gmra.mxu0 %v6579
    %v6856 = vpop.f32.mrf.mxu0
    %v6857 = vadd.f32 %v6752, %v6856
    %v6858 = vpop.f32.mrf.mxu0
    %6859 = vmatprep.mubr.f32.mxu0 %v6584
    %6860 = vmatmul.mubr.f32.gmra.mxu0 %v6583
    %v6861 = vpop.f32.mrf.mxu0
    %v6862 = vadd.f32 %v6757, %v6861
    %v6863 = vpop.f32.mrf.mxu0
    %6864 = vmatprep.mubr.f32.mxu0 %v6588
    %6865 = vmatmul.mubr.f32.gmra.mxu0 %v6587
    %v6866 = vpop.f32.mrf.mxu0
    %v6867 = vadd.f32 %v6762, %v6866
    %v6868 = vpop.f32.mrf.mxu0
    %6869 = vdwg.mxu0
    %v6870 = vld [vmem:[%s13] sm:$0x1]
    %v6871 = vld [vmem:[%s14] sm:$0x1]
    %6872 = vmatprep.subr.mxu0 0.0
    %6873 = vmatpush1.msra.mxu0 %v5966
    %6874 = vmatprep.subr.mxu0 0.0
    %6875 = vmatpush1.msra.mxu0 %v5965
    %6876 = vmatprep.subr.mxu0 0.0
    %6877 = vmatpush1.msra.mxu0 %v5964
    %6878 = vmatprep.subr.mxu0 0.0
    %6879 = vmatpush1.msra.mxu0 %v5963
    %6880 = vmatprep.subr.mxu0 0.0
    %6881 = vmatpush1.msra.mxu0 %v5962
    %6882 = vmatprep.subr.mxu0 0.0
    %6883 = vmatpush1.msra.mxu0 %v5961
    %6884 = vmatprep.subr.mxu0 0.0
    %6885 = vmatpush1.msra.mxu0 %v5960
    %6886 = vmatprep.subr.mxu0 0.0
    %6887 = vmatpush1.msra.mxu0 %v5959
    %6888 = vmatprep.subr.mxu0 0.0
    %6889 = vmatpush1.msra.mxu0 %v5958
    %6890 = vmatprep.subr.mxu0 0.0
    %6891 = vmatpush1.msra.mxu0 %v5957
    %6892 = vmatprep.subr.mxu0 0.0
    %6893 = vmatpush1.msra.mxu0 %v5956
    %6894 = vmatprep.subr.mxu0 0.0
    %6895 = vmatpush1.msra.mxu0 %v5955
    %6896 = vmatprep.subr.mxu0 0.0
    %6897 = vmatpush1.msra.mxu0 %v5954
    %6898 = vmatprep.subr.mxu0 0.0
    %6899 = vmatpush1.msra.mxu0 %v5953
    %6900 = vmatprep.subr.mxu0 0.0
    %6901 = vmatpush1.msra.mxu0 %v5952
    %6902 = vmatprep.subr.mxu0 0.0
    %6903 = vmatpush1.msra.mxu0 %v5951
    %6904 = vmatprep.subr.mxu0 0.0
    %6905 = vmatpush2.msra.mxu0 0.0
    %6906 = vmatprep.subr.mxu0 0.0
    %6907 = vmatpush2.msra.mxu0 0.0
    %6908 = vmatprep.subr.mxu0 0.0
    %6909 = vmatpush2.msra.mxu0 0.0
    %6910 = vmatprep.subr.mxu0 0.0
    %6911 = vmatpush2.msra.mxu0 0.0
    %6912 = vmatprep.subr.mxu0 0.0
    %6913 = vmatpush2.msra.mxu0 0.0
    %6914 = vmatprep.subr.mxu0 0.0
    %6915 = vmatpush2.msra.mxu0 0.0
    %6916 = vmatprep.subr.mxu0 0.0
    %6917 = vmatpush2.msra.mxu0 0.0
    %6918 = vmatprep.subr.mxu0 0.0
    %6919 = vmatpush2.msra.mxu0 0.0
    %6920 = vmatprep.subr.mxu0 0.0
    %6921 = vmatpush2.msra.mxu0 0.0
    %6922 = vmatprep.subr.mxu0 0.0
    %6923 = vmatpush2.msra.mxu0 0.0
    %6924 = vmatprep.subr.mxu0 0.0
    %6925 = vmatpush2.msra.mxu0 0.0
    %6926 = vmatprep.subr.mxu0 0.0
    %6927 = vmatpush2.msra.mxu0 0.0
    %6928 = vmatprep.subr.mxu0 0.0
    %6929 = vmatpush2.msra.mxu0 0.0
    %6930 = vmatprep.subr.mxu0 0.0
    %6931 = vmatpush2.msra.mxu0 0.0
    %6932 = vmatprep.subr.mxu0 0.0
    %6933 = vmatpush2.msra.mxu0 0.0
    %6934 = vmatprep.subr.mxu0 0.0
    %6935 = vmatpush2.msra.mxu0 0.0
    %6936 = vmatprep.mubr.f32.mxu0 0.0
    %6937 = vmatmul.mubr.f32.gmra.mxu0 %v6832
    %v6938 = vpop.f32.mrf.mxu0
    %v6939 = vadd.f32 0.0, %v6938
    %v6940 = vpop.f32.mrf.mxu0
    %6941 = vmatprep.mubr.f32.mxu0 0.0
    %6942 = vmatmul.mubr.f32.gmra.mxu0 %v6837
    %v6943 = vpop.f32.mrf.mxu0
    %v6944 = vadd.f32 0.0, %v6943
    %v6945 = vpop.f32.mrf.mxu0
    %6946 = vmatprep.mubr.f32.mxu0 0.0
    %6947 = vmatmul.mubr.f32.gmra.mxu0 %v6842
    %v6948 = vpop.f32.mrf.mxu0
    %v6949 = vadd.f32 0.0, %v6948
    %v6950 = vpop.f32.mrf.mxu0
    %6951 = vmatprep.mubr.f32.mxu0 0.0
    %6952 = vmatmul.mubr.f32.gmra.mxu0 %v6847
    %v6953 = vpop.f32.mrf.mxu0
    %v6954 = vadd.f32 0.0, %v6953
    %v6955 = vpop.f32.mrf.mxu0
    %6956 = vmatprep.mubr.f32.mxu0 0.0
    %6957 = vmatmul.mubr.f32.gmra.mxu0 %v6852
    %v6958 = vpop.f32.mrf.mxu0
    %v6959 = vadd.f32 0.0, %v6958
    %v6960 = vpop.f32.mrf.mxu0
    %6961 = vmatprep.mubr.f32.mxu0 0.0
    %6962 = vmatmul.mubr.f32.gmra.mxu0 %v6857
    %v6963 = vpop.f32.mrf.mxu0
    %v6964 = vadd.f32 0.0, %v6963
    %v6965 = vpop.f32.mrf.mxu0
    %6966 = vmatprep.mubr.f32.mxu0 0.0
    %6967 = vmatmul.mubr.f32.gmra.mxu0 %v6862
    %v6968 = vpop.f32.mrf.mxu0
    %v6969 = vadd.f32 0.0, %v6968
    %v6970 = vpop.f32.mrf.mxu0
    %6971 = vmatprep.mubr.f32.mxu0 0.0
    %6972 = vmatmul.mubr.f32.gmra.mxu0 %v6867
    %v6973 = vpop.f32.mrf.mxu0
    %v6974 = vadd.f32 0.0, %v6973
    %v6975 = vpop.f32.mrf.mxu0
    %6976 = vdwg.mxu0
    %v6977 = vsub.f32 %v6832, %v6939
    %v6978 = vsub.f32 %v6837, %v6944
    %v6979 = vsub.f32 %v6842, %v6949
    %v6980 = vsub.f32 %v6847, %v6954
    %v6981 = vsub.f32 %v6852, %v6959
    %v6982 = vsub.f32 %v6857, %v6964
    %v6983 = vsub.f32 %v6862, %v6969
    %v6984 = vsub.f32 %v6867, %v6974
    %v6985 = vmul.f32 %v6977, %v6977
    %v6986 = vmul.f32 %v6978, %v6978
    %v6987 = vmul.f32 %v6979, %v6979
    %v6988 = vmul.f32 %v6980, %v6980
    %v6989 = vmul.f32 %v6981, %v6981
    %v6990 = vmul.f32 %v6982, %v6982
    %v6991 = vmul.f32 %v6983, %v6983
    %v6992 = vmul.f32 %v6984, %v6984
    %6993 = vmatprep.subr.mxu0 0.0
    %6994 = vmatpush1.msra.mxu0 %v5966
    %6995 = vmatprep.subr.mxu0 0.0
    %6996 = vmatpush1.msra.mxu0 %v5965
    %6997 = vmatprep.subr.mxu0 0.0
    %6998 = vmatpush1.msra.mxu0 %v5964
    %6999 = vmatprep.subr.mxu0 0.0
    %7000 = vmatpush1.msra.mxu0 %v5963
    %7001 = vmatprep.subr.mxu0 0.0
    %7002 = vmatpush1.msra.mxu0 %v5962
    %7003 = vmatprep.subr.mxu0 0.0
    %7004 = vmatpush1.msra.mxu0 %v5961
    %7005 = vmatprep.subr.mxu0 0.0
    %7006 = vmatpush1.msra.mxu0 %v5960
    %7007 = vmatprep.subr.mxu0 0.0
    %7008 = vmatpush1.msra.mxu0 %v5959
    %7009 = vmatprep.subr.mxu0 0.0
    %7010 = vmatpush1.msra.mxu0 %v5958
    %7011 = vmatprep.subr.mxu0 0.0
    %7012 = vmatpush1.msra.mxu0 %v5957
    %7013 = vmatprep.subr.mxu0 0.0
    %7014 = vmatpush1.msra.mxu0 %v5956
    %7015 = vmatprep.subr.mxu0 0.0
    %7016 = vmatpush1.msra.mxu0 %v5955
    %7017 = vmatprep.subr.mxu0 0.0
    %7018 = vmatpush1.msra.mxu0 %v5954
    %7019 = vmatprep.subr.mxu0 0.0
    %7020 = vmatpush1.msra.mxu0 %v5953
    %7021 = vmatprep.subr.mxu0 0.0
    %7022 = vmatpush1.msra.mxu0 %v5952
    %7023 = vmatprep.subr.mxu0 0.0
    %7024 = vmatpush1.msra.mxu0 %v5951
    %7025 = vmatprep.subr.mxu0 0.0
    %7026 = vmatpush2.msra.mxu0 0.0
    %7027 = vmatprep.subr.mxu0 0.0
    %7028 = vmatpush2.msra.mxu0 0.0
    %7029 = vmatprep.subr.mxu0 0.0
    %7030 = vmatpush2.msra.mxu0 0.0
    %7031 = vmatprep.subr.mxu0 0.0
    %7032 = vmatpush2.msra.mxu0 0.0
    %7033 = vmatprep.subr.mxu0 0.0
    %7034 = vmatpush2.msra.mxu0 0.0
    %7035 = vmatprep.subr.mxu0 0.0
    %7036 = vmatpush2.msra.mxu0 0.0
    %7037 = vmatprep.subr.mxu0 0.0
    %7038 = vmatpush2.msra.mxu0 0.0
    %7039 = vmatprep.subr.mxu0 0.0
    %7040 = vmatpush2.msra.mxu0 0.0
    %7041 = vmatprep.subr.mxu0 0.0
    %7042 = vmatpush2.msra.mxu0 0.0
    %7043 = vmatprep.subr.mxu0 0.0
    %7044 = vmatpush2.msra.mxu0 0.0
    %7045 = vmatprep.subr.mxu0 0.0
    %7046 = vmatpush2.msra.mxu0 0.0
    %7047 = vmatprep.subr.mxu0 0.0
    %7048 = vmatpush2.msra.mxu0 0.0
    %7049 = vmatprep.subr.mxu0 0.0
    %7050 = vmatpush2.msra.mxu0 0.0
    %7051 = vmatprep.subr.mxu0 0.0
    %7052 = vmatpush2.msra.mxu0 0.0
    %7053 = vmatprep.subr.mxu0 0.0
    %7054 = vmatpush2.msra.mxu0 0.0
    %7055 = vmatprep.subr.mxu0 0.0
    %7056 = vmatpush2.msra.mxu0 0.0
    %7057 = vmatprep.mubr.f32.mxu0 0.0
    %7058 = vmatmul.mubr.f32.gmra.mxu0 %v6985
    %v7059 = vpop.f32.mrf.mxu0
    %v7060 = vadd.f32 1e-05, %v7059
    %v7061 = vpop.f32.mrf.mxu0
    %7062 = vmatprep.mubr.f32.mxu0 0.0
    %7063 = vmatmul.mubr.f32.gmra.mxu0 %v6986
    %v7064 = vpop.f32.mrf.mxu0
    %v7065 = vadd.f32 1e-05, %v7064
    %v7066 = vpop.f32.mrf.mxu0
    %7067 = vmatprep.mubr.f32.mxu0 0.0
    %7068 = vmatmul.mubr.f32.gmra.mxu0 %v6987
    %v7069 = vpop.f32.mrf.mxu0
    %v7070 = vadd.f32 1e-05, %v7069
    %v7071 = vpop.f32.mrf.mxu0
    %7072 = vmatprep.mubr.f32.mxu0 0.0
    %7073 = vmatmul.mubr.f32.gmra.mxu0 %v6988
    %v7074 = vpop.f32.mrf.mxu0
    %v7075 = vadd.f32 1e-05, %v7074
    %v7076 = vpop.f32.mrf.mxu0
    %7077 = vmatprep.mubr.f32.mxu0 0.0
    %7078 = vmatmul.mubr.f32.gmra.mxu0 %v6989
    %v7079 = vpop.f32.mrf.mxu0
    %v7080 = vadd.f32 1e-05, %v7079
    %v7081 = vpop.f32.mrf.mxu0
    %7082 = vmatprep.mubr.f32.mxu0 0.0
    %7083 = vmatmul.mubr.f32.gmra.mxu0 %v6990
    %v7084 = vpop.f32.mrf.mxu0
    %v7085 = vadd.f32 1e-05, %v7084
    %v7086 = vpop.f32.mrf.mxu0
    %7087 = vmatprep.mubr.f32.mxu0 0.0
    %7088 = vmatmul.mubr.f32.gmra.mxu0 %v6991
    %v7089 = vpop.f32.mrf.mxu0
    %v7090 = vadd.f32 1e-05, %v7089
    %v7091 = vpop.f32.mrf.mxu0
    %7092 = vmatprep.mubr.f32.mxu0 0.0
    %7093 = vmatmul.mubr.f32.gmra.mxu0 %v6992
    %v7094 = vpop.f32.mrf.mxu0
    %v7095 = vadd.f32 1e-05, %v7094
    %v7096 = vpop.f32.mrf.mxu0
    %7097 = vdwg.mxu0
    %v7098 = vrsqrt.pop %v7060
    %v7099 = vrsqrt.pop %v7065
    %v7100 = vrsqrt.pop %v7070
    %v7101 = vrsqrt.pop %v7075
    %v7102 = vrsqrt.pop %v7080
    %v7103 = vrsqrt.pop %v7085
    %v7104 = vrsqrt.pop %v7090
    %v7105 = vrsqrt.pop %v7095
    %v7106 = vmul.f32 %v6977, %v7098
    %v7107 = vmul.f32 %v6978, %v7099
    %v7108 = vmul.f32 %v6979, %v7100
    %v7109 = vmul.f32 %v6980, %v7101
    %v7110 = vmul.f32 %v6981, %v7102
    %v7111 = vmul.f32 %v6982, %v7103
    %v7112 = vmul.f32 %v6983, %v7104
    %v7113 = vmul.f32 %v6984, %v7105
    %v7115 = vlaneseq
    %v7116 = vshrl.u32 %v7115, 7
    %v7117 = vsub.s32 0, %v7116
    %v7118 = vrot.slane %v6870, %v7117
    %v7120 = vmul.f32 %v7106, %v7118
    %v7121 = vmul.f32 %v7107, %v7118
    %v7122 = vmul.f32 %v7108, %v7118
    %v7123 = vmul.f32 %v7109, %v7118
    %v7124 = vmul.f32 %v7110, %v7118
    %v7125 = vmul.f32 %v7111, %v7118
    %v7126 = vmul.f32 %v7112, %v7118
    %v7127 = vmul.f32 %v7113, %v7118
    %v7129 = vlaneseq
    %v7130 = vshrl.u32 %v7129, 7
    %v7131 = vsub.s32 0, %v7130
    %v7132 = vrot.slane %v6871, %v7131
    %v7134 = vadd.f32 %v7120, %v7132
    %v7135 = vadd.f32 %v7121, %v7132
    %v7136 = vadd.f32 %v7122, %v7132
    %v7137 = vadd.f32 %v7123, %v7132
    %v7138 = vadd.f32 %v7124, %v7132
    %v7139 = vadd.f32 %v7125, %v7132
    %v7140 = vadd.f32 %v7126, %v7132
    %v7141 = vadd.f32 %v7127, %v7132
    %v7142 = vadd.f32 %v6237, %v7134
    %v7143 = vadd.f32 %v6238, %v7135
    %v7144 = vadd.f32 %v6239, %v7136
    %v7145 = vadd.f32 %v6240, %v7137
    %v7146 = vadd.f32 %v6241, %v7138
    %v7147 = vadd.f32 %v6242, %v7139
    %v7148 = vadd.f32 %v6243, %v7140
    %v7149 = vadd.f32 %v6244, %v7141
    %7150 = vst [vmem:[#allocation10] sm:$0xff] %v7142
    %7151 = vst [vmem:[#allocation10 + $0x8] sm:$0xff] %v7143
    %7152 = vst [vmem:[#allocation10 + $0x10] sm:$0xff] %v7144
    %7153 = vst [vmem:[#allocation10 + $0x18] sm:$0xff] %v7145
    %7154 = vst [vmem:[#allocation10 + $0x20] sm:$0xff] %v7146
    %7155 = vst [vmem:[#allocation10 + $0x28] sm:$0xff] %v7147
    %7156 = vst [vmem:[#allocation10 + $0x30] sm:$0xff] %v7148
    %7157 = vst [vmem:[#allocation10 + $0x38] sm:$0xff] %v7149
    // Predicated region
    $region94: #{tpu_custom_call.1} parent=1 // pred_check
      _
    $region95: #{tpu_custom_call.1} parent=1 // pred_check_branch
      %7159 = sbr.rel (0) target = $region97
    $region96: #{tpu_custom_call.1} parent=1 // pred_region
      %s7161 = ssub.s32 1024, 1024
      %7162 = vsyncadd [#allocation4], %s7161
      %s7163 = sshll.u32 [#allocation10], 4
      %s7164 = int_to_ptr.vmem [resolvable:$true] %s7163
      %7169 = dma.vmem_to_hbm [thread:$0]  %s7164, 1024, %s19, [#allocation4], 128, 128, 8
    $region97: #{tpu_custom_call.1} parent=1 // pred_fallthru
      _
    // Predicated region
    $region98: #{tpu_custom_call.1} parent=1 // pred_check
      _
    $region99: #{tpu_custom_call.1} parent=1 // pred_check_branch
      %7171 = sbr.rel (0) target = $region101
    $region100: #{tpu_custom_call.1} parent=1 // pred_region
      %7172 = dma.done [#allocation4], 1024
    $region101: #{tpu_custom_call.1} parent=1 // pred_fallthru
      _
    %7173 = vsyncpa [#allocation3], 1
    %7174 = vsyncpa [#allocation6], 1
    %7175 = vsyncpa [#allocation9], 1
    %7176 = vsyncpa [#allocation4], 1

</llo_original>
